<compile_context>
chip_gen: v5e
topology: v5e:2x2
jax: 0.10.0
libtpu: 0.0.40
codegen_flags: <defaults>
</compile_context>

<pallas_src>
import functools

import numpy as np
import jax
import jax.numpy as jnp
from jax import lax
from jax.experimental import pallas as pl
from jax.experimental.pallas import tpu as pltpu


_LANE = 128          # every feature dim is zero-padded to 128 lanes
_NUM_GC_LAYERS = 14  # gcn_0, 6 x (gcn_1, gcn_2), gcn_7
_COORD0 = 120        # polygon X/Y live on lanes 120 / 121 of the padded vector


# -----------------------------------------------------------------------------
# Fused kernel: both coarse-to-fine steps, one batch element per grid program.
# -----------------------------------------------------------------------------
def _poly_gnn_kernel(featc_ref, hullb_ref, conv_ref, adj_ref,
                     gw1_ref, gw2_ref, gb_ref, fcw_ref, fcb_ref, out_ref,
                     *, num_steps, num_layers, feat_h, feat_w):
    """Everything for one batch element stays resident in VMEM.

    featc: (1, N, 128) f32  feature_hull coords on lanes 120:122
    hullb: (1, N, 128) f32  binary_hull  coords on lanes 120:122
    conv:  (1, HW, 128) bf16  CNN features on lanes 0:120
    adj:   (N, N) f32         shared ring adjacency
    gw1/gw2: (S, 14, 128, 128) bf16  per-layer W1 / W2 (zero padded)
    gb:    (S, 14, 1, 128) f32       per-layer b1 + b2
    fcw:   (S, 128, 128) bf16  final fc, mapped onto output lanes 120:122
    fcb:   (S, 1, 128) f32
    out:   (1, S, N, 128) f32  predicted polygons on lanes 120:122
    """
    n = featc_ref.shape[1]
    hw = conv_ref.shape[1]
    conv = conv_ref[0]                                   # (HW, 128) bf16
    adj = adj_ref[...].astype(jnp.bfloat16)              # (N, N)
    iota = lax.broadcasted_iota(jnp.int32, (n, hw), 1)

    def coords_of(p):                                    # (N,128) -> (N,1),(N,1)
        return (p[:, _COORD0:_COORD0 + 1], p[:, _COORD0 + 1:_COORD0 + 2])

    def graph_conv(h, step, layer, relu=False, res=None):
        hb = h.astype(jnp.bfloat16)
        ah = jnp.dot(adj, hb, preferred_element_type=jnp.float32).astype(jnp.bfloat16)
        y = (jnp.dot(hb, gw1_ref[step, layer], preferred_element_type=jnp.float32)
             + jnp.dot(ah, gw2_ref[step, layer], preferred_element_type=jnp.float32)
             + gb_ref[step, layer])
        if res is not None:
            y = y + res
        if relu:
            y = jnp.maximum(y, 0.0)
        return y

    def gcn(x, step):
        h = graph_conv(x, step, 0)                               # gcn_0
        for blk in range((num_layers - 2) // 2):                 # residual blocks
            y = graph_conv(h, step, 1 + 2 * blk, relu=True)      # relu(gcn_1(h))
            h = graph_conv(y, step, 2 + 2 * blk, relu=True, res=h)  # relu(gcn_2(y)+h)
        h = graph_conv(h, step, num_layers - 1)                  # gcn_7 (-> 32)
        # final fc (32 -> 2); weights are pre-placed so the shift lands on the
        # coordinate lanes 120:122, everything else stays zero.
        return (jnp.dot(h.astype(jnp.bfloat16), fcw_ref[step],
                        preferred_element_type=jnp.float32) + fcb_ref[step])

    poly = hullb_ref[0]                                  # (N,128), binary hull
    for step in range(num_steps):
        if step == 0:
            # sampling(): nearest-cell gather at the initial feature-hull coords.
            # TODO(synk): utils.prepare_gcn_component's exact index convention
            # is unavailable; step 0 is made consistent with interpolated_sum.
            fx, fy = coords_of(featc_ref[0])
            ix = jnp.clip(jnp.floor(fx * feat_h), 0, feat_h - 1)
            iy = jnp.clip(jnp.floor(fy * feat_w), 0, feat_w - 1)
            idx = (ix * feat_w + iy).astype(jnp.int32)            # (N,1)
            sel = jnp.where(iota == idx, 1.0, 0.0)
        else:
            # interpolated_sum(): 4-tap bilinear sample at the current polygon
            # (weights computed before clipping, exactly like the reference).
            px, py = coords_of(poly)
            xs = px * feat_h
            x0 = jnp.floor(xs)
            x1 = x0 + 1.0
            ys = py * feat_w
            y0 = jnp.floor(ys)
            y1 = y0 + 1.0
            w00 = (x1 - xs) * (y1 - ys)
            w01 = (x1 - xs) * (ys - y0)
            w10 = (xs - x0) * (y1 - ys)
            w11 = (xs - x0) * (ys - y0)
            x0c = jnp.clip(x0, 0, feat_h - 1)
            x1c = jnp.clip(x1, 0, feat_h - 1)
            y0c = jnp.clip(y0, 0, feat_w - 1)
            y1c = jnp.clip(y1, 0, feat_w - 1)
            i00 = (x0c * feat_w + y0c).astype(jnp.int32)
            i01 = (x0c * feat_w + y1c).astype(jnp.int32)
            i10 = (x1c * feat_w + y0c).astype(jnp.int32)
            i11 = (x1c * feat_w + y1c).astype(jnp.int32)
            sel = (jnp.where(iota == i00, w00, 0.0)
                   + jnp.where(iota == i01, w01, 0.0)
                   + jnp.where(iota == i10, w10, 0.0)
                   + jnp.where(iota == i11, w11, 0.0))
        # gather + concat: cnn features occupy lanes 0:120, polygon coords
        # lanes 120:122, so a single add reproduces torch.cat((cnn, hull), 2).
        cnn = jnp.dot(sel.astype(jnp.bfloat16), conv,
                      preferred_element_type=jnp.float32)         # (N,128) f32
        shift = gcn(cnn + poly, step)                             # lanes 120:122
        poly = poly + shift                                       # add_shift
        out_ref[0, step] = poly


def fused_poly_gnn(featc, hullb, conv, adj, gw1, gw2, gb, fcw, fcb,
                   *, feat_h, feat_w):
    """One pallas_call for the whole forward pass; returns (B, S, N, 2)."""
    B, N, _ = featc.shape
    S, L = gw1.shape[0], gw1.shape[1]
    hw = conv.shape[1]
    kernel = functools.partial(_poly_gnn_kernel, num_steps=S, num_layers=L,
                               feat_h=feat_h, feat_w=feat_w)
    per_batch3 = lambda b: (b, 0, 0)
    shared2 = lambda b: (0, 0)
    shared3 = lambda b: (0, 0, 0)
    shared4 = lambda b: (0, 0, 0, 0)
    out = pl.pallas_call(
        kernel,
        out_shape=jax.ShapeDtypeStruct((B, S, N, _LANE), jnp.float32),
        grid=(B,),
        in_specs=[
            pl.BlockSpec((1, N, _LANE), per_batch3),          # featc
            pl.BlockSpec((1, N, _LANE), per_batch3),          # hullb
            pl.BlockSpec((1, hw, _LANE), per_batch3),         # conv
            pl.BlockSpec((N, N), shared2),                    # adj (shared)
            pl.BlockSpec((S, L, _LANE, _LANE), shared4),      # gw1
            pl.BlockSpec((S, L, _LANE, _LANE), shared4),      # gw2
            pl.BlockSpec((S, L, 1, _LANE), shared4),          # gb
            pl.BlockSpec((S, _LANE, _LANE), shared3),         # fcw
            pl.BlockSpec((S, 1, _LANE), shared3),             # fcb
        ],
        out_specs=pl.BlockSpec((1, S, N, _LANE), lambda b: (b, 0, 0, 0)),
        compiler_params=pltpu.CompilerParams(
            dimension_semantics=("parallel",)),
    )(featc, hullb, conv, adj, gw1, gw2, gb, fcw, fcb)
    return out[..., _COORD0:_COORD0 + 2]                      # (B, S, N, 2)


# -----------------------------------------------------------------------------
# Parameter init (matches the module init: Linear w ~ N(0, 0.01), b = 0)
# -----------------------------------------------------------------------------
def _init_linear(key, fin, fout):
    return 0.01 * jax.random.normal(key, (fin, fout), jnp.float32), \
           jnp.zeros((fout,), jnp.float32)


def _init_graph_conv(key, fin, fout):
    k1, k2 = jax.random.split(key)
    w1, b1 = _init_linear(k1, fin, fout)
    w2, b2 = _init_linear(k2, fin, fout)
    return (w1, b1, w2, b2)


def init_gcn_params(key, state_dim=120, feature_dim=122):
    keys = jax.random.split(key, 16)
    params = {"gcn_0": _init_graph_conv(keys[0], feature_dim, state_dim),
              "res": [],
              "gcn_7": _init_graph_conv(keys[1], state_dim, 32)}
    for r in range(6):
        params["res"].append({
            "gcn_1": _init_graph_conv(keys[2 + 2 * r], state_dim, state_dim),
            "gcn_2": _init_graph_conv(keys[3 + 2 * r], state_dim, state_dim)})
    params["fc_w"], params["fc_b"] = _init_linear(keys[14], 32, 2)
    return params


def init_polygnn_params(key, coarse_to_fine_steps=2, state_dim=120, fdim=122):
    keys = jax.random.split(key, coarse_to_fine_steps)
    return {"gnn": [init_gcn_params(k, state_dim, fdim) for k in keys]}


# -----------------------------------------------------------------------------
# One-time host-side weight padding / stacking (keeps the kernel lane-dense)
# -----------------------------------------------------------------------------
def _pad_weight(w):
    fin, fout = w.shape
    return jnp.zeros((_LANE, _LANE), jnp.float32).at[:fin, :fout].set(w)


def _prepare_step(p):
    layers = [p["gcn_0"]]
    for r in range(len(p["res"])):
        layers.append(p["res"][r]["gcn_1"])
        layers.append(p["res"][r]["gcn_2"])
    layers.append(p["gcn_7"])
    w1 = jnp.stack([_pad_weight(l[0]) for l in layers])          # (14,128,128)
    w2 = jnp.stack([_pad_weight(l[2]) for l in layers])          # (14,128,128)
    b = jnp.stack([jnp.zeros((1, _LANE), jnp.float32)
                   .at[0, :l[1].shape[0]].set(l[1] + l[3]) for l in layers])
    fcw = jnp.zeros((_LANE, _LANE), jnp.float32) \
             .at[:p["fc_w"].shape[0], _COORD0:_COORD0 + 2].set(p["fc_w"])
    fcb = jnp.zeros((1, _LANE), jnp.float32) \
             .at[0, _COORD0:_COORD0 + 2].set(p["fc_b"])
    return w1, w2, b, fcw, fcb


def prepare_fused_params(gnn_params):
    per_step = [_prepare_step(p) for p in gnn_params]
    gw1 = jnp.stack([s[0] for s in per_step]).astype(jnp.bfloat16)
    gw2 = jnp.stack([s[1] for s in per_step]).astype(jnp.bfloat16)
    gb = jnp.stack([s[2] for s in per_step])
    fcw = jnp.stack([s[3] for s in per_step]).astype(jnp.bfloat16)
    fcb = jnp.stack([s[4] for s in per_step])
    return gw1, gw2, gb, fcw, fcb


# -----------------------------------------------------------------------------
# Adjacency (ring graph, identical per batch element -> built once, shared)
# -----------------------------------------------------------------------------
@functools.lru_cache(maxsize=None)
def _ring_adjacency_np(n_nodes, n_adj):
    a = np.zeros((n_nodes, n_nodes), np.float32)
    for i in range(n_nodes):
        for j in range(-n_adj // 2, n_adj // 2 + 1):
            if j != 0:
                a[i, (i + j) % n_nodes] = 1.0
                a[(i + j) % n_nodes, i] = 1.0
    return a


def _pad_coords(coords):
    """(B, N, 2) -> (B, N, 128) f32 with coords on lanes 120:122."""
    b, n, _ = coords.shape
    return jnp.zeros((b, n, _LANE), jnp.float32) \
              .at[:, :, _COORD0:_COORD0 + 2].set(coords.astype(jnp.float32))


# -----------------------------------------------------------------------------
# Glue reproducing PolyGNN.forward semantics
# -----------------------------------------------------------------------------
def poly_gnn_forward(tg2, feature_hull, original_hull, binary_hull, bbox, params,
                     coarse_to_fine_steps=2):
    B, C, feat_h1, feat_w1 = tg2.shape                   # NCHW, C = 120
    n_points = binary_hull.shape[1]
    hw = feat_h1 * feat_w1

    # conv_layers = tg2.permute(0,2,3,1).view(-1, H*W, 120), padded to 128
    # lanes and cast to bf16 (f32 accumulation happens inside the kernel).
    conv = jnp.transpose(tg2, (0, 2, 3, 1)).reshape(B, hw, C)
    conv = jnp.pad(conv, ((0, 0), (0, 0), (0, _LANE - C))).astype(jnp.bfloat16)

    featc = _pad_coords(feature_hull)
    hullb = _pad_coords(binary_hull)

    # TODO(synk): utils.prepare_gcn_component's exact adjacency (n_adj=20) is
    # unavailable; an unnormalized symmetric ring adjacency is assumed.
    adj = jnp.asarray(_ring_adjacency_np(n_points, 20))
    adj_batched = jnp.broadcast_to(adj, (B, n_points, n_points))

    fused = prepare_fused_params(params["gnn"][:coarse_to_fine_steps])

    polys = fused_poly_gnn(featc, hullb, conv, adj, *fused,
                           feat_h=feat_h1, feat_w=feat_w1)   # (B, S, N, 2)

    return {
        "pred_polys": [polys[:, s] for s in range(coarse_to_fine_steps)],
        "n_points": n_points,
        "hull_original": original_hull,
        "hull_binary": binary_hull,
        "adjacent": adj_batched,
    }


# -----------------------------------------------------------------------------
if __name__ == "__main__":
    key = jax.random.PRNGKey(0)
    k_tg2, k_hull, k_params = jax.random.split(key, 3)

    B, C, H, W = 2, 120, 16, 16        # state_dim = 120 is fixed by the module
    N_POINTS = 16

    tg2 = jax.random.normal(k_tg2, (B, C, H, W), jnp.float32)       # NCHW
    binary_hull = jax.random.uniform(k_hull, (B, N_POINTS, 2), jnp.float32,
                                     minval=0.05, maxval=0.95)
    feature_hull = binary_hull
    original_hull = binary_hull * jnp.array([H, W], jnp.float32)
    bbox = [[0.0, 0.0, float(W), float(H)] for _ in range(B)]

    params = init_polygnn_params(k_params, coarse_to_fine_steps=2,
                                 state_dim=120, fdim=122)

    out = poly_gnn_forward(tg2, feature_hull, original_hull, binary_hull,
                           bbox, params, coarse_to_fine_steps=2)
    jax.block_until_ready(out["pred_polys"])

    assert out["pred_polys"][0].shape == (B, N_POINTS, 2)
    assert out["pred_polys"][1].shape == (B, N_POINTS, 2)
    assert out["adjacent"].shape == (B, N_POINTS, N_POINTS)
    assert all(bool(jnp.all(jnp.isfinite(p))) for p in out["pred_polys"])
    print("KERNEL_OK")
</pallas_src>

<mosaic_0001>
module attributes {stable_mosaic.version = 11 : i64} {
  func.func @_poly_gnn_kernel(%arg0: i32, %arg1: memref<1x16x128xf32, #tpu.memory_space<vmem>>, %arg2: memref<1x16x128xf32, #tpu.memory_space<vmem>>, %arg3: memref<1x256x128xbf16, #tpu.memory_space<vmem>>, %arg4: memref<16x16xf32, #tpu.memory_space<vmem>>, %arg5: memref<2x14x128x128xbf16, #tpu.memory_space<vmem>>, %arg6: memref<2x14x128x128xbf16, #tpu.memory_space<vmem>>, %arg7: memref<2x14x1x128xf32, #tpu.memory_space<vmem>>, %arg8: memref<2x128x128xbf16, #tpu.memory_space<vmem>>, %arg9: memref<2x1x128xf32, #tpu.memory_space<vmem>>, %arg10: memref<1x2x16x128xf32, #tpu.memory_space<vmem>>) attributes {dimension_semantics = [#tpu.dimension_semantics<parallel>], iteration_bounds = array<i64: 2>, scalar_prefetch = 0 : i64, scratch_operands = 0 : i64, tpu.core_type = #tpu.core_type<tc>, window_params = [{transform_indices = @transform_0, window_bounds = array<i64: 1, 16, 128>}, {transform_indices = @transform_1, window_bounds = array<i64: 1, 16, 128>}, {transform_indices = @transform_2, window_bounds = array<i64: 1, 256, 128>}, {pipeline_mode = #tpu.pipeline_mode<synchronous>, transform_indices = @transform_3, window_bounds = array<i64: 16, 16>}, {pipeline_mode = #tpu.pipeline_mode<synchronous>, transform_indices = @transform_4, window_bounds = array<i64: 2, 14, 128, 128>}, {pipeline_mode = #tpu.pipeline_mode<synchronous>, transform_indices = @transform_5, window_bounds = array<i64: 2, 14, 128, 128>}, {pipeline_mode = #tpu.pipeline_mode<synchronous>, transform_indices = @transform_6, window_bounds = array<i64: 2, 14, 1, 128>}, {pipeline_mode = #tpu.pipeline_mode<synchronous>, transform_indices = @transform_7, window_bounds = array<i64: 2, 128, 128>}, {pipeline_mode = #tpu.pipeline_mode<synchronous>, transform_indices = @transform_8, window_bounds = array<i64: 2, 1, 128>}, {transform_indices = @transform_9, window_bounds = array<i64: 1, 2, 16, 128>}]} {
    %c0 = arith.constant 0 : index
    %c0_0 = arith.constant 0 : index
    %c0_1 = arith.constant 0 : index
    %0 = vector.load %arg3[%c0, %c0_0, %c0_1] : memref<1x256x128xbf16, #tpu.memory_space<vmem>>, vector<1x256x128xbf16>
    %1 = vector.shape_cast %0 : vector<1x256x128xbf16> to vector<256x128xbf16>
    %c0_2 = arith.constant 0 : index
    %c0_3 = arith.constant 0 : index
    %2 = vector.load %arg4[%c0_2, %c0_3] : memref<16x16xf32, #tpu.memory_space<vmem>>, vector<16x16xf32>
    %3 = arith.truncf %2 : vector<16x16xf32> to vector<16x16xbf16>
    %4 = tpu.iota {dimensions = array<i32: 1>} : vector<16x256xi32>
    %c0_4 = arith.constant 0 : index
    %c0_5 = arith.constant 0 : index
    %c0_6 = arith.constant 0 : index
    %5 = vector.load %arg2[%c0_4, %c0_5, %c0_6] : memref<1x16x128xf32, #tpu.memory_space<vmem>>, vector<1x16x128xf32>
    %6 = vector.shape_cast %5 : vector<1x16x128xf32> to vector<16x128xf32>
    %c0_7 = arith.constant 0 : index
    %c0_8 = arith.constant 0 : index
    %c0_9 = arith.constant 0 : index
    %7 = vector.load %arg1[%c0_7, %c0_8, %c0_9] : memref<1x16x128xf32, #tpu.memory_space<vmem>>, vector<1x16x128xf32>
    %8 = vector.shape_cast %7 : vector<1x16x128xf32> to vector<16x128xf32>
    %9 = vector.extract_strided_slice %8 {offsets = [0, 120], sizes = [16, 1], strides = [1, 1]} : vector<16x128xf32> to vector<16x1xf32>
    %10 = vector.extract_strided_slice %8 {offsets = [0, 121], sizes = [16, 1], strides = [1, 1]} : vector<16x128xf32> to vector<16x1xf32>
    %cst = arith.constant 1.600000e+01 : f32
    %11 = vector.broadcast %cst : f32 to vector<16x1xf32>
    %12 = arith.mulf %9, %11 : vector<16x1xf32>
    %13 = math.floor %12 : vector<16x1xf32>
    %c0_i32 = arith.constant 0 : i32
    %c15_i32 = arith.constant 15 : i32
    %14 = arith.sitofp %c0_i32 : i32 to f32
    %15 = vector.broadcast %14 : f32 to vector<16x1xf32>
    %16 = arith.maximumf %15, %13 : vector<16x1xf32>
    %17 = arith.sitofp %c15_i32 : i32 to f32
    %18 = vector.broadcast %17 : f32 to vector<16x1xf32>
    %19 = arith.minimumf %18, %16 : vector<16x1xf32>
    %cst_10 = arith.constant 1.600000e+01 : f32
    %20 = vector.broadcast %cst_10 : f32 to vector<16x1xf32>
    %21 = arith.mulf %10, %20 : vector<16x1xf32>
    %22 = math.floor %21 : vector<16x1xf32>
    %c0_i32_11 = arith.constant 0 : i32
    %c15_i32_12 = arith.constant 15 : i32
    %23 = arith.sitofp %c0_i32_11 : i32 to f32
    %24 = vector.broadcast %23 : f32 to vector<16x1xf32>
    %25 = arith.maximumf %24, %22 : vector<16x1xf32>
    %26 = arith.sitofp %c15_i32_12 : i32 to f32
    %27 = vector.broadcast %26 : f32 to vector<16x1xf32>
    %28 = arith.minimumf %27, %25 : vector<16x1xf32>
    %cst_13 = arith.constant 1.600000e+01 : f32
    %29 = vector.broadcast %cst_13 : f32 to vector<16x1xf32>
    %30 = arith.mulf %19, %29 : vector<16x1xf32>
    %31 = arith.addf %30, %28 : vector<16x1xf32>
    %32 = arith.fptosi %31 : vector<16x1xf32> to vector<16x1xi32>
    %33 = vector.broadcast %32 : vector<16x1xi32> to vector<16x256xi32>
    %34 = arith.cmpi eq, %4, %33 : vector<16x256xi32>
    %cst_14 = arith.constant 1.000000e+00 : f32
    %cst_15 = arith.constant 0.000000e+00 : f32
    %35 = vector.broadcast %cst_14 : f32 to vector<16x256xf32>
    %36 = vector.broadcast %cst_15 : f32 to vector<16x256xf32>
    %37 = arith.select %34, %35, %36 : vector<16x256xi1>, vector<16x256xf32>
    %38 = arith.truncf %37 : vector<16x256xf32> to vector<16x256xbf16>
    %cst_16 = arith.constant dense<0.000000e+00> : vector<16x128xf32>
    %39 = tpu.matmul %38, %1, %cst_16 {dimension_numbers = #tpu.dot_dimension_numbers<[1], [0], [0], [1], [0, 0, 1, 1], [], []>} : vector<16x256xbf16>, vector<256x128xbf16>, vector<16x128xf32> -> vector<16x128xf32>
    %40 = arith.addf %39, %6 : vector<16x128xf32>
    %41 = arith.truncf %40 : vector<16x128xf32> to vector<16x128xbf16>
    %cst_17 = arith.constant dense<0.000000e+00> : vector<16x128xf32>
    %42 = tpu.matmul %3, %41, %cst_17 {dimension_numbers = #tpu.dot_dimension_numbers<[1], [0], [0], [1], [0, 0, 1, 1], [], []>} : vector<16x16xbf16>, vector<16x128xbf16>, vector<16x128xf32> -> vector<16x128xf32>
    %43 = arith.truncf %42 : vector<16x128xf32> to vector<16x128xbf16>
    %c0_18 = arith.constant 0 : index
    %c0_19 = arith.constant 0 : index
    %c0_20 = arith.constant 0 : index
    %c0_21 = arith.constant 0 : index
    %44 = vector.load %arg5[%c0_18, %c0_19, %c0_20, %c0_21] : memref<2x14x128x128xbf16, #tpu.memory_space<vmem>>, vector<1x1x128x128xbf16>
    %45 = vector.shape_cast %44 : vector<1x1x128x128xbf16> to vector<128x128xbf16>
    %cst_22 = arith.constant dense<0.000000e+00> : vector<16x128xf32>
    %46 = tpu.matmul %41, %45, %cst_22 {dimension_numbers = #tpu.dot_dimension_numbers<[1], [0], [0], [1], [0, 0, 1, 1], [], []>} : vector<16x128xbf16>, vector<128x128xbf16>, vector<16x128xf32> -> vector<16x128xf32>
    %c0_23 = arith.constant 0 : index
    %c0_24 = arith.constant 0 : index
    %c0_25 = arith.constant 0 : index
    %c0_26 = arith.constant 0 : index
    %47 = vector.load %arg6[%c0_23, %c0_24, %c0_25, %c0_26] : memref<2x14x128x128xbf16, #tpu.memory_space<vmem>>, vector<1x1x128x128xbf16>
    %48 = vector.shape_cast %47 : vector<1x1x128x128xbf16> to vector<128x128xbf16>
    %cst_27 = arith.constant dense<0.000000e+00> : vector<16x128xf32>
    %49 = tpu.matmul %43, %48, %cst_27 {dimension_numbers = #tpu.dot_dimension_numbers<[1], [0], [0], [1], [0, 0, 1, 1], [], []>} : vector<16x128xbf16>, vector<128x128xbf16>, vector<16x128xf32> -> vector<16x128xf32>
    %50 = arith.addf %46, %49 : vector<16x128xf32>
    %c0_28 = arith.constant 0 : index
    %c0_29 = arith.constant 0 : index
    %c0_30 = arith.constant 0 : index
    %c0_31 = arith.constant 0 : index
    %51 = vector.load %arg7[%c0_28, %c0_29, %c0_30, %c0_31] : memref<2x14x1x128xf32, #tpu.memory_space<vmem>>, vector<1x1x1x128xf32>
    %52 = vector.shape_cast %51 : vector<1x1x1x128xf32> to vector<1x128xf32>
    %53 = vector.broadcast %52 : vector<1x128xf32> to vector<16x128xf32>
    %54 = arith.addf %50, %53 : vector<16x128xf32>
    %55 = arith.truncf %54 : vector<16x128xf32> to vector<16x128xbf16>
    %cst_32 = arith.constant dense<0.000000e+00> : vector<16x128xf32>
    %56 = tpu.matmul %3, %55, %cst_32 {dimension_numbers = #tpu.dot_dimension_numbers<[1], [0], [0], [1], [0, 0, 1, 1], [], []>} : vector<16x16xbf16>, vector<16x128xbf16>, vector<16x128xf32> -> vector<16x128xf32>
    %57 = arith.truncf %56 : vector<16x128xf32> to vector<16x128xbf16>
    %c0_33 = arith.constant 0 : index
    %c1 = arith.constant 1 : index
    %c0_34 = arith.constant 0 : index
    %c0_35 = arith.constant 0 : index
    %58 = vector.load %arg5[%c0_33, %c1, %c0_34, %c0_35] : memref<2x14x128x128xbf16, #tpu.memory_space<vmem>>, vector<1x1x128x128xbf16>
    %59 = vector.shape_cast %58 : vector<1x1x128x128xbf16> to vector<128x128xbf16>
    %cst_36 = arith.constant dense<0.000000e+00> : vector<16x128xf32>
    %60 = tpu.matmul %55, %59, %cst_36 {dimension_numbers = #tpu.dot_dimension_numbers<[1], [0], [0], [1], [0, 0, 1, 1], [], []>} : vector<16x128xbf16>, vector<128x128xbf16>, vector<16x128xf32> -> vector<16x128xf32>
    %c0_37 = arith.constant 0 : index
    %c1_38 = arith.constant 1 : index
    %c0_39 = arith.constant 0 : index
    %c0_40 = arith.constant 0 : index
    %61 = vector.load %arg6[%c0_37, %c1_38, %c0_39, %c0_40] : memref<2x14x128x128xbf16, #tpu.memory_space<vmem>>, vector<1x1x128x128xbf16>
    %62 = vector.shape_cast %61 : vector<1x1x128x128xbf16> to vector<128x128xbf16>
    %cst_41 = arith.constant dense<0.000000e+00> : vector<16x128xf32>
    %63 = tpu.matmul %57, %62, %cst_41 {dimension_numbers = #tpu.dot_dimension_numbers<[1], [0], [0], [1], [0, 0, 1, 1], [], []>} : vector<16x128xbf16>, vector<128x128xbf16>, vector<16x128xf32> -> vector<16x128xf32>
    %64 = arith.addf %60, %63 : vector<16x128xf32>
    %c0_42 = arith.constant 0 : index
    %c1_43 = arith.constant 1 : index
    %c0_44 = arith.constant 0 : index
    %c0_45 = arith.constant 0 : index
    %65 = vector.load %arg7[%c0_42, %c1_43, %c0_44, %c0_45] : memref<2x14x1x128xf32, #tpu.memory_space<vmem>>, vector<1x1x1x128xf32>
    %66 = vector.shape_cast %65 : vector<1x1x1x128xf32> to vector<1x128xf32>
    %67 = vector.broadcast %66 : vector<1x128xf32> to vector<16x128xf32>
    %68 = arith.addf %64, %67 : vector<16x128xf32>
    %cst_46 = arith.constant 0.000000e+00 : f32
    %69 = vector.broadcast %cst_46 : f32 to vector<16x128xf32>
    %70 = arith.maximumf %68, %69 : vector<16x128xf32>
    %71 = arith.truncf %70 : vector<16x128xf32> to vector<16x128xbf16>
    %cst_47 = arith.constant dense<0.000000e+00> : vector<16x128xf32>
    %72 = tpu.matmul %3, %71, %cst_47 {dimension_numbers = #tpu.dot_dimension_numbers<[1], [0], [0], [1], [0, 0, 1, 1], [], []>} : vector<16x16xbf16>, vector<16x128xbf16>, vector<16x128xf32> -> vector<16x128xf32>
    %73 = arith.truncf %72 : vector<16x128xf32> to vector<16x128xbf16>
    %c0_48 = arith.constant 0 : index
    %c2 = arith.constant 2 : index
    %c0_49 = arith.constant 0 : index
    %c0_50 = arith.constant 0 : index
    %74 = vector.load %arg5[%c0_48, %c2, %c0_49, %c0_50] : memref<2x14x128x128xbf16, #tpu.memory_space<vmem>>, vector<1x1x128x128xbf16>
    %75 = vector.shape_cast %74 : vector<1x1x128x128xbf16> to vector<128x128xbf16>
    %cst_51 = arith.constant dense<0.000000e+00> : vector<16x128xf32>
    %76 = tpu.matmul %71, %75, %cst_51 {dimension_numbers = #tpu.dot_dimension_numbers<[1], [0], [0], [1], [0, 0, 1, 1], [], []>} : vector<16x128xbf16>, vector<128x128xbf16>, vector<16x128xf32> -> vector<16x128xf32>
    %c0_52 = arith.constant 0 : index
    %c2_53 = arith.constant 2 : index
    %c0_54 = arith.constant 0 : index
    %c0_55 = arith.constant 0 : index
    %77 = vector.load %arg6[%c0_52, %c2_53, %c0_54, %c0_55] : memref<2x14x128x128xbf16, #tpu.memory_space<vmem>>, vector<1x1x128x128xbf16>
    %78 = vector.shape_cast %77 : vector<1x1x128x128xbf16> to vector<128x128xbf16>
    %cst_56 = arith.constant dense<0.000000e+00> : vector<16x128xf32>
    %79 = tpu.matmul %73, %78, %cst_56 {dimension_numbers = #tpu.dot_dimension_numbers<[1], [0], [0], [1], [0, 0, 1, 1], [], []>} : vector<16x128xbf16>, vector<128x128xbf16>, vector<16x128xf32> -> vector<16x128xf32>
    %80 = arith.addf %76, %79 : vector<16x128xf32>
    %c0_57 = arith.constant 0 : index
    %c2_58 = arith.constant 2 : index
    %c0_59 = arith.constant 0 : index
    %c0_60 = arith.constant 0 : index
    %81 = vector.load %arg7[%c0_57, %c2_58, %c0_59, %c0_60] : memref<2x14x1x128xf32, #tpu.memory_space<vmem>>, vector<1x1x1x128xf32>
    %82 = vector.shape_cast %81 : vector<1x1x1x128xf32> to vector<1x128xf32>
    %83 = vector.broadcast %82 : vector<1x128xf32> to vector<16x128xf32>
    %84 = arith.addf %80, %83 : vector<16x128xf32>
    %85 = arith.addf %84, %54 : vector<16x128xf32>
    %cst_61 = arith.constant 0.000000e+00 : f32
    %86 = vector.broadcast %cst_61 : f32 to vector<16x128xf32>
    %87 = arith.maximumf %85, %86 : vector<16x128xf32>
    %88 = arith.truncf %87 : vector<16x128xf32> to vector<16x128xbf16>
    %cst_62 = arith.constant dense<0.000000e+00> : vector<16x128xf32>
    %89 = tpu.matmul %3, %88, %cst_62 {dimension_numbers = #tpu.dot_dimension_numbers<[1], [0], [0], [1], [0, 0, 1, 1], [], []>} : vector<16x16xbf16>, vector<16x128xbf16>, vector<16x128xf32> -> vector<16x128xf32>
    %90 = arith.truncf %89 : vector<16x128xf32> to vector<16x128xbf16>
    %c0_63 = arith.constant 0 : index
    %c3 = arith.constant 3 : index
    %c0_64 = arith.constant 0 : index
    %c0_65 = arith.constant 0 : index
    %91 = vector.load %arg5[%c0_63, %c3, %c0_64, %c0_65] : memref<2x14x128x128xbf16, #tpu.memory_space<vmem>>, vector<1x1x128x128xbf16>
    %92 = vector.shape_cast %91 : vector<1x1x128x128xbf16> to vector<128x128xbf16>
    %cst_66 = arith.constant dense<0.000000e+00> : vector<16x128xf32>
    %93 = tpu.matmul %88, %92, %cst_66 {dimension_numbers = #tpu.dot_dimension_numbers<[1], [0], [0], [1], [0, 0, 1, 1], [], []>} : vector<16x128xbf16>, vector<128x128xbf16>, vector<16x128xf32> -> vector<16x128xf32>
    %c0_67 = arith.constant 0 : index
    %c3_68 = arith.constant 3 : index
    %c0_69 = arith.constant 0 : index
    %c0_70 = arith.constant 0 : index
    %94 = vector.load %arg6[%c0_67, %c3_68, %c0_69, %c0_70] : memref<2x14x128x128xbf16, #tpu.memory_space<vmem>>, vector<1x1x128x128xbf16>
    %95 = vector.shape_cast %94 : vector<1x1x128x128xbf16> to vector<128x128xbf16>
    %cst_71 = arith.constant dense<0.000000e+00> : vector<16x128xf32>
    %96 = tpu.matmul %90, %95, %cst_71 {dimension_numbers = #tpu.dot_dimension_numbers<[1], [0], [0], [1], [0, 0, 1, 1], [], []>} : vector<16x128xbf16>, vector<128x128xbf16>, vector<16x128xf32> -> vector<16x128xf32>
    %97 = arith.addf %93, %96 : vector<16x128xf32>
    %c0_72 = arith.constant 0 : index
    %c3_73 = arith.constant 3 : index
    %c0_74 = arith.constant 0 : index
    %c0_75 = arith.constant 0 : index
    %98 = vector.load %arg7[%c0_72, %c3_73, %c0_74, %c0_75] : memref<2x14x1x128xf32, #tpu.memory_space<vmem>>, vector<1x1x1x128xf32>
    %99 = vector.shape_cast %98 : vector<1x1x1x128xf32> to vector<1x128xf32>
    %100 = vector.broadcast %99 : vector<1x128xf32> to vector<16x128xf32>
    %101 = arith.addf %97, %100 : vector<16x128xf32>
    %cst_76 = arith.constant 0.000000e+00 : f32
    %102 = vector.broadcast %cst_76 : f32 to vector<16x128xf32>
    %103 = arith.maximumf %101, %102 : vector<16x128xf32>
    %104 = arith.truncf %103 : vector<16x128xf32> to vector<16x128xbf16>
    %cst_77 = arith.constant dense<0.000000e+00> : vector<16x128xf32>
    %105 = tpu.matmul %3, %104, %cst_77 {dimension_numbers = #tpu.dot_dimension_numbers<[1], [0], [0], [1], [0, 0, 1, 1], [], []>} : vector<16x16xbf16>, vector<16x128xbf16>, vector<16x128xf32> -> vector<16x128xf32>
    %106 = arith.truncf %105 : vector<16x128xf32> to vector<16x128xbf16>
    %c0_78 = arith.constant 0 : index
    %c4 = arith.constant 4 : index
    %c0_79 = arith.constant 0 : index
    %c0_80 = arith.constant 0 : index
    %107 = vector.load %arg5[%c0_78, %c4, %c0_79, %c0_80] : memref<2x14x128x128xbf16, #tpu.memory_space<vmem>>, vector<1x1x128x128xbf16>
    %108 = vector.shape_cast %107 : vector<1x1x128x128xbf16> to vector<128x128xbf16>
    %cst_81 = arith.constant dense<0.000000e+00> : vector<16x128xf32>
    %109 = tpu.matmul %104, %108, %cst_81 {dimension_numbers = #tpu.dot_dimension_numbers<[1], [0], [0], [1], [0, 0, 1, 1], [], []>} : vector<16x128xbf16>, vector<128x128xbf16>, vector<16x128xf32> -> vector<16x128xf32>
    %c0_82 = arith.constant 0 : index
    %c4_83 = arith.constant 4 : index
    %c0_84 = arith.constant 0 : index
    %c0_85 = arith.constant 0 : index
    %110 = vector.load %arg6[%c0_82, %c4_83, %c0_84, %c0_85] : memref<2x14x128x128xbf16, #tpu.memory_space<vmem>>, vector<1x1x128x128xbf16>
    %111 = vector.shape_cast %110 : vector<1x1x128x128xbf16> to vector<128x128xbf16>
    %cst_86 = arith.constant dense<0.000000e+00> : vector<16x128xf32>
    %112 = tpu.matmul %106, %111, %cst_86 {dimension_numbers = #tpu.dot_dimension_numbers<[1], [0], [0], [1], [0, 0, 1, 1], [], []>} : vector<16x128xbf16>, vector<128x128xbf16>, vector<16x128xf32> -> vector<16x128xf32>
    %113 = arith.addf %109, %112 : vector<16x128xf32>
    %c0_87 = arith.constant 0 : index
    %c4_88 = arith.constant 4 : index
    %c0_89 = arith.constant 0 : index
    %c0_90 = arith.constant 0 : index
    %114 = vector.load %arg7[%c0_87, %c4_88, %c0_89, %c0_90] : memref<2x14x1x128xf32, #tpu.memory_space<vmem>>, vector<1x1x1x128xf32>
    %115 = vector.shape_cast %114 : vector<1x1x1x128xf32> to vector<1x128xf32>
    %116 = vector.broadcast %115 : vector<1x128xf32> to vector<16x128xf32>
    %117 = arith.addf %113, %116 : vector<16x128xf32>
    %118 = arith.addf %117, %87 : vector<16x128xf32>
    %cst_91 = arith.constant 0.000000e+00 : f32
    %119 = vector.broadcast %cst_91 : f32 to vector<16x128xf32>
    %120 = arith.maximumf %118, %119 : vector<16x128xf32>
    %121 = arith.truncf %120 : vector<16x128xf32> to vector<16x128xbf16>
    %cst_92 = arith.constant dense<0.000000e+00> : vector<16x128xf32>
    %122 = tpu.matmul %3, %121, %cst_92 {dimension_numbers = #tpu.dot_dimension_numbers<[1], [0], [0], [1], [0, 0, 1, 1], [], []>} : vector<16x16xbf16>, vector<16x128xbf16>, vector<16x128xf32> -> vector<16x128xf32>
    %123 = arith.truncf %122 : vector<16x128xf32> to vector<16x128xbf16>
    %c0_93 = arith.constant 0 : index
    %c5 = arith.constant 5 : index
    %c0_94 = arith.constant 0 : index
    %c0_95 = arith.constant 0 : index
    %124 = vector.load %arg5[%c0_93, %c5, %c0_94, %c0_95] : memref<2x14x128x128xbf16, #tpu.memory_space<vmem>>, vector<1x1x128x128xbf16>
    %125 = vector.shape_cast %124 : vector<1x1x128x128xbf16> to vector<128x128xbf16>
    %cst_96 = arith.constant dense<0.000000e+00> : vector<16x128xf32>
    %126 = tpu.matmul %121, %125, %cst_96 {dimension_numbers = #tpu.dot_dimension_numbers<[1], [0], [0], [1], [0, 0, 1, 1], [], []>} : vector<16x128xbf16>, vector<128x128xbf16>, vector<16x128xf32> -> vector<16x128xf32>
    %c0_97 = arith.constant 0 : index
    %c5_98 = arith.constant 5 : index
    %c0_99 = arith.constant 0 : index
    %c0_100 = arith.constant 0 : index
    %127 = vector.load %arg6[%c0_97, %c5_98, %c0_99, %c0_100] : memref<2x14x128x128xbf16, #tpu.memory_space<vmem>>, vector<1x1x128x128xbf16>
    %128 = vector.shape_cast %127 : vector<1x1x128x128xbf16> to vector<128x128xbf16>
    %cst_101 = arith.constant dense<0.000000e+00> : vector<16x128xf32>
    %129 = tpu.matmul %123, %128, %cst_101 {dimension_numbers = #tpu.dot_dimension_numbers<[1], [0], [0], [1], [0, 0, 1, 1], [], []>} : vector<16x128xbf16>, vector<128x128xbf16>, vector<16x128xf32> -> vector<16x128xf32>
    %130 = arith.addf %126, %129 : vector<16x128xf32>
    %c0_102 = arith.constant 0 : index
    %c5_103 = arith.constant 5 : index
    %c0_104 = arith.constant 0 : index
    %c0_105 = arith.constant 0 : index
    %131 = vector.load %arg7[%c0_102, %c5_103, %c0_104, %c0_105] : memref<2x14x1x128xf32, #tpu.memory_space<vmem>>, vector<1x1x1x128xf32>
    %132 = vector.shape_cast %131 : vector<1x1x1x128xf32> to vector<1x128xf32>
    %133 = vector.broadcast %132 : vector<1x128xf32> to vector<16x128xf32>
    %134 = arith.addf %130, %133 : vector<16x128xf32>
    %cst_106 = arith.constant 0.000000e+00 : f32
    %135 = vector.broadcast %cst_106 : f32 to vector<16x128xf32>
    %136 = arith.maximumf %134, %135 : vector<16x128xf32>
    %137 = arith.truncf %136 : vector<16x128xf32> to vector<16x128xbf16>
    %cst_107 = arith.constant dense<0.000000e+00> : vector<16x128xf32>
    %138 = tpu.matmul %3, %137, %cst_107 {dimension_numbers = #tpu.dot_dimension_numbers<[1], [0], [0], [1], [0, 0, 1, 1], [], []>} : vector<16x16xbf16>, vector<16x128xbf16>, vector<16x128xf32> -> vector<16x128xf32>
    %139 = arith.truncf %138 : vector<16x128xf32> to vector<16x128xbf16>
    %c0_108 = arith.constant 0 : index
    %c6 = arith.constant 6 : index
    %c0_109 = arith.constant 0 : index
    %c0_110 = arith.constant 0 : index
    %140 = vector.load %arg5[%c0_108, %c6, %c0_109, %c0_110] : memref<2x14x128x128xbf16, #tpu.memory_space<vmem>>, vector<1x1x128x128xbf16>
    %141 = vector.shape_cast %140 : vector<1x1x128x128xbf16> to vector<128x128xbf16>
    %cst_111 = arith.constant dense<0.000000e+00> : vector<16x128xf32>
    %142 = tpu.matmul %137, %141, %cst_111 {dimension_numbers = #tpu.dot_dimension_numbers<[1], [0], [0], [1], [0, 0, 1, 1], [], []>} : vector<16x128xbf16>, vector<128x128xbf16>, vector<16x128xf32> -> vector<16x128xf32>
    %c0_112 = arith.constant 0 : index
    %c6_113 = arith.constant 6 : index
    %c0_114 = arith.constant 0 : index
    %c0_115 = arith.constant 0 : index
    %143 = vector.load %arg6[%c0_112, %c6_113, %c0_114, %c0_115] : memref<2x14x128x128xbf16, #tpu.memory_space<vmem>>, vector<1x1x128x128xbf16>
    %144 = vector.shape_cast %143 : vector<1x1x128x128xbf16> to vector<128x128xbf16>
    %cst_116 = arith.constant dense<0.000000e+00> : vector<16x128xf32>
    %145 = tpu.matmul %139, %144, %cst_116 {dimension_numbers = #tpu.dot_dimension_numbers<[1], [0], [0], [1], [0, 0, 1, 1], [], []>} : vector<16x128xbf16>, vector<128x128xbf16>, vector<16x128xf32> -> vector<16x128xf32>
    %146 = arith.addf %142, %145 : vector<16x128xf32>
    %c0_117 = arith.constant 0 : index
    %c6_118 = arith.constant 6 : index
    %c0_119 = arith.constant 0 : index
    %c0_120 = arith.constant 0 : index
    %147 = vector.load %arg7[%c0_117, %c6_118, %c0_119, %c0_120] : memref<2x14x1x128xf32, #tpu.memory_space<vmem>>, vector<1x1x1x128xf32>
    %148 = vector.shape_cast %147 : vector<1x1x1x128xf32> to vector<1x128xf32>
    %149 = vector.broadcast %148 : vector<1x128xf32> to vector<16x128xf32>
    %150 = arith.addf %146, %149 : vector<16x128xf32>
    %151 = arith.addf %150, %120 : vector<16x128xf32>
    %cst_121 = arith.constant 0.000000e+00 : f32
    %152 = vector.broadcast %cst_121 : f32 to vector<16x128xf32>
    %153 = arith.maximumf %151, %152 : vector<16x128xf32>
    %154 = arith.truncf %153 : vector<16x128xf32> to vector<16x128xbf16>
    %cst_122 = arith.constant dense<0.000000e+00> : vector<16x128xf32>
    %155 = tpu.matmul %3, %154, %cst_122 {dimension_numbers = #tpu.dot_dimension_numbers<[1], [0], [0], [1], [0, 0, 1, 1], [], []>} : vector<16x16xbf16>, vector<16x128xbf16>, vector<16x128xf32> -> vector<16x128xf32>
    %156 = arith.truncf %155 : vector<16x128xf32> to vector<16x128xbf16>
    %c0_123 = arith.constant 0 : index
    %c7 = arith.constant 7 : index
    %c0_124 = arith.constant 0 : index
    %c0_125 = arith.constant 0 : index
    %157 = vector.load %arg5[%c0_123, %c7, %c0_124, %c0_125] : memref<2x14x128x128xbf16, #tpu.memory_space<vmem>>, vector<1x1x128x128xbf16>
    %158 = vector.shape_cast %157 : vector<1x1x128x128xbf16> to vector<128x128xbf16>
    %cst_126 = arith.constant dense<0.000000e+00> : vector<16x128xf32>
    %159 = tpu.matmul %154, %158, %cst_126 {dimension_numbers = #tpu.dot_dimension_numbers<[1], [0], [0], [1], [0, 0, 1, 1], [], []>} : vector<16x128xbf16>, vector<128x128xbf16>, vector<16x128xf32> -> vector<16x128xf32>
    %c0_127 = arith.constant 0 : index
    %c7_128 = arith.constant 7 : index
    %c0_129 = arith.constant 0 : index
    %c0_130 = arith.constant 0 : index
    %160 = vector.load %arg6[%c0_127, %c7_128, %c0_129, %c0_130] : memref<2x14x128x128xbf16, #tpu.memory_space<vmem>>, vector<1x1x128x128xbf16>
    %161 = vector.shape_cast %160 : vector<1x1x128x128xbf16> to vector<128x128xbf16>
    %cst_131 = arith.constant dense<0.000000e+00> : vector<16x128xf32>
    %162 = tpu.matmul %156, %161, %cst_131 {dimension_numbers = #tpu.dot_dimension_numbers<[1], [0], [0], [1], [0, 0, 1, 1], [], []>} : vector<16x128xbf16>, vector<128x128xbf16>, vector<16x128xf32> -> vector<16x128xf32>
    %163 = arith.addf %159, %162 : vector<16x128xf32>
    %c0_132 = arith.constant 0 : index
    %c7_133 = arith.constant 7 : index
    %c0_134 = arith.constant 0 : index
    %c0_135 = arith.constant 0 : index
    %164 = vector.load %arg7[%c0_132, %c7_133, %c0_134, %c0_135] : memref<2x14x1x128xf32, #tpu.memory_space<vmem>>, vector<1x1x1x128xf32>
    %165 = vector.shape_cast %164 : vector<1x1x1x128xf32> to vector<1x128xf32>
    %166 = vector.broadcast %165 : vector<1x128xf32> to vector<16x128xf32>
    %167 = arith.addf %163, %166 : vector<16x128xf32>
    %cst_136 = arith.constant 0.000000e+00 : f32
    %168 = vector.broadcast %cst_136 : f32 to vector<16x128xf32>
    %169 = arith.maximumf %167, %168 : vector<16x128xf32>
    %170 = arith.truncf %169 : vector<16x128xf32> to vector<16x128xbf16>
    %cst_137 = arith.constant dense<0.000000e+00> : vector<16x128xf32>
    %171 = tpu.matmul %3, %170, %cst_137 {dimension_numbers = #tpu.dot_dimension_numbers<[1], [0], [0], [1], [0, 0, 1, 1], [], []>} : vector<16x16xbf16>, vector<16x128xbf16>, vector<16x128xf32> -> vector<16x128xf32>
    %172 = arith.truncf %171 : vector<16x128xf32> to vector<16x128xbf16>
    %c0_138 = arith.constant 0 : index
    %c8 = arith.constant 8 : index
    %c0_139 = arith.constant 0 : index
    %c0_140 = arith.constant 0 : index
    %173 = vector.load %arg5[%c0_138, %c8, %c0_139, %c0_140] : memref<2x14x128x128xbf16, #tpu.memory_space<vmem>>, vector<1x1x128x128xbf16>
    %174 = vector.shape_cast %173 : vector<1x1x128x128xbf16> to vector<128x128xbf16>
    %cst_141 = arith.constant dense<0.000000e+00> : vector<16x128xf32>
    %175 = tpu.matmul %170, %174, %cst_141 {dimension_numbers = #tpu.dot_dimension_numbers<[1], [0], [0], [1], [0, 0, 1, 1], [], []>} : vector<16x128xbf16>, vector<128x128xbf16>, vector<16x128xf32> -> vector<16x128xf32>
    %c0_142 = arith.constant 0 : index
    %c8_143 = arith.constant 8 : index
    %c0_144 = arith.constant 0 : index
    %c0_145 = arith.constant 0 : index
    %176 = vector.load %arg6[%c0_142, %c8_143, %c0_144, %c0_145] : memref<2x14x128x128xbf16, #tpu.memory_space<vmem>>, vector<1x1x128x128xbf16>
    %177 = vector.shape_cast %176 : vector<1x1x128x128xbf16> to vector<128x128xbf16>
    %cst_146 = arith.constant dense<0.000000e+00> : vector<16x128xf32>
    %178 = tpu.matmul %172, %177, %cst_146 {dimension_numbers = #tpu.dot_dimension_numbers<[1], [0], [0], [1], [0, 0, 1, 1], [], []>} : vector<16x128xbf16>, vector<128x128xbf16>, vector<16x128xf32> -> vector<16x128xf32>
    %179 = arith.addf %175, %178 : vector<16x128xf32>
    %c0_147 = arith.constant 0 : index
    %c8_148 = arith.constant 8 : index
    %c0_149 = arith.constant 0 : index
    %c0_150 = arith.constant 0 : index
    %180 = vector.load %arg7[%c0_147, %c8_148, %c0_149, %c0_150] : memref<2x14x1x128xf32, #tpu.memory_space<vmem>>, vector<1x1x1x128xf32>
    %181 = vector.shape_cast %180 : vector<1x1x1x128xf32> to vector<1x128xf32>
    %182 = vector.broadcast %181 : vector<1x128xf32> to vector<16x128xf32>
    %183 = arith.addf %179, %182 : vector<16x128xf32>
    %184 = arith.addf %183, %153 : vector<16x128xf32>
    %cst_151 = arith.constant 0.000000e+00 : f32
    %185 = vector.broadcast %cst_151 : f32 to vector<16x128xf32>
    %186 = arith.maximumf %184, %185 : vector<16x128xf32>
    %187 = arith.truncf %186 : vector<16x128xf32> to vector<16x128xbf16>
    %cst_152 = arith.constant dense<0.000000e+00> : vector<16x128xf32>
    %188 = tpu.matmul %3, %187, %cst_152 {dimension_numbers = #tpu.dot_dimension_numbers<[1], [0], [0], [1], [0, 0, 1, 1], [], []>} : vector<16x16xbf16>, vector<16x128xbf16>, vector<16x128xf32> -> vector<16x128xf32>
    %189 = arith.truncf %188 : vector<16x128xf32> to vector<16x128xbf16>
    %c0_153 = arith.constant 0 : index
    %c9 = arith.constant 9 : index
    %c0_154 = arith.constant 0 : index
    %c0_155 = arith.constant 0 : index
    %190 = vector.load %arg5[%c0_153, %c9, %c0_154, %c0_155] : memref<2x14x128x128xbf16, #tpu.memory_space<vmem>>, vector<1x1x128x128xbf16>
    %191 = vector.shape_cast %190 : vector<1x1x128x128xbf16> to vector<128x128xbf16>
    %cst_156 = arith.constant dense<0.000000e+00> : vector<16x128xf32>
    %192 = tpu.matmul %187, %191, %cst_156 {dimension_numbers = #tpu.dot_dimension_numbers<[1], [0], [0], [1], [0, 0, 1, 1], [], []>} : vector<16x128xbf16>, vector<128x128xbf16>, vector<16x128xf32> -> vector<16x128xf32>
    %c0_157 = arith.constant 0 : index
    %c9_158 = arith.constant 9 : index
    %c0_159 = arith.constant 0 : index
    %c0_160 = arith.constant 0 : index
    %193 = vector.load %arg6[%c0_157, %c9_158, %c0_159, %c0_160] : memref<2x14x128x128xbf16, #tpu.memory_space<vmem>>, vector<1x1x128x128xbf16>
    %194 = vector.shape_cast %193 : vector<1x1x128x128xbf16> to vector<128x128xbf16>
    %cst_161 = arith.constant dense<0.000000e+00> : vector<16x128xf32>
    %195 = tpu.matmul %189, %194, %cst_161 {dimension_numbers = #tpu.dot_dimension_numbers<[1], [0], [0], [1], [0, 0, 1, 1], [], []>} : vector<16x128xbf16>, vector<128x128xbf16>, vector<16x128xf32> -> vector<16x128xf32>
    %196 = arith.addf %192, %195 : vector<16x128xf32>
    %c0_162 = arith.constant 0 : index
    %c9_163 = arith.constant 9 : index
    %c0_164 = arith.constant 0 : index
    %c0_165 = arith.constant 0 : index
    %197 = vector.load %arg7[%c0_162, %c9_163, %c0_164, %c0_165] : memref<2x14x1x128xf32, #tpu.memory_space<vmem>>, vector<1x1x1x128xf32>
    %198 = vector.shape_cast %197 : vector<1x1x1x128xf32> to vector<1x128xf32>
    %199 = vector.broadcast %198 : vector<1x128xf32> to vector<16x128xf32>
    %200 = arith.addf %196, %199 : vector<16x128xf32>
    %cst_166 = arith.constant 0.000000e+00 : f32
    %201 = vector.broadcast %cst_166 : f32 to vector<16x128xf32>
    %202 = arith.maximumf %200, %201 : vector<16x128xf32>
    %203 = arith.truncf %202 : vector<16x128xf32> to vector<16x128xbf16>
    %cst_167 = arith.constant dense<0.000000e+00> : vector<16x128xf32>
    %204 = tpu.matmul %3, %203, %cst_167 {dimension_numbers = #tpu.dot_dimension_numbers<[1], [0], [0], [1], [0, 0, 1, 1], [], []>} : vector<16x16xbf16>, vector<16x128xbf16>, vector<16x128xf32> -> vector<16x128xf32>
    %205 = arith.truncf %204 : vector<16x128xf32> to vector<16x128xbf16>
    %c0_168 = arith.constant 0 : index
    %c10 = arith.constant 10 : index
    %c0_169 = arith.constant 0 : index
    %c0_170 = arith.constant 0 : index
    %206 = vector.load %arg5[%c0_168, %c10, %c0_169, %c0_170] : memref<2x14x128x128xbf16, #tpu.memory_space<vmem>>, vector<1x1x128x128xbf16>
    %207 = vector.shape_cast %206 : vector<1x1x128x128xbf16> to vector<128x128xbf16>
    %cst_171 = arith.constant dense<0.000000e+00> : vector<16x128xf32>
    %208 = tpu.matmul %203, %207, %cst_171 {dimension_numbers = #tpu.dot_dimension_numbers<[1], [0], [0], [1], [0, 0, 1, 1], [], []>} : vector<16x128xbf16>, vector<128x128xbf16>, vector<16x128xf32> -> vector<16x128xf32>
    %c0_172 = arith.constant 0 : index
    %c10_173 = arith.constant 10 : index
    %c0_174 = arith.constant 0 : index
    %c0_175 = arith.constant 0 : index
    %209 = vector.load %arg6[%c0_172, %c10_173, %c0_174, %c0_175] : memref<2x14x128x128xbf16, #tpu.memory_space<vmem>>, vector<1x1x128x128xbf16>
    %210 = vector.shape_cast %209 : vector<1x1x128x128xbf16> to vector<128x128xbf16>
    %cst_176 = arith.constant dense<0.000000e+00> : vector<16x128xf32>
    %211 = tpu.matmul %205, %210, %cst_176 {dimension_numbers = #tpu.dot_dimension_numbers<[1], [0], [0], [1], [0, 0, 1, 1], [], []>} : vector<16x128xbf16>, vector<128x128xbf16>, vector<16x128xf32> -> vector<16x128xf32>
    %212 = arith.addf %208, %211 : vector<16x128xf32>
    %c0_177 = arith.constant 0 : index
    %c10_178 = arith.constant 10 : index
    %c0_179 = arith.constant 0 : index
    %c0_180 = arith.constant 0 : index
    %213 = vector.load %arg7[%c0_177, %c10_178, %c0_179, %c0_180] : memref<2x14x1x128xf32, #tpu.memory_space<vmem>>, vector<1x1x1x128xf32>
    %214 = vector.shape_cast %213 : vector<1x1x1x128xf32> to vector<1x128xf32>
    %215 = vector.broadcast %214 : vector<1x128xf32> to vector<16x128xf32>
    %216 = arith.addf %212, %215 : vector<16x128xf32>
    %217 = arith.addf %216, %186 : vector<16x128xf32>
    %cst_181 = arith.constant 0.000000e+00 : f32
    %218 = vector.broadcast %cst_181 : f32 to vector<16x128xf32>
    %219 = arith.maximumf %217, %218 : vector<16x128xf32>
    %220 = arith.truncf %219 : vector<16x128xf32> to vector<16x128xbf16>
    %cst_182 = arith.constant dense<0.000000e+00> : vector<16x128xf32>
    %221 = tpu.matmul %3, %220, %cst_182 {dimension_numbers = #tpu.dot_dimension_numbers<[1], [0], [0], [1], [0, 0, 1, 1], [], []>} : vector<16x16xbf16>, vector<16x128xbf16>, vector<16x128xf32> -> vector<16x128xf32>
    %222 = arith.truncf %221 : vector<16x128xf32> to vector<16x128xbf16>
    %c0_183 = arith.constant 0 : index
    %c11 = arith.constant 11 : index
    %c0_184 = arith.constant 0 : index
    %c0_185 = arith.constant 0 : index
    %223 = vector.load %arg5[%c0_183, %c11, %c0_184, %c0_185] : memref<2x14x128x128xbf16, #tpu.memory_space<vmem>>, vector<1x1x128x128xbf16>
    %224 = vector.shape_cast %223 : vector<1x1x128x128xbf16> to vector<128x128xbf16>
    %cst_186 = arith.constant dense<0.000000e+00> : vector<16x128xf32>
    %225 = tpu.matmul %220, %224, %cst_186 {dimension_numbers = #tpu.dot_dimension_numbers<[1], [0], [0], [1], [0, 0, 1, 1], [], []>} : vector<16x128xbf16>, vector<128x128xbf16>, vector<16x128xf32> -> vector<16x128xf32>
    %c0_187 = arith.constant 0 : index
    %c11_188 = arith.constant 11 : index
    %c0_189 = arith.constant 0 : index
    %c0_190 = arith.constant 0 : index
    %226 = vector.load %arg6[%c0_187, %c11_188, %c0_189, %c0_190] : memref<2x14x128x128xbf16, #tpu.memory_space<vmem>>, vector<1x1x128x128xbf16>
    %227 = vector.shape_cast %226 : vector<1x1x128x128xbf16> to vector<128x128xbf16>
    %cst_191 = arith.constant dense<0.000000e+00> : vector<16x128xf32>
    %228 = tpu.matmul %222, %227, %cst_191 {dimension_numbers = #tpu.dot_dimension_numbers<[1], [0], [0], [1], [0, 0, 1, 1], [], []>} : vector<16x128xbf16>, vector<128x128xbf16>, vector<16x128xf32> -> vector<16x128xf32>
    %229 = arith.addf %225, %228 : vector<16x128xf32>
    %c0_192 = arith.constant 0 : index
    %c11_193 = arith.constant 11 : index
    %c0_194 = arith.constant 0 : index
    %c0_195 = arith.constant 0 : index
    %230 = vector.load %arg7[%c0_192, %c11_193, %c0_194, %c0_195] : memref<2x14x1x128xf32, #tpu.memory_space<vmem>>, vector<1x1x1x128xf32>
    %231 = vector.shape_cast %230 : vector<1x1x1x128xf32> to vector<1x128xf32>
    %232 = vector.broadcast %231 : vector<1x128xf32> to vector<16x128xf32>
    %233 = arith.addf %229, %232 : vector<16x128xf32>
    %cst_196 = arith.constant 0.000000e+00 : f32
    %234 = vector.broadcast %cst_196 : f32 to vector<16x128xf32>
    %235 = arith.maximumf %233, %234 : vector<16x128xf32>
    %236 = arith.truncf %235 : vector<16x128xf32> to vector<16x128xbf16>
    %cst_197 = arith.constant dense<0.000000e+00> : vector<16x128xf32>
    %237 = tpu.matmul %3, %236, %cst_197 {dimension_numbers = #tpu.dot_dimension_numbers<[1], [0], [0], [1], [0, 0, 1, 1], [], []>} : vector<16x16xbf16>, vector<16x128xbf16>, vector<16x128xf32> -> vector<16x128xf32>
    %238 = arith.truncf %237 : vector<16x128xf32> to vector<16x128xbf16>
    %c0_198 = arith.constant 0 : index
    %c12 = arith.constant 12 : index
    %c0_199 = arith.constant 0 : index
    %c0_200 = arith.constant 0 : index
    %239 = vector.load %arg5[%c0_198, %c12, %c0_199, %c0_200] : memref<2x14x128x128xbf16, #tpu.memory_space<vmem>>, vector<1x1x128x128xbf16>
    %240 = vector.shape_cast %239 : vector<1x1x128x128xbf16> to vector<128x128xbf16>
    %cst_201 = arith.constant dense<0.000000e+00> : vector<16x128xf32>
    %241 = tpu.matmul %236, %240, %cst_201 {dimension_numbers = #tpu.dot_dimension_numbers<[1], [0], [0], [1], [0, 0, 1, 1], [], []>} : vector<16x128xbf16>, vector<128x128xbf16>, vector<16x128xf32> -> vector<16x128xf32>
    %c0_202 = arith.constant 0 : index
    %c12_203 = arith.constant 12 : index
    %c0_204 = arith.constant 0 : index
    %c0_205 = arith.constant 0 : index
    %242 = vector.load %arg6[%c0_202, %c12_203, %c0_204, %c0_205] : memref<2x14x128x128xbf16, #tpu.memory_space<vmem>>, vector<1x1x128x128xbf16>
    %243 = vector.shape_cast %242 : vector<1x1x128x128xbf16> to vector<128x128xbf16>
    %cst_206 = arith.constant dense<0.000000e+00> : vector<16x128xf32>
    %244 = tpu.matmul %238, %243, %cst_206 {dimension_numbers = #tpu.dot_dimension_numbers<[1], [0], [0], [1], [0, 0, 1, 1], [], []>} : vector<16x128xbf16>, vector<128x128xbf16>, vector<16x128xf32> -> vector<16x128xf32>
    %245 = arith.addf %241, %244 : vector<16x128xf32>
    %c0_207 = arith.constant 0 : index
    %c12_208 = arith.constant 12 : index
    %c0_209 = arith.constant 0 : index
    %c0_210 = arith.constant 0 : index
    %246 = vector.load %arg7[%c0_207, %c12_208, %c0_209, %c0_210] : memref<2x14x1x128xf32, #tpu.memory_space<vmem>>, vector<1x1x1x128xf32>
    %247 = vector.shape_cast %246 : vector<1x1x1x128xf32> to vector<1x128xf32>
    %248 = vector.broadcast %247 : vector<1x128xf32> to vector<16x128xf32>
    %249 = arith.addf %245, %248 : vector<16x128xf32>
    %250 = arith.addf %249, %219 : vector<16x128xf32>
    %cst_211 = arith.constant 0.000000e+00 : f32
    %251 = vector.broadcast %cst_211 : f32 to vector<16x128xf32>
    %252 = arith.maximumf %250, %251 : vector<16x128xf32>
    %253 = arith.truncf %252 : vector<16x128xf32> to vector<16x128xbf16>
    %cst_212 = arith.constant dense<0.000000e+00> : vector<16x128xf32>
    %254 = tpu.matmul %3, %253, %cst_212 {dimension_numbers = #tpu.dot_dimension_numbers<[1], [0], [0], [1], [0, 0, 1, 1], [], []>} : vector<16x16xbf16>, vector<16x128xbf16>, vector<16x128xf32> -> vector<16x128xf32>
    %255 = arith.truncf %254 : vector<16x128xf32> to vector<16x128xbf16>
    %c0_213 = arith.constant 0 : index
    %c13 = arith.constant 13 : index
    %c0_214 = arith.constant 0 : index
    %c0_215 = arith.constant 0 : index
    %256 = vector.load %arg5[%c0_213, %c13, %c0_214, %c0_215] : memref<2x14x128x128xbf16, #tpu.memory_space<vmem>>, vector<1x1x128x128xbf16>
    %257 = vector.shape_cast %256 : vector<1x1x128x128xbf16> to vector<128x128xbf16>
    %cst_216 = arith.constant dense<0.000000e+00> : vector<16x128xf32>
    %258 = tpu.matmul %253, %257, %cst_216 {dimension_numbers = #tpu.dot_dimension_numbers<[1], [0], [0], [1], [0, 0, 1, 1], [], []>} : vector<16x128xbf16>, vector<128x128xbf16>, vector<16x128xf32> -> vector<16x128xf32>
    %c0_217 = arith.constant 0 : index
    %c13_218 = arith.constant 13 : index
    %c0_219 = arith.constant 0 : index
    %c0_220 = arith.constant 0 : index
    %259 = vector.load %arg6[%c0_217, %c13_218, %c0_219, %c0_220] : memref<2x14x128x128xbf16, #tpu.memory_space<vmem>>, vector<1x1x128x128xbf16>
    %260 = vector.shape_cast %259 : vector<1x1x128x128xbf16> to vector<128x128xbf16>
    %cst_221 = arith.constant dense<0.000000e+00> : vector<16x128xf32>
    %261 = tpu.matmul %255, %260, %cst_221 {dimension_numbers = #tpu.dot_dimension_numbers<[1], [0], [0], [1], [0, 0, 1, 1], [], []>} : vector<16x128xbf16>, vector<128x128xbf16>, vector<16x128xf32> -> vector<16x128xf32>
    %262 = arith.addf %258, %261 : vector<16x128xf32>
    %c0_222 = arith.constant 0 : index
    %c13_223 = arith.constant 13 : index
    %c0_224 = arith.constant 0 : index
    %c0_225 = arith.constant 0 : index
    %263 = vector.load %arg7[%c0_222, %c13_223, %c0_224, %c0_225] : memref<2x14x1x128xf32, #tpu.memory_space<vmem>>, vector<1x1x1x128xf32>
    %264 = vector.shape_cast %263 : vector<1x1x1x128xf32> to vector<1x128xf32>
    %265 = vector.broadcast %264 : vector<1x128xf32> to vector<16x128xf32>
    %266 = arith.addf %262, %265 : vector<16x128xf32>
    %267 = arith.truncf %266 : vector<16x128xf32> to vector<16x128xbf16>
    %c0_226 = arith.constant 0 : index
    %c0_227 = arith.constant 0 : index
    %c0_228 = arith.constant 0 : index
    %268 = vector.load %arg8[%c0_226, %c0_227, %c0_228] : memref<2x128x128xbf16, #tpu.memory_space<vmem>>, vector<1x128x128xbf16>
    %269 = vector.shape_cast %268 : vector<1x128x128xbf16> to vector<128x128xbf16>
    %cst_229 = arith.constant dense<0.000000e+00> : vector<16x128xf32>
    %270 = tpu.matmul %267, %269, %cst_229 {dimension_numbers = #tpu.dot_dimension_numbers<[1], [0], [0], [1], [0, 0, 1, 1], [], []>} : vector<16x128xbf16>, vector<128x128xbf16>, vector<16x128xf32> -> vector<16x128xf32>
    %c0_230 = arith.constant 0 : index
    %c0_231 = arith.constant 0 : index
    %c0_232 = arith.constant 0 : index
    %271 = vector.load %arg9[%c0_230, %c0_231, %c0_232] : memref<2x1x128xf32, #tpu.memory_space<vmem>>, vector<1x1x128xf32>
    %272 = vector.shape_cast %271 : vector<1x1x128xf32> to vector<1x128xf32>
    %273 = vector.broadcast %272 : vector<1x128xf32> to vector<16x128xf32>
    %274 = arith.addf %270, %273 : vector<16x128xf32>
    %275 = arith.addf %6, %274 : vector<16x128xf32>
    %c0_233 = arith.constant 0 : index
    %c0_234 = arith.constant 0 : index
    %c0_235 = arith.constant 0 : index
    %c0_236 = arith.constant 0 : index
    %276 = vector.load %arg10[%c0_233, %c0_234, %c0_235, %c0_236] : memref<1x2x16x128xf32, #tpu.memory_space<vmem>>, vector<1x1x16x128xf32>
    %277 = vector.shape_cast %276 : vector<1x1x16x128xf32> to vector<16x128xf32>
    %278 = vector.shape_cast %275 : vector<16x128xf32> to vector<1x1x16x128xf32>
    tpu.vector_store %arg10[%c0_233, %c0_234, %c0_235, %c0_236], %278 {strides = array<i32>} : memref<1x2x16x128xf32, #tpu.memory_space<vmem>>, vector<1x1x16x128xf32>,
    %279 = vector.extract_strided_slice %275 {offsets = [0, 120], sizes = [16, 1], strides = [1, 1]} : vector<16x128xf32> to vector<16x1xf32>
    %280 = vector.extract_strided_slice %275 {offsets = [0, 121], sizes = [16, 1], strides = [1, 1]} : vector<16x128xf32> to vector<16x1xf32>
    %cst_237 = arith.constant 1.600000e+01 : f32
    %281 = vector.broadcast %cst_237 : f32 to vector<16x1xf32>
    %282 = arith.mulf %279, %281 : vector<16x1xf32>
    %283 = math.floor %282 : vector<16x1xf32>
    %cst_238 = arith.constant 1.000000e+00 : f32
    %284 = vector.broadcast %cst_238 : f32 to vector<16x1xf32>
    %285 = arith.addf %283, %284 : vector<16x1xf32>
    %cst_239 = arith.constant 1.600000e+01 : f32
    %286 = vector.broadcast %cst_239 : f32 to vector<16x1xf32>
    %287 = arith.mulf %280, %286 : vector<16x1xf32>
    %288 = math.floor %287 : vector<16x1xf32>
    %cst_240 = arith.constant 1.000000e+00 : f32
    %289 = vector.broadcast %cst_240 : f32 to vector<16x1xf32>
    %290 = arith.addf %288, %289 : vector<16x1xf32>
    %291 = arith.subf %285, %282 : vector<16x1xf32>
    %292 = arith.subf %290, %287 : vector<16x1xf32>
    %293 = arith.mulf %291, %292 : vector<16x1xf32>
    %294 = arith.subf %285, %282 : vector<16x1xf32>
    %295 = arith.subf %287, %288 : vector<16x1xf32>
    %296 = arith.mulf %294, %295 : vector<16x1xf32>
    %297 = arith.subf %282, %283 : vector<16x1xf32>
    %298 = arith.subf %290, %287 : vector<16x1xf32>
    %299 = arith.mulf %297, %298 : vector<16x1xf32>
    %300 = arith.subf %282, %283 : vector<16x1xf32>
    %301 = arith.subf %287, %288 : vector<16x1xf32>
    %302 = arith.mulf %300, %301 : vector<16x1xf32>
    %c0_i32_241 = arith.constant 0 : i32
    %c15_i32_242 = arith.constant 15 : i32
    %303 = arith.sitofp %c0_i32_241 : i32 to f32
    %304 = vector.broadcast %303 : f32 to vector<16x1xf32>
    %305 = arith.maximumf %304, %283 : vector<16x1xf32>
    %306 = arith.sitofp %c15_i32_242 : i32 to f32
    %307 = vector.broadcast %306 : f32 to vector<16x1xf32>
    %308 = arith.minimumf %307, %305 : vector<16x1xf32>
    %c0_i32_243 = arith.constant 0 : i32
    %c15_i32_244 = arith.constant 15 : i32
    %309 = arith.sitofp %c0_i32_243 : i32 to f32
    %310 = vector.broadcast %309 : f32 to vector<16x1xf32>
    %311 = arith.maximumf %310, %285 : vector<16x1xf32>
    %312 = arith.sitofp %c15_i32_244 : i32 to f32
    %313 = vector.broadcast %312 : f32 to vector<16x1xf32>
    %314 = arith.minimumf %313, %311 : vector<16x1xf32>
    %c0_i32_245 = arith.constant 0 : i32
    %c15_i32_246 = arith.constant 15 : i32
    %315 = arith.sitofp %c0_i32_245 : i32 to f32
    %316 = vector.broadcast %315 : f32 to vector<16x1xf32>
    %317 = arith.maximumf %316, %288 : vector<16x1xf32>
    %318 = arith.sitofp %c15_i32_246 : i32 to f32
    %319 = vector.broadcast %318 : f32 to vector<16x1xf32>
    %320 = arith.minimumf %319, %317 : vector<16x1xf32>
    %c0_i32_247 = arith.constant 0 : i32
    %c15_i32_248 = arith.constant 15 : i32
    %321 = arith.sitofp %c0_i32_247 : i32 to f32
    %322 = vector.broadcast %321 : f32 to vector<16x1xf32>
    %323 = arith.maximumf %322, %290 : vector<16x1xf32>
    %324 = arith.sitofp %c15_i32_248 : i32 to f32
    %325 = vector.broadcast %324 : f32 to vector<16x1xf32>
    %326 = arith.minimumf %325, %323 : vector<16x1xf32>
    %cst_249 = arith.constant 1.600000e+01 : f32
    %327 = vector.broadcast %cst_249 : f32 to vector<16x1xf32>
    %328 = arith.mulf %308, %327 : vector<16x1xf32>
    %329 = arith.addf %328, %320 : vector<16x1xf32>
    %330 = arith.fptosi %329 : vector<16x1xf32> to vector<16x1xi32>
    %cst_250 = arith.constant 1.600000e+01 : f32
    %331 = vector.broadcast %cst_250 : f32 to vector<16x1xf32>
    %332 = arith.mulf %308, %331 : vector<16x1xf32>
    %333 = arith.addf %332, %326 : vector<16x1xf32>
    %334 = arith.fptosi %333 : vector<16x1xf32> to vector<16x1xi32>
    %cst_251 = arith.constant 1.600000e+01 : f32
    %335 = vector.broadcast %cst_251 : f32 to vector<16x1xf32>
    %336 = arith.mulf %314, %335 : vector<16x1xf32>
    %337 = arith.addf %336, %320 : vector<16x1xf32>
    %338 = arith.fptosi %337 : vector<16x1xf32> to vector<16x1xi32>
    %cst_252 = arith.constant 1.600000e+01 : f32
    %339 = vector.broadcast %cst_252 : f32 to vector<16x1xf32>
    %340 = arith.mulf %314, %339 : vector<16x1xf32>
    %341 = arith.addf %340, %326 : vector<16x1xf32>
    %342 = arith.fptosi %341 : vector<16x1xf32> to vector<16x1xi32>
    %343 = vector.broadcast %330 : vector<16x1xi32> to vector<16x256xi32>
    %344 = arith.cmpi eq, %4, %343 : vector<16x256xi32>
    %cst_253 = arith.constant 0.000000e+00 : f32
    %345 = vector.shape_cast %293 : vector<16x1xf32> to vector<16x1xf32>
    %346 = vector.broadcast %345 : vector<16x1xf32> to vector<16x256xf32>
    %347 = vector.broadcast %cst_253 : f32 to vector<16x256xf32>
    %348 = arith.select %344, %346, %347 : vector<16x256xi1>, vector<16x256xf32>
    %349 = vector.broadcast %334 : vector<16x1xi32> to vector<16x256xi32>
    %350 = arith.cmpi eq, %4, %349 : vector<16x256xi32>
    %cst_254 = arith.constant 0.000000e+00 : f32
    %351 = vector.shape_cast %296 : vector<16x1xf32> to vector<16x1xf32>
    %352 = vector.broadcast %351 : vector<16x1xf32> to vector<16x256xf32>
    %353 = vector.broadcast %cst_254 : f32 to vector<16x256xf32>
    %354 = arith.select %350, %352, %353 : vector<16x256xi1>, vector<16x256xf32>
    %355 = arith.addf %348, %354 : vector<16x256xf32>
    %356 = vector.broadcast %338 : vector<16x1xi32> to vector<16x256xi32>
    %357 = arith.cmpi eq, %4, %356 : vector<16x256xi32>
    %cst_255 = arith.constant 0.000000e+00 : f32
    %358 = vector.shape_cast %299 : vector<16x1xf32> to vector<16x1xf32>
    %359 = vector.broadcast %358 : vector<16x1xf32> to vector<16x256xf32>
    %360 = vector.broadcast %cst_255 : f32 to vector<16x256xf32>
    %361 = arith.select %357, %359, %360 : vector<16x256xi1>, vector<16x256xf32>
    %362 = arith.addf %355, %361 : vector<16x256xf32>
    %363 = vector.broadcast %342 : vector<16x1xi32> to vector<16x256xi32>
    %364 = arith.cmpi eq, %4, %363 : vector<16x256xi32>
    %cst_256 = arith.constant 0.000000e+00 : f32
    %365 = vector.shape_cast %302 : vector<16x1xf32> to vector<16x1xf32>
    %366 = vector.broadcast %365 : vector<16x1xf32> to vector<16x256xf32>
    %367 = vector.broadcast %cst_256 : f32 to vector<16x256xf32>
    %368 = arith.select %364, %366, %367 : vector<16x256xi1>, vector<16x256xf32>
    %369 = arith.addf %362, %368 : vector<16x256xf32>
    %370 = arith.truncf %369 : vector<16x256xf32> to vector<16x256xbf16>
    %cst_257 = arith.constant dense<0.000000e+00> : vector<16x128xf32>
    %371 = tpu.matmul %370, %1, %cst_257 {dimension_numbers = #tpu.dot_dimension_numbers<[1], [0], [0], [1], [0, 0, 1, 1], [], []>} : vector<16x256xbf16>, vector<256x128xbf16>, vector<16x128xf32> -> vector<16x128xf32>
    %372 = arith.addf %371, %275 : vector<16x128xf32>
    %373 = arith.truncf %372 : vector<16x128xf32> to vector<16x128xbf16>
    %cst_258 = arith.constant dense<0.000000e+00> : vector<16x128xf32>
    %374 = tpu.matmul %3, %373, %cst_258 {dimension_numbers = #tpu.dot_dimension_numbers<[1], [0], [0], [1], [0, 0, 1, 1], [], []>} : vector<16x16xbf16>, vector<16x128xbf16>, vector<16x128xf32> -> vector<16x128xf32>
    %375 = arith.truncf %374 : vector<16x128xf32> to vector<16x128xbf16>
    %c1_259 = arith.constant 1 : index
    %c0_260 = arith.constant 0 : index
    %c0_261 = arith.constant 0 : index
    %c0_262 = arith.constant 0 : index
    %376 = vector.load %arg5[%c1_259, %c0_260, %c0_261, %c0_262] : memref<2x14x128x128xbf16, #tpu.memory_space<vmem>>, vector<1x1x128x128xbf16>
    %377 = vector.shape_cast %376 : vector<1x1x128x128xbf16> to vector<128x128xbf16>
    %cst_263 = arith.constant dense<0.000000e+00> : vector<16x128xf32>
    %378 = tpu.matmul %373, %377, %cst_263 {dimension_numbers = #tpu.dot_dimension_numbers<[1], [0], [0], [1], [0, 0, 1, 1], [], []>} : vector<16x128xbf16>, vector<128x128xbf16>, vector<16x128xf32> -> vector<16x128xf32>
    %c1_264 = arith.constant 1 : index
    %c0_265 = arith.constant 0 : index
    %c0_266 = arith.constant 0 : index
    %c0_267 = arith.constant 0 : index
    %379 = vector.load %arg6[%c1_264, %c0_265, %c0_266, %c0_267] : memref<2x14x128x128xbf16, #tpu.memory_space<vmem>>, vector<1x1x128x128xbf16>
    %380 = vector.shape_cast %379 : vector<1x1x128x128xbf16> to vector<128x128xbf16>
    %cst_268 = arith.constant dense<0.000000e+00> : vector<16x128xf32>
    %381 = tpu.matmul %375, %380, %cst_268 {dimension_numbers = #tpu.dot_dimension_numbers<[1], [0], [0], [1], [0, 0, 1, 1], [], []>} : vector<16x128xbf16>, vector<128x128xbf16>, vector<16x128xf32> -> vector<16x128xf32>
    %382 = arith.addf %378, %381 : vector<16x128xf32>
    %c1_269 = arith.constant 1 : index
    %c0_270 = arith.constant 0 : index
    %c0_271 = arith.constant 0 : index
    %c0_272 = arith.constant 0 : index
    %383 = vector.load %arg7[%c1_269, %c0_270, %c0_271, %c0_272] : memref<2x14x1x128xf32, #tpu.memory_space<vmem>>, vector<1x1x1x128xf32>
    %384 = vector.shape_cast %383 : vector<1x1x1x128xf32> to vector<1x128xf32>
    %385 = vector.broadcast %384 : vector<1x128xf32> to vector<16x128xf32>
    %386 = arith.addf %382, %385 : vector<16x128xf32>
    %387 = arith.truncf %386 : vector<16x128xf32> to vector<16x128xbf16>
    %cst_273 = arith.constant dense<0.000000e+00> : vector<16x128xf32>
    %388 = tpu.matmul %3, %387, %cst_273 {dimension_numbers = #tpu.dot_dimension_numbers<[1], [0], [0], [1], [0, 0, 1, 1], [], []>} : vector<16x16xbf16>, vector<16x128xbf16>, vector<16x128xf32> -> vector<16x128xf32>
    %389 = arith.truncf %388 : vector<16x128xf32> to vector<16x128xbf16>
    %c1_274 = arith.constant 1 : index
    %c1_275 = arith.constant 1 : index
    %c0_276 = arith.constant 0 : index
    %c0_277 = arith.constant 0 : index
    %390 = vector.load %arg5[%c1_274, %c1_275, %c0_276, %c0_277] : memref<2x14x128x128xbf16, #tpu.memory_space<vmem>>, vector<1x1x128x128xbf16>
    %391 = vector.shape_cast %390 : vector<1x1x128x128xbf16> to vector<128x128xbf16>
    %cst_278 = arith.constant dense<0.000000e+00> : vector<16x128xf32>
    %392 = tpu.matmul %387, %391, %cst_278 {dimension_numbers = #tpu.dot_dimension_numbers<[1], [0], [0], [1], [0, 0, 1, 1], [], []>} : vector<16x128xbf16>, vector<128x128xbf16>, vector<16x128xf32> -> vector<16x128xf32>
    %c1_279 = arith.constant 1 : index
    %c1_280 = arith.constant 1 : index
    %c0_281 = arith.constant 0 : index
    %c0_282 = arith.constant 0 : index
    %393 = vector.load %arg6[%c1_279, %c1_280, %c0_281, %c0_282] : memref<2x14x128x128xbf16, #tpu.memory_space<vmem>>, vector<1x1x128x128xbf16>
    %394 = vector.shape_cast %393 : vector<1x1x128x128xbf16> to vector<128x128xbf16>
    %cst_283 = arith.constant dense<0.000000e+00> : vector<16x128xf32>
    %395 = tpu.matmul %389, %394, %cst_283 {dimension_numbers = #tpu.dot_dimension_numbers<[1], [0], [0], [1], [0, 0, 1, 1], [], []>} : vector<16x128xbf16>, vector<128x128xbf16>, vector<16x128xf32> -> vector<16x128xf32>
    %396 = arith.addf %392, %395 : vector<16x128xf32>
    %c1_284 = arith.constant 1 : index
    %c1_285 = arith.constant 1 : index
    %c0_286 = arith.constant 0 : index
    %c0_287 = arith.constant 0 : index
    %397 = vector.load %arg7[%c1_284, %c1_285, %c0_286, %c0_287] : memref<2x14x1x128xf32, #tpu.memory_space<vmem>>, vector<1x1x1x128xf32>
    %398 = vector.shape_cast %397 : vector<1x1x1x128xf32> to vector<1x128xf32>
    %399 = vector.broadcast %398 : vector<1x128xf32> to vector<16x128xf32>
    %400 = arith.addf %396, %399 : vector<16x128xf32>
    %cst_288 = arith.constant 0.000000e+00 : f32
    %401 = vector.broadcast %cst_288 : f32 to vector<16x128xf32>
    %402 = arith.maximumf %400, %401 : vector<16x128xf32>
    %403 = arith.truncf %402 : vector<16x128xf32> to vector<16x128xbf16>
    %cst_289 = arith.constant dense<0.000000e+00> : vector<16x128xf32>
    %404 = tpu.matmul %3, %403, %cst_289 {dimension_numbers = #tpu.dot_dimension_numbers<[1], [0], [0], [1], [0, 0, 1, 1], [], []>} : vector<16x16xbf16>, vector<16x128xbf16>, vector<16x128xf32> -> vector<16x128xf32>
    %405 = arith.truncf %404 : vector<16x128xf32> to vector<16x128xbf16>
    %c1_290 = arith.constant 1 : index
    %c2_291 = arith.constant 2 : index
    %c0_292 = arith.constant 0 : index
    %c0_293 = arith.constant 0 : index
    %406 = vector.load %arg5[%c1_290, %c2_291, %c0_292, %c0_293] : memref<2x14x128x128xbf16, #tpu.memory_space<vmem>>, vector<1x1x128x128xbf16>
    %407 = vector.shape_cast %406 : vector<1x1x128x128xbf16> to vector<128x128xbf16>
    %cst_294 = arith.constant dense<0.000000e+00> : vector<16x128xf32>
    %408 = tpu.matmul %403, %407, %cst_294 {dimension_numbers = #tpu.dot_dimension_numbers<[1], [0], [0], [1], [0, 0, 1, 1], [], []>} : vector<16x128xbf16>, vector<128x128xbf16>, vector<16x128xf32> -> vector<16x128xf32>
    %c1_295 = arith.constant 1 : index
    %c2_296 = arith.constant 2 : index
    %c0_297 = arith.constant 0 : index
    %c0_298 = arith.constant 0 : index
    %409 = vector.load %arg6[%c1_295, %c2_296, %c0_297, %c0_298] : memref<2x14x128x128xbf16, #tpu.memory_space<vmem>>, vector<1x1x128x128xbf16>
    %410 = vector.shape_cast %409 : vector<1x1x128x128xbf16> to vector<128x128xbf16>
    %cst_299 = arith.constant dense<0.000000e+00> : vector<16x128xf32>
    %411 = tpu.matmul %405, %410, %cst_299 {dimension_numbers = #tpu.dot_dimension_numbers<[1], [0], [0], [1], [0, 0, 1, 1], [], []>} : vector<16x128xbf16>, vector<128x128xbf16>, vector<16x128xf32> -> vector<16x128xf32>
    %412 = arith.addf %408, %411 : vector<16x128xf32>
    %c1_300 = arith.constant 1 : index
    %c2_301 = arith.constant 2 : index
    %c0_302 = arith.constant 0 : index
    %c0_303 = arith.constant 0 : index
    %413 = vector.load %arg7[%c1_300, %c2_301, %c0_302, %c0_303] : memref<2x14x1x128xf32, #tpu.memory_space<vmem>>, vector<1x1x1x128xf32>
    %414 = vector.shape_cast %413 : vector<1x1x1x128xf32> to vector<1x128xf32>
    %415 = vector.broadcast %414 : vector<1x128xf32> to vector<16x128xf32>
    %416 = arith.addf %412, %415 : vector<16x128xf32>
    %417 = arith.addf %416, %386 : vector<16x128xf32>
    %cst_304 = arith.constant 0.000000e+00 : f32
    %418 = vector.broadcast %cst_304 : f32 to vector<16x128xf32>
    %419 = arith.maximumf %417, %418 : vector<16x128xf32>
    %420 = arith.truncf %419 : vector<16x128xf32> to vector<16x128xbf16>
    %cst_305 = arith.constant dense<0.000000e+00> : vector<16x128xf32>
    %421 = tpu.matmul %3, %420, %cst_305 {dimension_numbers = #tpu.dot_dimension_numbers<[1], [0], [0], [1], [0, 0, 1, 1], [], []>} : vector<16x16xbf16>, vector<16x128xbf16>, vector<16x128xf32> -> vector<16x128xf32>
    %422 = arith.truncf %421 : vector<16x128xf32> to vector<16x128xbf16>
    %c1_306 = arith.constant 1 : index
    %c3_307 = arith.constant 3 : index
    %c0_308 = arith.constant 0 : index
    %c0_309 = arith.constant 0 : index
    %423 = vector.load %arg5[%c1_306, %c3_307, %c0_308, %c0_309] : memref<2x14x128x128xbf16, #tpu.memory_space<vmem>>, vector<1x1x128x128xbf16>
    %424 = vector.shape_cast %423 : vector<1x1x128x128xbf16> to vector<128x128xbf16>
    %cst_310 = arith.constant dense<0.000000e+00> : vector<16x128xf32>
    %425 = tpu.matmul %420, %424, %cst_310 {dimension_numbers = #tpu.dot_dimension_numbers<[1], [0], [0], [1], [0, 0, 1, 1], [], []>} : vector<16x128xbf16>, vector<128x128xbf16>, vector<16x128xf32> -> vector<16x128xf32>
    %c1_311 = arith.constant 1 : index
    %c3_312 = arith.constant 3 : index
    %c0_313 = arith.constant 0 : index
    %c0_314 = arith.constant 0 : index
    %426 = vector.load %arg6[%c1_311, %c3_312, %c0_313, %c0_314] : memref<2x14x128x128xbf16, #tpu.memory_space<vmem>>, vector<1x1x128x128xbf16>
    %427 = vector.shape_cast %426 : vector<1x1x128x128xbf16> to vector<128x128xbf16>
    %cst_315 = arith.constant dense<0.000000e+00> : vector<16x128xf32>
    %428 = tpu.matmul %422, %427, %cst_315 {dimension_numbers = #tpu.dot_dimension_numbers<[1], [0], [0], [1], [0, 0, 1, 1], [], []>} : vector<16x128xbf16>, vector<128x128xbf16>, vector<16x128xf32> -> vector<16x128xf32>
    %429 = arith.addf %425, %428 : vector<16x128xf32>
    %c1_316 = arith.constant 1 : index
    %c3_317 = arith.constant 3 : index
    %c0_318 = arith.constant 0 : index
    %c0_319 = arith.constant 0 : index
    %430 = vector.load %arg7[%c1_316, %c3_317, %c0_318, %c0_319] : memref<2x14x1x128xf32, #tpu.memory_space<vmem>>, vector<1x1x1x128xf32>
    %431 = vector.shape_cast %430 : vector<1x1x1x128xf32> to vector<1x128xf32>
    %432 = vector.broadcast %431 : vector<1x128xf32> to vector<16x128xf32>
    %433 = arith.addf %429, %432 : vector<16x128xf32>
    %cst_320 = arith.constant 0.000000e+00 : f32
    %434 = vector.broadcast %cst_320 : f32 to vector<16x128xf32>
    %435 = arith.maximumf %433, %434 : vector<16x128xf32>
    %436 = arith.truncf %435 : vector<16x128xf32> to vector<16x128xbf16>
    %cst_321 = arith.constant dense<0.000000e+00> : vector<16x128xf32>
    %437 = tpu.matmul %3, %436, %cst_321 {dimension_numbers = #tpu.dot_dimension_numbers<[1], [0], [0], [1], [0, 0, 1, 1], [], []>} : vector<16x16xbf16>, vector<16x128xbf16>, vector<16x128xf32> -> vector<16x128xf32>
    %438 = arith.truncf %437 : vector<16x128xf32> to vector<16x128xbf16>
    %c1_322 = arith.constant 1 : index
    %c4_323 = arith.constant 4 : index
    %c0_324 = arith.constant 0 : index
    %c0_325 = arith.constant 0 : index
    %439 = vector.load %arg5[%c1_322, %c4_323, %c0_324, %c0_325] : memref<2x14x128x128xbf16, #tpu.memory_space<vmem>>, vector<1x1x128x128xbf16>
    %440 = vector.shape_cast %439 : vector<1x1x128x128xbf16> to vector<128x128xbf16>
    %cst_326 = arith.constant dense<0.000000e+00> : vector<16x128xf32>
    %441 = tpu.matmul %436, %440, %cst_326 {dimension_numbers = #tpu.dot_dimension_numbers<[1], [0], [0], [1], [0, 0, 1, 1], [], []>} : vector<16x128xbf16>, vector<128x128xbf16>, vector<16x128xf32> -> vector<16x128xf32>
    %c1_327 = arith.constant 1 : index
    %c4_328 = arith.constant 4 : index
    %c0_329 = arith.constant 0 : index
    %c0_330 = arith.constant 0 : index
    %442 = vector.load %arg6[%c1_327, %c4_328, %c0_329, %c0_330] : memref<2x14x128x128xbf16, #tpu.memory_space<vmem>>, vector<1x1x128x128xbf16>
    %443 = vector.shape_cast %442 : vector<1x1x128x128xbf16> to vector<128x128xbf16>
    %cst_331 = arith.constant dense<0.000000e+00> : vector<16x128xf32>
    %444 = tpu.matmul %438, %443, %cst_331 {dimension_numbers = #tpu.dot_dimension_numbers<[1], [0], [0], [1], [0, 0, 1, 1], [], []>} : vector<16x128xbf16>, vector<128x128xbf16>, vector<16x128xf32> -> vector<16x128xf32>
    %445 = arith.addf %441, %444 : vector<16x128xf32>
    %c1_332 = arith.constant 1 : index
    %c4_333 = arith.constant 4 : index
    %c0_334 = arith.constant 0 : index
    %c0_335 = arith.constant 0 : index
    %446 = vector.load %arg7[%c1_332, %c4_333, %c0_334, %c0_335] : memref<2x14x1x128xf32, #tpu.memory_space<vmem>>, vector<1x1x1x128xf32>
    %447 = vector.shape_cast %446 : vector<1x1x1x128xf32> to vector<1x128xf32>
    %448 = vector.broadcast %447 : vector<1x128xf32> to vector<16x128xf32>
    %449 = arith.addf %445, %448 : vector<16x128xf32>
    %450 = arith.addf %449, %419 : vector<16x128xf32>
    %cst_336 = arith.constant 0.000000e+00 : f32
    %451 = vector.broadcast %cst_336 : f32 to vector<16x128xf32>
    %452 = arith.maximumf %450, %451 : vector<16x128xf32>
    %453 = arith.truncf %452 : vector<16x128xf32> to vector<16x128xbf16>
    %cst_337 = arith.constant dense<0.000000e+00> : vector<16x128xf32>
    %454 = tpu.matmul %3, %453, %cst_337 {dimension_numbers = #tpu.dot_dimension_numbers<[1], [0], [0], [1], [0, 0, 1, 1], [], []>} : vector<16x16xbf16>, vector<16x128xbf16>, vector<16x128xf32> -> vector<16x128xf32>
    %455 = arith.truncf %454 : vector<16x128xf32> to vector<16x128xbf16>
    %c1_338 = arith.constant 1 : index
    %c5_339 = arith.constant 5 : index
    %c0_340 = arith.constant 0 : index
    %c0_341 = arith.constant 0 : index
    %456 = vector.load %arg5[%c1_338, %c5_339, %c0_340, %c0_341] : memref<2x14x128x128xbf16, #tpu.memory_space<vmem>>, vector<1x1x128x128xbf16>
    %457 = vector.shape_cast %456 : vector<1x1x128x128xbf16> to vector<128x128xbf16>
    %cst_342 = arith.constant dense<0.000000e+00> : vector<16x128xf32>
    %458 = tpu.matmul %453, %457, %cst_342 {dimension_numbers = #tpu.dot_dimension_numbers<[1], [0], [0], [1], [0, 0, 1, 1], [], []>} : vector<16x128xbf16>, vector<128x128xbf16>, vector<16x128xf32> -> vector<16x128xf32>
    %c1_343 = arith.constant 1 : index
    %c5_344 = arith.constant 5 : index
    %c0_345 = arith.constant 0 : index
    %c0_346 = arith.constant 0 : index
    %459 = vector.load %arg6[%c1_343, %c5_344, %c0_345, %c0_346] : memref<2x14x128x128xbf16, #tpu.memory_space<vmem>>, vector<1x1x128x128xbf16>
    %460 = vector.shape_cast %459 : vector<1x1x128x128xbf16> to vector<128x128xbf16>
    %cst_347 = arith.constant dense<0.000000e+00> : vector<16x128xf32>
    %461 = tpu.matmul %455, %460, %cst_347 {dimension_numbers = #tpu.dot_dimension_numbers<[1], [0], [0], [1], [0, 0, 1, 1], [], []>} : vector<16x128xbf16>, vector<128x128xbf16>, vector<16x128xf32> -> vector<16x128xf32>
    %462 = arith.addf %458, %461 : vector<16x128xf32>
    %c1_348 = arith.constant 1 : index
    %c5_349 = arith.constant 5 : index
    %c0_350 = arith.constant 0 : index
    %c0_351 = arith.constant 0 : index
    %463 = vector.load %arg7[%c1_348, %c5_349, %c0_350, %c0_351] : memref<2x14x1x128xf32, #tpu.memory_space<vmem>>, vector<1x1x1x128xf32>
    %464 = vector.shape_cast %463 : vector<1x1x1x128xf32> to vector<1x128xf32>
    %465 = vector.broadcast %464 : vector<1x128xf32> to vector<16x128xf32>
    %466 = arith.addf %462, %465 : vector<16x128xf32>
    %cst_352 = arith.constant 0.000000e+00 : f32
    %467 = vector.broadcast %cst_352 : f32 to vector<16x128xf32>
    %468 = arith.maximumf %466, %467 : vector<16x128xf32>
    %469 = arith.truncf %468 : vector<16x128xf32> to vector<16x128xbf16>
    %cst_353 = arith.constant dense<0.000000e+00> : vector<16x128xf32>
    %470 = tpu.matmul %3, %469, %cst_353 {dimension_numbers = #tpu.dot_dimension_numbers<[1], [0], [0], [1], [0, 0, 1, 1], [], []>} : vector<16x16xbf16>, vector<16x128xbf16>, vector<16x128xf32> -> vector<16x128xf32>
    %471 = arith.truncf %470 : vector<16x128xf32> to vector<16x128xbf16>
    %c1_354 = arith.constant 1 : index
    %c6_355 = arith.constant 6 : index
    %c0_356 = arith.constant 0 : index
    %c0_357 = arith.constant 0 : index
    %472 = vector.load %arg5[%c1_354, %c6_355, %c0_356, %c0_357] : memref<2x14x128x128xbf16, #tpu.memory_space<vmem>>, vector<1x1x128x128xbf16>
    %473 = vector.shape_cast %472 : vector<1x1x128x128xbf16> to vector<128x128xbf16>
    %cst_358 = arith.constant dense<0.000000e+00> : vector<16x128xf32>
    %474 = tpu.matmul %469, %473, %cst_358 {dimension_numbers = #tpu.dot_dimension_numbers<[1], [0], [0], [1], [0, 0, 1, 1], [], []>} : vector<16x128xbf16>, vector<128x128xbf16>, vector<16x128xf32> -> vector<16x128xf32>
    %c1_359 = arith.constant 1 : index
    %c6_360 = arith.constant 6 : index
    %c0_361 = arith.constant 0 : index
    %c0_362 = arith.constant 0 : index
    %475 = vector.load %arg6[%c1_359, %c6_360, %c0_361, %c0_362] : memref<2x14x128x128xbf16, #tpu.memory_space<vmem>>, vector<1x1x128x128xbf16>
    %476 = vector.shape_cast %475 : vector<1x1x128x128xbf16> to vector<128x128xbf16>
    %cst_363 = arith.constant dense<0.000000e+00> : vector<16x128xf32>
    %477 = tpu.matmul %471, %476, %cst_363 {dimension_numbers = #tpu.dot_dimension_numbers<[1], [0], [0], [1], [0, 0, 1, 1], [], []>} : vector<16x128xbf16>, vector<128x128xbf16>, vector<16x128xf32> -> vector<16x128xf32>
    %478 = arith.addf %474, %477 : vector<16x128xf32>
    %c1_364 = arith.constant 1 : index
    %c6_365 = arith.constant 6 : index
    %c0_366 = arith.constant 0 : index
    %c0_367 = arith.constant 0 : index
    %479 = vector.load %arg7[%c1_364, %c6_365, %c0_366, %c0_367] : memref<2x14x1x128xf32, #tpu.memory_space<vmem>>, vector<1x1x1x128xf32>
    %480 = vector.shape_cast %479 : vector<1x1x1x128xf32> to vector<1x128xf32>
    %481 = vector.broadcast %480 : vector<1x128xf32> to vector<16x128xf32>
    %482 = arith.addf %478, %481 : vector<16x128xf32>
    %483 = arith.addf %482, %452 : vector<16x128xf32>
    %cst_368 = arith.constant 0.000000e+00 : f32
    %484 = vector.broadcast %cst_368 : f32 to vector<16x128xf32>
    %485 = arith.maximumf %483, %484 : vector<16x128xf32>
    %486 = arith.truncf %485 : vector<16x128xf32> to vector<16x128xbf16>
    %cst_369 = arith.constant dense<0.000000e+00> : vector<16x128xf32>
    %487 = tpu.matmul %3, %486, %cst_369 {dimension_numbers = #tpu.dot_dimension_numbers<[1], [0], [0], [1], [0, 0, 1, 1], [], []>} : vector<16x16xbf16>, vector<16x128xbf16>, vector<16x128xf32> -> vector<16x128xf32>
    %488 = arith.truncf %487 : vector<16x128xf32> to vector<16x128xbf16>
    %c1_370 = arith.constant 1 : index
    %c7_371 = arith.constant 7 : index
    %c0_372 = arith.constant 0 : index
    %c0_373 = arith.constant 0 : index
    %489 = vector.load %arg5[%c1_370, %c7_371, %c0_372, %c0_373] : memref<2x14x128x128xbf16, #tpu.memory_space<vmem>>, vector<1x1x128x128xbf16>
    %490 = vector.shape_cast %489 : vector<1x1x128x128xbf16> to vector<128x128xbf16>
    %cst_374 = arith.constant dense<0.000000e+00> : vector<16x128xf32>
    %491 = tpu.matmul %486, %490, %cst_374 {dimension_numbers = #tpu.dot_dimension_numbers<[1], [0], [0], [1], [0, 0, 1, 1], [], []>} : vector<16x128xbf16>, vector<128x128xbf16>, vector<16x128xf32> -> vector<16x128xf32>
    %c1_375 = arith.constant 1 : index
    %c7_376 = arith.constant 7 : index
    %c0_377 = arith.constant 0 : index
    %c0_378 = arith.constant 0 : index
    %492 = vector.load %arg6[%c1_375, %c7_376, %c0_377, %c0_378] : memref<2x14x128x128xbf16, #tpu.memory_space<vmem>>, vector<1x1x128x128xbf16>
    %493 = vector.shape_cast %492 : vector<1x1x128x128xbf16> to vector<128x128xbf16>
    %cst_379 = arith.constant dense<0.000000e+00> : vector<16x128xf32>
    %494 = tpu.matmul %488, %493, %cst_379 {dimension_numbers = #tpu.dot_dimension_numbers<[1], [0], [0], [1], [0, 0, 1, 1], [], []>} : vector<16x128xbf16>, vector<128x128xbf16>, vector<16x128xf32> -> vector<16x128xf32>
    %495 = arith.addf %491, %494 : vector<16x128xf32>
    %c1_380 = arith.constant 1 : index
    %c7_381 = arith.constant 7 : index
    %c0_382 = arith.constant 0 : index
    %c0_383 = arith.constant 0 : index
    %496 = vector.load %arg7[%c1_380, %c7_381, %c0_382, %c0_383] : memref<2x14x1x128xf32, #tpu.memory_space<vmem>>, vector<1x1x1x128xf32>
    %497 = vector.shape_cast %496 : vector<1x1x1x128xf32> to vector<1x128xf32>
    %498 = vector.broadcast %497 : vector<1x128xf32> to vector<16x128xf32>
    %499 = arith.addf %495, %498 : vector<16x128xf32>
    %cst_384 = arith.constant 0.000000e+00 : f32
    %500 = vector.broadcast %cst_384 : f32 to vector<16x128xf32>
    %501 = arith.maximumf %499, %500 : vector<16x128xf32>
    %502 = arith.truncf %501 : vector<16x128xf32> to vector<16x128xbf16>
    %cst_385 = arith.constant dense<0.000000e+00> : vector<16x128xf32>
    %503 = tpu.matmul %3, %502, %cst_385 {dimension_numbers = #tpu.dot_dimension_numbers<[1], [0], [0], [1], [0, 0, 1, 1], [], []>} : vector<16x16xbf16>, vector<16x128xbf16>, vector<16x128xf32> -> vector<16x128xf32>
    %504 = arith.truncf %503 : vector<16x128xf32> to vector<16x128xbf16>
    %c1_386 = arith.constant 1 : index
    %c8_387 = arith.constant 8 : index
    %c0_388 = arith.constant 0 : index
    %c0_389 = arith.constant 0 : index
    %505 = vector.load %arg5[%c1_386, %c8_387, %c0_388, %c0_389] : memref<2x14x128x128xbf16, #tpu.memory_space<vmem>>, vector<1x1x128x128xbf16>
    %506 = vector.shape_cast %505 : vector<1x1x128x128xbf16> to vector<128x128xbf16>
    %cst_390 = arith.constant dense<0.000000e+00> : vector<16x128xf32>
    %507 = tpu.matmul %502, %506, %cst_390 {dimension_numbers = #tpu.dot_dimension_numbers<[1], [0], [0], [1], [0, 0, 1, 1], [], []>} : vector<16x128xbf16>, vector<128x128xbf16>, vector<16x128xf32> -> vector<16x128xf32>
    %c1_391 = arith.constant 1 : index
    %c8_392 = arith.constant 8 : index
    %c0_393 = arith.constant 0 : index
    %c0_394 = arith.constant 0 : index
    %508 = vector.load %arg6[%c1_391, %c8_392, %c0_393, %c0_394] : memref<2x14x128x128xbf16, #tpu.memory_space<vmem>>, vector<1x1x128x128xbf16>
    %509 = vector.shape_cast %508 : vector<1x1x128x128xbf16> to vector<128x128xbf16>
    %cst_395 = arith.constant dense<0.000000e+00> : vector<16x128xf32>
    %510 = tpu.matmul %504, %509, %cst_395 {dimension_numbers = #tpu.dot_dimension_numbers<[1], [0], [0], [1], [0, 0, 1, 1], [], []>} : vector<16x128xbf16>, vector<128x128xbf16>, vector<16x128xf32> -> vector<16x128xf32>
    %511 = arith.addf %507, %510 : vector<16x128xf32>
    %c1_396 = arith.constant 1 : index
    %c8_397 = arith.constant 8 : index
    %c0_398 = arith.constant 0 : index
    %c0_399 = arith.constant 0 : index
    %512 = vector.load %arg7[%c1_396, %c8_397, %c0_398, %c0_399] : memref<2x14x1x128xf32, #tpu.memory_space<vmem>>, vector<1x1x1x128xf32>
    %513 = vector.shape_cast %512 : vector<1x1x1x128xf32> to vector<1x128xf32>
    %514 = vector.broadcast %513 : vector<1x128xf32> to vector<16x128xf32>
    %515 = arith.addf %511, %514 : vector<16x128xf32>
    %516 = arith.addf %515, %485 : vector<16x128xf32>
    %cst_400 = arith.constant 0.000000e+00 : f32
    %517 = vector.broadcast %cst_400 : f32 to vector<16x128xf32>
    %518 = arith.maximumf %516, %517 : vector<16x128xf32>
    %519 = arith.truncf %518 : vector<16x128xf32> to vector<16x128xbf16>
    %cst_401 = arith.constant dense<0.000000e+00> : vector<16x128xf32>
    %520 = tpu.matmul %3, %519, %cst_401 {dimension_numbers = #tpu.dot_dimension_numbers<[1], [0], [0], [1], [0, 0, 1, 1], [], []>} : vector<16x16xbf16>, vector<16x128xbf16>, vector<16x128xf32> -> vector<16x128xf32>
    %521 = arith.truncf %520 : vector<16x128xf32> to vector<16x128xbf16>
    %c1_402 = arith.constant 1 : index
    %c9_403 = arith.constant 9 : index
    %c0_404 = arith.constant 0 : index
    %c0_405 = arith.constant 0 : index
    %522 = vector.load %arg5[%c1_402, %c9_403, %c0_404, %c0_405] : memref<2x14x128x128xbf16, #tpu.memory_space<vmem>>, vector<1x1x128x128xbf16>
    %523 = vector.shape_cast %522 : vector<1x1x128x128xbf16> to vector<128x128xbf16>
    %cst_406 = arith.constant dense<0.000000e+00> : vector<16x128xf32>
    %524 = tpu.matmul %519, %523, %cst_406 {dimension_numbers = #tpu.dot_dimension_numbers<[1], [0], [0], [1], [0, 0, 1, 1], [], []>} : vector<16x128xbf16>, vector<128x128xbf16>, vector<16x128xf32> -> vector<16x128xf32>
    %c1_407 = arith.constant 1 : index
    %c9_408 = arith.constant 9 : index
    %c0_409 = arith.constant 0 : index
    %c0_410 = arith.constant 0 : index
    %525 = vector.load %arg6[%c1_407, %c9_408, %c0_409, %c0_410] : memref<2x14x128x128xbf16, #tpu.memory_space<vmem>>, vector<1x1x128x128xbf16>
    %526 = vector.shape_cast %525 : vector<1x1x128x128xbf16> to vector<128x128xbf16>
    %cst_411 = arith.constant dense<0.000000e+00> : vector<16x128xf32>
    %527 = tpu.matmul %521, %526, %cst_411 {dimension_numbers = #tpu.dot_dimension_numbers<[1], [0], [0], [1], [0, 0, 1, 1], [], []>} : vector<16x128xbf16>, vector<128x128xbf16>, vector<16x128xf32> -> vector<16x128xf32>
    %528 = arith.addf %524, %527 : vector<16x128xf32>
    %c1_412 = arith.constant 1 : index
    %c9_413 = arith.constant 9 : index
    %c0_414 = arith.constant 0 : index
    %c0_415 = arith.constant 0 : index
    %529 = vector.load %arg7[%c1_412, %c9_413, %c0_414, %c0_415] : memref<2x14x1x128xf32, #tpu.memory_space<vmem>>, vector<1x1x1x128xf32>
    %530 = vector.shape_cast %529 : vector<1x1x1x128xf32> to vector<1x128xf32>
    %531 = vector.broadcast %530 : vector<1x128xf32> to vector<16x128xf32>
    %532 = arith.addf %528, %531 : vector<16x128xf32>
    %cst_416 = arith.constant 0.000000e+00 : f32
    %533 = vector.broadcast %cst_416 : f32 to vector<16x128xf32>
    %534 = arith.maximumf %532, %533 : vector<16x128xf32>
    %535 = arith.truncf %534 : vector<16x128xf32> to vector<16x128xbf16>
    %cst_417 = arith.constant dense<0.000000e+00> : vector<16x128xf32>
    %536 = tpu.matmul %3, %535, %cst_417 {dimension_numbers = #tpu.dot_dimension_numbers<[1], [0], [0], [1], [0, 0, 1, 1], [], []>} : vector<16x16xbf16>, vector<16x128xbf16>, vector<16x128xf32> -> vector<16x128xf32>
    %537 = arith.truncf %536 : vector<16x128xf32> to vector<16x128xbf16>
    %c1_418 = arith.constant 1 : index
    %c10_419 = arith.constant 10 : index
    %c0_420 = arith.constant 0 : index
    %c0_421 = arith.constant 0 : index
    %538 = vector.load %arg5[%c1_418, %c10_419, %c0_420, %c0_421] : memref<2x14x128x128xbf16, #tpu.memory_space<vmem>>, vector<1x1x128x128xbf16>
    %539 = vector.shape_cast %538 : vector<1x1x128x128xbf16> to vector<128x128xbf16>
    %cst_422 = arith.constant dense<0.000000e+00> : vector<16x128xf32>
    %540 = tpu.matmul %535, %539, %cst_422 {dimension_numbers = #tpu.dot_dimension_numbers<[1], [0], [0], [1], [0, 0, 1, 1], [], []>} : vector<16x128xbf16>, vector<128x128xbf16>, vector<16x128xf32> -> vector<16x128xf32>
    %c1_423 = arith.constant 1 : index
    %c10_424 = arith.constant 10 : index
    %c0_425 = arith.constant 0 : index
    %c0_426 = arith.constant 0 : index
    %541 = vector.load %arg6[%c1_423, %c10_424, %c0_425, %c0_426] : memref<2x14x128x128xbf16, #tpu.memory_space<vmem>>, vector<1x1x128x128xbf16>
    %542 = vector.shape_cast %541 : vector<1x1x128x128xbf16> to vector<128x128xbf16>
    %cst_427 = arith.constant dense<0.000000e+00> : vector<16x128xf32>
    %543 = tpu.matmul %537, %542, %cst_427 {dimension_numbers = #tpu.dot_dimension_numbers<[1], [0], [0], [1], [0, 0, 1, 1], [], []>} : vector<16x128xbf16>, vector<128x128xbf16>, vector<16x128xf32> -> vector<16x128xf32>
    %544 = arith.addf %540, %543 : vector<16x128xf32>
    %c1_428 = arith.constant 1 : index
    %c10_429 = arith.constant 10 : index
    %c0_430 = arith.constant 0 : index
    %c0_431 = arith.constant 0 : index
    %545 = vector.load %arg7[%c1_428, %c10_429, %c0_430, %c0_431] : memref<2x14x1x128xf32, #tpu.memory_space<vmem>>, vector<1x1x1x128xf32>
    %546 = vector.shape_cast %545 : vector<1x1x1x128xf32> to vector<1x128xf32>
    %547 = vector.broadcast %546 : vector<1x128xf32> to vector<16x128xf32>
    %548 = arith.addf %544, %547 : vector<16x128xf32>
    %549 = arith.addf %548, %518 : vector<16x128xf32>
    %cst_432 = arith.constant 0.000000e+00 : f32
    %550 = vector.broadcast %cst_432 : f32 to vector<16x128xf32>
    %551 = arith.maximumf %549, %550 : vector<16x128xf32>
    %552 = arith.truncf %551 : vector<16x128xf32> to vector<16x128xbf16>
    %cst_433 = arith.constant dense<0.000000e+00> : vector<16x128xf32>
    %553 = tpu.matmul %3, %552, %cst_433 {dimension_numbers = #tpu.dot_dimension_numbers<[1], [0], [0], [1], [0, 0, 1, 1], [], []>} : vector<16x16xbf16>, vector<16x128xbf16>, vector<16x128xf32> -> vector<16x128xf32>
    %554 = arith.truncf %553 : vector<16x128xf32> to vector<16x128xbf16>
    %c1_434 = arith.constant 1 : index
    %c11_435 = arith.constant 11 : index
    %c0_436 = arith.constant 0 : index
    %c0_437 = arith.constant 0 : index
    %555 = vector.load %arg5[%c1_434, %c11_435, %c0_436, %c0_437] : memref<2x14x128x128xbf16, #tpu.memory_space<vmem>>, vector<1x1x128x128xbf16>
    %556 = vector.shape_cast %555 : vector<1x1x128x128xbf16> to vector<128x128xbf16>
    %cst_438 = arith.constant dense<0.000000e+00> : vector<16x128xf32>
    %557 = tpu.matmul %552, %556, %cst_438 {dimension_numbers = #tpu.dot_dimension_numbers<[1], [0], [0], [1], [0, 0, 1, 1], [], []>} : vector<16x128xbf16>, vector<128x128xbf16>, vector<16x128xf32> -> vector<16x128xf32>
    %c1_439 = arith.constant 1 : index
    %c11_440 = arith.constant 11 : index
    %c0_441 = arith.constant 0 : index
    %c0_442 = arith.constant 0 : index
    %558 = vector.load %arg6[%c1_439, %c11_440, %c0_441, %c0_442] : memref<2x14x128x128xbf16, #tpu.memory_space<vmem>>, vector<1x1x128x128xbf16>
    %559 = vector.shape_cast %558 : vector<1x1x128x128xbf16> to vector<128x128xbf16>
    %cst_443 = arith.constant dense<0.000000e+00> : vector<16x128xf32>
    %560 = tpu.matmul %554, %559, %cst_443 {dimension_numbers = #tpu.dot_dimension_numbers<[1], [0], [0], [1], [0, 0, 1, 1], [], []>} : vector<16x128xbf16>, vector<128x128xbf16>, vector<16x128xf32> -> vector<16x128xf32>
    %561 = arith.addf %557, %560 : vector<16x128xf32>
    %c1_444 = arith.constant 1 : index
    %c11_445 = arith.constant 11 : index
    %c0_446 = arith.constant 0 : index
    %c0_447 = arith.constant 0 : index
    %562 = vector.load %arg7[%c1_444, %c11_445, %c0_446, %c0_447] : memref<2x14x1x128xf32, #tpu.memory_space<vmem>>, vector<1x1x1x128xf32>
    %563 = vector.shape_cast %562 : vector<1x1x1x128xf32> to vector<1x128xf32>
    %564 = vector.broadcast %563 : vector<1x128xf32> to vector<16x128xf32>
    %565 = arith.addf %561, %564 : vector<16x128xf32>
    %cst_448 = arith.constant 0.000000e+00 : f32
    %566 = vector.broadcast %cst_448 : f32 to vector<16x128xf32>
    %567 = arith.maximumf %565, %566 : vector<16x128xf32>
    %568 = arith.truncf %567 : vector<16x128xf32> to vector<16x128xbf16>
    %cst_449 = arith.constant dense<0.000000e+00> : vector<16x128xf32>
    %569 = tpu.matmul %3, %568, %cst_449 {dimension_numbers = #tpu.dot_dimension_numbers<[1], [0], [0], [1], [0, 0, 1, 1], [], []>} : vector<16x16xbf16>, vector<16x128xbf16>, vector<16x128xf32> -> vector<16x128xf32>
    %570 = arith.truncf %569 : vector<16x128xf32> to vector<16x128xbf16>
    %c1_450 = arith.constant 1 : index
    %c12_451 = arith.constant 12 : index
    %c0_452 = arith.constant 0 : index
    %c0_453 = arith.constant 0 : index
    %571 = vector.load %arg5[%c1_450, %c12_451, %c0_452, %c0_453] : memref<2x14x128x128xbf16, #tpu.memory_space<vmem>>, vector<1x1x128x128xbf16>
    %572 = vector.shape_cast %571 : vector<1x1x128x128xbf16> to vector<128x128xbf16>
    %cst_454 = arith.constant dense<0.000000e+00> : vector<16x128xf32>
    %573 = tpu.matmul %568, %572, %cst_454 {dimension_numbers = #tpu.dot_dimension_numbers<[1], [0], [0], [1], [0, 0, 1, 1], [], []>} : vector<16x128xbf16>, vector<128x128xbf16>, vector<16x128xf32> -> vector<16x128xf32>
    %c1_455 = arith.constant 1 : index
    %c12_456 = arith.constant 12 : index
    %c0_457 = arith.constant 0 : index
    %c0_458 = arith.constant 0 : index
    %574 = vector.load %arg6[%c1_455, %c12_456, %c0_457, %c0_458] : memref<2x14x128x128xbf16, #tpu.memory_space<vmem>>, vector<1x1x128x128xbf16>
    %575 = vector.shape_cast %574 : vector<1x1x128x128xbf16> to vector<128x128xbf16>
    %cst_459 = arith.constant dense<0.000000e+00> : vector<16x128xf32>
    %576 = tpu.matmul %570, %575, %cst_459 {dimension_numbers = #tpu.dot_dimension_numbers<[1], [0], [0], [1], [0, 0, 1, 1], [], []>} : vector<16x128xbf16>, vector<128x128xbf16>, vector<16x128xf32> -> vector<16x128xf32>
    %577 = arith.addf %573, %576 : vector<16x128xf32>
    %c1_460 = arith.constant 1 : index
    %c12_461 = arith.constant 12 : index
    %c0_462 = arith.constant 0 : index
    %c0_463 = arith.constant 0 : index
    %578 = vector.load %arg7[%c1_460, %c12_461, %c0_462, %c0_463] : memref<2x14x1x128xf32, #tpu.memory_space<vmem>>, vector<1x1x1x128xf32>
    %579 = vector.shape_cast %578 : vector<1x1x1x128xf32> to vector<1x128xf32>
    %580 = vector.broadcast %579 : vector<1x128xf32> to vector<16x128xf32>
    %581 = arith.addf %577, %580 : vector<16x128xf32>
    %582 = arith.addf %581, %551 : vector<16x128xf32>
    %cst_464 = arith.constant 0.000000e+00 : f32
    %583 = vector.broadcast %cst_464 : f32 to vector<16x128xf32>
    %584 = arith.maximumf %582, %583 : vector<16x128xf32>
    %585 = arith.truncf %584 : vector<16x128xf32> to vector<16x128xbf16>
    %cst_465 = arith.constant dense<0.000000e+00> : vector<16x128xf32>
    %586 = tpu.matmul %3, %585, %cst_465 {dimension_numbers = #tpu.dot_dimension_numbers<[1], [0], [0], [1], [0, 0, 1, 1], [], []>} : vector<16x16xbf16>, vector<16x128xbf16>, vector<16x128xf32> -> vector<16x128xf32>
    %587 = arith.truncf %586 : vector<16x128xf32> to vector<16x128xbf16>
    %c1_466 = arith.constant 1 : index
    %c13_467 = arith.constant 13 : index
    %c0_468 = arith.constant 0 : index
    %c0_469 = arith.constant 0 : index
    %588 = vector.load %arg5[%c1_466, %c13_467, %c0_468, %c0_469] : memref<2x14x128x128xbf16, #tpu.memory_space<vmem>>, vector<1x1x128x128xbf16>
    %589 = vector.shape_cast %588 : vector<1x1x128x128xbf16> to vector<128x128xbf16>
    %cst_470 = arith.constant dense<0.000000e+00> : vector<16x128xf32>
    %590 = tpu.matmul %585, %589, %cst_470 {dimension_numbers = #tpu.dot_dimension_numbers<[1], [0], [0], [1], [0, 0, 1, 1], [], []>} : vector<16x128xbf16>, vector<128x128xbf16>, vector<16x128xf32> -> vector<16x128xf32>
    %c1_471 = arith.constant 1 : index
    %c13_472 = arith.constant 13 : index
    %c0_473 = arith.constant 0 : index
    %c0_474 = arith.constant 0 : index
    %591 = vector.load %arg6[%c1_471, %c13_472, %c0_473, %c0_474] : memref<2x14x128x128xbf16, #tpu.memory_space<vmem>>, vector<1x1x128x128xbf16>
    %592 = vector.shape_cast %591 : vector<1x1x128x128xbf16> to vector<128x128xbf16>
    %cst_475 = arith.constant dense<0.000000e+00> : vector<16x128xf32>
    %593 = tpu.matmul %587, %592, %cst_475 {dimension_numbers = #tpu.dot_dimension_numbers<[1], [0], [0], [1], [0, 0, 1, 1], [], []>} : vector<16x128xbf16>, vector<128x128xbf16>, vector<16x128xf32> -> vector<16x128xf32>
    %594 = arith.addf %590, %593 : vector<16x128xf32>
    %c1_476 = arith.constant 1 : index
    %c13_477 = arith.constant 13 : index
    %c0_478 = arith.constant 0 : index
    %c0_479 = arith.constant 0 : index
    %595 = vector.load %arg7[%c1_476, %c13_477, %c0_478, %c0_479] : memref<2x14x1x128xf32, #tpu.memory_space<vmem>>, vector<1x1x1x128xf32>
    %596 = vector.shape_cast %595 : vector<1x1x1x128xf32> to vector<1x128xf32>
    %597 = vector.broadcast %596 : vector<1x128xf32> to vector<16x128xf32>
    %598 = arith.addf %594, %597 : vector<16x128xf32>
    %599 = arith.truncf %598 : vector<16x128xf32> to vector<16x128xbf16>
    %c1_480 = arith.constant 1 : index
    %c0_481 = arith.constant 0 : index
    %c0_482 = arith.constant 0 : index
    %600 = vector.load %arg8[%c1_480, %c0_481, %c0_482] : memref<2x128x128xbf16, #tpu.memory_space<vmem>>, vector<1x128x128xbf16>
    %601 = vector.shape_cast %600 : vector<1x128x128xbf16> to vector<128x128xbf16>
    %cst_483 = arith.constant dense<0.000000e+00> : vector<16x128xf32>
    %602 = tpu.matmul %599, %601, %cst_483 {dimension_numbers = #tpu.dot_dimension_numbers<[1], [0], [0], [1], [0, 0, 1, 1], [], []>} : vector<16x128xbf16>, vector<128x128xbf16>, vector<16x128xf32> -> vector<16x128xf32>
    %c1_484 = arith.constant 1 : index
    %c0_485 = arith.constant 0 : index
    %c0_486 = arith.constant 0 : index
    %603 = vector.load %arg9[%c1_484, %c0_485, %c0_486] : memref<2x1x128xf32, #tpu.memory_space<vmem>>, vector<1x1x128xf32>
    %604 = vector.shape_cast %603 : vector<1x1x128xf32> to vector<1x128xf32>
    %605 = vector.broadcast %604 : vector<1x128xf32> to vector<16x128xf32>
    %606 = arith.addf %602, %605 : vector<16x128xf32>
    %607 = arith.addf %275, %606 : vector<16x128xf32>
    %c0_487 = arith.constant 0 : index
    %c1_488 = arith.constant 1 : index
    %c0_489 = arith.constant 0 : index
    %c0_490 = arith.constant 0 : index
    %608 = vector.load %arg10[%c0_487, %c1_488, %c0_489, %c0_490] : memref<1x2x16x128xf32, #tpu.memory_space<vmem>>, vector<1x1x16x128xf32>
    %609 = vector.shape_cast %608 : vector<1x1x16x128xf32> to vector<16x128xf32>
    %610 = vector.shape_cast %607 : vector<16x128xf32> to vector<1x1x16x128xf32>
    tpu.vector_store %arg10[%c0_487, %c1_488, %c0_489, %c0_490], %610 {strides = array<i32>} : memref<1x2x16x128xf32, #tpu.memory_space<vmem>>, vector<1x1x16x128xf32>,
    return
  }
  func.func @transform_0(%arg0: i32) -> (i32, i32, i32) {
    %c0_i32 = arith.constant 0 : i32
    %c0_i32_0 = arith.constant 0 : i32
    %c0_i32_1 = arith.constant 0 : i32
    return %arg0, %c0_i32, %c0_i32_0 : i32, i32, i32
  }
  func.func @transform_1(%arg0: i32) -> (i32, i32, i32) {
    %c0_i32 = arith.constant 0 : i32
    %c0_i32_0 = arith.constant 0 : i32
    %c0_i32_1 = arith.constant 0 : i32
    return %arg0, %c0_i32, %c0_i32_0 : i32, i32, i32
  }
  func.func @transform_2(%arg0: i32) -> (i32, i32, i32) {
    %c0_i32 = arith.constant 0 : i32
    %c0_i32_0 = arith.constant 0 : i32
    %c0_i32_1 = arith.constant 0 : i32
    return %arg0, %c0_i32, %c0_i32_0 : i32, i32, i32
  }
  func.func @transform_3(%arg0: i32) -> (i32, i32) {
    %c0_i32 = arith.constant 0 : i32
    %c0_i32_0 = arith.constant 0 : i32
    %c0_i32_1 = arith.constant 0 : i32
    return %c0_i32, %c0_i32_0 : i32, i32
  }
  func.func @transform_4(%arg0: i32) -> (i32, i32, i32, i32) {
    %c0_i32 = arith.constant 0 : i32
    %c0_i32_0 = arith.constant 0 : i32
    %c0_i32_1 = arith.constant 0 : i32
    %c0_i32_2 = arith.constant 0 : i32
    %c0_i32_3 = arith.constant 0 : i32
    return %c0_i32, %c0_i32_0, %c0_i32_1, %c0_i32_2 : i32, i32, i32, i32
  }
  func.func @transform_5(%arg0: i32) -> (i32, i32, i32, i32) {
    %c0_i32 = arith.constant 0 : i32
    %c0_i32_0 = arith.constant 0 : i32
    %c0_i32_1 = arith.constant 0 : i32
    %c0_i32_2 = arith.constant 0 : i32
    %c0_i32_3 = arith.constant 0 : i32
    return %c0_i32, %c0_i32_0, %c0_i32_1, %c0_i32_2 : i32, i32, i32, i32
  }
  func.func @transform_6(%arg0: i32) -> (i32, i32, i32, i32) {
    %c0_i32 = arith.constant 0 : i32
    %c0_i32_0 = arith.constant 0 : i32
    %c0_i32_1 = arith.constant 0 : i32
    %c0_i32_2 = arith.constant 0 : i32
    %c0_i32_3 = arith.constant 0 : i32
    return %c0_i32, %c0_i32_0, %c0_i32_1, %c0_i32_2 : i32, i32, i32, i32
  }
  func.func @transform_7(%arg0: i32) -> (i32, i32, i32) {
    %c0_i32 = arith.constant 0 : i32
    %c0_i32_0 = arith.constant 0 : i32
    %c0_i32_1 = arith.constant 0 : i32
    %c0_i32_2 = arith.constant 0 : i32
    return %c0_i32, %c0_i32_0, %c0_i32_1 : i32, i32, i32
  }
  func.func @transform_8(%arg0: i32) -> (i32, i32, i32) {
    %c0_i32 = arith.constant 0 : i32
    %c0_i32_0 = arith.constant 0 : i32
    %c0_i32_1 = arith.constant 0 : i32
    %c0_i32_2 = arith.constant 0 : i32
    return %c0_i32, %c0_i32_0, %c0_i32_1 : i32, i32, i32
  }
  func.func @transform_9(%arg0: i32) -> (i32, i32, i32, i32) {
    %c0_i32 = arith.constant 0 : i32
    %c0_i32_0 = arith.constant 0 : i32
    %c0_i32_1 = arith.constant 0 : i32
    %c0_i32_2 = arith.constant 0 : i32
    return %arg0, %c0_i32, %c0_i32_0, %c0_i32_1 : i32, i32, i32, i32
  }
}

</mosaic_0001>

<llo_original>
// kernel: tpu_custom_call.1
$region0: #{tpu_custom_call.1}
  #allocation0 [shape = 'u32[]', space=smem, size = 0x4, offset = 0x4, fixed_abs, tag = 'smem constant byte address 0x4 - core index']
  #allocation1 [shape = 'u32[72,128]{1,0:T(1,128)}', space=vmem, size = 0x9000, scoped, tag = 'internal scratch']
  %s0 = inlined_call_operand.hbm [shape: f32[2,16,128], index: 0, kind: input, shape index: {}]
  %s1 = inlined_call_operand.hbm [shape: f32[2,16,128], index: 1, kind: input, shape index: {}]
  %s2 = inlined_call_operand.hbm [shape: bf16[2,256,128], index: 2, kind: input, shape index: {}]
  %s3 = inlined_call_operand.hbm [shape: f32[16,16], index: 3, kind: input, shape index: {}]
  %s4 = inlined_call_operand.hbm [shape: bf16[2,14,128,128], index: 4, kind: input, shape index: {}]
  %s5 = inlined_call_operand.hbm [shape: bf16[2,14,128,128], index: 5, kind: input, shape index: {}]
  %s6 = inlined_call_operand.hbm [shape: f32[2,14,1,128], index: 6, kind: input, shape index: {}]
  %s7 = inlined_call_operand.hbm [shape: bf16[2,128,128], index: 7, kind: input, shape index: {}]
  %s8 = inlined_call_operand.vmem [shape: f32[2,1,128], index: 8, kind: input, shape index: {}]
  %s9 = inlined_call_operand.hbm [shape: f32[2,2,16,128], index: 9, kind: output, shape index: {}]
  %s10 = sld [smem:[#allocation0]]
  $region101: #{tpu_custom_call.1} parent=0
    _
  %s12 = ssub.s32 1, %s10
  %s13 = scalar_select 0, %s12, %s10
  $region1: #{tpu_custom_call.1} parent=0
    #allocation2 [shape = 'u8[16384]{0}', space=vmem, size = 0x4000, scoped, tag = 'input window, operand 0']
    #allocation3 [shape = 's32[2]{0}', space=sflag, size = 0x8, scoped, tag = 'scoped memory for tpu_custom_call.1']
    #allocation4 [shape = 's32[2]{0}', space=sflag, size = 0x8, scoped, tag = 'scoped memory for tpu_custom_call.1']
    #allocation5 [shape = 'u8[16384]{0}', space=vmem, size = 0x4000, scoped, tag = 'input window, operand 1']
    #allocation6 [shape = 's32[2]{0}', space=sflag, size = 0x8, scoped, tag = 'scoped memory for tpu_custom_call.1']
    #allocation7 [shape = 'u8[131072]{0}', space=vmem, size = 0x20000, scoped, tag = 'input window, operand 2']
    #allocation8 [shape = 'u8[8192]{0}', space=vmem, size = 0x2000, scoped, tag = 'input window, operand 3, single buffered']
    #allocation9 [shape = 's32[1]{0}', space=sflag, size = 0x4, scoped, tag = 'scoped memory for tpu_custom_call.1']
    #allocation10 [shape = 'u8[917504]{0}', space=vmem, size = 0xe0000, scoped, tag = 'input window, operand 4, single buffered']
    #allocation11 [shape = 'u8[917504]{0}', space=vmem, size = 0xe0000, scoped, tag = 'input window, operand 5, single buffered']
    #allocation12 [shape = 's32[1]{0}', space=sflag, size = 0x4, scoped, tag = 'scoped memory for tpu_custom_call.1']
    #allocation13 [shape = 'u8[14336]{0}', space=vmem, size = 0x3800, scoped, tag = 'input window, operand 6, single buffered']
    #allocation14 [shape = 'u8[65536]{0}', space=vmem, size = 0x10000, scoped, tag = 'input window, operand 7, single buffered']
    #allocation15 [shape = 's32[1]{0}', space=sflag, size = 0x4, scoped, tag = 'scoped memory for tpu_custom_call.1']
    #allocation16 [shape = 'u8[32768]{0}', space=vmem, size = 0x8000, scoped, tag = 'output window, operand 0']
    %14 = vsyncpa [#allocation3], 0
    %s15 = scalar_lea.sflag [#allocation3], 1
    %16 = vsyncpa %s15, 0
    %17 = vsyncpa [#allocation6], 0
    %s18 = scalar_lea.sflag [#allocation6], 1
    %19 = vsyncpa %s18, 0
    %20 = vsyncpa [#allocation9], 0
    %21 = vsyncpa [#allocation12], 0
    %22 = vsyncpa [#allocation15], 0
    %23 = vsyncpa [#allocation4], 0
    %s24 = scalar_lea.sflag [#allocation4], 1
    %25 = vsyncpa %s24, 0
    loop: start=0, step=1, limit=4
    $region2: #{tpu_custom_call.1} parent=1 // loop_pre_header
      _
    $region3: #{tpu_custom_call.1} parent=1 // loop_header
      %s27 = sphi 0, %s31
      %p28 = scmp.ge.s32.totalorder %s27, 4
      %s37 = sphi 0, %s39
      %s40 = sphi 0, %s37
      %s41 = sphi 0, %s40
      %s57 = sphi 0, %s41
      %s63 = sphi 0, %s65
      %s66 = sphi 0, %s63
      %s67 = sphi 0, %s66
      %s83 = sphi 0, %s67
      %s89 = sphi 0, %s91
      %s92 = sphi 0, %s89
      %s93 = sphi 0, %s92
      %s109 = sphi 0, %s93
      %s113 = sphi 0, %s113
      %s115 = sphi 0, %s113
      %s116 = sphi 0, %s115
      %s130 = sphi 0, %s116
      %s134 = sphi 0, %s134
      %s136 = sphi 0, %s134
      %s137 = sphi 0, %s136
      %s151 = sphi 0, %s137
      %s155 = sphi 0, %s155
      %s157 = sphi 0, %s155
      %s158 = sphi 0, %s157
      %s172 = sphi 0, %s158
      %s176 = sphi 0, %s176
      %s178 = sphi 0, %s176
      %s179 = sphi 0, %s178
      %s193 = sphi 0, %s179
      %s197 = sphi 0, %s197
      %s199 = sphi 0, %s197
      %s200 = sphi 0, %s199
      %s214 = sphi 0, %s200
      %s218 = sphi 0, %s218
      %s220 = sphi 0, %s218
      %s221 = sphi 0, %s220
      %s235 = sphi 0, %s221
      %s241 = sphi 0, %s243
      %s244 = sphi 0, %s241
      %s245 = sphi 0, %s244
      %s261 = sphi 0, %s245
    $region4: #{tpu_custom_call.1} parent=1 // loop_header_branch
      %30 = sbr.rel (%p28) target = $region8
    $region5: #{tpu_custom_call.1} parent=1 // loop_body
      %s32 = ssub.s32 %s27, 1
      %s33 = ssub.s32 %s27, 2
      %s34 = sadd.s32 %s27, 1
      %s35 = ssub.s32 %s27, %s34
      %p36 = scmp.eq.s32.totalorder %s35, 0
      %s38 = sadd.s32 %s37, 1
      %s39 = scalar_select %p36, %s37, %s38
      %p42 = pneg %p36
      %p43 = scmp.eq.s32.totalorder %s27, 1
      %p44 = por %p42, %p43
      %p45 = scmp.ne.s32.totalorder %s37, %s40
      %p46 = scmp.eq.s32.totalorder %s27, 0
      %p47 = por %p45, %p46
      %p48 = scmp.ne.s32.totalorder %s37, %s40
      %p49 = scmp.eq.s32.totalorder %s32, 1
      %p50 = por %p48, %p49
      %p51 = scmp.ne.s32.totalorder %s40, %s41
      %p52 = scmp.eq.s32.totalorder %s32, 0
      %p53 = por %p51, %p52
      %p54 = scmp.ne.s32.totalorder %s40, %s41
      %p55 = scmp.eq.s32.totalorder %s33, 1
      %p56 = por %p54, %p55
      %p58 = scmp.ne.s32.totalorder %s41, %s57
      %p59 = scmp.eq.s32.totalorder %s33, 0
      %p60 = por %p58, %p59
      %s61 = ssub.s32 %s27, %s34
      %p62 = scmp.eq.s32.totalorder %s61, 0
      %s64 = sadd.s32 %s63, 1
      %s65 = scalar_select %p62, %s63, %s64
      %p68 = pneg %p62
      %p69 = scmp.eq.s32.totalorder %s27, 1
      %p70 = por %p68, %p69
      %p71 = scmp.ne.s32.totalorder %s63, %s66
      %p72 = scmp.eq.s32.totalorder %s27, 0
      %p73 = por %p71, %p72
      %p74 = scmp.ne.s32.totalorder %s63, %s66
      %p75 = scmp.eq.s32.totalorder %s32, 1
      %p76 = por %p74, %p75
      %p77 = scmp.ne.s32.totalorder %s66, %s67
      %p78 = scmp.eq.s32.totalorder %s32, 0
      %p79 = por %p77, %p78
      %p80 = scmp.ne.s32.totalorder %s66, %s67
      %p81 = scmp.eq.s32.totalorder %s33, 1
      %p82 = por %p80, %p81
      %p84 = scmp.ne.s32.totalorder %s67, %s83
      %p85 = scmp.eq.s32.totalorder %s33, 0
      %p86 = por %p84, %p85
      %s87 = ssub.s32 %s27, %s34
      %p88 = scmp.eq.s32.totalorder %s87, 0
      %s90 = sadd.s32 %s89, 1
      %s91 = scalar_select %p88, %s89, %s90
      %p94 = pneg %p88
      %p95 = scmp.eq.s32.totalorder %s27, 1
      %p96 = por %p94, %p95
      %p97 = scmp.ne.s32.totalorder %s89, %s92
      %p98 = scmp.eq.s32.totalorder %s27, 0
      %p99 = por %p97, %p98
      %p100 = scmp.ne.s32.totalorder %s89, %s92
      %p101 = scmp.eq.s32.totalorder %s32, 1
      %p102 = por %p100, %p101
      %p103 = scmp.ne.s32.totalorder %s92, %s93
      %p104 = scmp.eq.s32.totalorder %s32, 0
      %p105 = por %p103, %p104
      %p106 = scmp.ne.s32.totalorder %s92, %s93
      %p107 = scmp.eq.s32.totalorder %s33, 1
      %p108 = por %p106, %p107
      %p110 = scmp.ne.s32.totalorder %s93, %s109
      %p111 = scmp.eq.s32.totalorder %s33, 0
      %p112 = por %p110, %p111
      %s114 = sadd.s32 %s113, 1
      %p117 = scmp.eq.s32.totalorder %s27, 1
      %p118 = scmp.ne.s32.totalorder %s113, %s115
      %p119 = scmp.eq.s32.totalorder %s27, 0
      %p120 = por %p118, %p119
      %p121 = scmp.ne.s32.totalorder %s113, %s115
      %p122 = scmp.eq.s32.totalorder %s32, 1
      %p123 = por %p121, %p122
      %p124 = scmp.ne.s32.totalorder %s115, %s116
      %p125 = scmp.eq.s32.totalorder %s32, 0
      %p126 = por %p124, %p125
      %p127 = scmp.ne.s32.totalorder %s115, %s116
      %p128 = scmp.eq.s32.totalorder %s33, 1
      %p129 = por %p127, %p128
      %p131 = scmp.ne.s32.totalorder %s116, %s130
      %p132 = scmp.eq.s32.totalorder %s33, 0
      %p133 = por %p131, %p132
      %s135 = sadd.s32 %s134, 1
      %p138 = scmp.eq.s32.totalorder %s27, 1
      %p139 = scmp.ne.s32.totalorder %s134, %s136
      %p140 = scmp.eq.s32.totalorder %s27, 0
      %p141 = por %p139, %p140
      %p142 = scmp.ne.s32.totalorder %s134, %s136
      %p143 = scmp.eq.s32.totalorder %s32, 1
      %p144 = por %p142, %p143
      %p145 = scmp.ne.s32.totalorder %s136, %s137
      %p146 = scmp.eq.s32.totalorder %s32, 0
      %p147 = por %p145, %p146
      %p148 = scmp.ne.s32.totalorder %s136, %s137
      %p149 = scmp.eq.s32.totalorder %s33, 1
      %p150 = por %p148, %p149
      %p152 = scmp.ne.s32.totalorder %s137, %s151
      %p153 = scmp.eq.s32.totalorder %s33, 0
      %p154 = por %p152, %p153
      %s156 = sadd.s32 %s155, 1
      %p159 = scmp.eq.s32.totalorder %s27, 1
      %p160 = scmp.ne.s32.totalorder %s155, %s157
      %p161 = scmp.eq.s32.totalorder %s27, 0
      %p162 = por %p160, %p161
      %p163 = scmp.ne.s32.totalorder %s155, %s157
      %p164 = scmp.eq.s32.totalorder %s32, 1
      %p165 = por %p163, %p164
      %p166 = scmp.ne.s32.totalorder %s157, %s158
      %p167 = scmp.eq.s32.totalorder %s32, 0
      %p168 = por %p166, %p167
      %p169 = scmp.ne.s32.totalorder %s157, %s158
      %p170 = scmp.eq.s32.totalorder %s33, 1
      %p171 = por %p169, %p170
      %p173 = scmp.ne.s32.totalorder %s158, %s172
      %p174 = scmp.eq.s32.totalorder %s33, 0
      %p175 = por %p173, %p174
      %s177 = sadd.s32 %s176, 1
      %p180 = scmp.eq.s32.totalorder %s27, 1
      %p181 = scmp.ne.s32.totalorder %s176, %s178
      %p182 = scmp.eq.s32.totalorder %s27, 0
      %p183 = por %p181, %p182
      %p184 = scmp.ne.s32.totalorder %s176, %s178
      %p185 = scmp.eq.s32.totalorder %s32, 1
      %p186 = por %p184, %p185
      %p187 = scmp.ne.s32.totalorder %s178, %s179
      %p188 = scmp.eq.s32.totalorder %s32, 0
      %p189 = por %p187, %p188
      %p190 = scmp.ne.s32.totalorder %s178, %s179
      %p191 = scmp.eq.s32.totalorder %s33, 1
      %p192 = por %p190, %p191
      %p194 = scmp.ne.s32.totalorder %s179, %s193
      %p195 = scmp.eq.s32.totalorder %s33, 0
      %p196 = por %p194, %p195
      %s198 = sadd.s32 %s197, 1
      %p201 = scmp.eq.s32.totalorder %s27, 1
      %p202 = scmp.ne.s32.totalorder %s197, %s199
      %p203 = scmp.eq.s32.totalorder %s27, 0
      %p204 = por %p202, %p203
      %p205 = scmp.ne.s32.totalorder %s197, %s199
      %p206 = scmp.eq.s32.totalorder %s32, 1
      %p207 = por %p205, %p206
      %p208 = scmp.ne.s32.totalorder %s199, %s200
      %p209 = scmp.eq.s32.totalorder %s32, 0
      %p210 = por %p208, %p209
      %p211 = scmp.ne.s32.totalorder %s199, %s200
      %p212 = scmp.eq.s32.totalorder %s33, 1
      %p213 = por %p211, %p212
      %p215 = scmp.ne.s32.totalorder %s200, %s214
      %p216 = scmp.eq.s32.totalorder %s33, 0
      %p217 = por %p215, %p216
      %s219 = sadd.s32 %s218, 1
      %p222 = scmp.eq.s32.totalorder %s27, 1
      %p223 = scmp.ne.s32.totalorder %s218, %s220
      %p224 = scmp.eq.s32.totalorder %s27, 0
      %p225 = por %p223, %p224
      %p226 = scmp.ne.s32.totalorder %s218, %s220
      %p227 = scmp.eq.s32.totalorder %s32, 1
      %p228 = por %p226, %p227
      %p229 = scmp.ne.s32.totalorder %s220, %s221
      %p230 = scmp.eq.s32.totalorder %s32, 0
      %p231 = por %p229, %p230
      %p232 = scmp.ne.s32.totalorder %s220, %s221
      %p233 = scmp.eq.s32.totalorder %s33, 1
      %p234 = por %p232, %p233
      %p236 = scmp.ne.s32.totalorder %s221, %s235
      %p237 = scmp.eq.s32.totalorder %s33, 0
      %p238 = por %p236, %p237
      %s239 = ssub.s32 %s27, %s34
      %p240 = scmp.eq.s32.totalorder %s239, 0
      %s242 = sadd.s32 %s241, 1
      %s243 = scalar_select %p240, %s241, %s242
      %p246 = pneg %p240
      %p247 = scmp.eq.s32.totalorder %s27, 1
      %p248 = por %p246, %p247
      %p249 = scmp.ne.s32.totalorder %s241, %s244
      %p250 = scmp.eq.s32.totalorder %s27, 0
      %p251 = por %p249, %p250
      %p252 = scmp.ne.s32.totalorder %s241, %s244
      %p253 = scmp.eq.s32.totalorder %s32, 1
      %p254 = por %p252, %p253
      %p255 = scmp.ne.s32.totalorder %s244, %s245
      %p256 = scmp.eq.s32.totalorder %s32, 0
      %p257 = por %p255, %p256
      %p258 = scmp.ne.s32.totalorder %s244, %s245
      %p259 = scmp.eq.s32.totalorder %s33, 1
      %p260 = por %p258, %p259
      %p262 = scmp.ne.s32.totalorder %s245, %s261
      %p263 = scmp.eq.s32.totalorder %s33, 0
      %p264 = por %p262, %p263
      %p265 = scmp.le.s32.totalorder 1, %s27
      %p266 = scmp.lt.s32.totalorder %s27, 3
      %p267 = pnand %p265, %p266
      %p268 = pneg %p267
      // Predicated region
      $region9: #{tpu_custom_call.1} parent=5 // pred_check
        _
      $region10: #{tpu_custom_call.1} parent=5 // pred_check_branch
        %270 = sbr.rel (%p267) target = $region12
      $region11: #{tpu_custom_call.1} parent=5 // pred_region
        %s271 = ssub.s32 %s27, 1
        // Predicated region
        $region13: #{tpu_custom_call.1} parent=11 // pred_check
          %p272 = pneg %p126
        $region14: #{tpu_custom_call.1} parent=11 // pred_check_branch
          %274 = sbr.rel (%p272) target = $region16
        $region15: #{tpu_custom_call.1} parent=11 // pred_region
          %276 = vsyncadd [#allocation9], 0
          %s277 = sshll.u32 %s3, 4
          %s278 = int_to_ptr.hbm [resolvable:$true] %s277
          %s279 = sshll.u32 [#allocation8], 4
          %s280 = int_to_ptr.vmem [resolvable:$true] %s279
          %285 = dma.hbm_to_vmem [thread:$0]  %s278, 256, %s280, [#allocation9], 128, 128, 8
        $region16: #{tpu_custom_call.1} parent=11 // pred_fallthru
          _
        // Predicated region
        $region17: #{tpu_custom_call.1} parent=11 // pred_check
          %p286 = pneg %p147
        $region18: #{tpu_custom_call.1} parent=11 // pred_check_branch
          %288 = sbr.rel (%p286) target = $region20
        $region19: #{tpu_custom_call.1} parent=11 // pred_region
          %290 = vsyncadd [#allocation9], 0
          %s291 = sshll.u32 %s4, 4
          %s292 = int_to_ptr.hbm [resolvable:$true] %s291
          %s293 = sshll.u32 [#allocation10], 4
          %s294 = int_to_ptr.vmem [resolvable:$true] %s293
          %299 = dma.hbm_to_vmem [thread:$0]  %s292, 28672, %s294, [#allocation9], 64, 64, 4
        $region20: #{tpu_custom_call.1} parent=11 // pred_fallthru
          _
        // Predicated region
        $region21: #{tpu_custom_call.1} parent=11 // pred_check
          %p300 = pneg %p168
        $region22: #{tpu_custom_call.1} parent=11 // pred_check_branch
          %302 = sbr.rel (%p300) target = $region24
        $region23: #{tpu_custom_call.1} parent=11 // pred_region
          %304 = vsyncadd [#allocation12], 0
          %s305 = sshll.u32 %s5, 4
          %s306 = int_to_ptr.hbm [resolvable:$true] %s305
          %s307 = sshll.u32 [#allocation11], 4
          %s308 = int_to_ptr.vmem [resolvable:$true] %s307
          %313 = dma.hbm_to_vmem [thread:$0]  %s306, 28672, %s308, [#allocation12], 64, 64, 4
        $region24: #{tpu_custom_call.1} parent=11 // pred_fallthru
          _
        // Predicated region
        $region25: #{tpu_custom_call.1} parent=11 // pred_check
          %p314 = pneg %p189
        $region26: #{tpu_custom_call.1} parent=11 // pred_check_branch
          %316 = sbr.rel (%p314) target = $region28
        $region27: #{tpu_custom_call.1} parent=11 // pred_region
          %318 = vsyncadd [#allocation12], 0
          %s319 = sshll.u32 %s6, 4
          %s320 = int_to_ptr.hbm [resolvable:$true] %s319
          %s321 = sshll.u32 [#allocation13], 4
          %s322 = int_to_ptr.vmem [resolvable:$true] %s321
          %327 = dma.hbm_to_vmem [thread:$0]  %s320, 448, %s322, [#allocation12], 16, 16, 1
        $region28: #{tpu_custom_call.1} parent=11 // pred_fallthru
          _
        // Predicated region
        $region29: #{tpu_custom_call.1} parent=11 // pred_check
          %p328 = pneg %p210
        $region30: #{tpu_custom_call.1} parent=11 // pred_check_branch
          %330 = sbr.rel (%p328) target = $region32
        $region31: #{tpu_custom_call.1} parent=11 // pred_region
          %332 = vsyncadd [#allocation15], 0
          %s333 = sshll.u32 %s7, 4
          %s334 = int_to_ptr.hbm [resolvable:$true] %s333
          %s335 = sshll.u32 [#allocation14], 4
          %s336 = int_to_ptr.vmem [resolvable:$true] %s335
          %341 = dma.hbm_to_vmem [thread:$0]  %s334, 2048, %s336, [#allocation15], 64, 64, 4
        $region32: #{tpu_custom_call.1} parent=11 // pred_fallthru
          _
        // Predicated region
        $region33: #{tpu_custom_call.1} parent=11 // pred_check
          %p342 = pneg %p231
        $region34: #{tpu_custom_call.1} parent=11 // pred_check_branch
          %344 = sbr.rel (%p342) target = $region36
        $region35: #{tpu_custom_call.1} parent=11 // pred_region
          _
        $region36: #{tpu_custom_call.1} parent=11 // pred_fallthru
          _
      $region12: #{tpu_custom_call.1} parent=5 // pred_fallthru
        _
      %p345 = scmp.lt.s32.totalorder %s27, 2
      // Predicated region
      $region37: #{tpu_custom_call.1} parent=5 // pred_check
        %p346 = pneg %p345
      $region38: #{tpu_custom_call.1} parent=5 // pred_check_branch
        %348 = sbr.rel (%p346) target = $region40
      $region39: #{tpu_custom_call.1} parent=5 // pred_region
        // Predicated region
        $region41: #{tpu_custom_call.1} parent=39 // pred_check
          %p349 = pneg %p47
        $region42: #{tpu_custom_call.1} parent=39 // pred_check_branch
          %351 = sbr.rel (%p349) target = $region44
        $region43: #{tpu_custom_call.1} parent=39 // pred_region
          %s352 = sand.u32 %s37, 1
          %s353 = scalar_lea.sflag [#allocation3], %s352
          %s354 = sand.u32 %s37, 1
          %s355 = smul.addr %s354, 16
          %s356 = scalar_lea.vmem [#allocation2], %s355
          %358 = vsyncadd %s353, 0
          %s359 = smul.addr %s27, 2
          %s360 = smul.addr %s359, 8
          %s361 = scalar_lea.hbm %s0, %s360
          %s362 = sshll.u32 %s361, 4
          %s363 = int_to_ptr.hbm [resolvable:$true] %s362
          %s364 = sshll.u32 %s356, 4
          %s365 = int_to_ptr.vmem [resolvable:$true] %s364
          %370 = dma.hbm_to_vmem [thread:$0]  %s363, 256, %s365, %s353, 128, 128, 8
        $region44: #{tpu_custom_call.1} parent=39 // pred_fallthru
          _
        // Predicated region
        $region45: #{tpu_custom_call.1} parent=39 // pred_check
          %p371 = pneg %p73
        $region46: #{tpu_custom_call.1} parent=39 // pred_check_branch
          %373 = sbr.rel (%p371) target = $region48
        $region47: #{tpu_custom_call.1} parent=39 // pred_region
          %s374 = sand.u32 %s27, 1
          %s375 = scalar_lea.sflag [#allocation6], %s374
          %s376 = sand.u32 %s63, 1
          %s377 = smul.addr %s376, 16
          %s378 = scalar_lea.vmem [#allocation5], %s377
          %380 = vsyncadd %s375, 0
          %s381 = smul.addr %s27, 2
          %s382 = smul.addr %s381, 8
          %s383 = scalar_lea.hbm %s1, %s382
          %s384 = sshll.u32 %s383, 4
          %s385 = int_to_ptr.hbm [resolvable:$true] %s384
          %s386 = sshll.u32 %s378, 4
          %s387 = int_to_ptr.vmem [resolvable:$true] %s386
          %392 = dma.hbm_to_vmem [thread:$0]  %s385, 256, %s387, %s375, 128, 128, 8
        $region48: #{tpu_custom_call.1} parent=39 // pred_fallthru
          _
        // Predicated region
        $region49: #{tpu_custom_call.1} parent=39 // pred_check
          %p393 = pneg %p99
        $region50: #{tpu_custom_call.1} parent=39 // pred_check_branch
          %395 = sbr.rel (%p393) target = $region52
        $region51: #{tpu_custom_call.1} parent=39 // pred_region
          %s396 = sand.u32 %s27, 1
          %s397 = scalar_lea.sflag [#allocation6], %s396
          %s398 = sand.u32 %s89, 1
          %s399 = smul.addr %s398, 128
          %s400 = scalar_lea.vmem [#allocation7], %s399
          %402 = vsyncadd %s397, 0
          %s403 = smul.addr %s27, 32
          %s404 = smul.addr %s403, 4
          %s405 = scalar_lea.hbm %s2, %s404
          %s406 = sshll.u32 %s405, 4
          %s407 = int_to_ptr.hbm [resolvable:$true] %s406
          %s408 = sshll.u32 %s400, 4
          %s409 = int_to_ptr.vmem [resolvable:$true] %s408
          %414 = dma.hbm_to_vmem [thread:$0]  %s407, 2048, %s409, %s397, 64, 64, 4
        $region52: #{tpu_custom_call.1} parent=39 // pred_fallthru
          _
      $region40: #{tpu_custom_call.1} parent=5 // pred_fallthru
        _
      %p415 = scmp.le.s32.totalorder 1, %s27
      %p416 = scmp.lt.s32.totalorder %s27, 3
      %p417 = pnand %p415, %p416
      %p418 = pneg %p417
      // Predicated region
      $region53: #{tpu_custom_call.1} parent=5 // pred_check
        _
      $region54: #{tpu_custom_call.1} parent=5 // pred_check_branch
        %420 = sbr.rel (%p417) target = $region56
      $region55: #{tpu_custom_call.1} parent=5 // pred_region
        %s421 = ssub.s32 %s27, 1
        %s422 = sand.u32 %s40, 1
        %s423 = scalar_lea.sflag [#allocation3], %s422
        %s424 = sand.u32 %s40, 1
        %s425 = smul.addr %s424, 16
        %s426 = scalar_lea.vmem [#allocation2], %s425
        // Predicated region
        $region57: #{tpu_custom_call.1} parent=55 // pred_check
          %p427 = pneg %p53
        $region58: #{tpu_custom_call.1} parent=55 // pred_check_branch
          %429 = sbr.rel (%p427) target = $region60
        $region59: #{tpu_custom_call.1} parent=55 // pred_region
          %431 = dma.done %s423, 256
        $region60: #{tpu_custom_call.1} parent=55 // pred_fallthru
          _
        %s432 = sand.u32 %s32, 1
        %s433 = scalar_lea.sflag [#allocation6], %s432
        %s434 = sand.u32 %s66, 1
        %s435 = smul.addr %s434, 16
        %s436 = scalar_lea.vmem [#allocation5], %s435
        // Predicated region
        $region61: #{tpu_custom_call.1} parent=55 // pred_check
          %p437 = pneg %p79
        $region62: #{tpu_custom_call.1} parent=55 // pred_check_branch
          %439 = sbr.rel (%p437) target = $region64
        $region63: #{tpu_custom_call.1} parent=55 // pred_region
          %441 = dma.done %s433, 256
        $region64: #{tpu_custom_call.1} parent=55 // pred_fallthru
          _
        %s442 = sand.u32 %s32, 1
        %s443 = scalar_lea.sflag [#allocation6], %s442
        %s444 = sand.u32 %s92, 1
        %s445 = smul.addr %s444, 128
        %s446 = scalar_lea.vmem [#allocation7], %s445
        // Predicated region
        $region65: #{tpu_custom_call.1} parent=55 // pred_check
          %p447 = pneg %p105
        $region66: #{tpu_custom_call.1} parent=55 // pred_check_branch
          %449 = sbr.rel (%p447) target = $region68
        $region67: #{tpu_custom_call.1} parent=55 // pred_region
          %451 = dma.done %s443, 2048
        $region68: #{tpu_custom_call.1} parent=55 // pred_fallthru
          _
        // Predicated region
        $region69: #{tpu_custom_call.1} parent=55 // pred_check
          %p452 = pneg %p126
        $region70: #{tpu_custom_call.1} parent=55 // pred_check_branch
          %454 = sbr.rel (%p452) target = $region72
        $region71: #{tpu_custom_call.1} parent=55 // pred_region
          %456 = dma.done [#allocation9], 256
        $region72: #{tpu_custom_call.1} parent=55 // pred_fallthru
          _
        // Predicated region
        $region73: #{tpu_custom_call.1} parent=55 // pred_check
          %p457 = pneg %p147
        $region74: #{tpu_custom_call.1} parent=55 // pred_check_branch
          %459 = sbr.rel (%p457) target = $region76
        $region75: #{tpu_custom_call.1} parent=55 // pred_region
          %461 = dma.done [#allocation9], 28672
        $region76: #{tpu_custom_call.1} parent=55 // pred_fallthru
          _
        // Predicated region
        $region77: #{tpu_custom_call.1} parent=55 // pred_check
          %p462 = pneg %p168
        $region78: #{tpu_custom_call.1} parent=55 // pred_check_branch
          %464 = sbr.rel (%p462) target = $region80
        $region79: #{tpu_custom_call.1} parent=55 // pred_region
          %466 = dma.done [#allocation12], 28672
        $region80: #{tpu_custom_call.1} parent=55 // pred_fallthru
          _
        // Predicated region
        $region81: #{tpu_custom_call.1} parent=55 // pred_check
          %p467 = pneg %p189
        $region82: #{tpu_custom_call.1} parent=55 // pred_check_branch
          %469 = sbr.rel (%p467) target = $region84
        $region83: #{tpu_custom_call.1} parent=55 // pred_region
          %471 = dma.done [#allocation12], 448
        $region84: #{tpu_custom_call.1} parent=55 // pred_fallthru
          _
        // Predicated region
        $region85: #{tpu_custom_call.1} parent=55 // pred_check
          %p472 = pneg %p210
        $region86: #{tpu_custom_call.1} parent=55 // pred_check_branch
          %474 = sbr.rel (%p472) target = $region88
        $region87: #{tpu_custom_call.1} parent=55 // pred_region
          %476 = dma.done [#allocation15], 2048
        $region88: #{tpu_custom_call.1} parent=55 // pred_fallthru
          _
        %s477 = sand.u32 %s40, 1
        %s478 = scalar_lea.sflag [#allocation3], %s477
        %s479 = sand.u32 %s40, 1
        %s480 = smul.addr %s479, 16
        %s481 = scalar_lea.vmem [#allocation2], %s480
        %p482 = pneg %p53
        %p483 = pneg %p50
        %s484 = sand.u32 %s32, 1
        %s485 = scalar_lea.sflag [#allocation6], %s484
        %s486 = sand.u32 %s66, 1
        %s487 = smul.addr %s486, 16
        %s488 = scalar_lea.vmem [#allocation5], %s487
        %p489 = pneg %p79
        %p490 = pneg %p76
        %s491 = sand.u32 %s32, 1
        %s492 = scalar_lea.sflag [#allocation6], %s491
        %s493 = sand.u32 %s92, 1
        %s494 = smul.addr %s493, 128
        %s495 = scalar_lea.vmem [#allocation7], %s494
        %p496 = pneg %p105
        %p497 = pneg %p102
        %p498 = pneg %p126
        %p499 = pneg %p123
        %p500 = pneg %p147
        %p501 = pneg %p144
        %p502 = pneg %p168
        %p503 = pneg %p165
        %p504 = pneg %p189
        %p505 = pneg %p186
        %p506 = pneg %p210
        %p507 = pneg %p207
        %p508 = pneg %p231
        %p509 = pneg %p228
        %p510 = pneg %p257
        %p511 = pneg %p254
        %s512 = sand.u32 %s244, 1
        %s513 = scalar_lea.sflag [#allocation4], %s512
        %s514 = sand.u32 %s244, 1
        %s515 = smul.addr %s514, 32
        %s516 = scalar_lea.vmem [#allocation16], %s515
        %v518 = vld [vmem:[%s446] sm:$0xf]
        %v519 = vld [vmem:[%s446 + $0x4] sm:$0xf]
        %v520 = vld [vmem:[%s446 + $0x8] sm:$0xf]
        %v521 = vld [vmem:[%s446 + $0xc] sm:$0xf]
        %v522 = vld [vmem:[%s446 + $0x10] sm:$0xf]
        %v523 = vld [vmem:[%s446 + $0x14] sm:$0xf]
        %v524 = vld [vmem:[%s446 + $0x18] sm:$0xf]
        %v525 = vld [vmem:[%s446 + $0x1c] sm:$0xf]
        %v526 = vld [vmem:[%s446 + $0x20] sm:$0xf]
        %v527 = vld [vmem:[%s446 + $0x24] sm:$0xf]
        %v528 = vld [vmem:[%s446 + $0x28] sm:$0xf]
        %v529 = vld [vmem:[%s446 + $0x2c] sm:$0xf]
        %v530 = vld [vmem:[%s446 + $0x30] sm:$0xf]
        %v531 = vld [vmem:[%s446 + $0x34] sm:$0xf]
        %v532 = vld [vmem:[%s446 + $0x38] sm:$0xf]
        %v533 = vld [vmem:[%s446 + $0x3c] sm:$0xf]
        %v534 = vld [vmem:[%s446 + $0x40] sm:$0xf]
        %v535 = vld [vmem:[%s446 + $0x44] sm:$0xf]
        %v536 = vld [vmem:[%s446 + $0x48] sm:$0xf]
        %v537 = vld [vmem:[%s446 + $0x4c] sm:$0xf]
        %v538 = vld [vmem:[%s446 + $0x50] sm:$0xf]
        %v539 = vld [vmem:[%s446 + $0x54] sm:$0xf]
        %v540 = vld [vmem:[%s446 + $0x58] sm:$0xf]
        %v541 = vld [vmem:[%s446 + $0x5c] sm:$0xf]
        %v542 = vld [vmem:[%s446 + $0x60] sm:$0xf]
        %v543 = vld [vmem:[%s446 + $0x64] sm:$0xf]
        %v544 = vld [vmem:[%s446 + $0x68] sm:$0xf]
        %v545 = vld [vmem:[%s446 + $0x6c] sm:$0xf]
        %v546 = vld [vmem:[%s446 + $0x70] sm:$0xf]
        %v547 = vld [vmem:[%s446 + $0x74] sm:$0xf]
        %v548 = vld [vmem:[%s446 + $0x78] sm:$0xf]
        %v549 = vld [vmem:[%s446 + $0x7c] sm:$0xf]
        %v550 = vld [vmem:[#allocation8] sm:$0xff]
        %v551 = vld [vmem:[#allocation8 + $0x8] sm:$0xff]
        %v552 = vpack.c.bf16 %v551, %v550
        %v553 = vlaneseq
        %v554 = vand.u32 %v553, 127
        %v555 = vadd.s32 %v554, 128
        %v556 = vld [vmem:[%s436] sm:$0xff]
        %v557 = vld [vmem:[%s436 + $0x8] sm:$0xff]
        %v558 = vld [vmem:[%s426] sm:$0xff]
        %v559 = vld [vmem:[%s426 + $0x8] sm:$0xff]
        %v560 = vmul.f32 %v558, 16.0
        %v561 = vmul.f32 %v559, 16.0
        %v562 = vfloor.f32 %v560
        %v563 = vfloor.f32 %v561
        %v564 = vmax.f32 %v562, 0.0
        %v565 = vmax.f32 %v563, 0.0
        %v566 = vmin.f32 %v564, 15.0
        %v567 = vmin.f32 %v565, 15.0
        %v568 = vmul.f32 %v566, 16.0
        %v569 = vmul.f32 %v567, 16.0
        %572 = vrot.lane.b32.xlu0 %v566, 127
        %v573 = vpop.permute.xlu0 %572
        %574 = vrot.lane.b32.xlu0 %v567, 127
        %v575 = vpop.permute.xlu0 %574
        %v578 = vadd.f32 %v568, %v573
        %v579 = vadd.f32 %v569, %v575
        %v580 = vcvt.f32.s32.to.zero.pseudo %v578
        %v581 = vcvt.f32.s32.to.zero.pseudo %v579
        %582 = vset.pattern.permute.xlu0 120
        %583 = vperm.xlu0 %582, %v580
        %v584 = vpop.permute.xlu0 %583
        %585 = vset.pattern.permute.xlu0 120
        %586 = vperm.xlu0 %585, %v581
        %v587 = vpop.permute.xlu0 %586
        %vm588 = vcmp.eq.s32.totalorder %v554, %v584
        %vm589 = vcmp.eq.s32.totalorder %v555, %v584
        %vm590 = vcmp.eq.s32.totalorder %v554, %v587
        %vm591 = vcmp.eq.s32.totalorder %v555, %v587
        %v592 = vsel %vm588, 1.0, 0.0
        %v593 = vsel %vm589, 1.0, 0.0
        %v594 = vsel %vm590, 1.0, 0.0
        %v595 = vsel %vm591, 1.0, 0.0
        %v596 = vpack.c.bf16 %v594, %v592
        %v597 = vpack.c.bf16 %v595, %v593
        %v630 = vunpack.c.l.b16 %v518
        %v631 = vunpack.c.l.b16 %v519
        %v632 = vunpack.c.l.b16 %v520
        %v633 = vunpack.c.l.b16 %v521
        %v634 = vunpack.c.l.b16 %v522
        %v635 = vunpack.c.l.b16 %v523
        %v636 = vunpack.c.l.b16 %v524
        %v637 = vunpack.c.l.b16 %v525
        %v638 = vunpack.c.l.b16 %v526
        %v639 = vunpack.c.l.b16 %v527
        %v640 = vunpack.c.l.b16 %v528
        %v641 = vunpack.c.l.b16 %v529
        %v642 = vunpack.c.l.b16 %v530
        %v643 = vunpack.c.l.b16 %v531
        %v644 = vunpack.c.l.b16 %v532
        %v645 = vunpack.c.l.b16 %v533
        %v646 = vunpack.c.l.b16 %v534
        %v647 = vunpack.c.l.b16 %v535
        %v648 = vunpack.c.l.b16 %v536
        %v649 = vunpack.c.l.b16 %v537
        %v650 = vunpack.c.l.b16 %v538
        %v651 = vunpack.c.l.b16 %v539
        %v652 = vunpack.c.l.b16 %v540
        %v653 = vunpack.c.l.b16 %v541
        %v654 = vunpack.c.l.b16 %v542
        %v655 = vunpack.c.l.b16 %v543
        %v656 = vunpack.c.l.b16 %v544
        %v657 = vunpack.c.l.b16 %v545
        %v658 = vunpack.c.l.b16 %v546
        %v659 = vunpack.c.l.b16 %v547
        %v660 = vunpack.c.l.b16 %v548
        %v661 = vunpack.c.l.b16 %v549
        %v662 = vpack.c.b16 %v631, %v630
        %v663 = vpack.c.b16 %v633, %v632
        %v664 = vpack.c.b16 %v635, %v634
        %v665 = vpack.c.b16 %v637, %v636
        %v666 = vpack.c.b16 %v639, %v638
        %v667 = vpack.c.b16 %v641, %v640
        %v668 = vpack.c.b16 %v643, %v642
        %v669 = vpack.c.b16 %v645, %v644
        %v670 = vpack.c.b16 %v647, %v646
        %v671 = vpack.c.b16 %v649, %v648
        %v672 = vpack.c.b16 %v651, %v650
        %v673 = vpack.c.b16 %v653, %v652
        %v674 = vpack.c.b16 %v655, %v654
        %v675 = vpack.c.b16 %v657, %v656
        %v676 = vpack.c.b16 %v659, %v658
        %v677 = vpack.c.b16 %v661, %v660
        %694 = vmatpush.bf16.msra.mxu0 %v669
        %695 = vmatpush.bf16.msra.mxu0 %v668
        %696 = vmatpush.bf16.msra.mxu0 %v667
        %697 = vmatpush.bf16.msra.mxu0 %v666
        %698 = vmatpush.bf16.msra.mxu0 %v665
        %699 = vmatpush.bf16.msra.mxu0 %v664
        %700 = vmatpush.bf16.msra.mxu0 %v663
        %701 = vmatpush.bf16.msra.mxu0 %v662
        %702 = vmatmul.bf16.gmra.mxu0 %v596
        %v703 = vpop.f32.mrf.mxu0
        %v704 = vadd.f32 %v556, %v703
        %v705 = vpop.f32.mrf.mxu0
        %v706 = vadd.f32 %v557, %v705
        %707 = vdwg.mxu0
        %708 = vmatpush.bf16.msra.mxu0 %v677
        %709 = vmatpush.bf16.msra.mxu0 %v676
        %710 = vmatpush.bf16.msra.mxu0 %v675
        %711 = vmatpush.bf16.msra.mxu0 %v674
        %712 = vmatpush.bf16.msra.mxu0 %v673
        %713 = vmatpush.bf16.msra.mxu0 %v672
        %714 = vmatpush.bf16.msra.mxu0 %v671
        %715 = vmatpush.bf16.msra.mxu0 %v670
        %716 = vmatmul.bf16.gmra.mxu0 %v597
        %v717 = vpop.f32.mrf.mxu0
        %v718 = vadd.f32 %v704, %v717
        %v719 = vpop.f32.mrf.mxu0
        %v720 = vadd.f32 %v706, %v719
        %721 = vdwg.mxu0
        %v722 = vpack.c.bf16 %v720, %v718
        %vm723 = vcmask 130048
        %v725 = vsel %vm723, %v552, 0
        %727 = vmatpush.bf16.msra.mxu0 0
        %728 = vmatpush.bf16.msra.mxu0 0
        %729 = vmatpush.bf16.msra.mxu0 0
        %730 = vmatpush.bf16.msra.mxu0 0
        %731 = vmatpush.bf16.msra.mxu0 0
        %732 = vmatpush.bf16.msra.mxu0 0
        %733 = vmatpush.bf16.msra.mxu0 0
        %734 = vmatpush.bf16.msra.mxu0 %v722
        %735 = vmatmul.bf16.gmra.mxu0 %v725
        %v736 = vpop.f32.mrf.mxu0
        %v737 = vadd.f32 0.0, %v736
        %v738 = vpop.f32.mrf.mxu0
        %v739 = vadd.f32 0.0, %v738
        %740 = vdwg.mxu0
        %v741 = vpack.c.bf16 %v739, %v737
        %v742 = vld [vmem:[#allocation10] sm:$0xf]
        %v743 = vld [vmem:[#allocation10 + $0x4] sm:$0xf]
        %v744 = vld [vmem:[#allocation10 + $0x8] sm:$0xf]
        %v745 = vld [vmem:[#allocation10 + $0xc] sm:$0xf]
        %v746 = vld [vmem:[#allocation10 + $0x10] sm:$0xf]
        %v747 = vld [vmem:[#allocation10 + $0x14] sm:$0xf]
        %v748 = vld [vmem:[#allocation10 + $0x18] sm:$0xf]
        %v749 = vld [vmem:[#allocation10 + $0x1c] sm:$0xf]
        %v750 = vld [vmem:[#allocation10 + $0x20] sm:$0xf]
        %v751 = vld [vmem:[#allocation10 + $0x24] sm:$0xf]
        %v752 = vld [vmem:[#allocation10 + $0x28] sm:$0xf]
        %v753 = vld [vmem:[#allocation10 + $0x2c] sm:$0xf]
        %v754 = vld [vmem:[#allocation10 + $0x30] sm:$0xf]
        %v755 = vld [vmem:[#allocation10 + $0x34] sm:$0xf]
        %v756 = vld [vmem:[#allocation10 + $0x38] sm:$0xf]
        %v757 = vld [vmem:[#allocation10 + $0x3c] sm:$0xf]
        %v758 = vld [vmem:[#allocation11] sm:$0xf]
        %v759 = vld [vmem:[#allocation11 + $0x4] sm:$0xf]
        %v760 = vld [vmem:[#allocation11 + $0x8] sm:$0xf]
        %v761 = vld [vmem:[#allocation11 + $0xc] sm:$0xf]
        %v762 = vld [vmem:[#allocation11 + $0x10] sm:$0xf]
        %v763 = vld [vmem:[#allocation11 + $0x14] sm:$0xf]
        %v764 = vld [vmem:[#allocation11 + $0x18] sm:$0xf]
        %v765 = vld [vmem:[#allocation11 + $0x1c] sm:$0xf]
        %v766 = vld [vmem:[#allocation11 + $0x20] sm:$0xf]
        %v767 = vld [vmem:[#allocation11 + $0x24] sm:$0xf]
        %v768 = vld [vmem:[#allocation11 + $0x28] sm:$0xf]
        %v769 = vld [vmem:[#allocation11 + $0x2c] sm:$0xf]
        %v770 = vld [vmem:[#allocation11 + $0x30] sm:$0xf]
        %v771 = vld [vmem:[#allocation11 + $0x34] sm:$0xf]
        %v772 = vld [vmem:[#allocation11 + $0x38] sm:$0xf]
        %v773 = vld [vmem:[#allocation11 + $0x3c] sm:$0xf]
        %v790 = vunpack.c.l.b16 %v758
        %v791 = vunpack.c.l.b16 %v759
        %v792 = vunpack.c.l.b16 %v760
        %v793 = vunpack.c.l.b16 %v761
        %v794 = vunpack.c.l.b16 %v762
        %v795 = vunpack.c.l.b16 %v763
        %v796 = vunpack.c.l.b16 %v764
        %v797 = vunpack.c.l.b16 %v765
        %v798 = vunpack.c.l.b16 %v766
        %v799 = vunpack.c.l.b16 %v767
        %v800 = vunpack.c.l.b16 %v768
        %v801 = vunpack.c.l.b16 %v769
        %v802 = vunpack.c.l.b16 %v770
        %v803 = vunpack.c.l.b16 %v771
        %v804 = vunpack.c.l.b16 %v772
        %v805 = vunpack.c.l.b16 %v773
        %v806 = vpack.c.b16 %v791, %v790
        %v807 = vpack.c.b16 %v793, %v792
        %v808 = vpack.c.b16 %v795, %v794
        %v809 = vpack.c.b16 %v797, %v796
        %v810 = vpack.c.b16 %v799, %v798
        %v811 = vpack.c.b16 %v801, %v800
        %v812 = vpack.c.b16 %v803, %v802
        %v813 = vpack.c.b16 %v805, %v804
        %822 = vmatpush.bf16.msra.mxu0 %v813
        %823 = vmatpush.bf16.msra.mxu0 %v812
        %824 = vmatpush.bf16.msra.mxu0 %v811
        %825 = vmatpush.bf16.msra.mxu0 %v810
        %826 = vmatpush.bf16.msra.mxu0 %v809
        %827 = vmatpush.bf16.msra.mxu0 %v808
        %828 = vmatpush.bf16.msra.mxu0 %v807
        %829 = vmatpush.bf16.msra.mxu0 %v806
        %830 = vmatmul.bf16.gmra.mxu0 %v741
        %v831 = vpop.f32.mrf.mxu0
        %v832 = vadd.f32 0.0, %v831
        %v833 = vpop.f32.mrf.mxu0
        %v834 = vadd.f32 0.0, %v833
        %835 = vdwg.mxu0
        %v852 = vunpack.c.l.b16 %v742
        %v853 = vunpack.c.l.b16 %v743
        %v854 = vunpack.c.l.b16 %v744
        %v855 = vunpack.c.l.b16 %v745
        %v856 = vunpack.c.l.b16 %v746
        %v857 = vunpack.c.l.b16 %v747
        %v858 = vunpack.c.l.b16 %v748
        %v859 = vunpack.c.l.b16 %v749
        %v860 = vunpack.c.l.b16 %v750
        %v861 = vunpack.c.l.b16 %v751
        %v862 = vunpack.c.l.b16 %v752
        %v863 = vunpack.c.l.b16 %v753
        %v864 = vunpack.c.l.b16 %v754
        %v865 = vunpack.c.l.b16 %v755
        %v866 = vunpack.c.l.b16 %v756
        %v867 = vunpack.c.l.b16 %v757
        %v868 = vpack.c.b16 %v853, %v852
        %v869 = vpack.c.b16 %v855, %v854
        %v870 = vpack.c.b16 %v857, %v856
        %v871 = vpack.c.b16 %v859, %v858
        %v872 = vpack.c.b16 %v861, %v860
        %v873 = vpack.c.b16 %v863, %v862
        %v874 = vpack.c.b16 %v865, %v864
        %v875 = vpack.c.b16 %v867, %v866
        %884 = vmatpush.bf16.msra.mxu0 %v875
        %885 = vmatpush.bf16.msra.mxu0 %v874
        %886 = vmatpush.bf16.msra.mxu0 %v873
        %887 = vmatpush.bf16.msra.mxu0 %v872
        %888 = vmatpush.bf16.msra.mxu0 %v871
        %889 = vmatpush.bf16.msra.mxu0 %v870
        %890 = vmatpush.bf16.msra.mxu0 %v869
        %891 = vmatpush.bf16.msra.mxu0 %v868
        %892 = vmatmul.bf16.gmra.mxu0 %v722
        %v893 = vpop.f32.mrf.mxu0
        %v894 = vadd.f32 %v832, %v893
        %v895 = vpop.f32.mrf.mxu0
        %v896 = vadd.f32 %v834, %v895
        %897 = vdwg.mxu0
        %v898 = vld [vmem:[#allocation13] sm:$0x1]
        %v900 = vperm.slane %v898, 0
        %v902 = vadd.f32 %v894, %v900
        %v903 = vadd.f32 %v896, %v900
        %v904 = vpack.c.bf16 %v903, %v902
        %905 = vmatpush.bf16.msra.mxu0 0
        %906 = vmatpush.bf16.msra.mxu0 0
        %907 = vmatpush.bf16.msra.mxu0 0
        %908 = vmatpush.bf16.msra.mxu0 0
        %909 = vmatpush.bf16.msra.mxu0 0
        %910 = vmatpush.bf16.msra.mxu0 0
        %911 = vmatpush.bf16.msra.mxu0 0
        %912 = vmatpush.bf16.msra.mxu0 %v904
        %913 = vmatmul.bf16.gmra.mxu0 %v725
        %v914 = vpop.f32.mrf.mxu0
        %v915 = vadd.f32 0.0, %v914
        %v916 = vpop.f32.mrf.mxu0
        %v917 = vadd.f32 0.0, %v916
        %918 = vdwg.mxu0
        %v919 = vpack.c.bf16 %v917, %v915
        %s920 = scalar_lea.vmem [#allocation10], 64
        %v921 = vld [vmem:[%s920] sm:$0xf]
        %v922 = vld [vmem:[%s920 + $0x4] sm:$0xf]
        %v923 = vld [vmem:[%s920 + $0x8] sm:$0xf]
        %v924 = vld [vmem:[%s920 + $0xc] sm:$0xf]
        %v925 = vld [vmem:[%s920 + $0x10] sm:$0xf]
        %v926 = vld [vmem:[%s920 + $0x14] sm:$0xf]
        %v927 = vld [vmem:[%s920 + $0x18] sm:$0xf]
        %v928 = vld [vmem:[%s920 + $0x1c] sm:$0xf]
        %v929 = vld [vmem:[%s920 + $0x20] sm:$0xf]
        %v930 = vld [vmem:[%s920 + $0x24] sm:$0xf]
        %v931 = vld [vmem:[%s920 + $0x28] sm:$0xf]
        %v932 = vld [vmem:[%s920 + $0x2c] sm:$0xf]
        %v933 = vld [vmem:[%s920 + $0x30] sm:$0xf]
        %v934 = vld [vmem:[%s920 + $0x34] sm:$0xf]
        %v935 = vld [vmem:[%s920 + $0x38] sm:$0xf]
        %v936 = vld [vmem:[%s920 + $0x3c] sm:$0xf]
        %s937 = scalar_lea.vmem [#allocation11], 64
        %v938 = vld [vmem:[%s937] sm:$0xf]
        %v939 = vld [vmem:[%s937 + $0x4] sm:$0xf]
        %v940 = vld [vmem:[%s937 + $0x8] sm:$0xf]
        %v941 = vld [vmem:[%s937 + $0xc] sm:$0xf]
        %v942 = vld [vmem:[%s937 + $0x10] sm:$0xf]
        %v943 = vld [vmem:[%s937 + $0x14] sm:$0xf]
        %v944 = vld [vmem:[%s937 + $0x18] sm:$0xf]
        %v945 = vld [vmem:[%s937 + $0x1c] sm:$0xf]
        %v946 = vld [vmem:[%s937 + $0x20] sm:$0xf]
        %v947 = vld [vmem:[%s937 + $0x24] sm:$0xf]
        %v948 = vld [vmem:[%s937 + $0x28] sm:$0xf]
        %v949 = vld [vmem:[%s937 + $0x2c] sm:$0xf]
        %v950 = vld [vmem:[%s937 + $0x30] sm:$0xf]
        %v951 = vld [vmem:[%s937 + $0x34] sm:$0xf]
        %v952 = vld [vmem:[%s937 + $0x38] sm:$0xf]
        %v953 = vld [vmem:[%s937 + $0x3c] sm:$0xf]
        %v970 = vunpack.c.l.b16 %v938
        %v971 = vunpack.c.l.b16 %v939
        %v972 = vunpack.c.l.b16 %v940
        %v973 = vunpack.c.l.b16 %v941
        %v974 = vunpack.c.l.b16 %v942
        %v975 = vunpack.c.l.b16 %v943
        %v976 = vunpack.c.l.b16 %v944
        %v977 = vunpack.c.l.b16 %v945
        %v978 = vunpack.c.l.b16 %v946
        %v979 = vunpack.c.l.b16 %v947
        %v980 = vunpack.c.l.b16 %v948
        %v981 = vunpack.c.l.b16 %v949
        %v982 = vunpack.c.l.b16 %v950
        %v983 = vunpack.c.l.b16 %v951
        %v984 = vunpack.c.l.b16 %v952
        %v985 = vunpack.c.l.b16 %v953
        %v986 = vpack.c.b16 %v971, %v970
        %v987 = vpack.c.b16 %v973, %v972
        %v988 = vpack.c.b16 %v975, %v974
        %v989 = vpack.c.b16 %v977, %v976
        %v990 = vpack.c.b16 %v979, %v978
        %v991 = vpack.c.b16 %v981, %v980
        %v992 = vpack.c.b16 %v983, %v982
        %v993 = vpack.c.b16 %v985, %v984
        %1002 = vmatpush.bf16.msra.mxu0 %v993
        %1003 = vmatpush.bf16.msra.mxu0 %v992
        %1004 = vmatpush.bf16.msra.mxu0 %v991
        %1005 = vmatpush.bf16.msra.mxu0 %v990
        %1006 = vmatpush.bf16.msra.mxu0 %v989
        %1007 = vmatpush.bf16.msra.mxu0 %v988
        %1008 = vmatpush.bf16.msra.mxu0 %v987
        %1009 = vmatpush.bf16.msra.mxu0 %v986
        %1010 = vmatmul.bf16.gmra.mxu0 %v919
        %v1011 = vpop.f32.mrf.mxu0
        %v1012 = vadd.f32 0.0, %v1011
        %v1013 = vpop.f32.mrf.mxu0
        %v1014 = vadd.f32 0.0, %v1013
        %1015 = vdwg.mxu0
        %v1032 = vunpack.c.l.b16 %v921
        %v1033 = vunpack.c.l.b16 %v922
        %v1034 = vunpack.c.l.b16 %v923
        %v1035 = vunpack.c.l.b16 %v924
        %v1036 = vunpack.c.l.b16 %v925
        %v1037 = vunpack.c.l.b16 %v926
        %v1038 = vunpack.c.l.b16 %v927
        %v1039 = vunpack.c.l.b16 %v928
        %v1040 = vunpack.c.l.b16 %v929
        %v1041 = vunpack.c.l.b16 %v930
        %v1042 = vunpack.c.l.b16 %v931
        %v1043 = vunpack.c.l.b16 %v932
        %v1044 = vunpack.c.l.b16 %v933
        %v1045 = vunpack.c.l.b16 %v934
        %v1046 = vunpack.c.l.b16 %v935
        %v1047 = vunpack.c.l.b16 %v936
        %v1048 = vpack.c.b16 %v1033, %v1032
        %v1049 = vpack.c.b16 %v1035, %v1034
        %v1050 = vpack.c.b16 %v1037, %v1036
        %v1051 = vpack.c.b16 %v1039, %v1038
        %v1052 = vpack.c.b16 %v1041, %v1040
        %v1053 = vpack.c.b16 %v1043, %v1042
        %v1054 = vpack.c.b16 %v1045, %v1044
        %v1055 = vpack.c.b16 %v1047, %v1046
        %1064 = vmatpush.bf16.msra.mxu0 %v1055
        %1065 = vmatpush.bf16.msra.mxu0 %v1054
        %1066 = vmatpush.bf16.msra.mxu0 %v1053
        %1067 = vmatpush.bf16.msra.mxu0 %v1052
        %1068 = vmatpush.bf16.msra.mxu0 %v1051
        %1069 = vmatpush.bf16.msra.mxu0 %v1050
        %1070 = vmatpush.bf16.msra.mxu0 %v1049
        %1071 = vmatpush.bf16.msra.mxu0 %v1048
        %1072 = vmatmul.bf16.gmra.mxu0 %v904
        %v1073 = vpop.f32.mrf.mxu0
        %v1074 = vadd.f32 %v1012, %v1073
        %v1075 = vpop.f32.mrf.mxu0
        %v1076 = vadd.f32 %v1014, %v1075
        %1077 = vdwg.mxu0
        %s1078 = scalar_lea.vmem [#allocation13], 1
        %v1079 = vld [vmem:[%s1078] sm:$0x1]
        %v1081 = vperm.slane %v1079, 0
        %v1083 = vadd.f32 %v1074, %v1081
        %v1084 = vadd.f32 %v1076, %v1081
        %v1085 = vmax.f32 %v1083, 0.0
        %v1086 = vmax.f32 %v1084, 0.0
        %v1087 = vpack.c.bf16 %v1086, %v1085
        %1088 = vmatpush.bf16.msra.mxu0 0
        %1089 = vmatpush.bf16.msra.mxu0 0
        %1090 = vmatpush.bf16.msra.mxu0 0
        %1091 = vmatpush.bf16.msra.mxu0 0
        %1092 = vmatpush.bf16.msra.mxu0 0
        %1093 = vmatpush.bf16.msra.mxu0 0
        %1094 = vmatpush.bf16.msra.mxu0 0
        %1095 = vmatpush.bf16.msra.mxu0 %v1087
        %1096 = vmatmul.bf16.gmra.mxu0 %v725
        %v1097 = vpop.f32.mrf.mxu0
        %v1098 = vadd.f32 0.0, %v1097
        %v1099 = vpop.f32.mrf.mxu0
        %v1100 = vadd.f32 0.0, %v1099
        %1101 = vdwg.mxu0
        %v1102 = vpack.c.bf16 %v1100, %v1098
        %s1103 = scalar_lea.vmem [#allocation10], 128
        %v1104 = vld [vmem:[%s1103] sm:$0xf]
        %v1105 = vld [vmem:[%s1103 + $0x4] sm:$0xf]
        %v1106 = vld [vmem:[%s1103 + $0x8] sm:$0xf]
        %v1107 = vld [vmem:[%s1103 + $0xc] sm:$0xf]
        %v1108 = vld [vmem:[%s1103 + $0x10] sm:$0xf]
        %v1109 = vld [vmem:[%s1103 + $0x14] sm:$0xf]
        %v1110 = vld [vmem:[%s1103 + $0x18] sm:$0xf]
        %v1111 = vld [vmem:[%s1103 + $0x1c] sm:$0xf]
        %v1112 = vld [vmem:[%s1103 + $0x20] sm:$0xf]
        %v1113 = vld [vmem:[%s1103 + $0x24] sm:$0xf]
        %v1114 = vld [vmem:[%s1103 + $0x28] sm:$0xf]
        %v1115 = vld [vmem:[%s1103 + $0x2c] sm:$0xf]
        %v1116 = vld [vmem:[%s1103 + $0x30] sm:$0xf]
        %v1117 = vld [vmem:[%s1103 + $0x34] sm:$0xf]
        %v1118 = vld [vmem:[%s1103 + $0x38] sm:$0xf]
        %v1119 = vld [vmem:[%s1103 + $0x3c] sm:$0xf]
        %s1120 = scalar_lea.vmem [#allocation11], 128
        %v1121 = vld [vmem:[%s1120] sm:$0xf]
        %v1122 = vld [vmem:[%s1120 + $0x4] sm:$0xf]
        %v1123 = vld [vmem:[%s1120 + $0x8] sm:$0xf]
        %v1124 = vld [vmem:[%s1120 + $0xc] sm:$0xf]
        %v1125 = vld [vmem:[%s1120 + $0x10] sm:$0xf]
        %v1126 = vld [vmem:[%s1120 + $0x14] sm:$0xf]
        %v1127 = vld [vmem:[%s1120 + $0x18] sm:$0xf]
        %v1128 = vld [vmem:[%s1120 + $0x1c] sm:$0xf]
        %v1129 = vld [vmem:[%s1120 + $0x20] sm:$0xf]
        %v1130 = vld [vmem:[%s1120 + $0x24] sm:$0xf]
        %v1131 = vld [vmem:[%s1120 + $0x28] sm:$0xf]
        %v1132 = vld [vmem:[%s1120 + $0x2c] sm:$0xf]
        %v1133 = vld [vmem:[%s1120 + $0x30] sm:$0xf]
        %v1134 = vld [vmem:[%s1120 + $0x34] sm:$0xf]
        %v1135 = vld [vmem:[%s1120 + $0x38] sm:$0xf]
        %v1136 = vld [vmem:[%s1120 + $0x3c] sm:$0xf]
        %v1153 = vunpack.c.l.b16 %v1121
        %v1154 = vunpack.c.l.b16 %v1122
        %v1155 = vunpack.c.l.b16 %v1123
        %v1156 = vunpack.c.l.b16 %v1124
        %v1157 = vunpack.c.l.b16 %v1125
        %v1158 = vunpack.c.l.b16 %v1126
        %v1159 = vunpack.c.l.b16 %v1127
        %v1160 = vunpack.c.l.b16 %v1128
        %v1161 = vunpack.c.l.b16 %v1129
        %v1162 = vunpack.c.l.b16 %v1130
        %v1163 = vunpack.c.l.b16 %v1131
        %v1164 = vunpack.c.l.b16 %v1132
        %v1165 = vunpack.c.l.b16 %v1133
        %v1166 = vunpack.c.l.b16 %v1134
        %v1167 = vunpack.c.l.b16 %v1135
        %v1168 = vunpack.c.l.b16 %v1136
        %v1169 = vpack.c.b16 %v1154, %v1153
        %v1170 = vpack.c.b16 %v1156, %v1155
        %v1171 = vpack.c.b16 %v1158, %v1157
        %v1172 = vpack.c.b16 %v1160, %v1159
        %v1173 = vpack.c.b16 %v1162, %v1161
        %v1174 = vpack.c.b16 %v1164, %v1163
        %v1175 = vpack.c.b16 %v1166, %v1165
        %v1176 = vpack.c.b16 %v1168, %v1167
        %1185 = vmatpush.bf16.msra.mxu0 %v1176
        %1186 = vmatpush.bf16.msra.mxu0 %v1175
        %1187 = vmatpush.bf16.msra.mxu0 %v1174
        %1188 = vmatpush.bf16.msra.mxu0 %v1173
        %1189 = vmatpush.bf16.msra.mxu0 %v1172
        %1190 = vmatpush.bf16.msra.mxu0 %v1171
        %1191 = vmatpush.bf16.msra.mxu0 %v1170
        %1192 = vmatpush.bf16.msra.mxu0 %v1169
        %1193 = vmatmul.bf16.gmra.mxu0 %v1102
        %v1194 = vpop.f32.mrf.mxu0
        %v1195 = vadd.f32 0.0, %v1194
        %v1196 = vpop.f32.mrf.mxu0
        %v1197 = vadd.f32 0.0, %v1196
        %1198 = vdwg.mxu0
        %v1215 = vunpack.c.l.b16 %v1104
        %v1216 = vunpack.c.l.b16 %v1105
        %v1217 = vunpack.c.l.b16 %v1106
        %v1218 = vunpack.c.l.b16 %v1107
        %v1219 = vunpack.c.l.b16 %v1108
        %v1220 = vunpack.c.l.b16 %v1109
        %v1221 = vunpack.c.l.b16 %v1110
        %v1222 = vunpack.c.l.b16 %v1111
        %v1223 = vunpack.c.l.b16 %v1112
        %v1224 = vunpack.c.l.b16 %v1113
        %v1225 = vunpack.c.l.b16 %v1114
        %v1226 = vunpack.c.l.b16 %v1115
        %v1227 = vunpack.c.l.b16 %v1116
        %v1228 = vunpack.c.l.b16 %v1117
        %v1229 = vunpack.c.l.b16 %v1118
        %v1230 = vunpack.c.l.b16 %v1119
        %v1231 = vpack.c.b16 %v1216, %v1215
        %v1232 = vpack.c.b16 %v1218, %v1217
        %v1233 = vpack.c.b16 %v1220, %v1219
        %v1234 = vpack.c.b16 %v1222, %v1221
        %v1235 = vpack.c.b16 %v1224, %v1223
        %v1236 = vpack.c.b16 %v1226, %v1225
        %v1237 = vpack.c.b16 %v1228, %v1227
        %v1238 = vpack.c.b16 %v1230, %v1229
        %1247 = vmatpush.bf16.msra.mxu0 %v1238
        %1248 = vmatpush.bf16.msra.mxu0 %v1237
        %1249 = vmatpush.bf16.msra.mxu0 %v1236
        %1250 = vmatpush.bf16.msra.mxu0 %v1235
        %1251 = vmatpush.bf16.msra.mxu0 %v1234
        %1252 = vmatpush.bf16.msra.mxu0 %v1233
        %1253 = vmatpush.bf16.msra.mxu0 %v1232
        %1254 = vmatpush.bf16.msra.mxu0 %v1231
        %1255 = vmatmul.bf16.gmra.mxu0 %v1087
        %v1256 = vpop.f32.mrf.mxu0
        %v1257 = vadd.f32 %v1195, %v1256
        %v1258 = vpop.f32.mrf.mxu0
        %v1259 = vadd.f32 %v1197, %v1258
        %1260 = vdwg.mxu0
        %s1261 = scalar_lea.vmem [#allocation13], 2
        %v1262 = vld [vmem:[%s1261] sm:$0x1]
        %v1264 = vperm.slane %v1262, 0
        %v1266 = vadd.f32 %v1257, %v1264
        %v1267 = vadd.f32 %v1259, %v1264
        %v1268 = vadd.f32 %v1266, %v902
        %v1269 = vadd.f32 %v1267, %v903
        %v1270 = vmax.f32 %v1268, 0.0
        %v1271 = vmax.f32 %v1269, 0.0
        %v1272 = vpack.c.bf16 %v1271, %v1270
        %1273 = vmatpush.bf16.msra.mxu0 0
        %1274 = vmatpush.bf16.msra.mxu0 0
        %1275 = vmatpush.bf16.msra.mxu0 0
        %1276 = vmatpush.bf16.msra.mxu0 0
        %1277 = vmatpush.bf16.msra.mxu0 0
        %1278 = vmatpush.bf16.msra.mxu0 0
        %1279 = vmatpush.bf16.msra.mxu0 0
        %1280 = vmatpush.bf16.msra.mxu0 %v1272
        %1281 = vmatmul.bf16.gmra.mxu0 %v725
        %v1282 = vpop.f32.mrf.mxu0
        %v1283 = vadd.f32 0.0, %v1282
        %v1284 = vpop.f32.mrf.mxu0
        %v1285 = vadd.f32 0.0, %v1284
        %1286 = vdwg.mxu0
        %v1287 = vpack.c.bf16 %v1285, %v1283
        %s1288 = scalar_lea.vmem [#allocation10], 192
        %v1289 = vld [vmem:[%s1288] sm:$0xf]
        %v1290 = vld [vmem:[%s1288 + $0x4] sm:$0xf]
        %v1291 = vld [vmem:[%s1288 + $0x8] sm:$0xf]
        %v1292 = vld [vmem:[%s1288 + $0xc] sm:$0xf]
        %v1293 = vld [vmem:[%s1288 + $0x10] sm:$0xf]
        %v1294 = vld [vmem:[%s1288 + $0x14] sm:$0xf]
        %v1295 = vld [vmem:[%s1288 + $0x18] sm:$0xf]
        %v1296 = vld [vmem:[%s1288 + $0x1c] sm:$0xf]
        %v1297 = vld [vmem:[%s1288 + $0x20] sm:$0xf]
        %v1298 = vld [vmem:[%s1288 + $0x24] sm:$0xf]
        %v1299 = vld [vmem:[%s1288 + $0x28] sm:$0xf]
        %v1300 = vld [vmem:[%s1288 + $0x2c] sm:$0xf]
        %v1301 = vld [vmem:[%s1288 + $0x30] sm:$0xf]
        %v1302 = vld [vmem:[%s1288 + $0x34] sm:$0xf]
        %v1303 = vld [vmem:[%s1288 + $0x38] sm:$0xf]
        %v1304 = vld [vmem:[%s1288 + $0x3c] sm:$0xf]
        %s1305 = scalar_lea.vmem [#allocation11], 192
        %v1306 = vld [vmem:[%s1305] sm:$0xf]
        %v1307 = vld [vmem:[%s1305 + $0x4] sm:$0xf]
        %v1308 = vld [vmem:[%s1305 + $0x8] sm:$0xf]
        %v1309 = vld [vmem:[%s1305 + $0xc] sm:$0xf]
        %v1310 = vld [vmem:[%s1305 + $0x10] sm:$0xf]
        %v1311 = vld [vmem:[%s1305 + $0x14] sm:$0xf]
        %v1312 = vld [vmem:[%s1305 + $0x18] sm:$0xf]
        %v1313 = vld [vmem:[%s1305 + $0x1c] sm:$0xf]
        %v1314 = vld [vmem:[%s1305 + $0x20] sm:$0xf]
        %v1315 = vld [vmem:[%s1305 + $0x24] sm:$0xf]
        %v1316 = vld [vmem:[%s1305 + $0x28] sm:$0xf]
        %v1317 = vld [vmem:[%s1305 + $0x2c] sm:$0xf]
        %v1318 = vld [vmem:[%s1305 + $0x30] sm:$0xf]
        %v1319 = vld [vmem:[%s1305 + $0x34] sm:$0xf]
        %v1320 = vld [vmem:[%s1305 + $0x38] sm:$0xf]
        %v1321 = vld [vmem:[%s1305 + $0x3c] sm:$0xf]
        %v1338 = vunpack.c.l.b16 %v1306
        %v1339 = vunpack.c.l.b16 %v1307
        %v1340 = vunpack.c.l.b16 %v1308
        %v1341 = vunpack.c.l.b16 %v1309
        %v1342 = vunpack.c.l.b16 %v1310
        %v1343 = vunpack.c.l.b16 %v1311
        %v1344 = vunpack.c.l.b16 %v1312
        %v1345 = vunpack.c.l.b16 %v1313
        %v1346 = vunpack.c.l.b16 %v1314
        %v1347 = vunpack.c.l.b16 %v1315
        %v1348 = vunpack.c.l.b16 %v1316
        %v1349 = vunpack.c.l.b16 %v1317
        %v1350 = vunpack.c.l.b16 %v1318
        %v1351 = vunpack.c.l.b16 %v1319
        %v1352 = vunpack.c.l.b16 %v1320
        %v1353 = vunpack.c.l.b16 %v1321
        %v1354 = vpack.c.b16 %v1339, %v1338
        %v1355 = vpack.c.b16 %v1341, %v1340
        %v1356 = vpack.c.b16 %v1343, %v1342
        %v1357 = vpack.c.b16 %v1345, %v1344
        %v1358 = vpack.c.b16 %v1347, %v1346
        %v1359 = vpack.c.b16 %v1349, %v1348
        %v1360 = vpack.c.b16 %v1351, %v1350
        %v1361 = vpack.c.b16 %v1353, %v1352
        %1370 = vmatpush.bf16.msra.mxu0 %v1361
        %1371 = vmatpush.bf16.msra.mxu0 %v1360
        %1372 = vmatpush.bf16.msra.mxu0 %v1359
        %1373 = vmatpush.bf16.msra.mxu0 %v1358
        %1374 = vmatpush.bf16.msra.mxu0 %v1357
        %1375 = vmatpush.bf16.msra.mxu0 %v1356
        %1376 = vmatpush.bf16.msra.mxu0 %v1355
        %1377 = vmatpush.bf16.msra.mxu0 %v1354
        %1378 = vmatmul.bf16.gmra.mxu0 %v1287
        %v1379 = vpop.f32.mrf.mxu0
        %v1380 = vadd.f32 0.0, %v1379
        %v1381 = vpop.f32.mrf.mxu0
        %v1382 = vadd.f32 0.0, %v1381
        %1383 = vdwg.mxu0
        %v1400 = vunpack.c.l.b16 %v1289
        %v1401 = vunpack.c.l.b16 %v1290
        %v1402 = vunpack.c.l.b16 %v1291
        %v1403 = vunpack.c.l.b16 %v1292
        %v1404 = vunpack.c.l.b16 %v1293
        %v1405 = vunpack.c.l.b16 %v1294
        %v1406 = vunpack.c.l.b16 %v1295
        %v1407 = vunpack.c.l.b16 %v1296
        %v1408 = vunpack.c.l.b16 %v1297
        %v1409 = vunpack.c.l.b16 %v1298
        %v1410 = vunpack.c.l.b16 %v1299
        %v1411 = vunpack.c.l.b16 %v1300
        %v1412 = vunpack.c.l.b16 %v1301
        %v1413 = vunpack.c.l.b16 %v1302
        %v1414 = vunpack.c.l.b16 %v1303
        %v1415 = vunpack.c.l.b16 %v1304
        %v1416 = vpack.c.b16 %v1401, %v1400
        %v1417 = vpack.c.b16 %v1403, %v1402
        %v1418 = vpack.c.b16 %v1405, %v1404
        %v1419 = vpack.c.b16 %v1407, %v1406
        %v1420 = vpack.c.b16 %v1409, %v1408
        %v1421 = vpack.c.b16 %v1411, %v1410
        %v1422 = vpack.c.b16 %v1413, %v1412
        %v1423 = vpack.c.b16 %v1415, %v1414
        %1432 = vmatpush.bf16.msra.mxu0 %v1423
        %1433 = vmatpush.bf16.msra.mxu0 %v1422
        %1434 = vmatpush.bf16.msra.mxu0 %v1421
        %1435 = vmatpush.bf16.msra.mxu0 %v1420
        %1436 = vmatpush.bf16.msra.mxu0 %v1419
        %1437 = vmatpush.bf16.msra.mxu0 %v1418
        %1438 = vmatpush.bf16.msra.mxu0 %v1417
        %1439 = vmatpush.bf16.msra.mxu0 %v1416
        %1440 = vmatmul.bf16.gmra.mxu0 %v1272
        %v1441 = vpop.f32.mrf.mxu0
        %v1442 = vadd.f32 %v1380, %v1441
        %v1443 = vpop.f32.mrf.mxu0
        %v1444 = vadd.f32 %v1382, %v1443
        %1445 = vdwg.mxu0
        %s1446 = scalar_lea.vmem [#allocation13], 3
        %v1447 = vld [vmem:[%s1446] sm:$0x1]
        %v1449 = vperm.slane %v1447, 0
        %v1451 = vadd.f32 %v1442, %v1449
        %v1452 = vadd.f32 %v1444, %v1449
        %v1453 = vmax.f32 %v1451, 0.0
        %v1454 = vmax.f32 %v1452, 0.0
        %v1455 = vpack.c.bf16 %v1454, %v1453
        %1456 = vmatpush.bf16.msra.mxu0 0
        %1457 = vmatpush.bf16.msra.mxu0 0
        %1458 = vmatpush.bf16.msra.mxu0 0
        %1459 = vmatpush.bf16.msra.mxu0 0
        %1460 = vmatpush.bf16.msra.mxu0 0
        %1461 = vmatpush.bf16.msra.mxu0 0
        %1462 = vmatpush.bf16.msra.mxu0 0
        %1463 = vmatpush.bf16.msra.mxu0 %v1455
        %1464 = vmatmul.bf16.gmra.mxu0 %v725
        %v1465 = vpop.f32.mrf.mxu0
        %v1466 = vadd.f32 0.0, %v1465
        %v1467 = vpop.f32.mrf.mxu0
        %v1468 = vadd.f32 0.0, %v1467
        %1469 = vdwg.mxu0
        %v1470 = vpack.c.bf16 %v1468, %v1466
        %s1471 = scalar_lea.vmem [#allocation10], 256
        %v1472 = vld [vmem:[%s1471] sm:$0xf]
        %v1473 = vld [vmem:[%s1471 + $0x4] sm:$0xf]
        %v1474 = vld [vmem:[%s1471 + $0x8] sm:$0xf]
        %v1475 = vld [vmem:[%s1471 + $0xc] sm:$0xf]
        %v1476 = vld [vmem:[%s1471 + $0x10] sm:$0xf]
        %v1477 = vld [vmem:[%s1471 + $0x14] sm:$0xf]
        %v1478 = vld [vmem:[%s1471 + $0x18] sm:$0xf]
        %v1479 = vld [vmem:[%s1471 + $0x1c] sm:$0xf]
        %v1480 = vld [vmem:[%s1471 + $0x20] sm:$0xf]
        %v1481 = vld [vmem:[%s1471 + $0x24] sm:$0xf]
        %v1482 = vld [vmem:[%s1471 + $0x28] sm:$0xf]
        %v1483 = vld [vmem:[%s1471 + $0x2c] sm:$0xf]
        %v1484 = vld [vmem:[%s1471 + $0x30] sm:$0xf]
        %v1485 = vld [vmem:[%s1471 + $0x34] sm:$0xf]
        %v1486 = vld [vmem:[%s1471 + $0x38] sm:$0xf]
        %v1487 = vld [vmem:[%s1471 + $0x3c] sm:$0xf]
        %s1488 = scalar_lea.vmem [#allocation11], 256
        %v1489 = vld [vmem:[%s1488] sm:$0xf]
        %v1490 = vld [vmem:[%s1488 + $0x4] sm:$0xf]
        %v1491 = vld [vmem:[%s1488 + $0x8] sm:$0xf]
        %v1492 = vld [vmem:[%s1488 + $0xc] sm:$0xf]
        %v1493 = vld [vmem:[%s1488 + $0x10] sm:$0xf]
        %v1494 = vld [vmem:[%s1488 + $0x14] sm:$0xf]
        %v1495 = vld [vmem:[%s1488 + $0x18] sm:$0xf]
        %v1496 = vld [vmem:[%s1488 + $0x1c] sm:$0xf]
        %v1497 = vld [vmem:[%s1488 + $0x20] sm:$0xf]
        %v1498 = vld [vmem:[%s1488 + $0x24] sm:$0xf]
        %v1499 = vld [vmem:[%s1488 + $0x28] sm:$0xf]
        %v1500 = vld [vmem:[%s1488 + $0x2c] sm:$0xf]
        %v1501 = vld [vmem:[%s1488 + $0x30] sm:$0xf]
        %v1502 = vld [vmem:[%s1488 + $0x34] sm:$0xf]
        %v1503 = vld [vmem:[%s1488 + $0x38] sm:$0xf]
        %v1504 = vld [vmem:[%s1488 + $0x3c] sm:$0xf]
        %v1521 = vunpack.c.l.b16 %v1489
        %v1522 = vunpack.c.l.b16 %v1490
        %v1523 = vunpack.c.l.b16 %v1491
        %v1524 = vunpack.c.l.b16 %v1492
        %v1525 = vunpack.c.l.b16 %v1493
        %v1526 = vunpack.c.l.b16 %v1494
        %v1527 = vunpack.c.l.b16 %v1495
        %v1528 = vunpack.c.l.b16 %v1496
        %v1529 = vunpack.c.l.b16 %v1497
        %v1530 = vunpack.c.l.b16 %v1498
        %v1531 = vunpack.c.l.b16 %v1499
        %v1532 = vunpack.c.l.b16 %v1500
        %v1533 = vunpack.c.l.b16 %v1501
        %v1534 = vunpack.c.l.b16 %v1502
        %v1535 = vunpack.c.l.b16 %v1503
        %v1536 = vunpack.c.l.b16 %v1504
        %v1537 = vpack.c.b16 %v1522, %v1521
        %v1538 = vpack.c.b16 %v1524, %v1523
        %v1539 = vpack.c.b16 %v1526, %v1525
        %v1540 = vpack.c.b16 %v1528, %v1527
        %v1541 = vpack.c.b16 %v1530, %v1529
        %v1542 = vpack.c.b16 %v1532, %v1531
        %v1543 = vpack.c.b16 %v1534, %v1533
        %v1544 = vpack.c.b16 %v1536, %v1535
        %1553 = vmatpush.bf16.msra.mxu0 %v1544
        %1554 = vmatpush.bf16.msra.mxu0 %v1543
        %1555 = vmatpush.bf16.msra.mxu0 %v1542
        %1556 = vmatpush.bf16.msra.mxu0 %v1541
        %1557 = vmatpush.bf16.msra.mxu0 %v1540
        %1558 = vmatpush.bf16.msra.mxu0 %v1539
        %1559 = vmatpush.bf16.msra.mxu0 %v1538
        %1560 = vmatpush.bf16.msra.mxu0 %v1537
        %1561 = vmatmul.bf16.gmra.mxu0 %v1470
        %v1562 = vpop.f32.mrf.mxu0
        %v1563 = vadd.f32 0.0, %v1562
        %v1564 = vpop.f32.mrf.mxu0
        %v1565 = vadd.f32 0.0, %v1564
        %1566 = vdwg.mxu0
        %v1583 = vunpack.c.l.b16 %v1472
        %v1584 = vunpack.c.l.b16 %v1473
        %v1585 = vunpack.c.l.b16 %v1474
        %v1586 = vunpack.c.l.b16 %v1475
        %v1587 = vunpack.c.l.b16 %v1476
        %v1588 = vunpack.c.l.b16 %v1477
        %v1589 = vunpack.c.l.b16 %v1478
        %v1590 = vunpack.c.l.b16 %v1479
        %v1591 = vunpack.c.l.b16 %v1480
        %v1592 = vunpack.c.l.b16 %v1481
        %v1593 = vunpack.c.l.b16 %v1482
        %v1594 = vunpack.c.l.b16 %v1483
        %v1595 = vunpack.c.l.b16 %v1484
        %v1596 = vunpack.c.l.b16 %v1485
        %v1597 = vunpack.c.l.b16 %v1486
        %v1598 = vunpack.c.l.b16 %v1487
        %v1599 = vpack.c.b16 %v1584, %v1583
        %v1600 = vpack.c.b16 %v1586, %v1585
        %v1601 = vpack.c.b16 %v1588, %v1587
        %v1602 = vpack.c.b16 %v1590, %v1589
        %v1603 = vpack.c.b16 %v1592, %v1591
        %v1604 = vpack.c.b16 %v1594, %v1593
        %v1605 = vpack.c.b16 %v1596, %v1595
        %v1606 = vpack.c.b16 %v1598, %v1597
        %1615 = vmatpush.bf16.msra.mxu0 %v1606
        %1616 = vmatpush.bf16.msra.mxu0 %v1605
        %1617 = vmatpush.bf16.msra.mxu0 %v1604
        %1618 = vmatpush.bf16.msra.mxu0 %v1603
        %1619 = vmatpush.bf16.msra.mxu0 %v1602
        %1620 = vmatpush.bf16.msra.mxu0 %v1601
        %1621 = vmatpush.bf16.msra.mxu0 %v1600
        %1622 = vmatpush.bf16.msra.mxu0 %v1599
        %1623 = vmatmul.bf16.gmra.mxu0 %v1455
        %v1624 = vpop.f32.mrf.mxu0
        %v1625 = vadd.f32 %v1563, %v1624
        %v1626 = vpop.f32.mrf.mxu0
        %v1627 = vadd.f32 %v1565, %v1626
        %1628 = vdwg.mxu0
        %s1629 = scalar_lea.vmem [#allocation13], 4
        %v1630 = vld [vmem:[%s1629] sm:$0x1]
        %v1632 = vperm.slane %v1630, 0
        %v1634 = vadd.f32 %v1625, %v1632
        %v1635 = vadd.f32 %v1627, %v1632
        %v1636 = vadd.f32 %v1634, %v1270
        %v1637 = vadd.f32 %v1635, %v1271
        %v1638 = vmax.f32 %v1636, 0.0
        %v1639 = vmax.f32 %v1637, 0.0
        %v1640 = vpack.c.bf16 %v1639, %v1638
        %1641 = vmatpush.bf16.msra.mxu0 0
        %1642 = vmatpush.bf16.msra.mxu0 0
        %1643 = vmatpush.bf16.msra.mxu0 0
        %1644 = vmatpush.bf16.msra.mxu0 0
        %1645 = vmatpush.bf16.msra.mxu0 0
        %1646 = vmatpush.bf16.msra.mxu0 0
        %1647 = vmatpush.bf16.msra.mxu0 0
        %1648 = vmatpush.bf16.msra.mxu0 %v1640
        %1649 = vmatmul.bf16.gmra.mxu0 %v725
        %v1650 = vpop.f32.mrf.mxu0
        %v1651 = vadd.f32 0.0, %v1650
        %v1652 = vpop.f32.mrf.mxu0
        %v1653 = vadd.f32 0.0, %v1652
        %1654 = vdwg.mxu0
        %v1655 = vpack.c.bf16 %v1653, %v1651
        %s1656 = scalar_lea.vmem [#allocation10], 320
        %v1657 = vld [vmem:[%s1656] sm:$0xf]
        %v1658 = vld [vmem:[%s1656 + $0x4] sm:$0xf]
        %v1659 = vld [vmem:[%s1656 + $0x8] sm:$0xf]
        %v1660 = vld [vmem:[%s1656 + $0xc] sm:$0xf]
        %v1661 = vld [vmem:[%s1656 + $0x10] sm:$0xf]
        %v1662 = vld [vmem:[%s1656 + $0x14] sm:$0xf]
        %v1663 = vld [vmem:[%s1656 + $0x18] sm:$0xf]
        %v1664 = vld [vmem:[%s1656 + $0x1c] sm:$0xf]
        %v1665 = vld [vmem:[%s1656 + $0x20] sm:$0xf]
        %v1666 = vld [vmem:[%s1656 + $0x24] sm:$0xf]
        %v1667 = vld [vmem:[%s1656 + $0x28] sm:$0xf]
        %v1668 = vld [vmem:[%s1656 + $0x2c] sm:$0xf]
        %v1669 = vld [vmem:[%s1656 + $0x30] sm:$0xf]
        %v1670 = vld [vmem:[%s1656 + $0x34] sm:$0xf]
        %v1671 = vld [vmem:[%s1656 + $0x38] sm:$0xf]
        %v1672 = vld [vmem:[%s1656 + $0x3c] sm:$0xf]
        %s1673 = scalar_lea.vmem [#allocation11], 320
        %v1674 = vld [vmem:[%s1673] sm:$0xf]
        %v1675 = vld [vmem:[%s1673 + $0x4] sm:$0xf]
        %v1676 = vld [vmem:[%s1673 + $0x8] sm:$0xf]
        %v1677 = vld [vmem:[%s1673 + $0xc] sm:$0xf]
        %v1678 = vld [vmem:[%s1673 + $0x10] sm:$0xf]
        %v1679 = vld [vmem:[%s1673 + $0x14] sm:$0xf]
        %v1680 = vld [vmem:[%s1673 + $0x18] sm:$0xf]
        %v1681 = vld [vmem:[%s1673 + $0x1c] sm:$0xf]
        %v1682 = vld [vmem:[%s1673 + $0x20] sm:$0xf]
        %v1683 = vld [vmem:[%s1673 + $0x24] sm:$0xf]
        %v1684 = vld [vmem:[%s1673 + $0x28] sm:$0xf]
        %v1685 = vld [vmem:[%s1673 + $0x2c] sm:$0xf]
        %v1686 = vld [vmem:[%s1673 + $0x30] sm:$0xf]
        %v1687 = vld [vmem:[%s1673 + $0x34] sm:$0xf]
        %v1688 = vld [vmem:[%s1673 + $0x38] sm:$0xf]
        %v1689 = vld [vmem:[%s1673 + $0x3c] sm:$0xf]
        %v1706 = vunpack.c.l.b16 %v1674
        %v1707 = vunpack.c.l.b16 %v1675
        %v1708 = vunpack.c.l.b16 %v1676
        %v1709 = vunpack.c.l.b16 %v1677
        %v1710 = vunpack.c.l.b16 %v1678
        %v1711 = vunpack.c.l.b16 %v1679
        %v1712 = vunpack.c.l.b16 %v1680
        %v1713 = vunpack.c.l.b16 %v1681
        %v1714 = vunpack.c.l.b16 %v1682
        %v1715 = vunpack.c.l.b16 %v1683
        %v1716 = vunpack.c.l.b16 %v1684
        %v1717 = vunpack.c.l.b16 %v1685
        %v1718 = vunpack.c.l.b16 %v1686
        %v1719 = vunpack.c.l.b16 %v1687
        %v1720 = vunpack.c.l.b16 %v1688
        %v1721 = vunpack.c.l.b16 %v1689
        %v1722 = vpack.c.b16 %v1707, %v1706
        %v1723 = vpack.c.b16 %v1709, %v1708
        %v1724 = vpack.c.b16 %v1711, %v1710
        %v1725 = vpack.c.b16 %v1713, %v1712
        %v1726 = vpack.c.b16 %v1715, %v1714
        %v1727 = vpack.c.b16 %v1717, %v1716
        %v1728 = vpack.c.b16 %v1719, %v1718
        %v1729 = vpack.c.b16 %v1721, %v1720
        %1738 = vmatpush.bf16.msra.mxu0 %v1729
        %1739 = vmatpush.bf16.msra.mxu0 %v1728
        %1740 = vmatpush.bf16.msra.mxu0 %v1727
        %1741 = vmatpush.bf16.msra.mxu0 %v1726
        %1742 = vmatpush.bf16.msra.mxu0 %v1725
        %1743 = vmatpush.bf16.msra.mxu0 %v1724
        %1744 = vmatpush.bf16.msra.mxu0 %v1723
        %1745 = vmatpush.bf16.msra.mxu0 %v1722
        %1746 = vmatmul.bf16.gmra.mxu0 %v1655
        %v1747 = vpop.f32.mrf.mxu0
        %v1748 = vadd.f32 0.0, %v1747
        %v1749 = vpop.f32.mrf.mxu0
        %v1750 = vadd.f32 0.0, %v1749
        %1751 = vdwg.mxu0
        %v1768 = vunpack.c.l.b16 %v1657
        %v1769 = vunpack.c.l.b16 %v1658
        %v1770 = vunpack.c.l.b16 %v1659
        %v1771 = vunpack.c.l.b16 %v1660
        %v1772 = vunpack.c.l.b16 %v1661
        %v1773 = vunpack.c.l.b16 %v1662
        %v1774 = vunpack.c.l.b16 %v1663
        %v1775 = vunpack.c.l.b16 %v1664
        %v1776 = vunpack.c.l.b16 %v1665
        %v1777 = vunpack.c.l.b16 %v1666
        %v1778 = vunpack.c.l.b16 %v1667
        %v1779 = vunpack.c.l.b16 %v1668
        %v1780 = vunpack.c.l.b16 %v1669
        %v1781 = vunpack.c.l.b16 %v1670
        %v1782 = vunpack.c.l.b16 %v1671
        %v1783 = vunpack.c.l.b16 %v1672
        %v1784 = vpack.c.b16 %v1769, %v1768
        %v1785 = vpack.c.b16 %v1771, %v1770
        %v1786 = vpack.c.b16 %v1773, %v1772
        %v1787 = vpack.c.b16 %v1775, %v1774
        %v1788 = vpack.c.b16 %v1777, %v1776
        %v1789 = vpack.c.b16 %v1779, %v1778
        %v1790 = vpack.c.b16 %v1781, %v1780
        %v1791 = vpack.c.b16 %v1783, %v1782
        %1800 = vmatpush.bf16.msra.mxu0 %v1791
        %1801 = vmatpush.bf16.msra.mxu0 %v1790
        %1802 = vmatpush.bf16.msra.mxu0 %v1789
        %1803 = vmatpush.bf16.msra.mxu0 %v1788
        %1804 = vmatpush.bf16.msra.mxu0 %v1787
        %1805 = vmatpush.bf16.msra.mxu0 %v1786
        %1806 = vmatpush.bf16.msra.mxu0 %v1785
        %1807 = vmatpush.bf16.msra.mxu0 %v1784
        %1808 = vmatmul.bf16.gmra.mxu0 %v1640
        %v1809 = vpop.f32.mrf.mxu0
        %v1810 = vadd.f32 %v1748, %v1809
        %v1811 = vpop.f32.mrf.mxu0
        %v1812 = vadd.f32 %v1750, %v1811
        %1813 = vdwg.mxu0
        %s1814 = scalar_lea.vmem [#allocation13], 5
        %v1815 = vld [vmem:[%s1814] sm:$0x1]
        %v1817 = vperm.slane %v1815, 0
        %v1819 = vadd.f32 %v1810, %v1817
        %v1820 = vadd.f32 %v1812, %v1817
        %v1821 = vmax.f32 %v1819, 0.0
        %v1822 = vmax.f32 %v1820, 0.0
        %v1823 = vpack.c.bf16 %v1822, %v1821
        %1824 = vmatpush.bf16.msra.mxu0 0
        %1825 = vmatpush.bf16.msra.mxu0 0
        %1826 = vmatpush.bf16.msra.mxu0 0
        %1827 = vmatpush.bf16.msra.mxu0 0
        %1828 = vmatpush.bf16.msra.mxu0 0
        %1829 = vmatpush.bf16.msra.mxu0 0
        %1830 = vmatpush.bf16.msra.mxu0 0
        %1831 = vmatpush.bf16.msra.mxu0 %v1823
        %1832 = vmatmul.bf16.gmra.mxu0 %v725
        %v1833 = vpop.f32.mrf.mxu0
        %v1834 = vadd.f32 0.0, %v1833
        %v1835 = vpop.f32.mrf.mxu0
        %v1836 = vadd.f32 0.0, %v1835
        %1837 = vdwg.mxu0
        %v1838 = vpack.c.bf16 %v1836, %v1834
        %s1839 = scalar_lea.vmem [#allocation10], 384
        %v1840 = vld [vmem:[%s1839] sm:$0xf]
        %v1841 = vld [vmem:[%s1839 + $0x4] sm:$0xf]
        %v1842 = vld [vmem:[%s1839 + $0x8] sm:$0xf]
        %v1843 = vld [vmem:[%s1839 + $0xc] sm:$0xf]
        %v1844 = vld [vmem:[%s1839 + $0x10] sm:$0xf]
        %v1845 = vld [vmem:[%s1839 + $0x14] sm:$0xf]
        %v1846 = vld [vmem:[%s1839 + $0x18] sm:$0xf]
        %v1847 = vld [vmem:[%s1839 + $0x1c] sm:$0xf]
        %v1848 = vld [vmem:[%s1839 + $0x20] sm:$0xf]
        %v1849 = vld [vmem:[%s1839 + $0x24] sm:$0xf]
        %v1850 = vld [vmem:[%s1839 + $0x28] sm:$0xf]
        %v1851 = vld [vmem:[%s1839 + $0x2c] sm:$0xf]
        %v1852 = vld [vmem:[%s1839 + $0x30] sm:$0xf]
        %v1853 = vld [vmem:[%s1839 + $0x34] sm:$0xf]
        %v1854 = vld [vmem:[%s1839 + $0x38] sm:$0xf]
        %v1855 = vld [vmem:[%s1839 + $0x3c] sm:$0xf]
        %s1856 = scalar_lea.vmem [#allocation11], 384
        %v1857 = vld [vmem:[%s1856] sm:$0xf]
        %v1858 = vld [vmem:[%s1856 + $0x4] sm:$0xf]
        %v1859 = vld [vmem:[%s1856 + $0x8] sm:$0xf]
        %v1860 = vld [vmem:[%s1856 + $0xc] sm:$0xf]
        %v1861 = vld [vmem:[%s1856 + $0x10] sm:$0xf]
        %v1862 = vld [vmem:[%s1856 + $0x14] sm:$0xf]
        %v1863 = vld [vmem:[%s1856 + $0x18] sm:$0xf]
        %v1864 = vld [vmem:[%s1856 + $0x1c] sm:$0xf]
        %v1865 = vld [vmem:[%s1856 + $0x20] sm:$0xf]
        %v1866 = vld [vmem:[%s1856 + $0x24] sm:$0xf]
        %v1867 = vld [vmem:[%s1856 + $0x28] sm:$0xf]
        %v1868 = vld [vmem:[%s1856 + $0x2c] sm:$0xf]
        %v1869 = vld [vmem:[%s1856 + $0x30] sm:$0xf]
        %v1870 = vld [vmem:[%s1856 + $0x34] sm:$0xf]
        %v1871 = vld [vmem:[%s1856 + $0x38] sm:$0xf]
        %v1872 = vld [vmem:[%s1856 + $0x3c] sm:$0xf]
        %v1889 = vunpack.c.l.b16 %v1857
        %v1890 = vunpack.c.l.b16 %v1858
        %v1891 = vunpack.c.l.b16 %v1859
        %v1892 = vunpack.c.l.b16 %v1860
        %v1893 = vunpack.c.l.b16 %v1861
        %v1894 = vunpack.c.l.b16 %v1862
        %v1895 = vunpack.c.l.b16 %v1863
        %v1896 = vunpack.c.l.b16 %v1864
        %v1897 = vunpack.c.l.b16 %v1865
        %v1898 = vunpack.c.l.b16 %v1866
        %v1899 = vunpack.c.l.b16 %v1867
        %v1900 = vunpack.c.l.b16 %v1868
        %v1901 = vunpack.c.l.b16 %v1869
        %v1902 = vunpack.c.l.b16 %v1870
        %v1903 = vunpack.c.l.b16 %v1871
        %v1904 = vunpack.c.l.b16 %v1872
        %v1905 = vpack.c.b16 %v1890, %v1889
        %v1906 = vpack.c.b16 %v1892, %v1891
        %v1907 = vpack.c.b16 %v1894, %v1893
        %v1908 = vpack.c.b16 %v1896, %v1895
        %v1909 = vpack.c.b16 %v1898, %v1897
        %v1910 = vpack.c.b16 %v1900, %v1899
        %v1911 = vpack.c.b16 %v1902, %v1901
        %v1912 = vpack.c.b16 %v1904, %v1903
        %1921 = vmatpush.bf16.msra.mxu0 %v1912
        %1922 = vmatpush.bf16.msra.mxu0 %v1911
        %1923 = vmatpush.bf16.msra.mxu0 %v1910
        %1924 = vmatpush.bf16.msra.mxu0 %v1909
        %1925 = vmatpush.bf16.msra.mxu0 %v1908
        %1926 = vmatpush.bf16.msra.mxu0 %v1907
        %1927 = vmatpush.bf16.msra.mxu0 %v1906
        %1928 = vmatpush.bf16.msra.mxu0 %v1905
        %1929 = vmatmul.bf16.gmra.mxu0 %v1838
        %v1930 = vpop.f32.mrf.mxu0
        %v1931 = vadd.f32 0.0, %v1930
        %v1932 = vpop.f32.mrf.mxu0
        %v1933 = vadd.f32 0.0, %v1932
        %1934 = vdwg.mxu0
        %v1951 = vunpack.c.l.b16 %v1840
        %v1952 = vunpack.c.l.b16 %v1841
        %v1953 = vunpack.c.l.b16 %v1842
        %v1954 = vunpack.c.l.b16 %v1843
        %v1955 = vunpack.c.l.b16 %v1844
        %v1956 = vunpack.c.l.b16 %v1845
        %v1957 = vunpack.c.l.b16 %v1846
        %v1958 = vunpack.c.l.b16 %v1847
        %v1959 = vunpack.c.l.b16 %v1848
        %v1960 = vunpack.c.l.b16 %v1849
        %v1961 = vunpack.c.l.b16 %v1850
        %v1962 = vunpack.c.l.b16 %v1851
        %v1963 = vunpack.c.l.b16 %v1852
        %v1964 = vunpack.c.l.b16 %v1853
        %v1965 = vunpack.c.l.b16 %v1854
        %v1966 = vunpack.c.l.b16 %v1855
        %v1967 = vpack.c.b16 %v1952, %v1951
        %v1968 = vpack.c.b16 %v1954, %v1953
        %v1969 = vpack.c.b16 %v1956, %v1955
        %v1970 = vpack.c.b16 %v1958, %v1957
        %v1971 = vpack.c.b16 %v1960, %v1959
        %v1972 = vpack.c.b16 %v1962, %v1961
        %v1973 = vpack.c.b16 %v1964, %v1963
        %v1974 = vpack.c.b16 %v1966, %v1965
        %1983 = vmatpush.bf16.msra.mxu0 %v1974
        %1984 = vmatpush.bf16.msra.mxu0 %v1973
        %1985 = vmatpush.bf16.msra.mxu0 %v1972
        %1986 = vmatpush.bf16.msra.mxu0 %v1971
        %1987 = vmatpush.bf16.msra.mxu0 %v1970
        %1988 = vmatpush.bf16.msra.mxu0 %v1969
        %1989 = vmatpush.bf16.msra.mxu0 %v1968
        %1990 = vmatpush.bf16.msra.mxu0 %v1967
        %1991 = vmatmul.bf16.gmra.mxu0 %v1823
        %v1992 = vpop.f32.mrf.mxu0
        %v1993 = vadd.f32 %v1931, %v1992
        %v1994 = vpop.f32.mrf.mxu0
        %v1995 = vadd.f32 %v1933, %v1994
        %1996 = vdwg.mxu0
        %s1997 = scalar_lea.vmem [#allocation13], 6
        %v1998 = vld [vmem:[%s1997] sm:$0x1]
        %v2000 = vperm.slane %v1998, 0
        %v2002 = vadd.f32 %v1993, %v2000
        %v2003 = vadd.f32 %v1995, %v2000
        %v2004 = vadd.f32 %v2002, %v1638
        %v2005 = vadd.f32 %v2003, %v1639
        %v2006 = vmax.f32 %v2004, 0.0
        %v2007 = vmax.f32 %v2005, 0.0
        %v2008 = vpack.c.bf16 %v2007, %v2006
        %2009 = vmatpush.bf16.msra.mxu0 0
        %2010 = vmatpush.bf16.msra.mxu0 0
        %2011 = vmatpush.bf16.msra.mxu0 0
        %2012 = vmatpush.bf16.msra.mxu0 0
        %2013 = vmatpush.bf16.msra.mxu0 0
        %2014 = vmatpush.bf16.msra.mxu0 0
        %2015 = vmatpush.bf16.msra.mxu0 0
        %2016 = vmatpush.bf16.msra.mxu0 %v2008
        %2017 = vmatmul.bf16.gmra.mxu0 %v725
        %v2018 = vpop.f32.mrf.mxu0
        %v2019 = vadd.f32 0.0, %v2018
        %v2020 = vpop.f32.mrf.mxu0
        %v2021 = vadd.f32 0.0, %v2020
        %2022 = vdwg.mxu0
        %v2023 = vpack.c.bf16 %v2021, %v2019
        %s2024 = scalar_lea.vmem [#allocation10], 448
        %v2025 = vld [vmem:[%s2024] sm:$0xf]
        %v2026 = vld [vmem:[%s2024 + $0x4] sm:$0xf]
        %v2027 = vld [vmem:[%s2024 + $0x8] sm:$0xf]
        %v2028 = vld [vmem:[%s2024 + $0xc] sm:$0xf]
        %v2029 = vld [vmem:[%s2024 + $0x10] sm:$0xf]
        %v2030 = vld [vmem:[%s2024 + $0x14] sm:$0xf]
        %v2031 = vld [vmem:[%s2024 + $0x18] sm:$0xf]
        %v2032 = vld [vmem:[%s2024 + $0x1c] sm:$0xf]
        %v2033 = vld [vmem:[%s2024 + $0x20] sm:$0xf]
        %v2034 = vld [vmem:[%s2024 + $0x24] sm:$0xf]
        %v2035 = vld [vmem:[%s2024 + $0x28] sm:$0xf]
        %v2036 = vld [vmem:[%s2024 + $0x2c] sm:$0xf]
        %v2037 = vld [vmem:[%s2024 + $0x30] sm:$0xf]
        %v2038 = vld [vmem:[%s2024 + $0x34] sm:$0xf]
        %v2039 = vld [vmem:[%s2024 + $0x38] sm:$0xf]
        %v2040 = vld [vmem:[%s2024 + $0x3c] sm:$0xf]
        %s2041 = scalar_lea.vmem [#allocation11], 448
        %v2042 = vld [vmem:[%s2041] sm:$0xf]
        %v2043 = vld [vmem:[%s2041 + $0x4] sm:$0xf]
        %v2044 = vld [vmem:[%s2041 + $0x8] sm:$0xf]
        %v2045 = vld [vmem:[%s2041 + $0xc] sm:$0xf]
        %v2046 = vld [vmem:[%s2041 + $0x10] sm:$0xf]
        %v2047 = vld [vmem:[%s2041 + $0x14] sm:$0xf]
        %v2048 = vld [vmem:[%s2041 + $0x18] sm:$0xf]
        %v2049 = vld [vmem:[%s2041 + $0x1c] sm:$0xf]
        %v2050 = vld [vmem:[%s2041 + $0x20] sm:$0xf]
        %v2051 = vld [vmem:[%s2041 + $0x24] sm:$0xf]
        %v2052 = vld [vmem:[%s2041 + $0x28] sm:$0xf]
        %v2053 = vld [vmem:[%s2041 + $0x2c] sm:$0xf]
        %v2054 = vld [vmem:[%s2041 + $0x30] sm:$0xf]
        %v2055 = vld [vmem:[%s2041 + $0x34] sm:$0xf]
        %v2056 = vld [vmem:[%s2041 + $0x38] sm:$0xf]
        %v2057 = vld [vmem:[%s2041 + $0x3c] sm:$0xf]
        %v2074 = vunpack.c.l.b16 %v2042
        %v2075 = vunpack.c.l.b16 %v2043
        %v2076 = vunpack.c.l.b16 %v2044
        %v2077 = vunpack.c.l.b16 %v2045
        %v2078 = vunpack.c.l.b16 %v2046
        %v2079 = vunpack.c.l.b16 %v2047
        %v2080 = vunpack.c.l.b16 %v2048
        %v2081 = vunpack.c.l.b16 %v2049
        %v2082 = vunpack.c.l.b16 %v2050
        %v2083 = vunpack.c.l.b16 %v2051
        %v2084 = vunpack.c.l.b16 %v2052
        %v2085 = vunpack.c.l.b16 %v2053
        %v2086 = vunpack.c.l.b16 %v2054
        %v2087 = vunpack.c.l.b16 %v2055
        %v2088 = vunpack.c.l.b16 %v2056
        %v2089 = vunpack.c.l.b16 %v2057
        %v2090 = vpack.c.b16 %v2075, %v2074
        %v2091 = vpack.c.b16 %v2077, %v2076
        %v2092 = vpack.c.b16 %v2079, %v2078
        %v2093 = vpack.c.b16 %v2081, %v2080
        %v2094 = vpack.c.b16 %v2083, %v2082
        %v2095 = vpack.c.b16 %v2085, %v2084
        %v2096 = vpack.c.b16 %v2087, %v2086
        %v2097 = vpack.c.b16 %v2089, %v2088
        %2106 = vmatpush.bf16.msra.mxu0 %v2097
        %2107 = vmatpush.bf16.msra.mxu0 %v2096
        %2108 = vmatpush.bf16.msra.mxu0 %v2095
        %2109 = vmatpush.bf16.msra.mxu0 %v2094
        %2110 = vmatpush.bf16.msra.mxu0 %v2093
        %2111 = vmatpush.bf16.msra.mxu0 %v2092
        %2112 = vmatpush.bf16.msra.mxu0 %v2091
        %2113 = vmatpush.bf16.msra.mxu0 %v2090
        %2114 = vmatmul.bf16.gmra.mxu0 %v2023
        %v2115 = vpop.f32.mrf.mxu0
        %v2116 = vadd.f32 0.0, %v2115
        %v2117 = vpop.f32.mrf.mxu0
        %v2118 = vadd.f32 0.0, %v2117
        %2119 = vdwg.mxu0
        %v2136 = vunpack.c.l.b16 %v2025
        %v2137 = vunpack.c.l.b16 %v2026
        %v2138 = vunpack.c.l.b16 %v2027
        %v2139 = vunpack.c.l.b16 %v2028
        %v2140 = vunpack.c.l.b16 %v2029
        %v2141 = vunpack.c.l.b16 %v2030
        %v2142 = vunpack.c.l.b16 %v2031
        %v2143 = vunpack.c.l.b16 %v2032
        %v2144 = vunpack.c.l.b16 %v2033
        %v2145 = vunpack.c.l.b16 %v2034
        %v2146 = vunpack.c.l.b16 %v2035
        %v2147 = vunpack.c.l.b16 %v2036
        %v2148 = vunpack.c.l.b16 %v2037
        %v2149 = vunpack.c.l.b16 %v2038
        %v2150 = vunpack.c.l.b16 %v2039
        %v2151 = vunpack.c.l.b16 %v2040
        %v2152 = vpack.c.b16 %v2137, %v2136
        %v2153 = vpack.c.b16 %v2139, %v2138
        %v2154 = vpack.c.b16 %v2141, %v2140
        %v2155 = vpack.c.b16 %v2143, %v2142
        %v2156 = vpack.c.b16 %v2145, %v2144
        %v2157 = vpack.c.b16 %v2147, %v2146
        %v2158 = vpack.c.b16 %v2149, %v2148
        %v2159 = vpack.c.b16 %v2151, %v2150
        %2168 = vmatpush.bf16.msra.mxu0 %v2159
        %2169 = vmatpush.bf16.msra.mxu0 %v2158
        %2170 = vmatpush.bf16.msra.mxu0 %v2157
        %2171 = vmatpush.bf16.msra.mxu0 %v2156
        %2172 = vmatpush.bf16.msra.mxu0 %v2155
        %2173 = vmatpush.bf16.msra.mxu0 %v2154
        %2174 = vmatpush.bf16.msra.mxu0 %v2153
        %2175 = vmatpush.bf16.msra.mxu0 %v2152
        %2176 = vmatmul.bf16.gmra.mxu0 %v2008
        %v2177 = vpop.f32.mrf.mxu0
        %v2178 = vadd.f32 %v2116, %v2177
        %v2179 = vpop.f32.mrf.mxu0
        %v2180 = vadd.f32 %v2118, %v2179
        %2181 = vdwg.mxu0
        %s2182 = scalar_lea.vmem [#allocation13], 7
        %v2183 = vld [vmem:[%s2182] sm:$0x1]
        %v2185 = vperm.slane %v2183, 0
        %v2187 = vadd.f32 %v2178, %v2185
        %v2188 = vadd.f32 %v2180, %v2185
        %v2189 = vmax.f32 %v2187, 0.0
        %v2190 = vmax.f32 %v2188, 0.0
        %v2191 = vpack.c.bf16 %v2190, %v2189
        %2192 = vmatpush.bf16.msra.mxu0 0
        %2193 = vmatpush.bf16.msra.mxu0 0
        %2194 = vmatpush.bf16.msra.mxu0 0
        %2195 = vmatpush.bf16.msra.mxu0 0
        %2196 = vmatpush.bf16.msra.mxu0 0
        %2197 = vmatpush.bf16.msra.mxu0 0
        %2198 = vmatpush.bf16.msra.mxu0 0
        %2199 = vmatpush.bf16.msra.mxu0 %v2191
        %2200 = vmatmul.bf16.gmra.mxu0 %v725
        %v2201 = vpop.f32.mrf.mxu0
        %v2202 = vadd.f32 0.0, %v2201
        %v2203 = vpop.f32.mrf.mxu0
        %v2204 = vadd.f32 0.0, %v2203
        %2205 = vdwg.mxu0
        %v2206 = vpack.c.bf16 %v2204, %v2202
        %s2207 = scalar_lea.vmem [#allocation10], 512
        %v2208 = vld [vmem:[%s2207] sm:$0xf]
        %v2209 = vld [vmem:[%s2207 + $0x4] sm:$0xf]
        %v2210 = vld [vmem:[%s2207 + $0x8] sm:$0xf]
        %v2211 = vld [vmem:[%s2207 + $0xc] sm:$0xf]
        %v2212 = vld [vmem:[%s2207 + $0x10] sm:$0xf]
        %v2213 = vld [vmem:[%s2207 + $0x14] sm:$0xf]
        %v2214 = vld [vmem:[%s2207 + $0x18] sm:$0xf]
        %v2215 = vld [vmem:[%s2207 + $0x1c] sm:$0xf]
        %v2216 = vld [vmem:[%s2207 + $0x20] sm:$0xf]
        %v2217 = vld [vmem:[%s2207 + $0x24] sm:$0xf]
        %v2218 = vld [vmem:[%s2207 + $0x28] sm:$0xf]
        %v2219 = vld [vmem:[%s2207 + $0x2c] sm:$0xf]
        %v2220 = vld [vmem:[%s2207 + $0x30] sm:$0xf]
        %v2221 = vld [vmem:[%s2207 + $0x34] sm:$0xf]
        %v2222 = vld [vmem:[%s2207 + $0x38] sm:$0xf]
        %v2223 = vld [vmem:[%s2207 + $0x3c] sm:$0xf]
        %s2224 = scalar_lea.vmem [#allocation11], 512
        %v2225 = vld [vmem:[%s2224] sm:$0xf]
        %v2226 = vld [vmem:[%s2224 + $0x4] sm:$0xf]
        %v2227 = vld [vmem:[%s2224 + $0x8] sm:$0xf]
        %v2228 = vld [vmem:[%s2224 + $0xc] sm:$0xf]
        %v2229 = vld [vmem:[%s2224 + $0x10] sm:$0xf]
        %v2230 = vld [vmem:[%s2224 + $0x14] sm:$0xf]
        %v2231 = vld [vmem:[%s2224 + $0x18] sm:$0xf]
        %v2232 = vld [vmem:[%s2224 + $0x1c] sm:$0xf]
        %v2233 = vld [vmem:[%s2224 + $0x20] sm:$0xf]
        %v2234 = vld [vmem:[%s2224 + $0x24] sm:$0xf]
        %v2235 = vld [vmem:[%s2224 + $0x28] sm:$0xf]
        %v2236 = vld [vmem:[%s2224 + $0x2c] sm:$0xf]
        %v2237 = vld [vmem:[%s2224 + $0x30] sm:$0xf]
        %v2238 = vld [vmem:[%s2224 + $0x34] sm:$0xf]
        %v2239 = vld [vmem:[%s2224 + $0x38] sm:$0xf]
        %v2240 = vld [vmem:[%s2224 + $0x3c] sm:$0xf]
        %v2257 = vunpack.c.l.b16 %v2225
        %v2258 = vunpack.c.l.b16 %v2226
        %v2259 = vunpack.c.l.b16 %v2227
        %v2260 = vunpack.c.l.b16 %v2228
        %v2261 = vunpack.c.l.b16 %v2229
        %v2262 = vunpack.c.l.b16 %v2230
        %v2263 = vunpack.c.l.b16 %v2231
        %v2264 = vunpack.c.l.b16 %v2232
        %v2265 = vunpack.c.l.b16 %v2233
        %v2266 = vunpack.c.l.b16 %v2234
        %v2267 = vunpack.c.l.b16 %v2235
        %v2268 = vunpack.c.l.b16 %v2236
        %v2269 = vunpack.c.l.b16 %v2237
        %v2270 = vunpack.c.l.b16 %v2238
        %v2271 = vunpack.c.l.b16 %v2239
        %v2272 = vunpack.c.l.b16 %v2240
        %v2273 = vpack.c.b16 %v2258, %v2257
        %v2274 = vpack.c.b16 %v2260, %v2259
        %v2275 = vpack.c.b16 %v2262, %v2261
        %v2276 = vpack.c.b16 %v2264, %v2263
        %v2277 = vpack.c.b16 %v2266, %v2265
        %v2278 = vpack.c.b16 %v2268, %v2267
        %v2279 = vpack.c.b16 %v2270, %v2269
        %v2280 = vpack.c.b16 %v2272, %v2271
        %2289 = vmatpush.bf16.msra.mxu0 %v2280
        %2290 = vmatpush.bf16.msra.mxu0 %v2279
        %2291 = vmatpush.bf16.msra.mxu0 %v2278
        %2292 = vmatpush.bf16.msra.mxu0 %v2277
        %2293 = vmatpush.bf16.msra.mxu0 %v2276
        %2294 = vmatpush.bf16.msra.mxu0 %v2275
        %2295 = vmatpush.bf16.msra.mxu0 %v2274
        %2296 = vmatpush.bf16.msra.mxu0 %v2273
        %2297 = vmatmul.bf16.gmra.mxu0 %v2206
        %v2298 = vpop.f32.mrf.mxu0
        %v2299 = vadd.f32 0.0, %v2298
        %v2300 = vpop.f32.mrf.mxu0
        %v2301 = vadd.f32 0.0, %v2300
        %2302 = vdwg.mxu0
        %v2319 = vunpack.c.l.b16 %v2208
        %v2320 = vunpack.c.l.b16 %v2209
        %v2321 = vunpack.c.l.b16 %v2210
        %v2322 = vunpack.c.l.b16 %v2211
        %v2323 = vunpack.c.l.b16 %v2212
        %v2324 = vunpack.c.l.b16 %v2213
        %v2325 = vunpack.c.l.b16 %v2214
        %v2326 = vunpack.c.l.b16 %v2215
        %v2327 = vunpack.c.l.b16 %v2216
        %v2328 = vunpack.c.l.b16 %v2217
        %v2329 = vunpack.c.l.b16 %v2218
        %v2330 = vunpack.c.l.b16 %v2219
        %v2331 = vunpack.c.l.b16 %v2220
        %v2332 = vunpack.c.l.b16 %v2221
        %v2333 = vunpack.c.l.b16 %v2222
        %v2334 = vunpack.c.l.b16 %v2223
        %v2335 = vpack.c.b16 %v2320, %v2319
        %v2336 = vpack.c.b16 %v2322, %v2321
        %v2337 = vpack.c.b16 %v2324, %v2323
        %v2338 = vpack.c.b16 %v2326, %v2325
        %v2339 = vpack.c.b16 %v2328, %v2327
        %v2340 = vpack.c.b16 %v2330, %v2329
        %v2341 = vpack.c.b16 %v2332, %v2331
        %v2342 = vpack.c.b16 %v2334, %v2333
        %2351 = vmatpush.bf16.msra.mxu0 %v2342
        %2352 = vmatpush.bf16.msra.mxu0 %v2341
        %2353 = vmatpush.bf16.msra.mxu0 %v2340
        %2354 = vmatpush.bf16.msra.mxu0 %v2339
        %2355 = vmatpush.bf16.msra.mxu0 %v2338
        %2356 = vmatpush.bf16.msra.mxu0 %v2337
        %2357 = vmatpush.bf16.msra.mxu0 %v2336
        %2358 = vmatpush.bf16.msra.mxu0 %v2335
        %2359 = vmatmul.bf16.gmra.mxu0 %v2191
        %v2360 = vpop.f32.mrf.mxu0
        %v2361 = vadd.f32 %v2299, %v2360
        %v2362 = vpop.f32.mrf.mxu0
        %v2363 = vadd.f32 %v2301, %v2362
        %2364 = vdwg.mxu0
        %s2365 = scalar_lea.vmem [#allocation13], 8
        %v2366 = vld [vmem:[%s2365] sm:$0x1]
        %v2368 = vperm.slane %v2366, 0
        %v2370 = vadd.f32 %v2361, %v2368
        %v2371 = vadd.f32 %v2363, %v2368
        %v2372 = vadd.f32 %v2370, %v2006
        %v2373 = vadd.f32 %v2371, %v2007
        %v2374 = vmax.f32 %v2372, 0.0
        %v2375 = vmax.f32 %v2373, 0.0
        %v2376 = vpack.c.bf16 %v2375, %v2374
        %2377 = vmatpush.bf16.msra.mxu0 0
        %2378 = vmatpush.bf16.msra.mxu0 0
        %2379 = vmatpush.bf16.msra.mxu0 0
        %2380 = vmatpush.bf16.msra.mxu0 0
        %2381 = vmatpush.bf16.msra.mxu0 0
        %2382 = vmatpush.bf16.msra.mxu0 0
        %2383 = vmatpush.bf16.msra.mxu0 0
        %2384 = vmatpush.bf16.msra.mxu0 %v2376
        %2385 = vmatmul.bf16.gmra.mxu0 %v725
        %v2386 = vpop.f32.mrf.mxu0
        %v2387 = vadd.f32 0.0, %v2386
        %v2388 = vpop.f32.mrf.mxu0
        %v2389 = vadd.f32 0.0, %v2388
        %2390 = vdwg.mxu0
        %v2391 = vpack.c.bf16 %v2389, %v2387
        %s2392 = scalar_lea.vmem [#allocation10], 576
        %v2393 = vld [vmem:[%s2392] sm:$0xf]
        %v2394 = vld [vmem:[%s2392 + $0x4] sm:$0xf]
        %v2395 = vld [vmem:[%s2392 + $0x8] sm:$0xf]
        %v2396 = vld [vmem:[%s2392 + $0xc] sm:$0xf]
        %v2397 = vld [vmem:[%s2392 + $0x10] sm:$0xf]
        %v2398 = vld [vmem:[%s2392 + $0x14] sm:$0xf]
        %v2399 = vld [vmem:[%s2392 + $0x18] sm:$0xf]
        %v2400 = vld [vmem:[%s2392 + $0x1c] sm:$0xf]
        %v2401 = vld [vmem:[%s2392 + $0x20] sm:$0xf]
        %v2402 = vld [vmem:[%s2392 + $0x24] sm:$0xf]
        %v2403 = vld [vmem:[%s2392 + $0x28] sm:$0xf]
        %v2404 = vld [vmem:[%s2392 + $0x2c] sm:$0xf]
        %v2405 = vld [vmem:[%s2392 + $0x30] sm:$0xf]
        %v2406 = vld [vmem:[%s2392 + $0x34] sm:$0xf]
        %v2407 = vld [vmem:[%s2392 + $0x38] sm:$0xf]
        %v2408 = vld [vmem:[%s2392 + $0x3c] sm:$0xf]
        %s2409 = scalar_lea.vmem [#allocation11], 576
        %v2410 = vld [vmem:[%s2409] sm:$0xf]
        %v2411 = vld [vmem:[%s2409 + $0x4] sm:$0xf]
        %v2412 = vld [vmem:[%s2409 + $0x8] sm:$0xf]
        %v2413 = vld [vmem:[%s2409 + $0xc] sm:$0xf]
        %v2414 = vld [vmem:[%s2409 + $0x10] sm:$0xf]
        %v2415 = vld [vmem:[%s2409 + $0x14] sm:$0xf]
        %v2416 = vld [vmem:[%s2409 + $0x18] sm:$0xf]
        %v2417 = vld [vmem:[%s2409 + $0x1c] sm:$0xf]
        %v2418 = vld [vmem:[%s2409 + $0x20] sm:$0xf]
        %v2419 = vld [vmem:[%s2409 + $0x24] sm:$0xf]
        %v2420 = vld [vmem:[%s2409 + $0x28] sm:$0xf]
        %v2421 = vld [vmem:[%s2409 + $0x2c] sm:$0xf]
        %v2422 = vld [vmem:[%s2409 + $0x30] sm:$0xf]
        %v2423 = vld [vmem:[%s2409 + $0x34] sm:$0xf]
        %v2424 = vld [vmem:[%s2409 + $0x38] sm:$0xf]
        %v2425 = vld [vmem:[%s2409 + $0x3c] sm:$0xf]
        %v2442 = vunpack.c.l.b16 %v2410
        %v2443 = vunpack.c.l.b16 %v2411
        %v2444 = vunpack.c.l.b16 %v2412
        %v2445 = vunpack.c.l.b16 %v2413
        %v2446 = vunpack.c.l.b16 %v2414
        %v2447 = vunpack.c.l.b16 %v2415
        %v2448 = vunpack.c.l.b16 %v2416
        %v2449 = vunpack.c.l.b16 %v2417
        %v2450 = vunpack.c.l.b16 %v2418
        %v2451 = vunpack.c.l.b16 %v2419
        %v2452 = vunpack.c.l.b16 %v2420
        %v2453 = vunpack.c.l.b16 %v2421
        %v2454 = vunpack.c.l.b16 %v2422
        %v2455 = vunpack.c.l.b16 %v2423
        %v2456 = vunpack.c.l.b16 %v2424
        %v2457 = vunpack.c.l.b16 %v2425
        %v2458 = vpack.c.b16 %v2443, %v2442
        %v2459 = vpack.c.b16 %v2445, %v2444
        %v2460 = vpack.c.b16 %v2447, %v2446
        %v2461 = vpack.c.b16 %v2449, %v2448
        %v2462 = vpack.c.b16 %v2451, %v2450
        %v2463 = vpack.c.b16 %v2453, %v2452
        %v2464 = vpack.c.b16 %v2455, %v2454
        %v2465 = vpack.c.b16 %v2457, %v2456
        %2474 = vmatpush.bf16.msra.mxu0 %v2465
        %2475 = vmatpush.bf16.msra.mxu0 %v2464
        %2476 = vmatpush.bf16.msra.mxu0 %v2463
        %2477 = vmatpush.bf16.msra.mxu0 %v2462
        %2478 = vmatpush.bf16.msra.mxu0 %v2461
        %2479 = vmatpush.bf16.msra.mxu0 %v2460
        %2480 = vmatpush.bf16.msra.mxu0 %v2459
        %2481 = vmatpush.bf16.msra.mxu0 %v2458
        %2482 = vmatmul.bf16.gmra.mxu0 %v2391
        %v2483 = vpop.f32.mrf.mxu0
        %v2484 = vadd.f32 0.0, %v2483
        %v2485 = vpop.f32.mrf.mxu0
        %v2486 = vadd.f32 0.0, %v2485
        %2487 = vdwg.mxu0
        %v2504 = vunpack.c.l.b16 %v2393
        %v2505 = vunpack.c.l.b16 %v2394
        %v2506 = vunpack.c.l.b16 %v2395
        %v2507 = vunpack.c.l.b16 %v2396
        %v2508 = vunpack.c.l.b16 %v2397
        %v2509 = vunpack.c.l.b16 %v2398
        %v2510 = vunpack.c.l.b16 %v2399
        %v2511 = vunpack.c.l.b16 %v2400
        %v2512 = vunpack.c.l.b16 %v2401
        %v2513 = vunpack.c.l.b16 %v2402
        %v2514 = vunpack.c.l.b16 %v2403
        %v2515 = vunpack.c.l.b16 %v2404
        %v2516 = vunpack.c.l.b16 %v2405
        %v2517 = vunpack.c.l.b16 %v2406
        %v2518 = vunpack.c.l.b16 %v2407
        %v2519 = vunpack.c.l.b16 %v2408
        %v2520 = vpack.c.b16 %v2505, %v2504
        %v2521 = vpack.c.b16 %v2507, %v2506
        %v2522 = vpack.c.b16 %v2509, %v2508
        %v2523 = vpack.c.b16 %v2511, %v2510
        %v2524 = vpack.c.b16 %v2513, %v2512
        %v2525 = vpack.c.b16 %v2515, %v2514
        %v2526 = vpack.c.b16 %v2517, %v2516
        %v2527 = vpack.c.b16 %v2519, %v2518
        %2536 = vmatpush.bf16.msra.mxu0 %v2527
        %2537 = vmatpush.bf16.msra.mxu0 %v2526
        %2538 = vmatpush.bf16.msra.mxu0 %v2525
        %2539 = vmatpush.bf16.msra.mxu0 %v2524
        %2540 = vmatpush.bf16.msra.mxu0 %v2523
        %2541 = vmatpush.bf16.msra.mxu0 %v2522
        %2542 = vmatpush.bf16.msra.mxu0 %v2521
        %2543 = vmatpush.bf16.msra.mxu0 %v2520
        %2544 = vmatmul.bf16.gmra.mxu0 %v2376
        %v2545 = vpop.f32.mrf.mxu0
        %v2546 = vadd.f32 %v2484, %v2545
        %v2547 = vpop.f32.mrf.mxu0
        %v2548 = vadd.f32 %v2486, %v2547
        %2549 = vdwg.mxu0
        %s2550 = scalar_lea.vmem [#allocation13], 9
        %v2551 = vld [vmem:[%s2550] sm:$0x1]
        %v2553 = vperm.slane %v2551, 0
        %v2555 = vadd.f32 %v2546, %v2553
        %v2556 = vadd.f32 %v2548, %v2553
        %v2557 = vmax.f32 %v2555, 0.0
        %v2558 = vmax.f32 %v2556, 0.0
        %v2559 = vpack.c.bf16 %v2558, %v2557
        %2560 = vmatpush.bf16.msra.mxu0 0
        %2561 = vmatpush.bf16.msra.mxu0 0
        %2562 = vmatpush.bf16.msra.mxu0 0
        %2563 = vmatpush.bf16.msra.mxu0 0
        %2564 = vmatpush.bf16.msra.mxu0 0
        %2565 = vmatpush.bf16.msra.mxu0 0
        %2566 = vmatpush.bf16.msra.mxu0 0
        %2567 = vmatpush.bf16.msra.mxu0 %v2559
        %2568 = vmatmul.bf16.gmra.mxu0 %v725
        %v2569 = vpop.f32.mrf.mxu0
        %v2570 = vadd.f32 0.0, %v2569
        %v2571 = vpop.f32.mrf.mxu0
        %v2572 = vadd.f32 0.0, %v2571
        %2573 = vdwg.mxu0
        %v2574 = vpack.c.bf16 %v2572, %v2570
        %s2575 = scalar_lea.vmem [#allocation10], 640
        %v2576 = vld [vmem:[%s2575] sm:$0xf]
        %v2577 = vld [vmem:[%s2575 + $0x4] sm:$0xf]
        %v2578 = vld [vmem:[%s2575 + $0x8] sm:$0xf]
        %v2579 = vld [vmem:[%s2575 + $0xc] sm:$0xf]
        %v2580 = vld [vmem:[%s2575 + $0x10] sm:$0xf]
        %v2581 = vld [vmem:[%s2575 + $0x14] sm:$0xf]
        %v2582 = vld [vmem:[%s2575 + $0x18] sm:$0xf]
        %v2583 = vld [vmem:[%s2575 + $0x1c] sm:$0xf]
        %v2584 = vld [vmem:[%s2575 + $0x20] sm:$0xf]
        %v2585 = vld [vmem:[%s2575 + $0x24] sm:$0xf]
        %v2586 = vld [vmem:[%s2575 + $0x28] sm:$0xf]
        %v2587 = vld [vmem:[%s2575 + $0x2c] sm:$0xf]
        %v2588 = vld [vmem:[%s2575 + $0x30] sm:$0xf]
        %v2589 = vld [vmem:[%s2575 + $0x34] sm:$0xf]
        %v2590 = vld [vmem:[%s2575 + $0x38] sm:$0xf]
        %v2591 = vld [vmem:[%s2575 + $0x3c] sm:$0xf]
        %s2592 = scalar_lea.vmem [#allocation11], 640
        %v2593 = vld [vmem:[%s2592] sm:$0xf]
        %v2594 = vld [vmem:[%s2592 + $0x4] sm:$0xf]
        %v2595 = vld [vmem:[%s2592 + $0x8] sm:$0xf]
        %v2596 = vld [vmem:[%s2592 + $0xc] sm:$0xf]
        %v2597 = vld [vmem:[%s2592 + $0x10] sm:$0xf]
        %v2598 = vld [vmem:[%s2592 + $0x14] sm:$0xf]
        %v2599 = vld [vmem:[%s2592 + $0x18] sm:$0xf]
        %v2600 = vld [vmem:[%s2592 + $0x1c] sm:$0xf]
        %v2601 = vld [vmem:[%s2592 + $0x20] sm:$0xf]
        %v2602 = vld [vmem:[%s2592 + $0x24] sm:$0xf]
        %v2603 = vld [vmem:[%s2592 + $0x28] sm:$0xf]
        %v2604 = vld [vmem:[%s2592 + $0x2c] sm:$0xf]
        %v2605 = vld [vmem:[%s2592 + $0x30] sm:$0xf]
        %v2606 = vld [vmem:[%s2592 + $0x34] sm:$0xf]
        %v2607 = vld [vmem:[%s2592 + $0x38] sm:$0xf]
        %v2608 = vld [vmem:[%s2592 + $0x3c] sm:$0xf]
        %v2625 = vunpack.c.l.b16 %v2593
        %v2626 = vunpack.c.l.b16 %v2594
        %v2627 = vunpack.c.l.b16 %v2595
        %v2628 = vunpack.c.l.b16 %v2596
        %v2629 = vunpack.c.l.b16 %v2597
        %v2630 = vunpack.c.l.b16 %v2598
        %v2631 = vunpack.c.l.b16 %v2599
        %v2632 = vunpack.c.l.b16 %v2600
        %v2633 = vunpack.c.l.b16 %v2601
        %v2634 = vunpack.c.l.b16 %v2602
        %v2635 = vunpack.c.l.b16 %v2603
        %v2636 = vunpack.c.l.b16 %v2604
        %v2637 = vunpack.c.l.b16 %v2605
        %v2638 = vunpack.c.l.b16 %v2606
        %v2639 = vunpack.c.l.b16 %v2607
        %v2640 = vunpack.c.l.b16 %v2608
        %v2641 = vpack.c.b16 %v2626, %v2625
        %v2642 = vpack.c.b16 %v2628, %v2627
        %v2643 = vpack.c.b16 %v2630, %v2629
        %v2644 = vpack.c.b16 %v2632, %v2631
        %v2645 = vpack.c.b16 %v2634, %v2633
        %v2646 = vpack.c.b16 %v2636, %v2635
        %v2647 = vpack.c.b16 %v2638, %v2637
        %v2648 = vpack.c.b16 %v2640, %v2639
        %2657 = vmatpush.bf16.msra.mxu0 %v2648
        %2658 = vmatpush.bf16.msra.mxu0 %v2647
        %2659 = vmatpush.bf16.msra.mxu0 %v2646
        %2660 = vmatpush.bf16.msra.mxu0 %v2645
        %2661 = vmatpush.bf16.msra.mxu0 %v2644
        %2662 = vmatpush.bf16.msra.mxu0 %v2643
        %2663 = vmatpush.bf16.msra.mxu0 %v2642
        %2664 = vmatpush.bf16.msra.mxu0 %v2641
        %2665 = vmatmul.bf16.gmra.mxu0 %v2574
        %v2666 = vpop.f32.mrf.mxu0
        %v2667 = vadd.f32 0.0, %v2666
        %v2668 = vpop.f32.mrf.mxu0
        %v2669 = vadd.f32 0.0, %v2668
        %2670 = vdwg.mxu0
        %v2687 = vunpack.c.l.b16 %v2576
        %v2688 = vunpack.c.l.b16 %v2577
        %v2689 = vunpack.c.l.b16 %v2578
        %v2690 = vunpack.c.l.b16 %v2579
        %v2691 = vunpack.c.l.b16 %v2580
        %v2692 = vunpack.c.l.b16 %v2581
        %v2693 = vunpack.c.l.b16 %v2582
        %v2694 = vunpack.c.l.b16 %v2583
        %v2695 = vunpack.c.l.b16 %v2584
        %v2696 = vunpack.c.l.b16 %v2585
        %v2697 = vunpack.c.l.b16 %v2586
        %v2698 = vunpack.c.l.b16 %v2587
        %v2699 = vunpack.c.l.b16 %v2588
        %v2700 = vunpack.c.l.b16 %v2589
        %v2701 = vunpack.c.l.b16 %v2590
        %v2702 = vunpack.c.l.b16 %v2591
        %v2703 = vpack.c.b16 %v2688, %v2687
        %v2704 = vpack.c.b16 %v2690, %v2689
        %v2705 = vpack.c.b16 %v2692, %v2691
        %v2706 = vpack.c.b16 %v2694, %v2693
        %v2707 = vpack.c.b16 %v2696, %v2695
        %v2708 = vpack.c.b16 %v2698, %v2697
        %v2709 = vpack.c.b16 %v2700, %v2699
        %v2710 = vpack.c.b16 %v2702, %v2701
        %2719 = vmatpush.bf16.msra.mxu0 %v2710
        %2720 = vmatpush.bf16.msra.mxu0 %v2709
        %2721 = vmatpush.bf16.msra.mxu0 %v2708
        %2722 = vmatpush.bf16.msra.mxu0 %v2707
        %2723 = vmatpush.bf16.msra.mxu0 %v2706
        %2724 = vmatpush.bf16.msra.mxu0 %v2705
        %2725 = vmatpush.bf16.msra.mxu0 %v2704
        %2726 = vmatpush.bf16.msra.mxu0 %v2703
        %2727 = vmatmul.bf16.gmra.mxu0 %v2559
        %v2728 = vpop.f32.mrf.mxu0
        %v2729 = vadd.f32 %v2667, %v2728
        %v2730 = vpop.f32.mrf.mxu0
        %v2731 = vadd.f32 %v2669, %v2730
        %2732 = vdwg.mxu0
        %s2733 = scalar_lea.vmem [#allocation13], 10
        %v2734 = vld [vmem:[%s2733] sm:$0x1]
        %v2736 = vperm.slane %v2734, 0
        %v2738 = vadd.f32 %v2729, %v2736
        %v2739 = vadd.f32 %v2731, %v2736
        %v2740 = vadd.f32 %v2738, %v2374
        %v2741 = vadd.f32 %v2739, %v2375
        %v2742 = vmax.f32 %v2740, 0.0
        %v2743 = vmax.f32 %v2741, 0.0
        %v2744 = vpack.c.bf16 %v2743, %v2742
        %2745 = vmatpush.bf16.msra.mxu0 0
        %2746 = vmatpush.bf16.msra.mxu0 0
        %2747 = vmatpush.bf16.msra.mxu0 0
        %2748 = vmatpush.bf16.msra.mxu0 0
        %2749 = vmatpush.bf16.msra.mxu0 0
        %2750 = vmatpush.bf16.msra.mxu0 0
        %2751 = vmatpush.bf16.msra.mxu0 0
        %2752 = vmatpush.bf16.msra.mxu0 %v2744
        %2753 = vmatmul.bf16.gmra.mxu0 %v725
        %v2754 = vpop.f32.mrf.mxu0
        %v2755 = vadd.f32 0.0, %v2754
        %v2756 = vpop.f32.mrf.mxu0
        %v2757 = vadd.f32 0.0, %v2756
        %2758 = vdwg.mxu0
        %v2759 = vpack.c.bf16 %v2757, %v2755
        %s2760 = scalar_lea.vmem [#allocation10], 704
        %v2761 = vld [vmem:[%s2760] sm:$0xf]
        %v2762 = vld [vmem:[%s2760 + $0x4] sm:$0xf]
        %v2763 = vld [vmem:[%s2760 + $0x8] sm:$0xf]
        %v2764 = vld [vmem:[%s2760 + $0xc] sm:$0xf]
        %v2765 = vld [vmem:[%s2760 + $0x10] sm:$0xf]
        %v2766 = vld [vmem:[%s2760 + $0x14] sm:$0xf]
        %v2767 = vld [vmem:[%s2760 + $0x18] sm:$0xf]
        %v2768 = vld [vmem:[%s2760 + $0x1c] sm:$0xf]
        %v2769 = vld [vmem:[%s2760 + $0x20] sm:$0xf]
        %v2770 = vld [vmem:[%s2760 + $0x24] sm:$0xf]
        %v2771 = vld [vmem:[%s2760 + $0x28] sm:$0xf]
        %v2772 = vld [vmem:[%s2760 + $0x2c] sm:$0xf]
        %v2773 = vld [vmem:[%s2760 + $0x30] sm:$0xf]
        %v2774 = vld [vmem:[%s2760 + $0x34] sm:$0xf]
        %v2775 = vld [vmem:[%s2760 + $0x38] sm:$0xf]
        %v2776 = vld [vmem:[%s2760 + $0x3c] sm:$0xf]
        %s2777 = scalar_lea.vmem [#allocation11], 704
        %v2778 = vld [vmem:[%s2777] sm:$0xf]
        %v2779 = vld [vmem:[%s2777 + $0x4] sm:$0xf]
        %v2780 = vld [vmem:[%s2777 + $0x8] sm:$0xf]
        %v2781 = vld [vmem:[%s2777 + $0xc] sm:$0xf]
        %v2782 = vld [vmem:[%s2777 + $0x10] sm:$0xf]
        %v2783 = vld [vmem:[%s2777 + $0x14] sm:$0xf]
        %v2784 = vld [vmem:[%s2777 + $0x18] sm:$0xf]
        %v2785 = vld [vmem:[%s2777 + $0x1c] sm:$0xf]
        %v2786 = vld [vmem:[%s2777 + $0x20] sm:$0xf]
        %v2787 = vld [vmem:[%s2777 + $0x24] sm:$0xf]
        %v2788 = vld [vmem:[%s2777 + $0x28] sm:$0xf]
        %v2789 = vld [vmem:[%s2777 + $0x2c] sm:$0xf]
        %v2790 = vld [vmem:[%s2777 + $0x30] sm:$0xf]
        %v2791 = vld [vmem:[%s2777 + $0x34] sm:$0xf]
        %v2792 = vld [vmem:[%s2777 + $0x38] sm:$0xf]
        %v2793 = vld [vmem:[%s2777 + $0x3c] sm:$0xf]
        %v2810 = vunpack.c.l.b16 %v2778
        %v2811 = vunpack.c.l.b16 %v2779
        %v2812 = vunpack.c.l.b16 %v2780
        %v2813 = vunpack.c.l.b16 %v2781
        %v2814 = vunpack.c.l.b16 %v2782
        %v2815 = vunpack.c.l.b16 %v2783
        %v2816 = vunpack.c.l.b16 %v2784
        %v2817 = vunpack.c.l.b16 %v2785
        %v2818 = vunpack.c.l.b16 %v2786
        %v2819 = vunpack.c.l.b16 %v2787
        %v2820 = vunpack.c.l.b16 %v2788
        %v2821 = vunpack.c.l.b16 %v2789
        %v2822 = vunpack.c.l.b16 %v2790
        %v2823 = vunpack.c.l.b16 %v2791
        %v2824 = vunpack.c.l.b16 %v2792
        %v2825 = vunpack.c.l.b16 %v2793
        %v2826 = vpack.c.b16 %v2811, %v2810
        %v2827 = vpack.c.b16 %v2813, %v2812
        %v2828 = vpack.c.b16 %v2815, %v2814
        %v2829 = vpack.c.b16 %v2817, %v2816
        %v2830 = vpack.c.b16 %v2819, %v2818
        %v2831 = vpack.c.b16 %v2821, %v2820
        %v2832 = vpack.c.b16 %v2823, %v2822
        %v2833 = vpack.c.b16 %v2825, %v2824
        %2842 = vmatpush.bf16.msra.mxu0 %v2833
        %2843 = vmatpush.bf16.msra.mxu0 %v2832
        %2844 = vmatpush.bf16.msra.mxu0 %v2831
        %2845 = vmatpush.bf16.msra.mxu0 %v2830
        %2846 = vmatpush.bf16.msra.mxu0 %v2829
        %2847 = vmatpush.bf16.msra.mxu0 %v2828
        %2848 = vmatpush.bf16.msra.mxu0 %v2827
        %2849 = vmatpush.bf16.msra.mxu0 %v2826
        %2850 = vmatmul.bf16.gmra.mxu0 %v2759
        %v2851 = vpop.f32.mrf.mxu0
        %v2852 = vadd.f32 0.0, %v2851
        %v2853 = vpop.f32.mrf.mxu0
        %v2854 = vadd.f32 0.0, %v2853
        %2855 = vdwg.mxu0
        %v2872 = vunpack.c.l.b16 %v2761
        %v2873 = vunpack.c.l.b16 %v2762
        %v2874 = vunpack.c.l.b16 %v2763
        %v2875 = vunpack.c.l.b16 %v2764
        %v2876 = vunpack.c.l.b16 %v2765
        %v2877 = vunpack.c.l.b16 %v2766
        %v2878 = vunpack.c.l.b16 %v2767
        %v2879 = vunpack.c.l.b16 %v2768
        %v2880 = vunpack.c.l.b16 %v2769
        %v2881 = vunpack.c.l.b16 %v2770
        %v2882 = vunpack.c.l.b16 %v2771
        %v2883 = vunpack.c.l.b16 %v2772
        %v2884 = vunpack.c.l.b16 %v2773
        %v2885 = vunpack.c.l.b16 %v2774
        %v2886 = vunpack.c.l.b16 %v2775
        %v2887 = vunpack.c.l.b16 %v2776
        %v2888 = vpack.c.b16 %v2873, %v2872
        %v2889 = vpack.c.b16 %v2875, %v2874
        %v2890 = vpack.c.b16 %v2877, %v2876
        %v2891 = vpack.c.b16 %v2879, %v2878
        %v2892 = vpack.c.b16 %v2881, %v2880
        %v2893 = vpack.c.b16 %v2883, %v2882
        %v2894 = vpack.c.b16 %v2885, %v2884
        %v2895 = vpack.c.b16 %v2887, %v2886
        %2904 = vmatpush.bf16.msra.mxu0 %v2895
        %2905 = vmatpush.bf16.msra.mxu0 %v2894
        %2906 = vmatpush.bf16.msra.mxu0 %v2893
        %2907 = vmatpush.bf16.msra.mxu0 %v2892
        %2908 = vmatpush.bf16.msra.mxu0 %v2891
        %2909 = vmatpush.bf16.msra.mxu0 %v2890
        %2910 = vmatpush.bf16.msra.mxu0 %v2889
        %2911 = vmatpush.bf16.msra.mxu0 %v2888
        %2912 = vmatmul.bf16.gmra.mxu0 %v2744
        %v2913 = vpop.f32.mrf.mxu0
        %v2914 = vadd.f32 %v2852, %v2913
        %v2915 = vpop.f32.mrf.mxu0
        %v2916 = vadd.f32 %v2854, %v2915
        %2917 = vdwg.mxu0
        %s2918 = scalar_lea.vmem [#allocation13], 11
        %v2919 = vld [vmem:[%s2918] sm:$0x1]
        %v2921 = vperm.slane %v2919, 0
        %v2923 = vadd.f32 %v2914, %v2921
        %v2924 = vadd.f32 %v2916, %v2921
        %v2925 = vmax.f32 %v2923, 0.0
        %v2926 = vmax.f32 %v2924, 0.0
        %v2927 = vpack.c.bf16 %v2926, %v2925
        %2928 = vmatpush.bf16.msra.mxu0 0
        %2929 = vmatpush.bf16.msra.mxu0 0
        %2930 = vmatpush.bf16.msra.mxu0 0
        %2931 = vmatpush.bf16.msra.mxu0 0
        %2932 = vmatpush.bf16.msra.mxu0 0
        %2933 = vmatpush.bf16.msra.mxu0 0
        %2934 = vmatpush.bf16.msra.mxu0 0
        %2935 = vmatpush.bf16.msra.mxu0 %v2927
        %2936 = vmatmul.bf16.gmra.mxu0 %v725
        %v2937 = vpop.f32.mrf.mxu0
        %v2938 = vadd.f32 0.0, %v2937
        %v2939 = vpop.f32.mrf.mxu0
        %v2940 = vadd.f32 0.0, %v2939
        %2941 = vdwg.mxu0
        %v2942 = vpack.c.bf16 %v2940, %v2938
        %s2943 = scalar_lea.vmem [#allocation10], 768
        %v2944 = vld [vmem:[%s2943] sm:$0xf]
        %v2945 = vld [vmem:[%s2943 + $0x4] sm:$0xf]
        %v2946 = vld [vmem:[%s2943 + $0x8] sm:$0xf]
        %v2947 = vld [vmem:[%s2943 + $0xc] sm:$0xf]
        %v2948 = vld [vmem:[%s2943 + $0x10] sm:$0xf]
        %v2949 = vld [vmem:[%s2943 + $0x14] sm:$0xf]
        %v2950 = vld [vmem:[%s2943 + $0x18] sm:$0xf]
        %v2951 = vld [vmem:[%s2943 + $0x1c] sm:$0xf]
        %v2952 = vld [vmem:[%s2943 + $0x20] sm:$0xf]
        %v2953 = vld [vmem:[%s2943 + $0x24] sm:$0xf]
        %v2954 = vld [vmem:[%s2943 + $0x28] sm:$0xf]
        %v2955 = vld [vmem:[%s2943 + $0x2c] sm:$0xf]
        %v2956 = vld [vmem:[%s2943 + $0x30] sm:$0xf]
        %v2957 = vld [vmem:[%s2943 + $0x34] sm:$0xf]
        %v2958 = vld [vmem:[%s2943 + $0x38] sm:$0xf]
        %v2959 = vld [vmem:[%s2943 + $0x3c] sm:$0xf]
        %s2960 = scalar_lea.vmem [#allocation11], 768
        %v2961 = vld [vmem:[%s2960] sm:$0xf]
        %v2962 = vld [vmem:[%s2960 + $0x4] sm:$0xf]
        %v2963 = vld [vmem:[%s2960 + $0x8] sm:$0xf]
        %v2964 = vld [vmem:[%s2960 + $0xc] sm:$0xf]
        %v2965 = vld [vmem:[%s2960 + $0x10] sm:$0xf]
        %v2966 = vld [vmem:[%s2960 + $0x14] sm:$0xf]
        %v2967 = vld [vmem:[%s2960 + $0x18] sm:$0xf]
        %v2968 = vld [vmem:[%s2960 + $0x1c] sm:$0xf]
        %v2969 = vld [vmem:[%s2960 + $0x20] sm:$0xf]
        %v2970 = vld [vmem:[%s2960 + $0x24] sm:$0xf]
        %v2971 = vld [vmem:[%s2960 + $0x28] sm:$0xf]
        %v2972 = vld [vmem:[%s2960 + $0x2c] sm:$0xf]
        %v2973 = vld [vmem:[%s2960 + $0x30] sm:$0xf]
        %v2974 = vld [vmem:[%s2960 + $0x34] sm:$0xf]
        %v2975 = vld [vmem:[%s2960 + $0x38] sm:$0xf]
        %v2976 = vld [vmem:[%s2960 + $0x3c] sm:$0xf]
        %v2993 = vunpack.c.l.b16 %v2961
        %v2994 = vunpack.c.l.b16 %v2962
        %v2995 = vunpack.c.l.b16 %v2963
        %v2996 = vunpack.c.l.b16 %v2964
        %v2997 = vunpack.c.l.b16 %v2965
        %v2998 = vunpack.c.l.b16 %v2966
        %v2999 = vunpack.c.l.b16 %v2967
        %v3000 = vunpack.c.l.b16 %v2968
        %v3001 = vunpack.c.l.b16 %v2969
        %v3002 = vunpack.c.l.b16 %v2970
        %v3003 = vunpack.c.l.b16 %v2971
        %v3004 = vunpack.c.l.b16 %v2972
        %v3005 = vunpack.c.l.b16 %v2973
        %v3006 = vunpack.c.l.b16 %v2974
        %v3007 = vunpack.c.l.b16 %v2975
        %v3008 = vunpack.c.l.b16 %v2976
        %v3009 = vpack.c.b16 %v2994, %v2993
        %v3010 = vpack.c.b16 %v2996, %v2995
        %v3011 = vpack.c.b16 %v2998, %v2997
        %v3012 = vpack.c.b16 %v3000, %v2999
        %v3013 = vpack.c.b16 %v3002, %v3001
        %v3014 = vpack.c.b16 %v3004, %v3003
        %v3015 = vpack.c.b16 %v3006, %v3005
        %v3016 = vpack.c.b16 %v3008, %v3007
        %3025 = vmatpush.bf16.msra.mxu0 %v3016
        %3026 = vmatpush.bf16.msra.mxu0 %v3015
        %3027 = vmatpush.bf16.msra.mxu0 %v3014
        %3028 = vmatpush.bf16.msra.mxu0 %v3013
        %3029 = vmatpush.bf16.msra.mxu0 %v3012
        %3030 = vmatpush.bf16.msra.mxu0 %v3011
        %3031 = vmatpush.bf16.msra.mxu0 %v3010
        %3032 = vmatpush.bf16.msra.mxu0 %v3009
        %3033 = vmatmul.bf16.gmra.mxu0 %v2942
        %v3034 = vpop.f32.mrf.mxu0
        %v3035 = vadd.f32 0.0, %v3034
        %v3036 = vpop.f32.mrf.mxu0
        %v3037 = vadd.f32 0.0, %v3036
        %3038 = vdwg.mxu0
        %v3055 = vunpack.c.l.b16 %v2944
        %v3056 = vunpack.c.l.b16 %v2945
        %v3057 = vunpack.c.l.b16 %v2946
        %v3058 = vunpack.c.l.b16 %v2947
        %v3059 = vunpack.c.l.b16 %v2948
        %v3060 = vunpack.c.l.b16 %v2949
        %v3061 = vunpack.c.l.b16 %v2950
        %v3062 = vunpack.c.l.b16 %v2951
        %v3063 = vunpack.c.l.b16 %v2952
        %v3064 = vunpack.c.l.b16 %v2953
        %v3065 = vunpack.c.l.b16 %v2954
        %v3066 = vunpack.c.l.b16 %v2955
        %v3067 = vunpack.c.l.b16 %v2956
        %v3068 = vunpack.c.l.b16 %v2957
        %v3069 = vunpack.c.l.b16 %v2958
        %v3070 = vunpack.c.l.b16 %v2959
        %v3071 = vpack.c.b16 %v3056, %v3055
        %v3072 = vpack.c.b16 %v3058, %v3057
        %v3073 = vpack.c.b16 %v3060, %v3059
        %v3074 = vpack.c.b16 %v3062, %v3061
        %v3075 = vpack.c.b16 %v3064, %v3063
        %v3076 = vpack.c.b16 %v3066, %v3065
        %v3077 = vpack.c.b16 %v3068, %v3067
        %v3078 = vpack.c.b16 %v3070, %v3069
        %3087 = vmatpush.bf16.msra.mxu0 %v3078
        %3088 = vmatpush.bf16.msra.mxu0 %v3077
        %3089 = vmatpush.bf16.msra.mxu0 %v3076
        %3090 = vmatpush.bf16.msra.mxu0 %v3075
        %3091 = vmatpush.bf16.msra.mxu0 %v3074
        %3092 = vmatpush.bf16.msra.mxu0 %v3073
        %3093 = vmatpush.bf16.msra.mxu0 %v3072
        %3094 = vmatpush.bf16.msra.mxu0 %v3071
        %3095 = vmatmul.bf16.gmra.mxu0 %v2927
        %v3096 = vpop.f32.mrf.mxu0
        %v3097 = vadd.f32 %v3035, %v3096
        %v3098 = vpop.f32.mrf.mxu0
        %v3099 = vadd.f32 %v3037, %v3098
        %3100 = vdwg.mxu0
        %s3101 = scalar_lea.vmem [#allocation13], 12
        %v3102 = vld [vmem:[%s3101] sm:$0x1]
        %v3104 = vperm.slane %v3102, 0
        %v3106 = vadd.f32 %v3097, %v3104
        %v3107 = vadd.f32 %v3099, %v3104
        %v3108 = vadd.f32 %v3106, %v2742
        %v3109 = vadd.f32 %v3107, %v2743
        %v3110 = vmax.f32 %v3108, 0.0
        %v3111 = vmax.f32 %v3109, 0.0
        %v3112 = vpack.c.bf16 %v3111, %v3110
        %3113 = vmatpush.bf16.msra.mxu0 0
        %3114 = vmatpush.bf16.msra.mxu0 0
        %3115 = vmatpush.bf16.msra.mxu0 0
        %3116 = vmatpush.bf16.msra.mxu0 0
        %3117 = vmatpush.bf16.msra.mxu0 0
        %3118 = vmatpush.bf16.msra.mxu0 0
        %3119 = vmatpush.bf16.msra.mxu0 0
        %3120 = vmatpush.bf16.msra.mxu0 %v3112
        %3121 = vmatmul.bf16.gmra.mxu0 %v725
        %v3122 = vpop.f32.mrf.mxu0
        %v3123 = vadd.f32 0.0, %v3122
        %v3124 = vpop.f32.mrf.mxu0
        %v3125 = vadd.f32 0.0, %v3124
        %3126 = vdwg.mxu0
        %v3127 = vpack.c.bf16 %v3125, %v3123
        %s3128 = scalar_lea.vmem [#allocation10], 832
        %v3129 = vld [vmem:[%s3128] sm:$0xf]
        %v3130 = vld [vmem:[%s3128 + $0x4] sm:$0xf]
        %v3131 = vld [vmem:[%s3128 + $0x8] sm:$0xf]
        %v3132 = vld [vmem:[%s3128 + $0xc] sm:$0xf]
        %v3133 = vld [vmem:[%s3128 + $0x10] sm:$0xf]
        %v3134 = vld [vmem:[%s3128 + $0x14] sm:$0xf]
        %v3135 = vld [vmem:[%s3128 + $0x18] sm:$0xf]
        %v3136 = vld [vmem:[%s3128 + $0x1c] sm:$0xf]
        %v3137 = vld [vmem:[%s3128 + $0x20] sm:$0xf]
        %v3138 = vld [vmem:[%s3128 + $0x24] sm:$0xf]
        %v3139 = vld [vmem:[%s3128 + $0x28] sm:$0xf]
        %v3140 = vld [vmem:[%s3128 + $0x2c] sm:$0xf]
        %v3141 = vld [vmem:[%s3128 + $0x30] sm:$0xf]
        %v3142 = vld [vmem:[%s3128 + $0x34] sm:$0xf]
        %v3143 = vld [vmem:[%s3128 + $0x38] sm:$0xf]
        %v3144 = vld [vmem:[%s3128 + $0x3c] sm:$0xf]
        %s3145 = scalar_lea.vmem [#allocation11], 832
        %v3146 = vld [vmem:[%s3145] sm:$0xf]
        %v3147 = vld [vmem:[%s3145 + $0x4] sm:$0xf]
        %v3148 = vld [vmem:[%s3145 + $0x8] sm:$0xf]
        %v3149 = vld [vmem:[%s3145 + $0xc] sm:$0xf]
        %v3150 = vld [vmem:[%s3145 + $0x10] sm:$0xf]
        %v3151 = vld [vmem:[%s3145 + $0x14] sm:$0xf]
        %v3152 = vld [vmem:[%s3145 + $0x18] sm:$0xf]
        %v3153 = vld [vmem:[%s3145 + $0x1c] sm:$0xf]
        %v3154 = vld [vmem:[%s3145 + $0x20] sm:$0xf]
        %v3155 = vld [vmem:[%s3145 + $0x24] sm:$0xf]
        %v3156 = vld [vmem:[%s3145 + $0x28] sm:$0xf]
        %v3157 = vld [vmem:[%s3145 + $0x2c] sm:$0xf]
        %v3158 = vld [vmem:[%s3145 + $0x30] sm:$0xf]
        %v3159 = vld [vmem:[%s3145 + $0x34] sm:$0xf]
        %v3160 = vld [vmem:[%s3145 + $0x38] sm:$0xf]
        %v3161 = vld [vmem:[%s3145 + $0x3c] sm:$0xf]
        %v3178 = vunpack.c.l.b16 %v3146
        %v3179 = vunpack.c.l.b16 %v3147
        %v3180 = vunpack.c.l.b16 %v3148
        %v3181 = vunpack.c.l.b16 %v3149
        %v3182 = vunpack.c.l.b16 %v3150
        %v3183 = vunpack.c.l.b16 %v3151
        %v3184 = vunpack.c.l.b16 %v3152
        %v3185 = vunpack.c.l.b16 %v3153
        %v3186 = vunpack.c.l.b16 %v3154
        %v3187 = vunpack.c.l.b16 %v3155
        %v3188 = vunpack.c.l.b16 %v3156
        %v3189 = vunpack.c.l.b16 %v3157
        %v3190 = vunpack.c.l.b16 %v3158
        %v3191 = vunpack.c.l.b16 %v3159
        %v3192 = vunpack.c.l.b16 %v3160
        %v3193 = vunpack.c.l.b16 %v3161
        %v3194 = vpack.c.b16 %v3179, %v3178
        %v3195 = vpack.c.b16 %v3181, %v3180
        %v3196 = vpack.c.b16 %v3183, %v3182
        %v3197 = vpack.c.b16 %v3185, %v3184
        %v3198 = vpack.c.b16 %v3187, %v3186
        %v3199 = vpack.c.b16 %v3189, %v3188
        %v3200 = vpack.c.b16 %v3191, %v3190
        %v3201 = vpack.c.b16 %v3193, %v3192
        %3210 = vmatpush.bf16.msra.mxu0 %v3201
        %3211 = vmatpush.bf16.msra.mxu0 %v3200
        %3212 = vmatpush.bf16.msra.mxu0 %v3199
        %3213 = vmatpush.bf16.msra.mxu0 %v3198
        %3214 = vmatpush.bf16.msra.mxu0 %v3197
        %3215 = vmatpush.bf16.msra.mxu0 %v3196
        %3216 = vmatpush.bf16.msra.mxu0 %v3195
        %3217 = vmatpush.bf16.msra.mxu0 %v3194
        %3218 = vmatmul.bf16.gmra.mxu0 %v3127
        %v3219 = vpop.f32.mrf.mxu0
        %v3220 = vadd.f32 0.0, %v3219
        %v3221 = vpop.f32.mrf.mxu0
        %v3222 = vadd.f32 0.0, %v3221
        %3223 = vdwg.mxu0
        %v3240 = vunpack.c.l.b16 %v3129
        %v3241 = vunpack.c.l.b16 %v3130
        %v3242 = vunpack.c.l.b16 %v3131
        %v3243 = vunpack.c.l.b16 %v3132
        %v3244 = vunpack.c.l.b16 %v3133
        %v3245 = vunpack.c.l.b16 %v3134
        %v3246 = vunpack.c.l.b16 %v3135
        %v3247 = vunpack.c.l.b16 %v3136
        %v3248 = vunpack.c.l.b16 %v3137
        %v3249 = vunpack.c.l.b16 %v3138
        %v3250 = vunpack.c.l.b16 %v3139
        %v3251 = vunpack.c.l.b16 %v3140
        %v3252 = vunpack.c.l.b16 %v3141
        %v3253 = vunpack.c.l.b16 %v3142
        %v3254 = vunpack.c.l.b16 %v3143
        %v3255 = vunpack.c.l.b16 %v3144
        %v3256 = vpack.c.b16 %v3241, %v3240
        %v3257 = vpack.c.b16 %v3243, %v3242
        %v3258 = vpack.c.b16 %v3245, %v3244
        %v3259 = vpack.c.b16 %v3247, %v3246
        %v3260 = vpack.c.b16 %v3249, %v3248
        %v3261 = vpack.c.b16 %v3251, %v3250
        %v3262 = vpack.c.b16 %v3253, %v3252
        %v3263 = vpack.c.b16 %v3255, %v3254
        %3272 = vmatpush.bf16.msra.mxu0 %v3263
        %3273 = vmatpush.bf16.msra.mxu0 %v3262
        %3274 = vmatpush.bf16.msra.mxu0 %v3261
        %3275 = vmatpush.bf16.msra.mxu0 %v3260
        %3276 = vmatpush.bf16.msra.mxu0 %v3259
        %3277 = vmatpush.bf16.msra.mxu0 %v3258
        %3278 = vmatpush.bf16.msra.mxu0 %v3257
        %3279 = vmatpush.bf16.msra.mxu0 %v3256
        %3280 = vmatmul.bf16.gmra.mxu0 %v3112
        %v3281 = vpop.f32.mrf.mxu0
        %v3282 = vadd.f32 %v3220, %v3281
        %v3283 = vpop.f32.mrf.mxu0
        %v3284 = vadd.f32 %v3222, %v3283
        %3285 = vdwg.mxu0
        %s3286 = scalar_lea.vmem [#allocation13], 13
        %v3287 = vld [vmem:[%s3286] sm:$0x1]
        %v3289 = vperm.slane %v3287, 0
        %v3291 = vadd.f32 %v3282, %v3289
        %v3292 = vadd.f32 %v3284, %v3289
        %v3293 = vpack.c.bf16 %v3292, %v3291
        %v3294 = vld [vmem:[#allocation14] sm:$0xf]
        %v3295 = vld [vmem:[#allocation14 + $0x4] sm:$0xf]
        %v3296 = vld [vmem:[#allocation14 + $0x8] sm:$0xf]
        %v3297 = vld [vmem:[#allocation14 + $0xc] sm:$0xf]
        %v3298 = vld [vmem:[#allocation14 + $0x10] sm:$0xf]
        %v3299 = vld [vmem:[#allocation14 + $0x14] sm:$0xf]
        %v3300 = vld [vmem:[#allocation14 + $0x18] sm:$0xf]
        %v3301 = vld [vmem:[#allocation14 + $0x1c] sm:$0xf]
        %v3302 = vld [vmem:[#allocation14 + $0x20] sm:$0xf]
        %v3303 = vld [vmem:[#allocation14 + $0x24] sm:$0xf]
        %v3304 = vld [vmem:[#allocation14 + $0x28] sm:$0xf]
        %v3305 = vld [vmem:[#allocation14 + $0x2c] sm:$0xf]
        %v3306 = vld [vmem:[#allocation14 + $0x30] sm:$0xf]
        %v3307 = vld [vmem:[#allocation14 + $0x34] sm:$0xf]
        %v3308 = vld [vmem:[#allocation14 + $0x38] sm:$0xf]
        %v3309 = vld [vmem:[#allocation14 + $0x3c] sm:$0xf]
        %v3310 = vld [vmem:[%s8] sm:$0x1]
        %v3312 = vperm.slane %v3310, 0
        %v3330 = vunpack.c.l.b16 %v3294
        %v3331 = vunpack.c.l.b16 %v3295
        %v3332 = vunpack.c.l.b16 %v3296
        %v3333 = vunpack.c.l.b16 %v3297
        %v3334 = vunpack.c.l.b16 %v3298
        %v3335 = vunpack.c.l.b16 %v3299
        %v3336 = vunpack.c.l.b16 %v3300
        %v3337 = vunpack.c.l.b16 %v3301
        %v3338 = vunpack.c.l.b16 %v3302
        %v3339 = vunpack.c.l.b16 %v3303
        %v3340 = vunpack.c.l.b16 %v3304
        %v3341 = vunpack.c.l.b16 %v3305
        %v3342 = vunpack.c.l.b16 %v3306
        %v3343 = vunpack.c.l.b16 %v3307
        %v3344 = vunpack.c.l.b16 %v3308
        %v3345 = vunpack.c.l.b16 %v3309
        %v3346 = vpack.c.b16 %v3331, %v3330
        %v3347 = vpack.c.b16 %v3333, %v3332
        %v3348 = vpack.c.b16 %v3335, %v3334
        %v3349 = vpack.c.b16 %v3337, %v3336
        %v3350 = vpack.c.b16 %v3339, %v3338
        %v3351 = vpack.c.b16 %v3341, %v3340
        %v3352 = vpack.c.b16 %v3343, %v3342
        %v3353 = vpack.c.b16 %v3345, %v3344
        %3362 = vmatpush.bf16.msra.mxu0 %v3353
        %3363 = vmatpush.bf16.msra.mxu0 %v3352
        %3364 = vmatpush.bf16.msra.mxu0 %v3351
        %3365 = vmatpush.bf16.msra.mxu0 %v3350
        %3366 = vmatpush.bf16.msra.mxu0 %v3349
        %3367 = vmatpush.bf16.msra.mxu0 %v3348
        %3368 = vmatpush.bf16.msra.mxu0 %v3347
        %3369 = vmatpush.bf16.msra.mxu0 %v3346
        %3370 = vmatmul.bf16.gmra.mxu0 %v3293
        %v3371 = vpop.f32.mrf.mxu0
        %v3372 = vadd.f32 %v3312, %v3371
        %v3373 = vpop.f32.mrf.mxu0
        %v3374 = vadd.f32 %v3312, %v3373
        %3375 = vdwg.mxu0
        %v3376 = vadd.f32 %v556, %v3372
        %v3377 = vadd.f32 %v557, %v3374
        %3378 = vst [vmem:[%s516] sm:$0xff] %v3376
        %3379 = vst [vmem:[%s516 + $0x8] sm:$0xff] %v3377
        %v3380 = vmul.f32 %v3376, 16.0
        %v3381 = vmul.f32 %v3377, 16.0
        %v3382 = vfloor.f32 %v3380
        %v3383 = vfloor.f32 %v3381
        %v3384 = vadd.f32 %v3382, 1.0
        %v3385 = vadd.f32 %v3383, 1.0
        %v3386 = vsub.f32 %v3384, %v3380
        %v3387 = vsub.f32 %v3385, %v3381
        %3390 = vrot.lane.b32.xlu0 %v3386, 127
        %v3391 = vpop.permute.xlu0 %3390
        %3392 = vrot.lane.b32.xlu0 %v3387, 127
        %v3393 = vpop.permute.xlu0 %3392
        %v3396 = vmul.f32 %v3386, %v3391
        %v3397 = vmul.f32 %v3387, %v3393
        %v3398 = vsub.f32 %v3380, %v3382
        %v3399 = vsub.f32 %v3381, %v3383
        %3402 = vrot.lane.b32.xlu0 %v3398, 127
        %v3403 = vpop.permute.xlu0 %3402
        %3404 = vrot.lane.b32.xlu0 %v3399, 127
        %v3405 = vpop.permute.xlu0 %3404
        %v3408 = vmul.f32 %v3386, %v3403
        %v3409 = vmul.f32 %v3387, %v3405
        %v3410 = vmul.f32 %v3398, %v3391
        %v3411 = vmul.f32 %v3399, %v3393
        %v3412 = vmul.f32 %v3398, %v3403
        %v3413 = vmul.f32 %v3399, %v3405
        %v3414 = vmax.f32 %v3382, 0.0
        %v3415 = vmax.f32 %v3383, 0.0
        %v3416 = vmin.f32 %v3414, 15.0
        %v3417 = vmin.f32 %v3415, 15.0
        %v3418 = vmax.f32 %v3384, 0.0
        %v3419 = vmax.f32 %v3385, 0.0
        %v3420 = vmin.f32 %v3418, 15.0
        %v3421 = vmin.f32 %v3419, 15.0
        %v3422 = vmul.f32 %v3416, 16.0
        %v3423 = vmul.f32 %v3417, 16.0
        %3426 = vrot.lane.b32.xlu0 %v3416, 127
        %v3427 = vpop.permute.xlu0 %3426
        %3428 = vrot.lane.b32.xlu0 %v3417, 127
        %v3429 = vpop.permute.xlu0 %3428
        %v3432 = vadd.f32 %v3422, %v3427
        %v3433 = vadd.f32 %v3423, %v3429
        %v3434 = vcvt.f32.s32.to.zero.pseudo %v3432
        %v3435 = vcvt.f32.s32.to.zero.pseudo %v3433
        %3438 = vrot.lane.b32.xlu0 %v3420, 127
        %v3439 = vpop.permute.xlu0 %3438
        %3440 = vrot.lane.b32.xlu0 %v3421, 127
        %v3441 = vpop.permute.xlu0 %3440
        %v3444 = vadd.f32 %v3422, %v3439
        %v3445 = vadd.f32 %v3423, %v3441
        %v3446 = vcvt.f32.s32.to.zero.pseudo %v3444
        %v3447 = vcvt.f32.s32.to.zero.pseudo %v3445
        %v3448 = vmul.f32 %v3420, 16.0
        %v3449 = vmul.f32 %v3421, 16.0
        %v3450 = vadd.f32 %v3448, %v3427
        %v3451 = vadd.f32 %v3449, %v3429
        %v3452 = vcvt.f32.s32.to.zero.pseudo %v3450
        %v3453 = vcvt.f32.s32.to.zero.pseudo %v3451
        %v3454 = vadd.f32 %v3448, %v3439
        %v3455 = vadd.f32 %v3449, %v3441
        %v3456 = vcvt.f32.s32.to.zero.pseudo %v3454
        %v3457 = vcvt.f32.s32.to.zero.pseudo %v3455
        %3458 = vset.pattern.permute.xlu0 120
        %3459 = vperm.xlu0 %3458, %v3434
        %v3460 = vpop.permute.xlu0 %3459
        %3461 = vset.pattern.permute.xlu0 120
        %3462 = vperm.xlu0 %3461, %v3435
        %v3463 = vpop.permute.xlu0 %3462
        %vm3464 = vcmp.eq.s32.totalorder %v554, %v3460
        %vm3465 = vcmp.eq.s32.totalorder %v555, %v3460
        %vm3466 = vcmp.eq.s32.totalorder %v554, %v3463
        %vm3467 = vcmp.eq.s32.totalorder %v555, %v3463
        %3469 = vset.pattern.permute.xlu0 120
        %3470 = vperm.xlu0 %3469, %v3396
        %v3471 = vpop.permute.xlu0 %3470
        %3474 = vset.pattern.permute.xlu0 120
        %3475 = vperm.xlu0 %3474, %v3397
        %v3476 = vpop.permute.xlu0 %3475
        %v3478 = vsel %vm3464, %v3471, 0.0
        %v3479 = vsel %vm3465, %v3471, 0.0
        %v3480 = vsel %vm3466, %v3476, 0.0
        %v3481 = vsel %vm3467, %v3476, 0.0
        %3482 = vset.pattern.permute.xlu0 120
        %3483 = vperm.xlu0 %3482, %v3446
        %v3484 = vpop.permute.xlu0 %3483
        %3485 = vset.pattern.permute.xlu0 120
        %3486 = vperm.xlu0 %3485, %v3447
        %v3487 = vpop.permute.xlu0 %3486
        %vm3488 = vcmp.eq.s32.totalorder %v554, %v3484
        %vm3489 = vcmp.eq.s32.totalorder %v555, %v3484
        %vm3490 = vcmp.eq.s32.totalorder %v554, %v3487
        %vm3491 = vcmp.eq.s32.totalorder %v555, %v3487
        %3493 = vset.pattern.permute.xlu0 120
        %3494 = vperm.xlu0 %3493, %v3408
        %v3495 = vpop.permute.xlu0 %3494
        %3498 = vset.pattern.permute.xlu0 120
        %3499 = vperm.xlu0 %3498, %v3409
        %v3500 = vpop.permute.xlu0 %3499
        %v3502 = vsel %vm3488, %v3495, 0.0
        %v3503 = vsel %vm3489, %v3495, 0.0
        %v3504 = vsel %vm3490, %v3500, 0.0
        %v3505 = vsel %vm3491, %v3500, 0.0
        %v3506 = vadd.f32 %v3478, %v3502
        %v3507 = vadd.f32 %v3479, %v3503
        %v3508 = vadd.f32 %v3480, %v3504
        %v3509 = vadd.f32 %v3481, %v3505
        %3510 = vset.pattern.permute.xlu0 120
        %3511 = vperm.xlu0 %3510, %v3452
        %v3512 = vpop.permute.xlu0 %3511
        %3513 = vset.pattern.permute.xlu0 120
        %3514 = vperm.xlu0 %3513, %v3453
        %v3515 = vpop.permute.xlu0 %3514
        %vm3516 = vcmp.eq.s32.totalorder %v554, %v3512
        %vm3517 = vcmp.eq.s32.totalorder %v555, %v3512
        %vm3518 = vcmp.eq.s32.totalorder %v554, %v3515
        %vm3519 = vcmp.eq.s32.totalorder %v555, %v3515
        %3521 = vset.pattern.permute.xlu0 120
        %3522 = vperm.xlu0 %3521, %v3410
        %v3523 = vpop.permute.xlu0 %3522
        %3526 = vset.pattern.permute.xlu0 120
        %3527 = vperm.xlu0 %3526, %v3411
        %v3528 = vpop.permute.xlu0 %3527
        %v3530 = vsel %vm3516, %v3523, 0.0
        %v3531 = vsel %vm3517, %v3523, 0.0
        %v3532 = vsel %vm3518, %v3528, 0.0
        %v3533 = vsel %vm3519, %v3528, 0.0
        %v3534 = vadd.f32 %v3506, %v3530
        %v3535 = vadd.f32 %v3507, %v3531
        %v3536 = vadd.f32 %v3508, %v3532
        %v3537 = vadd.f32 %v3509, %v3533
        %3538 = vset.pattern.permute.xlu0 120
        %3539 = vperm.xlu0 %3538, %v3456
        %v3540 = vpop.permute.xlu0 %3539
        %3541 = vset.pattern.permute.xlu0 120
        %3542 = vperm.xlu0 %3541, %v3457
        %v3543 = vpop.permute.xlu0 %3542
        %vm3544 = vcmp.eq.s32.totalorder %v554, %v3540
        %vm3545 = vcmp.eq.s32.totalorder %v555, %v3540
        %vm3546 = vcmp.eq.s32.totalorder %v554, %v3543
        %vm3547 = vcmp.eq.s32.totalorder %v555, %v3543
        %3549 = vset.pattern.permute.xlu0 120
        %3550 = vperm.xlu0 %3549, %v3412
        %v3551 = vpop.permute.xlu0 %3550
        %3554 = vset.pattern.permute.xlu0 120
        %3555 = vperm.xlu0 %3554, %v3413
        %v3556 = vpop.permute.xlu0 %3555
        %v3558 = vsel %vm3544, %v3551, 0.0
        %v3559 = vsel %vm3545, %v3551, 0.0
        %v3560 = vsel %vm3546, %v3556, 0.0
        %v3561 = vsel %vm3547, %v3556, 0.0
        %v3562 = vadd.f32 %v3534, %v3558
        %v3563 = vadd.f32 %v3535, %v3559
        %v3564 = vadd.f32 %v3536, %v3560
        %v3565 = vadd.f32 %v3537, %v3561
        %v3566 = vpack.c.bf16 %v3564, %v3562
        %v3567 = vpack.c.bf16 %v3565, %v3563
        %3568 = vmatpush.bf16.msra.mxu0 %v669
        %3569 = vmatpush.bf16.msra.mxu0 %v668
        %3570 = vmatpush.bf16.msra.mxu0 %v667
        %3571 = vmatpush.bf16.msra.mxu0 %v666
        %3572 = vmatpush.bf16.msra.mxu0 %v665
        %3573 = vmatpush.bf16.msra.mxu0 %v664
        %3574 = vmatpush.bf16.msra.mxu0 %v663
        %3575 = vmatpush.bf16.msra.mxu0 %v662
        %3576 = vmatmul.bf16.gmra.mxu0 %v3566
        %v3577 = vpop.f32.mrf.mxu0
        %v3578 = vadd.f32 %v3376, %v3577
        %v3579 = vpop.f32.mrf.mxu0
        %v3580 = vadd.f32 %v3377, %v3579
        %3581 = vdwg.mxu0
        %3582 = vmatpush.bf16.msra.mxu0 %v677
        %3583 = vmatpush.bf16.msra.mxu0 %v676
        %3584 = vmatpush.bf16.msra.mxu0 %v675
        %3585 = vmatpush.bf16.msra.mxu0 %v674
        %3586 = vmatpush.bf16.msra.mxu0 %v673
        %3587 = vmatpush.bf16.msra.mxu0 %v672
        %3588 = vmatpush.bf16.msra.mxu0 %v671
        %3589 = vmatpush.bf16.msra.mxu0 %v670
        %3590 = vmatmul.bf16.gmra.mxu0 %v3567
        %v3591 = vpop.f32.mrf.mxu0
        %v3592 = vadd.f32 %v3578, %v3591
        %v3593 = vpop.f32.mrf.mxu0
        %v3594 = vadd.f32 %v3580, %v3593
        %3595 = vdwg.mxu0
        %v3596 = vpack.c.bf16 %v3594, %v3592
        %3597 = vmatpush.bf16.msra.mxu0 0
        %3598 = vmatpush.bf16.msra.mxu0 0
        %3599 = vmatpush.bf16.msra.mxu0 0
        %3600 = vmatpush.bf16.msra.mxu0 0
        %3601 = vmatpush.bf16.msra.mxu0 0
        %3602 = vmatpush.bf16.msra.mxu0 0
        %3603 = vmatpush.bf16.msra.mxu0 0
        %3604 = vmatpush.bf16.msra.mxu0 %v3596
        %3605 = vmatmul.bf16.gmra.mxu0 %v725
        %v3606 = vpop.f32.mrf.mxu0
        %v3607 = vadd.f32 0.0, %v3606
        %v3608 = vpop.f32.mrf.mxu0
        %v3609 = vadd.f32 0.0, %v3608
        %3610 = vdwg.mxu0
        %v3611 = vpack.c.bf16 %v3609, %v3607
        %s3612 = scalar_lea.vmem [#allocation10], 896
        %v3613 = vld [vmem:[%s3612] sm:$0xf]
        %v3614 = vld [vmem:[%s3612 + $0x4] sm:$0xf]
        %v3615 = vld [vmem:[%s3612 + $0x8] sm:$0xf]
        %v3616 = vld [vmem:[%s3612 + $0xc] sm:$0xf]
        %v3617 = vld [vmem:[%s3612 + $0x10] sm:$0xf]
        %v3618 = vld [vmem:[%s3612 + $0x14] sm:$0xf]
        %v3619 = vld [vmem:[%s3612 + $0x18] sm:$0xf]
        %v3620 = vld [vmem:[%s3612 + $0x1c] sm:$0xf]
        %v3621 = vld [vmem:[%s3612 + $0x20] sm:$0xf]
        %v3622 = vld [vmem:[%s3612 + $0x24] sm:$0xf]
        %v3623 = vld [vmem:[%s3612 + $0x28] sm:$0xf]
        %v3624 = vld [vmem:[%s3612 + $0x2c] sm:$0xf]
        %v3625 = vld [vmem:[%s3612 + $0x30] sm:$0xf]
        %v3626 = vld [vmem:[%s3612 + $0x34] sm:$0xf]
        %v3627 = vld [vmem:[%s3612 + $0x38] sm:$0xf]
        %v3628 = vld [vmem:[%s3612 + $0x3c] sm:$0xf]
        %s3629 = scalar_lea.vmem [#allocation11], 896
        %v3630 = vld [vmem:[%s3629] sm:$0xf]
        %v3631 = vld [vmem:[%s3629 + $0x4] sm:$0xf]
        %v3632 = vld [vmem:[%s3629 + $0x8] sm:$0xf]
        %v3633 = vld [vmem:[%s3629 + $0xc] sm:$0xf]
        %v3634 = vld [vmem:[%s3629 + $0x10] sm:$0xf]
        %v3635 = vld [vmem:[%s3629 + $0x14] sm:$0xf]
        %v3636 = vld [vmem:[%s3629 + $0x18] sm:$0xf]
        %v3637 = vld [vmem:[%s3629 + $0x1c] sm:$0xf]
        %v3638 = vld [vmem:[%s3629 + $0x20] sm:$0xf]
        %v3639 = vld [vmem:[%s3629 + $0x24] sm:$0xf]
        %v3640 = vld [vmem:[%s3629 + $0x28] sm:$0xf]
        %v3641 = vld [vmem:[%s3629 + $0x2c] sm:$0xf]
        %v3642 = vld [vmem:[%s3629 + $0x30] sm:$0xf]
        %v3643 = vld [vmem:[%s3629 + $0x34] sm:$0xf]
        %v3644 = vld [vmem:[%s3629 + $0x38] sm:$0xf]
        %v3645 = vld [vmem:[%s3629 + $0x3c] sm:$0xf]
        %v3662 = vunpack.c.l.b16 %v3630
        %v3663 = vunpack.c.l.b16 %v3631
        %v3664 = vunpack.c.l.b16 %v3632
        %v3665 = vunpack.c.l.b16 %v3633
        %v3666 = vunpack.c.l.b16 %v3634
        %v3667 = vunpack.c.l.b16 %v3635
        %v3668 = vunpack.c.l.b16 %v3636
        %v3669 = vunpack.c.l.b16 %v3637
        %v3670 = vunpack.c.l.b16 %v3638
        %v3671 = vunpack.c.l.b16 %v3639
        %v3672 = vunpack.c.l.b16 %v3640
        %v3673 = vunpack.c.l.b16 %v3641
        %v3674 = vunpack.c.l.b16 %v3642
        %v3675 = vunpack.c.l.b16 %v3643
        %v3676 = vunpack.c.l.b16 %v3644
        %v3677 = vunpack.c.l.b16 %v3645
        %v3678 = vpack.c.b16 %v3663, %v3662
        %v3679 = vpack.c.b16 %v3665, %v3664
        %v3680 = vpack.c.b16 %v3667, %v3666
        %v3681 = vpack.c.b16 %v3669, %v3668
        %v3682 = vpack.c.b16 %v3671, %v3670
        %v3683 = vpack.c.b16 %v3673, %v3672
        %v3684 = vpack.c.b16 %v3675, %v3674
        %v3685 = vpack.c.b16 %v3677, %v3676
        %3694 = vmatpush.bf16.msra.mxu0 %v3685
        %3695 = vmatpush.bf16.msra.mxu0 %v3684
        %3696 = vmatpush.bf16.msra.mxu0 %v3683
        %3697 = vmatpush.bf16.msra.mxu0 %v3682
        %3698 = vmatpush.bf16.msra.mxu0 %v3681
        %3699 = vmatpush.bf16.msra.mxu0 %v3680
        %3700 = vmatpush.bf16.msra.mxu0 %v3679
        %3701 = vmatpush.bf16.msra.mxu0 %v3678
        %3702 = vmatmul.bf16.gmra.mxu0 %v3611
        %v3703 = vpop.f32.mrf.mxu0
        %v3704 = vadd.f32 0.0, %v3703
        %v3705 = vpop.f32.mrf.mxu0
        %v3706 = vadd.f32 0.0, %v3705
        %3707 = vdwg.mxu0
        %v3724 = vunpack.c.l.b16 %v3613
        %v3725 = vunpack.c.l.b16 %v3614
        %v3726 = vunpack.c.l.b16 %v3615
        %v3727 = vunpack.c.l.b16 %v3616
        %v3728 = vunpack.c.l.b16 %v3617
        %v3729 = vunpack.c.l.b16 %v3618
        %v3730 = vunpack.c.l.b16 %v3619
        %v3731 = vunpack.c.l.b16 %v3620
        %v3732 = vunpack.c.l.b16 %v3621
        %v3733 = vunpack.c.l.b16 %v3622
        %v3734 = vunpack.c.l.b16 %v3623
        %v3735 = vunpack.c.l.b16 %v3624
        %v3736 = vunpack.c.l.b16 %v3625
        %v3737 = vunpack.c.l.b16 %v3626
        %v3738 = vunpack.c.l.b16 %v3627
        %v3739 = vunpack.c.l.b16 %v3628
        %v3740 = vpack.c.b16 %v3725, %v3724
        %v3741 = vpack.c.b16 %v3727, %v3726
        %v3742 = vpack.c.b16 %v3729, %v3728
        %v3743 = vpack.c.b16 %v3731, %v3730
        %v3744 = vpack.c.b16 %v3733, %v3732
        %v3745 = vpack.c.b16 %v3735, %v3734
        %v3746 = vpack.c.b16 %v3737, %v3736
        %v3747 = vpack.c.b16 %v3739, %v3738
        %3756 = vmatpush.bf16.msra.mxu0 %v3747
        %3757 = vmatpush.bf16.msra.mxu0 %v3746
        %3758 = vmatpush.bf16.msra.mxu0 %v3745
        %3759 = vmatpush.bf16.msra.mxu0 %v3744
        %3760 = vmatpush.bf16.msra.mxu0 %v3743
        %3761 = vmatpush.bf16.msra.mxu0 %v3742
        %3762 = vmatpush.bf16.msra.mxu0 %v3741
        %3763 = vmatpush.bf16.msra.mxu0 %v3740
        %3764 = vmatmul.bf16.gmra.mxu0 %v3596
        %v3765 = vpop.f32.mrf.mxu0
        %v3766 = vadd.f32 %v3704, %v3765
        %v3767 = vpop.f32.mrf.mxu0
        %v3768 = vadd.f32 %v3706, %v3767
        %3769 = vdwg.mxu0
        %s3770 = scalar_lea.vmem [#allocation13], 14
        %v3771 = vld [vmem:[%s3770] sm:$0x1]
        %v3773 = vperm.slane %v3771, 0
        %v3775 = vadd.f32 %v3766, %v3773
        %v3776 = vadd.f32 %v3768, %v3773
        %v3777 = vpack.c.bf16 %v3776, %v3775
        %3778 = vmatpush.bf16.msra.mxu0 0
        %3779 = vmatpush.bf16.msra.mxu0 0
        %3780 = vmatpush.bf16.msra.mxu0 0
        %3781 = vmatpush.bf16.msra.mxu0 0
        %3782 = vmatpush.bf16.msra.mxu0 0
        %3783 = vmatpush.bf16.msra.mxu0 0
        %3784 = vmatpush.bf16.msra.mxu0 0
        %3785 = vmatpush.bf16.msra.mxu0 %v3777
        %3786 = vmatmul.bf16.gmra.mxu0 %v725
        %v3787 = vpop.f32.mrf.mxu0
        %v3788 = vadd.f32 0.0, %v3787
        %v3789 = vpop.f32.mrf.mxu0
        %v3790 = vadd.f32 0.0, %v3789
        %3791 = vdwg.mxu0
        %v3792 = vpack.c.bf16 %v3790, %v3788
        %s3793 = scalar_lea.vmem [#allocation10], 960
        %v3794 = vld [vmem:[%s3793] sm:$0xf]
        %v3795 = vld [vmem:[%s3793 + $0x4] sm:$0xf]
        %v3796 = vld [vmem:[%s3793 + $0x8] sm:$0xf]
        %v3797 = vld [vmem:[%s3793 + $0xc] sm:$0xf]
        %v3798 = vld [vmem:[%s3793 + $0x10] sm:$0xf]
        %v3799 = vld [vmem:[%s3793 + $0x14] sm:$0xf]
        %v3800 = vld [vmem:[%s3793 + $0x18] sm:$0xf]
        %v3801 = vld [vmem:[%s3793 + $0x1c] sm:$0xf]
        %v3802 = vld [vmem:[%s3793 + $0x20] sm:$0xf]
        %v3803 = vld [vmem:[%s3793 + $0x24] sm:$0xf]
        %v3804 = vld [vmem:[%s3793 + $0x28] sm:$0xf]
        %v3805 = vld [vmem:[%s3793 + $0x2c] sm:$0xf]
        %v3806 = vld [vmem:[%s3793 + $0x30] sm:$0xf]
        %v3807 = vld [vmem:[%s3793 + $0x34] sm:$0xf]
        %v3808 = vld [vmem:[%s3793 + $0x38] sm:$0xf]
        %v3809 = vld [vmem:[%s3793 + $0x3c] sm:$0xf]
        %s3810 = scalar_lea.vmem [#allocation11], 960
        %v3811 = vld [vmem:[%s3810] sm:$0xf]
        %v3812 = vld [vmem:[%s3810 + $0x4] sm:$0xf]
        %v3813 = vld [vmem:[%s3810 + $0x8] sm:$0xf]
        %v3814 = vld [vmem:[%s3810 + $0xc] sm:$0xf]
        %v3815 = vld [vmem:[%s3810 + $0x10] sm:$0xf]
        %v3816 = vld [vmem:[%s3810 + $0x14] sm:$0xf]
        %v3817 = vld [vmem:[%s3810 + $0x18] sm:$0xf]
        %v3818 = vld [vmem:[%s3810 + $0x1c] sm:$0xf]
        %v3819 = vld [vmem:[%s3810 + $0x20] sm:$0xf]
        %v3820 = vld [vmem:[%s3810 + $0x24] sm:$0xf]
        %v3821 = vld [vmem:[%s3810 + $0x28] sm:$0xf]
        %v3822 = vld [vmem:[%s3810 + $0x2c] sm:$0xf]
        %v3823 = vld [vmem:[%s3810 + $0x30] sm:$0xf]
        %v3824 = vld [vmem:[%s3810 + $0x34] sm:$0xf]
        %v3825 = vld [vmem:[%s3810 + $0x38] sm:$0xf]
        %v3826 = vld [vmem:[%s3810 + $0x3c] sm:$0xf]
        %v3843 = vunpack.c.l.b16 %v3811
        %v3844 = vunpack.c.l.b16 %v3812
        %v3845 = vunpack.c.l.b16 %v3813
        %v3846 = vunpack.c.l.b16 %v3814
        %v3847 = vunpack.c.l.b16 %v3815
        %v3848 = vunpack.c.l.b16 %v3816
        %v3849 = vunpack.c.l.b16 %v3817
        %v3850 = vunpack.c.l.b16 %v3818
        %v3851 = vunpack.c.l.b16 %v3819
        %v3852 = vunpack.c.l.b16 %v3820
        %v3853 = vunpack.c.l.b16 %v3821
        %v3854 = vunpack.c.l.b16 %v3822
        %v3855 = vunpack.c.l.b16 %v3823
        %v3856 = vunpack.c.l.b16 %v3824
        %v3857 = vunpack.c.l.b16 %v3825
        %v3858 = vunpack.c.l.b16 %v3826
        %v3859 = vpack.c.b16 %v3844, %v3843
        %v3860 = vpack.c.b16 %v3846, %v3845
        %v3861 = vpack.c.b16 %v3848, %v3847
        %v3862 = vpack.c.b16 %v3850, %v3849
        %v3863 = vpack.c.b16 %v3852, %v3851
        %v3864 = vpack.c.b16 %v3854, %v3853
        %v3865 = vpack.c.b16 %v3856, %v3855
        %v3866 = vpack.c.b16 %v3858, %v3857
        %3875 = vmatpush.bf16.msra.mxu0 %v3866
        %3876 = vmatpush.bf16.msra.mxu0 %v3865
        %3877 = vmatpush.bf16.msra.mxu0 %v3864
        %3878 = vmatpush.bf16.msra.mxu0 %v3863
        %3879 = vmatpush.bf16.msra.mxu0 %v3862
        %3880 = vmatpush.bf16.msra.mxu0 %v3861
        %3881 = vmatpush.bf16.msra.mxu0 %v3860
        %3882 = vmatpush.bf16.msra.mxu0 %v3859
        %3883 = vmatmul.bf16.gmra.mxu0 %v3792
        %v3884 = vpop.f32.mrf.mxu0
        %v3885 = vadd.f32 0.0, %v3884
        %v3886 = vpop.f32.mrf.mxu0
        %v3887 = vadd.f32 0.0, %v3886
        %3888 = vdwg.mxu0
        %v3905 = vunpack.c.l.b16 %v3794
        %v3906 = vunpack.c.l.b16 %v3795
        %v3907 = vunpack.c.l.b16 %v3796
        %v3908 = vunpack.c.l.b16 %v3797
        %v3909 = vunpack.c.l.b16 %v3798
        %v3910 = vunpack.c.l.b16 %v3799
        %v3911 = vunpack.c.l.b16 %v3800
        %v3912 = vunpack.c.l.b16 %v3801
        %v3913 = vunpack.c.l.b16 %v3802
        %v3914 = vunpack.c.l.b16 %v3803
        %v3915 = vunpack.c.l.b16 %v3804
        %v3916 = vunpack.c.l.b16 %v3805
        %v3917 = vunpack.c.l.b16 %v3806
        %v3918 = vunpack.c.l.b16 %v3807
        %v3919 = vunpack.c.l.b16 %v3808
        %v3920 = vunpack.c.l.b16 %v3809
        %v3921 = vpack.c.b16 %v3906, %v3905
        %v3922 = vpack.c.b16 %v3908, %v3907
        %v3923 = vpack.c.b16 %v3910, %v3909
        %v3924 = vpack.c.b16 %v3912, %v3911
        %v3925 = vpack.c.b16 %v3914, %v3913
        %v3926 = vpack.c.b16 %v3916, %v3915
        %v3927 = vpack.c.b16 %v3918, %v3917
        %v3928 = vpack.c.b16 %v3920, %v3919
        %3937 = vmatpush.bf16.msra.mxu0 %v3928
        %3938 = vmatpush.bf16.msra.mxu0 %v3927
        %3939 = vmatpush.bf16.msra.mxu0 %v3926
        %3940 = vmatpush.bf16.msra.mxu0 %v3925
        %3941 = vmatpush.bf16.msra.mxu0 %v3924
        %3942 = vmatpush.bf16.msra.mxu0 %v3923
        %3943 = vmatpush.bf16.msra.mxu0 %v3922
        %3944 = vmatpush.bf16.msra.mxu0 %v3921
        %3945 = vmatmul.bf16.gmra.mxu0 %v3777
        %v3946 = vpop.f32.mrf.mxu0
        %v3947 = vadd.f32 %v3885, %v3946
        %v3948 = vpop.f32.mrf.mxu0
        %v3949 = vadd.f32 %v3887, %v3948
        %3950 = vdwg.mxu0
        %s3951 = scalar_lea.vmem [#allocation13], 15
        %v3952 = vld [vmem:[%s3951] sm:$0x1]
        %v3954 = vperm.slane %v3952, 0
        %v3956 = vadd.f32 %v3947, %v3954
        %v3957 = vadd.f32 %v3949, %v3954
        %v3958 = vmax.f32 %v3956, 0.0
        %v3959 = vmax.f32 %v3957, 0.0
        %v3960 = vpack.c.bf16 %v3959, %v3958
        %3961 = vmatpush.bf16.msra.mxu0 0
        %3962 = vmatpush.bf16.msra.mxu0 0
        %3963 = vmatpush.bf16.msra.mxu0 0
        %3964 = vmatpush.bf16.msra.mxu0 0
        %3965 = vmatpush.bf16.msra.mxu0 0
        %3966 = vmatpush.bf16.msra.mxu0 0
        %3967 = vmatpush.bf16.msra.mxu0 0
        %3968 = vmatpush.bf16.msra.mxu0 %v3960
        %3969 = vmatmul.bf16.gmra.mxu0 %v725
        %v3970 = vpop.f32.mrf.mxu0
        %v3971 = vadd.f32 0.0, %v3970
        %v3972 = vpop.f32.mrf.mxu0
        %v3973 = vadd.f32 0.0, %v3972
        %3974 = vdwg.mxu0
        %v3975 = vpack.c.bf16 %v3973, %v3971
        %s3976 = scalar_lea.vmem [#allocation10], 1024
        %v3977 = vld [vmem:[%s3976] sm:$0xf]
        %v3978 = vld [vmem:[%s3976 + $0x4] sm:$0xf]
        %v3979 = vld [vmem:[%s3976 + $0x8] sm:$0xf]
        %v3980 = vld [vmem:[%s3976 + $0xc] sm:$0xf]
        %v3981 = vld [vmem:[%s3976 + $0x10] sm:$0xf]
        %v3982 = vld [vmem:[%s3976 + $0x14] sm:$0xf]
        %v3983 = vld [vmem:[%s3976 + $0x18] sm:$0xf]
        %v3984 = vld [vmem:[%s3976 + $0x1c] sm:$0xf]
        %v3985 = vld [vmem:[%s3976 + $0x20] sm:$0xf]
        %v3986 = vld [vmem:[%s3976 + $0x24] sm:$0xf]
        %v3987 = vld [vmem:[%s3976 + $0x28] sm:$0xf]
        %v3988 = vld [vmem:[%s3976 + $0x2c] sm:$0xf]
        %v3989 = vld [vmem:[%s3976 + $0x30] sm:$0xf]
        %v3990 = vld [vmem:[%s3976 + $0x34] sm:$0xf]
        %v3991 = vld [vmem:[%s3976 + $0x38] sm:$0xf]
        %v3992 = vld [vmem:[%s3976 + $0x3c] sm:$0xf]
        %s3993 = scalar_lea.vmem [#allocation11], 1024
        %v3994 = vld [vmem:[%s3993] sm:$0xf]
        %v3995 = vld [vmem:[%s3993 + $0x4] sm:$0xf]
        %v3996 = vld [vmem:[%s3993 + $0x8] sm:$0xf]
        %v3997 = vld [vmem:[%s3993 + $0xc] sm:$0xf]
        %v3998 = vld [vmem:[%s3993 + $0x10] sm:$0xf]
        %v3999 = vld [vmem:[%s3993 + $0x14] sm:$0xf]
        %v4000 = vld [vmem:[%s3993 + $0x18] sm:$0xf]
        %v4001 = vld [vmem:[%s3993 + $0x1c] sm:$0xf]
        %v4002 = vld [vmem:[%s3993 + $0x20] sm:$0xf]
        %v4003 = vld [vmem:[%s3993 + $0x24] sm:$0xf]
        %v4004 = vld [vmem:[%s3993 + $0x28] sm:$0xf]
        %v4005 = vld [vmem:[%s3993 + $0x2c] sm:$0xf]
        %v4006 = vld [vmem:[%s3993 + $0x30] sm:$0xf]
        %v4007 = vld [vmem:[%s3993 + $0x34] sm:$0xf]
        %v4008 = vld [vmem:[%s3993 + $0x38] sm:$0xf]
        %v4009 = vld [vmem:[%s3993 + $0x3c] sm:$0xf]
        %v4026 = vunpack.c.l.b16 %v3994
        %v4027 = vunpack.c.l.b16 %v3995
        %v4028 = vunpack.c.l.b16 %v3996
        %v4029 = vunpack.c.l.b16 %v3997
        %v4030 = vunpack.c.l.b16 %v3998
        %v4031 = vunpack.c.l.b16 %v3999
        %v4032 = vunpack.c.l.b16 %v4000
        %v4033 = vunpack.c.l.b16 %v4001
        %v4034 = vunpack.c.l.b16 %v4002
        %v4035 = vunpack.c.l.b16 %v4003
        %v4036 = vunpack.c.l.b16 %v4004
        %v4037 = vunpack.c.l.b16 %v4005
        %v4038 = vunpack.c.l.b16 %v4006
        %v4039 = vunpack.c.l.b16 %v4007
        %v4040 = vunpack.c.l.b16 %v4008
        %v4041 = vunpack.c.l.b16 %v4009
        %v4042 = vpack.c.b16 %v4027, %v4026
        %v4043 = vpack.c.b16 %v4029, %v4028
        %v4044 = vpack.c.b16 %v4031, %v4030
        %v4045 = vpack.c.b16 %v4033, %v4032
        %v4046 = vpack.c.b16 %v4035, %v4034
        %v4047 = vpack.c.b16 %v4037, %v4036
        %v4048 = vpack.c.b16 %v4039, %v4038
        %v4049 = vpack.c.b16 %v4041, %v4040
        %4058 = vmatpush.bf16.msra.mxu0 %v4049
        %4059 = vmatpush.bf16.msra.mxu0 %v4048
        %4060 = vmatpush.bf16.msra.mxu0 %v4047
        %4061 = vmatpush.bf16.msra.mxu0 %v4046
        %4062 = vmatpush.bf16.msra.mxu0 %v4045
        %4063 = vmatpush.bf16.msra.mxu0 %v4044
        %4064 = vmatpush.bf16.msra.mxu0 %v4043
        %4065 = vmatpush.bf16.msra.mxu0 %v4042
        %4066 = vmatmul.bf16.gmra.mxu0 %v3975
        %v4067 = vpop.f32.mrf.mxu0
        %v4068 = vadd.f32 0.0, %v4067
        %v4069 = vpop.f32.mrf.mxu0
        %v4070 = vadd.f32 0.0, %v4069
        %4071 = vdwg.mxu0
        %v4088 = vunpack.c.l.b16 %v3977
        %v4089 = vunpack.c.l.b16 %v3978
        %v4090 = vunpack.c.l.b16 %v3979
        %v4091 = vunpack.c.l.b16 %v3980
        %v4092 = vunpack.c.l.b16 %v3981
        %v4093 = vunpack.c.l.b16 %v3982
        %v4094 = vunpack.c.l.b16 %v3983
        %v4095 = vunpack.c.l.b16 %v3984
        %v4096 = vunpack.c.l.b16 %v3985
        %v4097 = vunpack.c.l.b16 %v3986
        %v4098 = vunpack.c.l.b16 %v3987
        %v4099 = vunpack.c.l.b16 %v3988
        %v4100 = vunpack.c.l.b16 %v3989
        %v4101 = vunpack.c.l.b16 %v3990
        %v4102 = vunpack.c.l.b16 %v3991
        %v4103 = vunpack.c.l.b16 %v3992
        %v4104 = vpack.c.b16 %v4089, %v4088
        %v4105 = vpack.c.b16 %v4091, %v4090
        %v4106 = vpack.c.b16 %v4093, %v4092
        %v4107 = vpack.c.b16 %v4095, %v4094
        %v4108 = vpack.c.b16 %v4097, %v4096
        %v4109 = vpack.c.b16 %v4099, %v4098
        %v4110 = vpack.c.b16 %v4101, %v4100
        %v4111 = vpack.c.b16 %v4103, %v4102
        %4120 = vmatpush.bf16.msra.mxu0 %v4111
        %4121 = vmatpush.bf16.msra.mxu0 %v4110
        %4122 = vmatpush.bf16.msra.mxu0 %v4109
        %4123 = vmatpush.bf16.msra.mxu0 %v4108
        %4124 = vmatpush.bf16.msra.mxu0 %v4107
        %4125 = vmatpush.bf16.msra.mxu0 %v4106
        %4126 = vmatpush.bf16.msra.mxu0 %v4105
        %4127 = vmatpush.bf16.msra.mxu0 %v4104
        %4128 = vmatmul.bf16.gmra.mxu0 %v3960
        %v4129 = vpop.f32.mrf.mxu0
        %v4130 = vadd.f32 %v4068, %v4129
        %v4131 = vpop.f32.mrf.mxu0
        %v4132 = vadd.f32 %v4070, %v4131
        %4133 = vdwg.mxu0
        %s4134 = scalar_lea.vmem [#allocation13], 16
        %v4135 = vld [vmem:[%s4134] sm:$0x1]
        %v4137 = vperm.slane %v4135, 0
        %v4139 = vadd.f32 %v4130, %v4137
        %v4140 = vadd.f32 %v4132, %v4137
        %v4141 = vadd.f32 %v4139, %v3775
        %v4142 = vadd.f32 %v4140, %v3776
        %v4143 = vmax.f32 %v4141, 0.0
        %v4144 = vmax.f32 %v4142, 0.0
        %v4145 = vpack.c.bf16 %v4144, %v4143
        %4146 = vmatpush.bf16.msra.mxu0 0
        %4147 = vmatpush.bf16.msra.mxu0 0
        %4148 = vmatpush.bf16.msra.mxu0 0
        %4149 = vmatpush.bf16.msra.mxu0 0
        %4150 = vmatpush.bf16.msra.mxu0 0
        %4151 = vmatpush.bf16.msra.mxu0 0
        %4152 = vmatpush.bf16.msra.mxu0 0
        %4153 = vmatpush.bf16.msra.mxu0 %v4145
        %4154 = vmatmul.bf16.gmra.mxu0 %v725
        %v4155 = vpop.f32.mrf.mxu0
        %v4156 = vadd.f32 0.0, %v4155
        %v4157 = vpop.f32.mrf.mxu0
        %v4158 = vadd.f32 0.0, %v4157
        %4159 = vdwg.mxu0
        %v4160 = vpack.c.bf16 %v4158, %v4156
        %s4161 = scalar_lea.vmem [#allocation10], 1088
        %v4162 = vld [vmem:[%s4161] sm:$0xf]
        %v4163 = vld [vmem:[%s4161 + $0x4] sm:$0xf]
        %v4164 = vld [vmem:[%s4161 + $0x8] sm:$0xf]
        %v4165 = vld [vmem:[%s4161 + $0xc] sm:$0xf]
        %v4166 = vld [vmem:[%s4161 + $0x10] sm:$0xf]
        %v4167 = vld [vmem:[%s4161 + $0x14] sm:$0xf]
        %v4168 = vld [vmem:[%s4161 + $0x18] sm:$0xf]
        %v4169 = vld [vmem:[%s4161 + $0x1c] sm:$0xf]
        %v4170 = vld [vmem:[%s4161 + $0x20] sm:$0xf]
        %v4171 = vld [vmem:[%s4161 + $0x24] sm:$0xf]
        %v4172 = vld [vmem:[%s4161 + $0x28] sm:$0xf]
        %v4173 = vld [vmem:[%s4161 + $0x2c] sm:$0xf]
        %v4174 = vld [vmem:[%s4161 + $0x30] sm:$0xf]
        %v4175 = vld [vmem:[%s4161 + $0x34] sm:$0xf]
        %v4176 = vld [vmem:[%s4161 + $0x38] sm:$0xf]
        %v4177 = vld [vmem:[%s4161 + $0x3c] sm:$0xf]
        %s4178 = scalar_lea.vmem [#allocation11], 1088
        %v4179 = vld [vmem:[%s4178] sm:$0xf]
        %v4180 = vld [vmem:[%s4178 + $0x4] sm:$0xf]
        %v4181 = vld [vmem:[%s4178 + $0x8] sm:$0xf]
        %v4182 = vld [vmem:[%s4178 + $0xc] sm:$0xf]
        %v4183 = vld [vmem:[%s4178 + $0x10] sm:$0xf]
        %v4184 = vld [vmem:[%s4178 + $0x14] sm:$0xf]
        %v4185 = vld [vmem:[%s4178 + $0x18] sm:$0xf]
        %v4186 = vld [vmem:[%s4178 + $0x1c] sm:$0xf]
        %v4187 = vld [vmem:[%s4178 + $0x20] sm:$0xf]
        %v4188 = vld [vmem:[%s4178 + $0x24] sm:$0xf]
        %v4189 = vld [vmem:[%s4178 + $0x28] sm:$0xf]
        %v4190 = vld [vmem:[%s4178 + $0x2c] sm:$0xf]
        %v4191 = vld [vmem:[%s4178 + $0x30] sm:$0xf]
        %v4192 = vld [vmem:[%s4178 + $0x34] sm:$0xf]
        %v4193 = vld [vmem:[%s4178 + $0x38] sm:$0xf]
        %v4194 = vld [vmem:[%s4178 + $0x3c] sm:$0xf]
        %v4211 = vunpack.c.l.b16 %v4179
        %v4212 = vunpack.c.l.b16 %v4180
        %v4213 = vunpack.c.l.b16 %v4181
        %v4214 = vunpack.c.l.b16 %v4182
        %v4215 = vunpack.c.l.b16 %v4183
        %v4216 = vunpack.c.l.b16 %v4184
        %v4217 = vunpack.c.l.b16 %v4185
        %v4218 = vunpack.c.l.b16 %v4186
        %v4219 = vunpack.c.l.b16 %v4187
        %v4220 = vunpack.c.l.b16 %v4188
        %v4221 = vunpack.c.l.b16 %v4189
        %v4222 = vunpack.c.l.b16 %v4190
        %v4223 = vunpack.c.l.b16 %v4191
        %v4224 = vunpack.c.l.b16 %v4192
        %v4225 = vunpack.c.l.b16 %v4193
        %v4226 = vunpack.c.l.b16 %v4194
        %v4227 = vpack.c.b16 %v4212, %v4211
        %v4228 = vpack.c.b16 %v4214, %v4213
        %v4229 = vpack.c.b16 %v4216, %v4215
        %v4230 = vpack.c.b16 %v4218, %v4217
        %v4231 = vpack.c.b16 %v4220, %v4219
        %v4232 = vpack.c.b16 %v4222, %v4221
        %v4233 = vpack.c.b16 %v4224, %v4223
        %v4234 = vpack.c.b16 %v4226, %v4225
        %4243 = vmatpush.bf16.msra.mxu0 %v4234
        %4244 = vmatpush.bf16.msra.mxu0 %v4233
        %4245 = vmatpush.bf16.msra.mxu0 %v4232
        %4246 = vmatpush.bf16.msra.mxu0 %v4231
        %4247 = vmatpush.bf16.msra.mxu0 %v4230
        %4248 = vmatpush.bf16.msra.mxu0 %v4229
        %4249 = vmatpush.bf16.msra.mxu0 %v4228
        %4250 = vmatpush.bf16.msra.mxu0 %v4227
        %4251 = vmatmul.bf16.gmra.mxu0 %v4160
        %v4252 = vpop.f32.mrf.mxu0
        %v4253 = vadd.f32 0.0, %v4252
        %v4254 = vpop.f32.mrf.mxu0
        %v4255 = vadd.f32 0.0, %v4254
        %4256 = vdwg.mxu0
        %v4273 = vunpack.c.l.b16 %v4162
        %v4274 = vunpack.c.l.b16 %v4163
        %v4275 = vunpack.c.l.b16 %v4164
        %v4276 = vunpack.c.l.b16 %v4165
        %v4277 = vunpack.c.l.b16 %v4166
        %v4278 = vunpack.c.l.b16 %v4167
        %v4279 = vunpack.c.l.b16 %v4168
        %v4280 = vunpack.c.l.b16 %v4169
        %v4281 = vunpack.c.l.b16 %v4170
        %v4282 = vunpack.c.l.b16 %v4171
        %v4283 = vunpack.c.l.b16 %v4172
        %v4284 = vunpack.c.l.b16 %v4173
        %v4285 = vunpack.c.l.b16 %v4174
        %v4286 = vunpack.c.l.b16 %v4175
        %v4287 = vunpack.c.l.b16 %v4176
        %v4288 = vunpack.c.l.b16 %v4177
        %v4289 = vpack.c.b16 %v4274, %v4273
        %v4290 = vpack.c.b16 %v4276, %v4275
        %v4291 = vpack.c.b16 %v4278, %v4277
        %v4292 = vpack.c.b16 %v4280, %v4279
        %v4293 = vpack.c.b16 %v4282, %v4281
        %v4294 = vpack.c.b16 %v4284, %v4283
        %v4295 = vpack.c.b16 %v4286, %v4285
        %v4296 = vpack.c.b16 %v4288, %v4287
        %4305 = vmatpush.bf16.msra.mxu0 %v4296
        %4306 = vmatpush.bf16.msra.mxu0 %v4295
        %4307 = vmatpush.bf16.msra.mxu0 %v4294
        %4308 = vmatpush.bf16.msra.mxu0 %v4293
        %4309 = vmatpush.bf16.msra.mxu0 %v4292
        %4310 = vmatpush.bf16.msra.mxu0 %v4291
        %4311 = vmatpush.bf16.msra.mxu0 %v4290
        %4312 = vmatpush.bf16.msra.mxu0 %v4289
        %4313 = vmatmul.bf16.gmra.mxu0 %v4145
        %v4314 = vpop.f32.mrf.mxu0
        %v4315 = vadd.f32 %v4253, %v4314
        %v4316 = vpop.f32.mrf.mxu0
        %v4317 = vadd.f32 %v4255, %v4316
        %4318 = vdwg.mxu0
        %s4319 = scalar_lea.vmem [#allocation13], 17
        %v4320 = vld [vmem:[%s4319] sm:$0x1]
        %v4322 = vperm.slane %v4320, 0
        %v4324 = vadd.f32 %v4315, %v4322
        %v4325 = vadd.f32 %v4317, %v4322
        %v4326 = vmax.f32 %v4324, 0.0
        %v4327 = vmax.f32 %v4325, 0.0
        %v4328 = vpack.c.bf16 %v4327, %v4326
        %4329 = vmatpush.bf16.msra.mxu0 0
        %4330 = vmatpush.bf16.msra.mxu0 0
        %4331 = vmatpush.bf16.msra.mxu0 0
        %4332 = vmatpush.bf16.msra.mxu0 0
        %4333 = vmatpush.bf16.msra.mxu0 0
        %4334 = vmatpush.bf16.msra.mxu0 0
        %4335 = vmatpush.bf16.msra.mxu0 0
        %4336 = vmatpush.bf16.msra.mxu0 %v4328
        %4337 = vmatmul.bf16.gmra.mxu0 %v725
        %v4338 = vpop.f32.mrf.mxu0
        %v4339 = vadd.f32 0.0, %v4338
        %v4340 = vpop.f32.mrf.mxu0
        %v4341 = vadd.f32 0.0, %v4340
        %4342 = vdwg.mxu0
        %v4343 = vpack.c.bf16 %v4341, %v4339
        %s4344 = scalar_lea.vmem [#allocation10], 1152
        %v4345 = vld [vmem:[%s4344] sm:$0xf]
        %v4346 = vld [vmem:[%s4344 + $0x4] sm:$0xf]
        %v4347 = vld [vmem:[%s4344 + $0x8] sm:$0xf]
        %v4348 = vld [vmem:[%s4344 + $0xc] sm:$0xf]
        %v4349 = vld [vmem:[%s4344 + $0x10] sm:$0xf]
        %v4350 = vld [vmem:[%s4344 + $0x14] sm:$0xf]
        %v4351 = vld [vmem:[%s4344 + $0x18] sm:$0xf]
        %v4352 = vld [vmem:[%s4344 + $0x1c] sm:$0xf]
        %v4353 = vld [vmem:[%s4344 + $0x20] sm:$0xf]
        %v4354 = vld [vmem:[%s4344 + $0x24] sm:$0xf]
        %v4355 = vld [vmem:[%s4344 + $0x28] sm:$0xf]
        %v4356 = vld [vmem:[%s4344 + $0x2c] sm:$0xf]
        %v4357 = vld [vmem:[%s4344 + $0x30] sm:$0xf]
        %v4358 = vld [vmem:[%s4344 + $0x34] sm:$0xf]
        %v4359 = vld [vmem:[%s4344 + $0x38] sm:$0xf]
        %v4360 = vld [vmem:[%s4344 + $0x3c] sm:$0xf]
        %s4361 = scalar_lea.vmem [#allocation11], 1152
        %v4362 = vld [vmem:[%s4361] sm:$0xf]
        %v4363 = vld [vmem:[%s4361 + $0x4] sm:$0xf]
        %v4364 = vld [vmem:[%s4361 + $0x8] sm:$0xf]
        %v4365 = vld [vmem:[%s4361 + $0xc] sm:$0xf]
        %v4366 = vld [vmem:[%s4361 + $0x10] sm:$0xf]
        %v4367 = vld [vmem:[%s4361 + $0x14] sm:$0xf]
        %v4368 = vld [vmem:[%s4361 + $0x18] sm:$0xf]
        %v4369 = vld [vmem:[%s4361 + $0x1c] sm:$0xf]
        %v4370 = vld [vmem:[%s4361 + $0x20] sm:$0xf]
        %v4371 = vld [vmem:[%s4361 + $0x24] sm:$0xf]
        %v4372 = vld [vmem:[%s4361 + $0x28] sm:$0xf]
        %v4373 = vld [vmem:[%s4361 + $0x2c] sm:$0xf]
        %v4374 = vld [vmem:[%s4361 + $0x30] sm:$0xf]
        %v4375 = vld [vmem:[%s4361 + $0x34] sm:$0xf]
        %v4376 = vld [vmem:[%s4361 + $0x38] sm:$0xf]
        %v4377 = vld [vmem:[%s4361 + $0x3c] sm:$0xf]
        %v4394 = vunpack.c.l.b16 %v4362
        %v4395 = vunpack.c.l.b16 %v4363
        %v4396 = vunpack.c.l.b16 %v4364
        %v4397 = vunpack.c.l.b16 %v4365
        %v4398 = vunpack.c.l.b16 %v4366
        %v4399 = vunpack.c.l.b16 %v4367
        %v4400 = vunpack.c.l.b16 %v4368
        %v4401 = vunpack.c.l.b16 %v4369
        %v4402 = vunpack.c.l.b16 %v4370
        %v4403 = vunpack.c.l.b16 %v4371
        %v4404 = vunpack.c.l.b16 %v4372
        %v4405 = vunpack.c.l.b16 %v4373
        %v4406 = vunpack.c.l.b16 %v4374
        %v4407 = vunpack.c.l.b16 %v4375
        %v4408 = vunpack.c.l.b16 %v4376
        %v4409 = vunpack.c.l.b16 %v4377
        %v4410 = vpack.c.b16 %v4395, %v4394
        %v4411 = vpack.c.b16 %v4397, %v4396
        %v4412 = vpack.c.b16 %v4399, %v4398
        %v4413 = vpack.c.b16 %v4401, %v4400
        %v4414 = vpack.c.b16 %v4403, %v4402
        %v4415 = vpack.c.b16 %v4405, %v4404
        %v4416 = vpack.c.b16 %v4407, %v4406
        %v4417 = vpack.c.b16 %v4409, %v4408
        %4426 = vmatpush.bf16.msra.mxu0 %v4417
        %4427 = vmatpush.bf16.msra.mxu0 %v4416
        %4428 = vmatpush.bf16.msra.mxu0 %v4415
        %4429 = vmatpush.bf16.msra.mxu0 %v4414
        %4430 = vmatpush.bf16.msra.mxu0 %v4413
        %4431 = vmatpush.bf16.msra.mxu0 %v4412
        %4432 = vmatpush.bf16.msra.mxu0 %v4411
        %4433 = vmatpush.bf16.msra.mxu0 %v4410
        %4434 = vmatmul.bf16.gmra.mxu0 %v4343
        %v4435 = vpop.f32.mrf.mxu0
        %v4436 = vadd.f32 0.0, %v4435
        %v4437 = vpop.f32.mrf.mxu0
        %v4438 = vadd.f32 0.0, %v4437
        %4439 = vdwg.mxu0
        %v4456 = vunpack.c.l.b16 %v4345
        %v4457 = vunpack.c.l.b16 %v4346
        %v4458 = vunpack.c.l.b16 %v4347
        %v4459 = vunpack.c.l.b16 %v4348
        %v4460 = vunpack.c.l.b16 %v4349
        %v4461 = vunpack.c.l.b16 %v4350
        %v4462 = vunpack.c.l.b16 %v4351
        %v4463 = vunpack.c.l.b16 %v4352
        %v4464 = vunpack.c.l.b16 %v4353
        %v4465 = vunpack.c.l.b16 %v4354
        %v4466 = vunpack.c.l.b16 %v4355
        %v4467 = vunpack.c.l.b16 %v4356
        %v4468 = vunpack.c.l.b16 %v4357
        %v4469 = vunpack.c.l.b16 %v4358
        %v4470 = vunpack.c.l.b16 %v4359
        %v4471 = vunpack.c.l.b16 %v4360
        %v4472 = vpack.c.b16 %v4457, %v4456
        %v4473 = vpack.c.b16 %v4459, %v4458
        %v4474 = vpack.c.b16 %v4461, %v4460
        %v4475 = vpack.c.b16 %v4463, %v4462
        %v4476 = vpack.c.b16 %v4465, %v4464
        %v4477 = vpack.c.b16 %v4467, %v4466
        %v4478 = vpack.c.b16 %v4469, %v4468
        %v4479 = vpack.c.b16 %v4471, %v4470
        %4488 = vmatpush.bf16.msra.mxu0 %v4479
        %4489 = vmatpush.bf16.msra.mxu0 %v4478
        %4490 = vmatpush.bf16.msra.mxu0 %v4477
        %4491 = vmatpush.bf16.msra.mxu0 %v4476
        %4492 = vmatpush.bf16.msra.mxu0 %v4475
        %4493 = vmatpush.bf16.msra.mxu0 %v4474
        %4494 = vmatpush.bf16.msra.mxu0 %v4473
        %4495 = vmatpush.bf16.msra.mxu0 %v4472
        %4496 = vmatmul.bf16.gmra.mxu0 %v4328
        %v4497 = vpop.f32.mrf.mxu0
        %v4498 = vadd.f32 %v4436, %v4497
        %v4499 = vpop.f32.mrf.mxu0
        %v4500 = vadd.f32 %v4438, %v4499
        %4501 = vdwg.mxu0
        %s4502 = scalar_lea.vmem [#allocation13], 18
        %v4503 = vld [vmem:[%s4502] sm:$0x1]
        %v4505 = vperm.slane %v4503, 0
        %v4507 = vadd.f32 %v4498, %v4505
        %v4508 = vadd.f32 %v4500, %v4505
        %v4509 = vadd.f32 %v4507, %v4143
        %v4510 = vadd.f32 %v4508, %v4144
        %v4511 = vmax.f32 %v4509, 0.0
        %v4512 = vmax.f32 %v4510, 0.0
        %v4513 = vpack.c.bf16 %v4512, %v4511
        %4514 = vmatpush.bf16.msra.mxu0 0
        %4515 = vmatpush.bf16.msra.mxu0 0
        %4516 = vmatpush.bf16.msra.mxu0 0
        %4517 = vmatpush.bf16.msra.mxu0 0
        %4518 = vmatpush.bf16.msra.mxu0 0
        %4519 = vmatpush.bf16.msra.mxu0 0
        %4520 = vmatpush.bf16.msra.mxu0 0
        %4521 = vmatpush.bf16.msra.mxu0 %v4513
        %4522 = vmatmul.bf16.gmra.mxu0 %v725
        %v4523 = vpop.f32.mrf.mxu0
        %v4524 = vadd.f32 0.0, %v4523
        %v4525 = vpop.f32.mrf.mxu0
        %v4526 = vadd.f32 0.0, %v4525
        %4527 = vdwg.mxu0
        %v4528 = vpack.c.bf16 %v4526, %v4524
        %s4529 = scalar_lea.vmem [#allocation10], 1216
        %v4530 = vld [vmem:[%s4529] sm:$0xf]
        %v4531 = vld [vmem:[%s4529 + $0x4] sm:$0xf]
        %v4532 = vld [vmem:[%s4529 + $0x8] sm:$0xf]
        %v4533 = vld [vmem:[%s4529 + $0xc] sm:$0xf]
        %v4534 = vld [vmem:[%s4529 + $0x10] sm:$0xf]
        %v4535 = vld [vmem:[%s4529 + $0x14] sm:$0xf]
        %v4536 = vld [vmem:[%s4529 + $0x18] sm:$0xf]
        %v4537 = vld [vmem:[%s4529 + $0x1c] sm:$0xf]
        %v4538 = vld [vmem:[%s4529 + $0x20] sm:$0xf]
        %v4539 = vld [vmem:[%s4529 + $0x24] sm:$0xf]
        %v4540 = vld [vmem:[%s4529 + $0x28] sm:$0xf]
        %v4541 = vld [vmem:[%s4529 + $0x2c] sm:$0xf]
        %v4542 = vld [vmem:[%s4529 + $0x30] sm:$0xf]
        %v4543 = vld [vmem:[%s4529 + $0x34] sm:$0xf]
        %v4544 = vld [vmem:[%s4529 + $0x38] sm:$0xf]
        %v4545 = vld [vmem:[%s4529 + $0x3c] sm:$0xf]
        %s4546 = scalar_lea.vmem [#allocation11], 1216
        %v4547 = vld [vmem:[%s4546] sm:$0xf]
        %v4548 = vld [vmem:[%s4546 + $0x4] sm:$0xf]
        %v4549 = vld [vmem:[%s4546 + $0x8] sm:$0xf]
        %v4550 = vld [vmem:[%s4546 + $0xc] sm:$0xf]
        %v4551 = vld [vmem:[%s4546 + $0x10] sm:$0xf]
        %v4552 = vld [vmem:[%s4546 + $0x14] sm:$0xf]
        %v4553 = vld [vmem:[%s4546 + $0x18] sm:$0xf]
        %v4554 = vld [vmem:[%s4546 + $0x1c] sm:$0xf]
        %v4555 = vld [vmem:[%s4546 + $0x20] sm:$0xf]
        %v4556 = vld [vmem:[%s4546 + $0x24] sm:$0xf]
        %v4557 = vld [vmem:[%s4546 + $0x28] sm:$0xf]
        %v4558 = vld [vmem:[%s4546 + $0x2c] sm:$0xf]
        %v4559 = vld [vmem:[%s4546 + $0x30] sm:$0xf]
        %v4560 = vld [vmem:[%s4546 + $0x34] sm:$0xf]
        %v4561 = vld [vmem:[%s4546 + $0x38] sm:$0xf]
        %v4562 = vld [vmem:[%s4546 + $0x3c] sm:$0xf]
        %v4579 = vunpack.c.l.b16 %v4547
        %v4580 = vunpack.c.l.b16 %v4548
        %v4581 = vunpack.c.l.b16 %v4549
        %v4582 = vunpack.c.l.b16 %v4550
        %v4583 = vunpack.c.l.b16 %v4551
        %v4584 = vunpack.c.l.b16 %v4552
        %v4585 = vunpack.c.l.b16 %v4553
        %v4586 = vunpack.c.l.b16 %v4554
        %v4587 = vunpack.c.l.b16 %v4555
        %v4588 = vunpack.c.l.b16 %v4556
        %v4589 = vunpack.c.l.b16 %v4557
        %v4590 = vunpack.c.l.b16 %v4558
        %v4591 = vunpack.c.l.b16 %v4559
        %v4592 = vunpack.c.l.b16 %v4560
        %v4593 = vunpack.c.l.b16 %v4561
        %v4594 = vunpack.c.l.b16 %v4562
        %v4595 = vpack.c.b16 %v4580, %v4579
        %v4596 = vpack.c.b16 %v4582, %v4581
        %v4597 = vpack.c.b16 %v4584, %v4583
        %v4598 = vpack.c.b16 %v4586, %v4585
        %v4599 = vpack.c.b16 %v4588, %v4587
        %v4600 = vpack.c.b16 %v4590, %v4589
        %v4601 = vpack.c.b16 %v4592, %v4591
        %v4602 = vpack.c.b16 %v4594, %v4593
        %4611 = vmatpush.bf16.msra.mxu0 %v4602
        %4612 = vmatpush.bf16.msra.mxu0 %v4601
        %4613 = vmatpush.bf16.msra.mxu0 %v4600
        %4614 = vmatpush.bf16.msra.mxu0 %v4599
        %4615 = vmatpush.bf16.msra.mxu0 %v4598
        %4616 = vmatpush.bf16.msra.mxu0 %v4597
        %4617 = vmatpush.bf16.msra.mxu0 %v4596
        %4618 = vmatpush.bf16.msra.mxu0 %v4595
        %4619 = vmatmul.bf16.gmra.mxu0 %v4528
        %v4620 = vpop.f32.mrf.mxu0
        %v4621 = vadd.f32 0.0, %v4620
        %v4622 = vpop.f32.mrf.mxu0
        %v4623 = vadd.f32 0.0, %v4622
        %4624 = vdwg.mxu0
        %v4641 = vunpack.c.l.b16 %v4530
        %v4642 = vunpack.c.l.b16 %v4531
        %v4643 = vunpack.c.l.b16 %v4532
        %v4644 = vunpack.c.l.b16 %v4533
        %v4645 = vunpack.c.l.b16 %v4534
        %v4646 = vunpack.c.l.b16 %v4535
        %v4647 = vunpack.c.l.b16 %v4536
        %v4648 = vunpack.c.l.b16 %v4537
        %v4649 = vunpack.c.l.b16 %v4538
        %v4650 = vunpack.c.l.b16 %v4539
        %v4651 = vunpack.c.l.b16 %v4540
        %v4652 = vunpack.c.l.b16 %v4541
        %v4653 = vunpack.c.l.b16 %v4542
        %v4654 = vunpack.c.l.b16 %v4543
        %v4655 = vunpack.c.l.b16 %v4544
        %v4656 = vunpack.c.l.b16 %v4545
        %v4657 = vpack.c.b16 %v4642, %v4641
        %v4658 = vpack.c.b16 %v4644, %v4643
        %v4659 = vpack.c.b16 %v4646, %v4645
        %v4660 = vpack.c.b16 %v4648, %v4647
        %v4661 = vpack.c.b16 %v4650, %v4649
        %v4662 = vpack.c.b16 %v4652, %v4651
        %v4663 = vpack.c.b16 %v4654, %v4653
        %v4664 = vpack.c.b16 %v4656, %v4655
        %4673 = vmatpush.bf16.msra.mxu0 %v4664
        %4674 = vmatpush.bf16.msra.mxu0 %v4663
        %4675 = vmatpush.bf16.msra.mxu0 %v4662
        %4676 = vmatpush.bf16.msra.mxu0 %v4661
        %4677 = vmatpush.bf16.msra.mxu0 %v4660
        %4678 = vmatpush.bf16.msra.mxu0 %v4659
        %4679 = vmatpush.bf16.msra.mxu0 %v4658
        %4680 = vmatpush.bf16.msra.mxu0 %v4657
        %4681 = vmatmul.bf16.gmra.mxu0 %v4513
        %v4682 = vpop.f32.mrf.mxu0
        %v4683 = vadd.f32 %v4621, %v4682
        %v4684 = vpop.f32.mrf.mxu0
        %v4685 = vadd.f32 %v4623, %v4684
        %4686 = vdwg.mxu0
        %s4687 = scalar_lea.vmem [#allocation13], 19
        %v4688 = vld [vmem:[%s4687] sm:$0x1]
        %v4690 = vperm.slane %v4688, 0
        %v4692 = vadd.f32 %v4683, %v4690
        %v4693 = vadd.f32 %v4685, %v4690
        %v4694 = vmax.f32 %v4692, 0.0
        %v4695 = vmax.f32 %v4693, 0.0
        %v4696 = vpack.c.bf16 %v4695, %v4694
        %4697 = vmatpush.bf16.msra.mxu0 0
        %4698 = vmatpush.bf16.msra.mxu0 0
        %4699 = vmatpush.bf16.msra.mxu0 0
        %4700 = vmatpush.bf16.msra.mxu0 0
        %4701 = vmatpush.bf16.msra.mxu0 0
        %4702 = vmatpush.bf16.msra.mxu0 0
        %4703 = vmatpush.bf16.msra.mxu0 0
        %4704 = vmatpush.bf16.msra.mxu0 %v4696
        %4705 = vmatmul.bf16.gmra.mxu0 %v725
        %v4706 = vpop.f32.mrf.mxu0
        %v4707 = vadd.f32 0.0, %v4706
        %v4708 = vpop.f32.mrf.mxu0
        %v4709 = vadd.f32 0.0, %v4708
        %4710 = vdwg.mxu0
        %v4711 = vpack.c.bf16 %v4709, %v4707
        %s4712 = scalar_lea.vmem [#allocation10], 1280
        %v4713 = vld [vmem:[%s4712] sm:$0xf]
        %v4714 = vld [vmem:[%s4712 + $0x4] sm:$0xf]
        %v4715 = vld [vmem:[%s4712 + $0x8] sm:$0xf]
        %v4716 = vld [vmem:[%s4712 + $0xc] sm:$0xf]
        %v4717 = vld [vmem:[%s4712 + $0x10] sm:$0xf]
        %v4718 = vld [vmem:[%s4712 + $0x14] sm:$0xf]
        %v4719 = vld [vmem:[%s4712 + $0x18] sm:$0xf]
        %v4720 = vld [vmem:[%s4712 + $0x1c] sm:$0xf]
        %v4721 = vld [vmem:[%s4712 + $0x20] sm:$0xf]
        %v4722 = vld [vmem:[%s4712 + $0x24] sm:$0xf]
        %v4723 = vld [vmem:[%s4712 + $0x28] sm:$0xf]
        %v4724 = vld [vmem:[%s4712 + $0x2c] sm:$0xf]
        %v4725 = vld [vmem:[%s4712 + $0x30] sm:$0xf]
        %v4726 = vld [vmem:[%s4712 + $0x34] sm:$0xf]
        %v4727 = vld [vmem:[%s4712 + $0x38] sm:$0xf]
        %v4728 = vld [vmem:[%s4712 + $0x3c] sm:$0xf]
        %s4729 = scalar_lea.vmem [#allocation11], 1280
        %v4730 = vld [vmem:[%s4729] sm:$0xf]
        %v4731 = vld [vmem:[%s4729 + $0x4] sm:$0xf]
        %v4732 = vld [vmem:[%s4729 + $0x8] sm:$0xf]
        %v4733 = vld [vmem:[%s4729 + $0xc] sm:$0xf]
        %v4734 = vld [vmem:[%s4729 + $0x10] sm:$0xf]
        %v4735 = vld [vmem:[%s4729 + $0x14] sm:$0xf]
        %v4736 = vld [vmem:[%s4729 + $0x18] sm:$0xf]
        %v4737 = vld [vmem:[%s4729 + $0x1c] sm:$0xf]
        %v4738 = vld [vmem:[%s4729 + $0x20] sm:$0xf]
        %v4739 = vld [vmem:[%s4729 + $0x24] sm:$0xf]
        %v4740 = vld [vmem:[%s4729 + $0x28] sm:$0xf]
        %v4741 = vld [vmem:[%s4729 + $0x2c] sm:$0xf]
        %v4742 = vld [vmem:[%s4729 + $0x30] sm:$0xf]
        %v4743 = vld [vmem:[%s4729 + $0x34] sm:$0xf]
        %v4744 = vld [vmem:[%s4729 + $0x38] sm:$0xf]
        %v4745 = vld [vmem:[%s4729 + $0x3c] sm:$0xf]
        %v4762 = vunpack.c.l.b16 %v4730
        %v4763 = vunpack.c.l.b16 %v4731
        %v4764 = vunpack.c.l.b16 %v4732
        %v4765 = vunpack.c.l.b16 %v4733
        %v4766 = vunpack.c.l.b16 %v4734
        %v4767 = vunpack.c.l.b16 %v4735
        %v4768 = vunpack.c.l.b16 %v4736
        %v4769 = vunpack.c.l.b16 %v4737
        %v4770 = vunpack.c.l.b16 %v4738
        %v4771 = vunpack.c.l.b16 %v4739
        %v4772 = vunpack.c.l.b16 %v4740
        %v4773 = vunpack.c.l.b16 %v4741
        %v4774 = vunpack.c.l.b16 %v4742
        %v4775 = vunpack.c.l.b16 %v4743
        %v4776 = vunpack.c.l.b16 %v4744
        %v4777 = vunpack.c.l.b16 %v4745
        %v4778 = vpack.c.b16 %v4763, %v4762
        %v4779 = vpack.c.b16 %v4765, %v4764
        %v4780 = vpack.c.b16 %v4767, %v4766
        %v4781 = vpack.c.b16 %v4769, %v4768
        %v4782 = vpack.c.b16 %v4771, %v4770
        %v4783 = vpack.c.b16 %v4773, %v4772
        %v4784 = vpack.c.b16 %v4775, %v4774
        %v4785 = vpack.c.b16 %v4777, %v4776
        %4794 = vmatpush.bf16.msra.mxu0 %v4785
        %4795 = vmatpush.bf16.msra.mxu0 %v4784
        %4796 = vmatpush.bf16.msra.mxu0 %v4783
        %4797 = vmatpush.bf16.msra.mxu0 %v4782
        %4798 = vmatpush.bf16.msra.mxu0 %v4781
        %4799 = vmatpush.bf16.msra.mxu0 %v4780
        %4800 = vmatpush.bf16.msra.mxu0 %v4779
        %4801 = vmatpush.bf16.msra.mxu0 %v4778
        %4802 = vmatmul.bf16.gmra.mxu0 %v4711
        %v4803 = vpop.f32.mrf.mxu0
        %v4804 = vadd.f32 0.0, %v4803
        %v4805 = vpop.f32.mrf.mxu0
        %v4806 = vadd.f32 0.0, %v4805
        %4807 = vdwg.mxu0
        %v4824 = vunpack.c.l.b16 %v4713
        %v4825 = vunpack.c.l.b16 %v4714
        %v4826 = vunpack.c.l.b16 %v4715
        %v4827 = vunpack.c.l.b16 %v4716
        %v4828 = vunpack.c.l.b16 %v4717
        %v4829 = vunpack.c.l.b16 %v4718
        %v4830 = vunpack.c.l.b16 %v4719
        %v4831 = vunpack.c.l.b16 %v4720
        %v4832 = vunpack.c.l.b16 %v4721
        %v4833 = vunpack.c.l.b16 %v4722
        %v4834 = vunpack.c.l.b16 %v4723
        %v4835 = vunpack.c.l.b16 %v4724
        %v4836 = vunpack.c.l.b16 %v4725
        %v4837 = vunpack.c.l.b16 %v4726
        %v4838 = vunpack.c.l.b16 %v4727
        %v4839 = vunpack.c.l.b16 %v4728
        %v4840 = vpack.c.b16 %v4825, %v4824
        %v4841 = vpack.c.b16 %v4827, %v4826
        %v4842 = vpack.c.b16 %v4829, %v4828
        %v4843 = vpack.c.b16 %v4831, %v4830
        %v4844 = vpack.c.b16 %v4833, %v4832
        %v4845 = vpack.c.b16 %v4835, %v4834
        %v4846 = vpack.c.b16 %v4837, %v4836
        %v4847 = vpack.c.b16 %v4839, %v4838
        %4856 = vmatpush.bf16.msra.mxu0 %v4847
        %4857 = vmatpush.bf16.msra.mxu0 %v4846
        %4858 = vmatpush.bf16.msra.mxu0 %v4845
        %4859 = vmatpush.bf16.msra.mxu0 %v4844
        %4860 = vmatpush.bf16.msra.mxu0 %v4843
        %4861 = vmatpush.bf16.msra.mxu0 %v4842
        %4862 = vmatpush.bf16.msra.mxu0 %v4841
        %4863 = vmatpush.bf16.msra.mxu0 %v4840
        %4864 = vmatmul.bf16.gmra.mxu0 %v4696
        %v4865 = vpop.f32.mrf.mxu0
        %v4866 = vadd.f32 %v4804, %v4865
        %v4867 = vpop.f32.mrf.mxu0
        %v4868 = vadd.f32 %v4806, %v4867
        %4869 = vdwg.mxu0
        %s4870 = scalar_lea.vmem [#allocation13], 20
        %v4871 = vld [vmem:[%s4870] sm:$0x1]
        %v4873 = vperm.slane %v4871, 0
        %v4875 = vadd.f32 %v4866, %v4873
        %v4876 = vadd.f32 %v4868, %v4873
        %v4877 = vadd.f32 %v4875, %v4511
        %v4878 = vadd.f32 %v4876, %v4512
        %v4879 = vmax.f32 %v4877, 0.0
        %v4880 = vmax.f32 %v4878, 0.0
        %v4881 = vpack.c.bf16 %v4880, %v4879
        %4882 = vmatpush.bf16.msra.mxu0 0
        %4883 = vmatpush.bf16.msra.mxu0 0
        %4884 = vmatpush.bf16.msra.mxu0 0
        %4885 = vmatpush.bf16.msra.mxu0 0
        %4886 = vmatpush.bf16.msra.mxu0 0
        %4887 = vmatpush.bf16.msra.mxu0 0
        %4888 = vmatpush.bf16.msra.mxu0 0
        %4889 = vmatpush.bf16.msra.mxu0 %v4881
        %4890 = vmatmul.bf16.gmra.mxu0 %v725
        %v4891 = vpop.f32.mrf.mxu0
        %v4892 = vadd.f32 0.0, %v4891
        %v4893 = vpop.f32.mrf.mxu0
        %v4894 = vadd.f32 0.0, %v4893
        %4895 = vdwg.mxu0
        %v4896 = vpack.c.bf16 %v4894, %v4892
        %s4897 = scalar_lea.vmem [#allocation10], 1344
        %v4898 = vld [vmem:[%s4897] sm:$0xf]
        %v4899 = vld [vmem:[%s4897 + $0x4] sm:$0xf]
        %v4900 = vld [vmem:[%s4897 + $0x8] sm:$0xf]
        %v4901 = vld [vmem:[%s4897 + $0xc] sm:$0xf]
        %v4902 = vld [vmem:[%s4897 + $0x10] sm:$0xf]
        %v4903 = vld [vmem:[%s4897 + $0x14] sm:$0xf]
        %v4904 = vld [vmem:[%s4897 + $0x18] sm:$0xf]
        %v4905 = vld [vmem:[%s4897 + $0x1c] sm:$0xf]
        %v4906 = vld [vmem:[%s4897 + $0x20] sm:$0xf]
        %v4907 = vld [vmem:[%s4897 + $0x24] sm:$0xf]
        %v4908 = vld [vmem:[%s4897 + $0x28] sm:$0xf]
        %v4909 = vld [vmem:[%s4897 + $0x2c] sm:$0xf]
        %v4910 = vld [vmem:[%s4897 + $0x30] sm:$0xf]
        %v4911 = vld [vmem:[%s4897 + $0x34] sm:$0xf]
        %v4912 = vld [vmem:[%s4897 + $0x38] sm:$0xf]
        %v4913 = vld [vmem:[%s4897 + $0x3c] sm:$0xf]
        %s4914 = scalar_lea.vmem [#allocation11], 1344
        %v4915 = vld [vmem:[%s4914] sm:$0xf]
        %v4916 = vld [vmem:[%s4914 + $0x4] sm:$0xf]
        %v4917 = vld [vmem:[%s4914 + $0x8] sm:$0xf]
        %v4918 = vld [vmem:[%s4914 + $0xc] sm:$0xf]
        %v4919 = vld [vmem:[%s4914 + $0x10] sm:$0xf]
        %v4920 = vld [vmem:[%s4914 + $0x14] sm:$0xf]
        %v4921 = vld [vmem:[%s4914 + $0x18] sm:$0xf]
        %v4922 = vld [vmem:[%s4914 + $0x1c] sm:$0xf]
        %v4923 = vld [vmem:[%s4914 + $0x20] sm:$0xf]
        %v4924 = vld [vmem:[%s4914 + $0x24] sm:$0xf]
        %v4925 = vld [vmem:[%s4914 + $0x28] sm:$0xf]
        %v4926 = vld [vmem:[%s4914 + $0x2c] sm:$0xf]
        %v4927 = vld [vmem:[%s4914 + $0x30] sm:$0xf]
        %v4928 = vld [vmem:[%s4914 + $0x34] sm:$0xf]
        %v4929 = vld [vmem:[%s4914 + $0x38] sm:$0xf]
        %v4930 = vld [vmem:[%s4914 + $0x3c] sm:$0xf]
        %v4947 = vunpack.c.l.b16 %v4915
        %v4948 = vunpack.c.l.b16 %v4916
        %v4949 = vunpack.c.l.b16 %v4917
        %v4950 = vunpack.c.l.b16 %v4918
        %v4951 = vunpack.c.l.b16 %v4919
        %v4952 = vunpack.c.l.b16 %v4920
        %v4953 = vunpack.c.l.b16 %v4921
        %v4954 = vunpack.c.l.b16 %v4922
        %v4955 = vunpack.c.l.b16 %v4923
        %v4956 = vunpack.c.l.b16 %v4924
        %v4957 = vunpack.c.l.b16 %v4925
        %v4958 = vunpack.c.l.b16 %v4926
        %v4959 = vunpack.c.l.b16 %v4927
        %v4960 = vunpack.c.l.b16 %v4928
        %v4961 = vunpack.c.l.b16 %v4929
        %v4962 = vunpack.c.l.b16 %v4930
        %v4963 = vpack.c.b16 %v4948, %v4947
        %v4964 = vpack.c.b16 %v4950, %v4949
        %v4965 = vpack.c.b16 %v4952, %v4951
        %v4966 = vpack.c.b16 %v4954, %v4953
        %v4967 = vpack.c.b16 %v4956, %v4955
        %v4968 = vpack.c.b16 %v4958, %v4957
        %v4969 = vpack.c.b16 %v4960, %v4959
        %v4970 = vpack.c.b16 %v4962, %v4961
        %4979 = vmatpush.bf16.msra.mxu0 %v4970
        %4980 = vmatpush.bf16.msra.mxu0 %v4969
        %4981 = vmatpush.bf16.msra.mxu0 %v4968
        %4982 = vmatpush.bf16.msra.mxu0 %v4967
        %4983 = vmatpush.bf16.msra.mxu0 %v4966
        %4984 = vmatpush.bf16.msra.mxu0 %v4965
        %4985 = vmatpush.bf16.msra.mxu0 %v4964
        %4986 = vmatpush.bf16.msra.mxu0 %v4963
        %4987 = vmatmul.bf16.gmra.mxu0 %v4896
        %v4988 = vpop.f32.mrf.mxu0
        %v4989 = vadd.f32 0.0, %v4988
        %v4990 = vpop.f32.mrf.mxu0
        %v4991 = vadd.f32 0.0, %v4990
        %4992 = vdwg.mxu0
        %v5009 = vunpack.c.l.b16 %v4898
        %v5010 = vunpack.c.l.b16 %v4899
        %v5011 = vunpack.c.l.b16 %v4900
        %v5012 = vunpack.c.l.b16 %v4901
        %v5013 = vunpack.c.l.b16 %v4902
        %v5014 = vunpack.c.l.b16 %v4903
        %v5015 = vunpack.c.l.b16 %v4904
        %v5016 = vunpack.c.l.b16 %v4905
        %v5017 = vunpack.c.l.b16 %v4906
        %v5018 = vunpack.c.l.b16 %v4907
        %v5019 = vunpack.c.l.b16 %v4908
        %v5020 = vunpack.c.l.b16 %v4909
        %v5021 = vunpack.c.l.b16 %v4910
        %v5022 = vunpack.c.l.b16 %v4911
        %v5023 = vunpack.c.l.b16 %v4912
        %v5024 = vunpack.c.l.b16 %v4913
        %v5025 = vpack.c.b16 %v5010, %v5009
        %v5026 = vpack.c.b16 %v5012, %v5011
        %v5027 = vpack.c.b16 %v5014, %v5013
        %v5028 = vpack.c.b16 %v5016, %v5015
        %v5029 = vpack.c.b16 %v5018, %v5017
        %v5030 = vpack.c.b16 %v5020, %v5019
        %v5031 = vpack.c.b16 %v5022, %v5021
        %v5032 = vpack.c.b16 %v5024, %v5023
        %5041 = vmatpush.bf16.msra.mxu0 %v5032
        %5042 = vmatpush.bf16.msra.mxu0 %v5031
        %5043 = vmatpush.bf16.msra.mxu0 %v5030
        %5044 = vmatpush.bf16.msra.mxu0 %v5029
        %5045 = vmatpush.bf16.msra.mxu0 %v5028
        %5046 = vmatpush.bf16.msra.mxu0 %v5027
        %5047 = vmatpush.bf16.msra.mxu0 %v5026
        %5048 = vmatpush.bf16.msra.mxu0 %v5025
        %5049 = vmatmul.bf16.gmra.mxu0 %v4881
        %v5050 = vpop.f32.mrf.mxu0
        %v5051 = vadd.f32 %v4989, %v5050
        %v5052 = vpop.f32.mrf.mxu0
        %v5053 = vadd.f32 %v4991, %v5052
        %5054 = vdwg.mxu0
        %s5055 = scalar_lea.vmem [#allocation13], 21
        %v5056 = vld [vmem:[%s5055] sm:$0x1]
        %v5058 = vperm.slane %v5056, 0
        %v5060 = vadd.f32 %v5051, %v5058
        %v5061 = vadd.f32 %v5053, %v5058
        %v5062 = vmax.f32 %v5060, 0.0
        %v5063 = vmax.f32 %v5061, 0.0
        %v5064 = vpack.c.bf16 %v5063, %v5062
        %5065 = vmatpush.bf16.msra.mxu0 0
        %5066 = vmatpush.bf16.msra.mxu0 0
        %5067 = vmatpush.bf16.msra.mxu0 0
        %5068 = vmatpush.bf16.msra.mxu0 0
        %5069 = vmatpush.bf16.msra.mxu0 0
        %5070 = vmatpush.bf16.msra.mxu0 0
        %5071 = vmatpush.bf16.msra.mxu0 0
        %5072 = vmatpush.bf16.msra.mxu0 %v5064
        %5073 = vmatmul.bf16.gmra.mxu0 %v725
        %v5074 = vpop.f32.mrf.mxu0
        %v5075 = vadd.f32 0.0, %v5074
        %v5076 = vpop.f32.mrf.mxu0
        %v5077 = vadd.f32 0.0, %v5076
        %5078 = vdwg.mxu0
        %v5079 = vpack.c.bf16 %v5077, %v5075
        %s5080 = scalar_lea.vmem [#allocation10], 1408
        %v5081 = vld [vmem:[%s5080] sm:$0xf]
        %v5082 = vld [vmem:[%s5080 + $0x4] sm:$0xf]
        %v5083 = vld [vmem:[%s5080 + $0x8] sm:$0xf]
        %v5084 = vld [vmem:[%s5080 + $0xc] sm:$0xf]
        %v5085 = vld [vmem:[%s5080 + $0x10] sm:$0xf]
        %v5086 = vld [vmem:[%s5080 + $0x14] sm:$0xf]
        %v5087 = vld [vmem:[%s5080 + $0x18] sm:$0xf]
        %v5088 = vld [vmem:[%s5080 + $0x1c] sm:$0xf]
        %v5089 = vld [vmem:[%s5080 + $0x20] sm:$0xf]
        %v5090 = vld [vmem:[%s5080 + $0x24] sm:$0xf]
        %v5091 = vld [vmem:[%s5080 + $0x28] sm:$0xf]
        %v5092 = vld [vmem:[%s5080 + $0x2c] sm:$0xf]
        %v5093 = vld [vmem:[%s5080 + $0x30] sm:$0xf]
        %v5094 = vld [vmem:[%s5080 + $0x34] sm:$0xf]
        %v5095 = vld [vmem:[%s5080 + $0x38] sm:$0xf]
        %v5096 = vld [vmem:[%s5080 + $0x3c] sm:$0xf]
        %s5097 = scalar_lea.vmem [#allocation11], 1408
        %v5098 = vld [vmem:[%s5097] sm:$0xf]
        %v5099 = vld [vmem:[%s5097 + $0x4] sm:$0xf]
        %v5100 = vld [vmem:[%s5097 + $0x8] sm:$0xf]
        %v5101 = vld [vmem:[%s5097 + $0xc] sm:$0xf]
        %v5102 = vld [vmem:[%s5097 + $0x10] sm:$0xf]
        %v5103 = vld [vmem:[%s5097 + $0x14] sm:$0xf]
        %v5104 = vld [vmem:[%s5097 + $0x18] sm:$0xf]
        %v5105 = vld [vmem:[%s5097 + $0x1c] sm:$0xf]
        %v5106 = vld [vmem:[%s5097 + $0x20] sm:$0xf]
        %v5107 = vld [vmem:[%s5097 + $0x24] sm:$0xf]
        %v5108 = vld [vmem:[%s5097 + $0x28] sm:$0xf]
        %v5109 = vld [vmem:[%s5097 + $0x2c] sm:$0xf]
        %v5110 = vld [vmem:[%s5097 + $0x30] sm:$0xf]
        %v5111 = vld [vmem:[%s5097 + $0x34] sm:$0xf]
        %v5112 = vld [vmem:[%s5097 + $0x38] sm:$0xf]
        %v5113 = vld [vmem:[%s5097 + $0x3c] sm:$0xf]
        %v5130 = vunpack.c.l.b16 %v5098
        %v5131 = vunpack.c.l.b16 %v5099
        %v5132 = vunpack.c.l.b16 %v5100
        %v5133 = vunpack.c.l.b16 %v5101
        %v5134 = vunpack.c.l.b16 %v5102
        %v5135 = vunpack.c.l.b16 %v5103
        %v5136 = vunpack.c.l.b16 %v5104
        %v5137 = vunpack.c.l.b16 %v5105
        %v5138 = vunpack.c.l.b16 %v5106
        %v5139 = vunpack.c.l.b16 %v5107
        %v5140 = vunpack.c.l.b16 %v5108
        %v5141 = vunpack.c.l.b16 %v5109
        %v5142 = vunpack.c.l.b16 %v5110
        %v5143 = vunpack.c.l.b16 %v5111
        %v5144 = vunpack.c.l.b16 %v5112
        %v5145 = vunpack.c.l.b16 %v5113
        %v5146 = vpack.c.b16 %v5131, %v5130
        %v5147 = vpack.c.b16 %v5133, %v5132
        %v5148 = vpack.c.b16 %v5135, %v5134
        %v5149 = vpack.c.b16 %v5137, %v5136
        %v5150 = vpack.c.b16 %v5139, %v5138
        %v5151 = vpack.c.b16 %v5141, %v5140
        %v5152 = vpack.c.b16 %v5143, %v5142
        %v5153 = vpack.c.b16 %v5145, %v5144
        %5162 = vmatpush.bf16.msra.mxu0 %v5153
        %5163 = vmatpush.bf16.msra.mxu0 %v5152
        %5164 = vmatpush.bf16.msra.mxu0 %v5151
        %5165 = vmatpush.bf16.msra.mxu0 %v5150
        %5166 = vmatpush.bf16.msra.mxu0 %v5149
        %5167 = vmatpush.bf16.msra.mxu0 %v5148
        %5168 = vmatpush.bf16.msra.mxu0 %v5147
        %5169 = vmatpush.bf16.msra.mxu0 %v5146
        %5170 = vmatmul.bf16.gmra.mxu0 %v5079
        %v5171 = vpop.f32.mrf.mxu0
        %v5172 = vadd.f32 0.0, %v5171
        %v5173 = vpop.f32.mrf.mxu0
        %v5174 = vadd.f32 0.0, %v5173
        %5175 = vdwg.mxu0
        %v5192 = vunpack.c.l.b16 %v5081
        %v5193 = vunpack.c.l.b16 %v5082
        %v5194 = vunpack.c.l.b16 %v5083
        %v5195 = vunpack.c.l.b16 %v5084
        %v5196 = vunpack.c.l.b16 %v5085
        %v5197 = vunpack.c.l.b16 %v5086
        %v5198 = vunpack.c.l.b16 %v5087
        %v5199 = vunpack.c.l.b16 %v5088
        %v5200 = vunpack.c.l.b16 %v5089
        %v5201 = vunpack.c.l.b16 %v5090
        %v5202 = vunpack.c.l.b16 %v5091
        %v5203 = vunpack.c.l.b16 %v5092
        %v5204 = vunpack.c.l.b16 %v5093
        %v5205 = vunpack.c.l.b16 %v5094
        %v5206 = vunpack.c.l.b16 %v5095
        %v5207 = vunpack.c.l.b16 %v5096
        %v5208 = vpack.c.b16 %v5193, %v5192
        %v5209 = vpack.c.b16 %v5195, %v5194
        %v5210 = vpack.c.b16 %v5197, %v5196
        %v5211 = vpack.c.b16 %v5199, %v5198
        %v5212 = vpack.c.b16 %v5201, %v5200
        %v5213 = vpack.c.b16 %v5203, %v5202
        %v5214 = vpack.c.b16 %v5205, %v5204
        %v5215 = vpack.c.b16 %v5207, %v5206
        %5224 = vmatpush.bf16.msra.mxu0 %v5215
        %5225 = vmatpush.bf16.msra.mxu0 %v5214
        %5226 = vmatpush.bf16.msra.mxu0 %v5213
        %5227 = vmatpush.bf16.msra.mxu0 %v5212
        %5228 = vmatpush.bf16.msra.mxu0 %v5211
        %5229 = vmatpush.bf16.msra.mxu0 %v5210
        %5230 = vmatpush.bf16.msra.mxu0 %v5209
        %5231 = vmatpush.bf16.msra.mxu0 %v5208
        %5232 = vmatmul.bf16.gmra.mxu0 %v5064
        %v5233 = vpop.f32.mrf.mxu0
        %v5234 = vadd.f32 %v5172, %v5233
        %v5235 = vpop.f32.mrf.mxu0
        %v5236 = vadd.f32 %v5174, %v5235
        %5237 = vdwg.mxu0
        %s5238 = scalar_lea.vmem [#allocation13], 22
        %v5239 = vld [vmem:[%s5238] sm:$0x1]
        %v5241 = vperm.slane %v5239, 0
        %v5243 = vadd.f32 %v5234, %v5241
        %v5244 = vadd.f32 %v5236, %v5241
        %v5245 = vadd.f32 %v5243, %v4879
        %v5246 = vadd.f32 %v5244, %v4880
        %v5247 = vmax.f32 %v5245, 0.0
        %v5248 = vmax.f32 %v5246, 0.0
        %v5249 = vpack.c.bf16 %v5248, %v5247
        %5250 = vmatpush.bf16.msra.mxu0 0
        %5251 = vmatpush.bf16.msra.mxu0 0
        %5252 = vmatpush.bf16.msra.mxu0 0
        %5253 = vmatpush.bf16.msra.mxu0 0
        %5254 = vmatpush.bf16.msra.mxu0 0
        %5255 = vmatpush.bf16.msra.mxu0 0
        %5256 = vmatpush.bf16.msra.mxu0 0
        %5257 = vmatpush.bf16.msra.mxu0 %v5249
        %5258 = vmatmul.bf16.gmra.mxu0 %v725
        %v5259 = vpop.f32.mrf.mxu0
        %v5260 = vadd.f32 0.0, %v5259
        %v5261 = vpop.f32.mrf.mxu0
        %v5262 = vadd.f32 0.0, %v5261
        %5263 = vdwg.mxu0
        %v5264 = vpack.c.bf16 %v5262, %v5260
        %s5265 = scalar_lea.vmem [#allocation10], 1472
        %v5266 = vld [vmem:[%s5265] sm:$0xf]
        %v5267 = vld [vmem:[%s5265 + $0x4] sm:$0xf]
        %v5268 = vld [vmem:[%s5265 + $0x8] sm:$0xf]
        %v5269 = vld [vmem:[%s5265 + $0xc] sm:$0xf]
        %v5270 = vld [vmem:[%s5265 + $0x10] sm:$0xf]
        %v5271 = vld [vmem:[%s5265 + $0x14] sm:$0xf]
        %v5272 = vld [vmem:[%s5265 + $0x18] sm:$0xf]
        %v5273 = vld [vmem:[%s5265 + $0x1c] sm:$0xf]
        %v5274 = vld [vmem:[%s5265 + $0x20] sm:$0xf]
        %v5275 = vld [vmem:[%s5265 + $0x24] sm:$0xf]
        %v5276 = vld [vmem:[%s5265 + $0x28] sm:$0xf]
        %v5277 = vld [vmem:[%s5265 + $0x2c] sm:$0xf]
        %v5278 = vld [vmem:[%s5265 + $0x30] sm:$0xf]
        %v5279 = vld [vmem:[%s5265 + $0x34] sm:$0xf]
        %v5280 = vld [vmem:[%s5265 + $0x38] sm:$0xf]
        %v5281 = vld [vmem:[%s5265 + $0x3c] sm:$0xf]
        %s5282 = scalar_lea.vmem [#allocation11], 1472
        %v5283 = vld [vmem:[%s5282] sm:$0xf]
        %v5284 = vld [vmem:[%s5282 + $0x4] sm:$0xf]
        %v5285 = vld [vmem:[%s5282 + $0x8] sm:$0xf]
        %v5286 = vld [vmem:[%s5282 + $0xc] sm:$0xf]
        %v5287 = vld [vmem:[%s5282 + $0x10] sm:$0xf]
        %v5288 = vld [vmem:[%s5282 + $0x14] sm:$0xf]
        %v5289 = vld [vmem:[%s5282 + $0x18] sm:$0xf]
        %v5290 = vld [vmem:[%s5282 + $0x1c] sm:$0xf]
        %v5291 = vld [vmem:[%s5282 + $0x20] sm:$0xf]
        %v5292 = vld [vmem:[%s5282 + $0x24] sm:$0xf]
        %v5293 = vld [vmem:[%s5282 + $0x28] sm:$0xf]
        %v5294 = vld [vmem:[%s5282 + $0x2c] sm:$0xf]
        %v5295 = vld [vmem:[%s5282 + $0x30] sm:$0xf]
        %v5296 = vld [vmem:[%s5282 + $0x34] sm:$0xf]
        %v5297 = vld [vmem:[%s5282 + $0x38] sm:$0xf]
        %v5298 = vld [vmem:[%s5282 + $0x3c] sm:$0xf]
        %v5315 = vunpack.c.l.b16 %v5283
        %v5316 = vunpack.c.l.b16 %v5284
        %v5317 = vunpack.c.l.b16 %v5285
        %v5318 = vunpack.c.l.b16 %v5286
        %v5319 = vunpack.c.l.b16 %v5287
        %v5320 = vunpack.c.l.b16 %v5288
        %v5321 = vunpack.c.l.b16 %v5289
        %v5322 = vunpack.c.l.b16 %v5290
        %v5323 = vunpack.c.l.b16 %v5291
        %v5324 = vunpack.c.l.b16 %v5292
        %v5325 = vunpack.c.l.b16 %v5293
        %v5326 = vunpack.c.l.b16 %v5294
        %v5327 = vunpack.c.l.b16 %v5295
        %v5328 = vunpack.c.l.b16 %v5296
        %v5329 = vunpack.c.l.b16 %v5297
        %v5330 = vunpack.c.l.b16 %v5298
        %v5331 = vpack.c.b16 %v5316, %v5315
        %v5332 = vpack.c.b16 %v5318, %v5317
        %v5333 = vpack.c.b16 %v5320, %v5319
        %v5334 = vpack.c.b16 %v5322, %v5321
        %v5335 = vpack.c.b16 %v5324, %v5323
        %v5336 = vpack.c.b16 %v5326, %v5325
        %v5337 = vpack.c.b16 %v5328, %v5327
        %v5338 = vpack.c.b16 %v5330, %v5329
        %5347 = vmatpush.bf16.msra.mxu0 %v5338
        %5348 = vmatpush.bf16.msra.mxu0 %v5337
        %5349 = vmatpush.bf16.msra.mxu0 %v5336
        %5350 = vmatpush.bf16.msra.mxu0 %v5335
        %5351 = vmatpush.bf16.msra.mxu0 %v5334
        %5352 = vmatpush.bf16.msra.mxu0 %v5333
        %5353 = vmatpush.bf16.msra.mxu0 %v5332
        %5354 = vmatpush.bf16.msra.mxu0 %v5331
        %5355 = vmatmul.bf16.gmra.mxu0 %v5264
        %v5356 = vpop.f32.mrf.mxu0
        %v5357 = vadd.f32 0.0, %v5356
        %v5358 = vpop.f32.mrf.mxu0
        %v5359 = vadd.f32 0.0, %v5358
        %5360 = vdwg.mxu0
        %v5377 = vunpack.c.l.b16 %v5266
        %v5378 = vunpack.c.l.b16 %v5267
        %v5379 = vunpack.c.l.b16 %v5268
        %v5380 = vunpack.c.l.b16 %v5269
        %v5381 = vunpack.c.l.b16 %v5270
        %v5382 = vunpack.c.l.b16 %v5271
        %v5383 = vunpack.c.l.b16 %v5272
        %v5384 = vunpack.c.l.b16 %v5273
        %v5385 = vunpack.c.l.b16 %v5274
        %v5386 = vunpack.c.l.b16 %v5275
        %v5387 = vunpack.c.l.b16 %v5276
        %v5388 = vunpack.c.l.b16 %v5277
        %v5389 = vunpack.c.l.b16 %v5278
        %v5390 = vunpack.c.l.b16 %v5279
        %v5391 = vunpack.c.l.b16 %v5280
        %v5392 = vunpack.c.l.b16 %v5281
        %v5393 = vpack.c.b16 %v5378, %v5377
        %v5394 = vpack.c.b16 %v5380, %v5379
        %v5395 = vpack.c.b16 %v5382, %v5381
        %v5396 = vpack.c.b16 %v5384, %v5383
        %v5397 = vpack.c.b16 %v5386, %v5385
        %v5398 = vpack.c.b16 %v5388, %v5387
        %v5399 = vpack.c.b16 %v5390, %v5389
        %v5400 = vpack.c.b16 %v5392, %v5391
        %5409 = vmatpush.bf16.msra.mxu0 %v5400
        %5410 = vmatpush.bf16.msra.mxu0 %v5399
        %5411 = vmatpush.bf16.msra.mxu0 %v5398
        %5412 = vmatpush.bf16.msra.mxu0 %v5397
        %5413 = vmatpush.bf16.msra.mxu0 %v5396
        %5414 = vmatpush.bf16.msra.mxu0 %v5395
        %5415 = vmatpush.bf16.msra.mxu0 %v5394
        %5416 = vmatpush.bf16.msra.mxu0 %v5393
        %5417 = vmatmul.bf16.gmra.mxu0 %v5249
        %v5418 = vpop.f32.mrf.mxu0
        %v5419 = vadd.f32 %v5357, %v5418
        %v5420 = vpop.f32.mrf.mxu0
        %v5421 = vadd.f32 %v5359, %v5420
        %5422 = vdwg.mxu0
        %s5423 = scalar_lea.vmem [#allocation13], 23
        %v5424 = vld [vmem:[%s5423] sm:$0x1]
        %v5426 = vperm.slane %v5424, 0
        %v5428 = vadd.f32 %v5419, %v5426
        %v5429 = vadd.f32 %v5421, %v5426
        %v5430 = vmax.f32 %v5428, 0.0
        %v5431 = vmax.f32 %v5429, 0.0
        %v5432 = vpack.c.bf16 %v5431, %v5430
        %5433 = vmatpush.bf16.msra.mxu0 0
        %5434 = vmatpush.bf16.msra.mxu0 0
        %5435 = vmatpush.bf16.msra.mxu0 0
        %5436 = vmatpush.bf16.msra.mxu0 0
        %5437 = vmatpush.bf16.msra.mxu0 0
        %5438 = vmatpush.bf16.msra.mxu0 0
        %5439 = vmatpush.bf16.msra.mxu0 0
        %5440 = vmatpush.bf16.msra.mxu0 %v5432
        %5441 = vmatmul.bf16.gmra.mxu0 %v725
        %v5442 = vpop.f32.mrf.mxu0
        %v5443 = vadd.f32 0.0, %v5442
        %v5444 = vpop.f32.mrf.mxu0
        %v5445 = vadd.f32 0.0, %v5444
        %5446 = vdwg.mxu0
        %v5447 = vpack.c.bf16 %v5445, %v5443
        %s5448 = scalar_lea.vmem [#allocation10], 1536
        %v5449 = vld [vmem:[%s5448] sm:$0xf]
        %v5450 = vld [vmem:[%s5448 + $0x4] sm:$0xf]
        %v5451 = vld [vmem:[%s5448 + $0x8] sm:$0xf]
        %v5452 = vld [vmem:[%s5448 + $0xc] sm:$0xf]
        %v5453 = vld [vmem:[%s5448 + $0x10] sm:$0xf]
        %v5454 = vld [vmem:[%s5448 + $0x14] sm:$0xf]
        %v5455 = vld [vmem:[%s5448 + $0x18] sm:$0xf]
        %v5456 = vld [vmem:[%s5448 + $0x1c] sm:$0xf]
        %v5457 = vld [vmem:[%s5448 + $0x20] sm:$0xf]
        %v5458 = vld [vmem:[%s5448 + $0x24] sm:$0xf]
        %v5459 = vld [vmem:[%s5448 + $0x28] sm:$0xf]
        %v5460 = vld [vmem:[%s5448 + $0x2c] sm:$0xf]
        %v5461 = vld [vmem:[%s5448 + $0x30] sm:$0xf]
        %v5462 = vld [vmem:[%s5448 + $0x34] sm:$0xf]
        %v5463 = vld [vmem:[%s5448 + $0x38] sm:$0xf]
        %v5464 = vld [vmem:[%s5448 + $0x3c] sm:$0xf]
        %s5465 = scalar_lea.vmem [#allocation11], 1536
        %v5466 = vld [vmem:[%s5465] sm:$0xf]
        %v5467 = vld [vmem:[%s5465 + $0x4] sm:$0xf]
        %v5468 = vld [vmem:[%s5465 + $0x8] sm:$0xf]
        %v5469 = vld [vmem:[%s5465 + $0xc] sm:$0xf]
        %v5470 = vld [vmem:[%s5465 + $0x10] sm:$0xf]
        %v5471 = vld [vmem:[%s5465 + $0x14] sm:$0xf]
        %v5472 = vld [vmem:[%s5465 + $0x18] sm:$0xf]
        %v5473 = vld [vmem:[%s5465 + $0x1c] sm:$0xf]
        %v5474 = vld [vmem:[%s5465 + $0x20] sm:$0xf]
        %v5475 = vld [vmem:[%s5465 + $0x24] sm:$0xf]
        %v5476 = vld [vmem:[%s5465 + $0x28] sm:$0xf]
        %v5477 = vld [vmem:[%s5465 + $0x2c] sm:$0xf]
        %v5478 = vld [vmem:[%s5465 + $0x30] sm:$0xf]
        %v5479 = vld [vmem:[%s5465 + $0x34] sm:$0xf]
        %v5480 = vld [vmem:[%s5465 + $0x38] sm:$0xf]
        %v5481 = vld [vmem:[%s5465 + $0x3c] sm:$0xf]
        %v5498 = vunpack.c.l.b16 %v5466
        %v5499 = vunpack.c.l.b16 %v5467
        %v5500 = vunpack.c.l.b16 %v5468
        %v5501 = vunpack.c.l.b16 %v5469
        %v5502 = vunpack.c.l.b16 %v5470
        %v5503 = vunpack.c.l.b16 %v5471
        %v5504 = vunpack.c.l.b16 %v5472
        %v5505 = vunpack.c.l.b16 %v5473
        %v5506 = vunpack.c.l.b16 %v5474
        %v5507 = vunpack.c.l.b16 %v5475
        %v5508 = vunpack.c.l.b16 %v5476
        %v5509 = vunpack.c.l.b16 %v5477
        %v5510 = vunpack.c.l.b16 %v5478
        %v5511 = vunpack.c.l.b16 %v5479
        %v5512 = vunpack.c.l.b16 %v5480
        %v5513 = vunpack.c.l.b16 %v5481
        %v5514 = vpack.c.b16 %v5499, %v5498
        %v5515 = vpack.c.b16 %v5501, %v5500
        %v5516 = vpack.c.b16 %v5503, %v5502
        %v5517 = vpack.c.b16 %v5505, %v5504
        %v5518 = vpack.c.b16 %v5507, %v5506
        %v5519 = vpack.c.b16 %v5509, %v5508
        %v5520 = vpack.c.b16 %v5511, %v5510
        %v5521 = vpack.c.b16 %v5513, %v5512
        %5530 = vmatpush.bf16.msra.mxu0 %v5521
        %5531 = vmatpush.bf16.msra.mxu0 %v5520
        %5532 = vmatpush.bf16.msra.mxu0 %v5519
        %5533 = vmatpush.bf16.msra.mxu0 %v5518
        %5534 = vmatpush.bf16.msra.mxu0 %v5517
        %5535 = vmatpush.bf16.msra.mxu0 %v5516
        %5536 = vmatpush.bf16.msra.mxu0 %v5515
        %5537 = vmatpush.bf16.msra.mxu0 %v5514
        %5538 = vmatmul.bf16.gmra.mxu0 %v5447
        %v5539 = vpop.f32.mrf.mxu0
        %v5540 = vadd.f32 0.0, %v5539
        %v5541 = vpop.f32.mrf.mxu0
        %v5542 = vadd.f32 0.0, %v5541
        %5543 = vdwg.mxu0
        %v5560 = vunpack.c.l.b16 %v5449
        %v5561 = vunpack.c.l.b16 %v5450
        %v5562 = vunpack.c.l.b16 %v5451
        %v5563 = vunpack.c.l.b16 %v5452
        %v5564 = vunpack.c.l.b16 %v5453
        %v5565 = vunpack.c.l.b16 %v5454
        %v5566 = vunpack.c.l.b16 %v5455
        %v5567 = vunpack.c.l.b16 %v5456
        %v5568 = vunpack.c.l.b16 %v5457
        %v5569 = vunpack.c.l.b16 %v5458
        %v5570 = vunpack.c.l.b16 %v5459
        %v5571 = vunpack.c.l.b16 %v5460
        %v5572 = vunpack.c.l.b16 %v5461
        %v5573 = vunpack.c.l.b16 %v5462
        %v5574 = vunpack.c.l.b16 %v5463
        %v5575 = vunpack.c.l.b16 %v5464
        %v5576 = vpack.c.b16 %v5561, %v5560
        %v5577 = vpack.c.b16 %v5563, %v5562
        %v5578 = vpack.c.b16 %v5565, %v5564
        %v5579 = vpack.c.b16 %v5567, %v5566
        %v5580 = vpack.c.b16 %v5569, %v5568
        %v5581 = vpack.c.b16 %v5571, %v5570
        %v5582 = vpack.c.b16 %v5573, %v5572
        %v5583 = vpack.c.b16 %v5575, %v5574
        %5592 = vmatpush.bf16.msra.mxu0 %v5583
        %5593 = vmatpush.bf16.msra.mxu0 %v5582
        %5594 = vmatpush.bf16.msra.mxu0 %v5581
        %5595 = vmatpush.bf16.msra.mxu0 %v5580
        %5596 = vmatpush.bf16.msra.mxu0 %v5579
        %5597 = vmatpush.bf16.msra.mxu0 %v5578
        %5598 = vmatpush.bf16.msra.mxu0 %v5577
        %5599 = vmatpush.bf16.msra.mxu0 %v5576
        %5600 = vmatmul.bf16.gmra.mxu0 %v5432
        %v5601 = vpop.f32.mrf.mxu0
        %v5602 = vadd.f32 %v5540, %v5601
        %v5603 = vpop.f32.mrf.mxu0
        %v5604 = vadd.f32 %v5542, %v5603
        %5605 = vdwg.mxu0
        %s5606 = scalar_lea.vmem [#allocation13], 24
        %v5607 = vld [vmem:[%s5606] sm:$0x1]
        %v5609 = vperm.slane %v5607, 0
        %v5611 = vadd.f32 %v5602, %v5609
        %v5612 = vadd.f32 %v5604, %v5609
        %v5613 = vadd.f32 %v5611, %v5247
        %v5614 = vadd.f32 %v5612, %v5248
        %v5615 = vmax.f32 %v5613, 0.0
        %v5616 = vmax.f32 %v5614, 0.0
        %v5617 = vpack.c.bf16 %v5616, %v5615
        %5618 = vmatpush.bf16.msra.mxu0 0
        %5619 = vmatpush.bf16.msra.mxu0 0
        %5620 = vmatpush.bf16.msra.mxu0 0
        %5621 = vmatpush.bf16.msra.mxu0 0
        %5622 = vmatpush.bf16.msra.mxu0 0
        %5623 = vmatpush.bf16.msra.mxu0 0
        %5624 = vmatpush.bf16.msra.mxu0 0
        %5625 = vmatpush.bf16.msra.mxu0 %v5617
        %5626 = vmatmul.bf16.gmra.mxu0 %v725
        %v5627 = vpop.f32.mrf.mxu0
        %v5628 = vadd.f32 0.0, %v5627
        %v5629 = vpop.f32.mrf.mxu0
        %v5630 = vadd.f32 0.0, %v5629
        %5631 = vdwg.mxu0
        %v5632 = vpack.c.bf16 %v5630, %v5628
        %s5633 = scalar_lea.vmem [#allocation10], 1600
        %v5634 = vld [vmem:[%s5633] sm:$0xf]
        %v5635 = vld [vmem:[%s5633 + $0x4] sm:$0xf]
        %v5636 = vld [vmem:[%s5633 + $0x8] sm:$0xf]
        %v5637 = vld [vmem:[%s5633 + $0xc] sm:$0xf]
        %v5638 = vld [vmem:[%s5633 + $0x10] sm:$0xf]
        %v5639 = vld [vmem:[%s5633 + $0x14] sm:$0xf]
        %v5640 = vld [vmem:[%s5633 + $0x18] sm:$0xf]
        %v5641 = vld [vmem:[%s5633 + $0x1c] sm:$0xf]
        %v5642 = vld [vmem:[%s5633 + $0x20] sm:$0xf]
        %v5643 = vld [vmem:[%s5633 + $0x24] sm:$0xf]
        %v5644 = vld [vmem:[%s5633 + $0x28] sm:$0xf]
        %v5645 = vld [vmem:[%s5633 + $0x2c] sm:$0xf]
        %v5646 = vld [vmem:[%s5633 + $0x30] sm:$0xf]
        %v5647 = vld [vmem:[%s5633 + $0x34] sm:$0xf]
        %v5648 = vld [vmem:[%s5633 + $0x38] sm:$0xf]
        %v5649 = vld [vmem:[%s5633 + $0x3c] sm:$0xf]
        %s5650 = scalar_lea.vmem [#allocation11], 1600
        %v5651 = vld [vmem:[%s5650] sm:$0xf]
        %v5652 = vld [vmem:[%s5650 + $0x4] sm:$0xf]
        %v5653 = vld [vmem:[%s5650 + $0x8] sm:$0xf]
        %v5654 = vld [vmem:[%s5650 + $0xc] sm:$0xf]
        %v5655 = vld [vmem:[%s5650 + $0x10] sm:$0xf]
        %v5656 = vld [vmem:[%s5650 + $0x14] sm:$0xf]
        %v5657 = vld [vmem:[%s5650 + $0x18] sm:$0xf]
        %v5658 = vld [vmem:[%s5650 + $0x1c] sm:$0xf]
        %v5659 = vld [vmem:[%s5650 + $0x20] sm:$0xf]
        %v5660 = vld [vmem:[%s5650 + $0x24] sm:$0xf]
        %v5661 = vld [vmem:[%s5650 + $0x28] sm:$0xf]
        %v5662 = vld [vmem:[%s5650 + $0x2c] sm:$0xf]
        %v5663 = vld [vmem:[%s5650 + $0x30] sm:$0xf]
        %v5664 = vld [vmem:[%s5650 + $0x34] sm:$0xf]
        %v5665 = vld [vmem:[%s5650 + $0x38] sm:$0xf]
        %v5666 = vld [vmem:[%s5650 + $0x3c] sm:$0xf]
        %v5683 = vunpack.c.l.b16 %v5651
        %v5684 = vunpack.c.l.b16 %v5652
        %v5685 = vunpack.c.l.b16 %v5653
        %v5686 = vunpack.c.l.b16 %v5654
        %v5687 = vunpack.c.l.b16 %v5655
        %v5688 = vunpack.c.l.b16 %v5656
        %v5689 = vunpack.c.l.b16 %v5657
        %v5690 = vunpack.c.l.b16 %v5658
        %v5691 = vunpack.c.l.b16 %v5659
        %v5692 = vunpack.c.l.b16 %v5660
        %v5693 = vunpack.c.l.b16 %v5661
        %v5694 = vunpack.c.l.b16 %v5662
        %v5695 = vunpack.c.l.b16 %v5663
        %v5696 = vunpack.c.l.b16 %v5664
        %v5697 = vunpack.c.l.b16 %v5665
        %v5698 = vunpack.c.l.b16 %v5666
        %v5699 = vpack.c.b16 %v5684, %v5683
        %v5700 = vpack.c.b16 %v5686, %v5685
        %v5701 = vpack.c.b16 %v5688, %v5687
        %v5702 = vpack.c.b16 %v5690, %v5689
        %v5703 = vpack.c.b16 %v5692, %v5691
        %v5704 = vpack.c.b16 %v5694, %v5693
        %v5705 = vpack.c.b16 %v5696, %v5695
        %v5706 = vpack.c.b16 %v5698, %v5697
        %5715 = vmatpush.bf16.msra.mxu0 %v5706
        %5716 = vmatpush.bf16.msra.mxu0 %v5705
        %5717 = vmatpush.bf16.msra.mxu0 %v5704
        %5718 = vmatpush.bf16.msra.mxu0 %v5703
        %5719 = vmatpush.bf16.msra.mxu0 %v5702
        %5720 = vmatpush.bf16.msra.mxu0 %v5701
        %5721 = vmatpush.bf16.msra.mxu0 %v5700
        %5722 = vmatpush.bf16.msra.mxu0 %v5699
        %5723 = vmatmul.bf16.gmra.mxu0 %v5632
        %v5724 = vpop.f32.mrf.mxu0
        %v5725 = vadd.f32 0.0, %v5724
        %v5726 = vpop.f32.mrf.mxu0
        %v5727 = vadd.f32 0.0, %v5726
        %5728 = vdwg.mxu0
        %v5745 = vunpack.c.l.b16 %v5634
        %v5746 = vunpack.c.l.b16 %v5635
        %v5747 = vunpack.c.l.b16 %v5636
        %v5748 = vunpack.c.l.b16 %v5637
        %v5749 = vunpack.c.l.b16 %v5638
        %v5750 = vunpack.c.l.b16 %v5639
        %v5751 = vunpack.c.l.b16 %v5640
        %v5752 = vunpack.c.l.b16 %v5641
        %v5753 = vunpack.c.l.b16 %v5642
        %v5754 = vunpack.c.l.b16 %v5643
        %v5755 = vunpack.c.l.b16 %v5644
        %v5756 = vunpack.c.l.b16 %v5645
        %v5757 = vunpack.c.l.b16 %v5646
        %v5758 = vunpack.c.l.b16 %v5647
        %v5759 = vunpack.c.l.b16 %v5648
        %v5760 = vunpack.c.l.b16 %v5649
        %v5761 = vpack.c.b16 %v5746, %v5745
        %v5762 = vpack.c.b16 %v5748, %v5747
        %v5763 = vpack.c.b16 %v5750, %v5749
        %v5764 = vpack.c.b16 %v5752, %v5751
        %v5765 = vpack.c.b16 %v5754, %v5753
        %v5766 = vpack.c.b16 %v5756, %v5755
        %v5767 = vpack.c.b16 %v5758, %v5757
        %v5768 = vpack.c.b16 %v5760, %v5759
        %5777 = vmatpush.bf16.msra.mxu0 %v5768
        %5778 = vmatpush.bf16.msra.mxu0 %v5767
        %5779 = vmatpush.bf16.msra.mxu0 %v5766
        %5780 = vmatpush.bf16.msra.mxu0 %v5765
        %5781 = vmatpush.bf16.msra.mxu0 %v5764
        %5782 = vmatpush.bf16.msra.mxu0 %v5763
        %5783 = vmatpush.bf16.msra.mxu0 %v5762
        %5784 = vmatpush.bf16.msra.mxu0 %v5761
        %5785 = vmatmul.bf16.gmra.mxu0 %v5617
        %v5786 = vpop.f32.mrf.mxu0
        %v5787 = vadd.f32 %v5725, %v5786
        %v5788 = vpop.f32.mrf.mxu0
        %v5789 = vadd.f32 %v5727, %v5788
        %5790 = vdwg.mxu0
        %s5791 = scalar_lea.vmem [#allocation13], 25
        %v5792 = vld [vmem:[%s5791] sm:$0x1]
        %v5794 = vperm.slane %v5792, 0
        %v5796 = vadd.f32 %v5787, %v5794
        %v5797 = vadd.f32 %v5789, %v5794
        %v5798 = vmax.f32 %v5796, 0.0
        %v5799 = vmax.f32 %v5797, 0.0
        %v5800 = vpack.c.bf16 %v5799, %v5798
        %5801 = vmatpush.bf16.msra.mxu0 0
        %5802 = vmatpush.bf16.msra.mxu0 0
        %5803 = vmatpush.bf16.msra.mxu0 0
        %5804 = vmatpush.bf16.msra.mxu0 0
        %5805 = vmatpush.bf16.msra.mxu0 0
        %5806 = vmatpush.bf16.msra.mxu0 0
        %5807 = vmatpush.bf16.msra.mxu0 0
        %5808 = vmatpush.bf16.msra.mxu0 %v5800
        %5809 = vmatmul.bf16.gmra.mxu0 %v725
        %v5810 = vpop.f32.mrf.mxu0
        %v5811 = vadd.f32 0.0, %v5810
        %v5812 = vpop.f32.mrf.mxu0
        %v5813 = vadd.f32 0.0, %v5812
        %5814 = vdwg.mxu0
        %v5815 = vpack.c.bf16 %v5813, %v5811
        %s5816 = scalar_lea.vmem [#allocation10], 1664
        %v5817 = vld [vmem:[%s5816] sm:$0xf]
        %v5818 = vld [vmem:[%s5816 + $0x4] sm:$0xf]
        %v5819 = vld [vmem:[%s5816 + $0x8] sm:$0xf]
        %v5820 = vld [vmem:[%s5816 + $0xc] sm:$0xf]
        %v5821 = vld [vmem:[%s5816 + $0x10] sm:$0xf]
        %v5822 = vld [vmem:[%s5816 + $0x14] sm:$0xf]
        %v5823 = vld [vmem:[%s5816 + $0x18] sm:$0xf]
        %v5824 = vld [vmem:[%s5816 + $0x1c] sm:$0xf]
        %v5825 = vld [vmem:[%s5816 + $0x20] sm:$0xf]
        %v5826 = vld [vmem:[%s5816 + $0x24] sm:$0xf]
        %v5827 = vld [vmem:[%s5816 + $0x28] sm:$0xf]
        %v5828 = vld [vmem:[%s5816 + $0x2c] sm:$0xf]
        %v5829 = vld [vmem:[%s5816 + $0x30] sm:$0xf]
        %v5830 = vld [vmem:[%s5816 + $0x34] sm:$0xf]
        %v5831 = vld [vmem:[%s5816 + $0x38] sm:$0xf]
        %v5832 = vld [vmem:[%s5816 + $0x3c] sm:$0xf]
        %s5833 = scalar_lea.vmem [#allocation11], 1664
        %v5834 = vld [vmem:[%s5833] sm:$0xf]
        %v5835 = vld [vmem:[%s5833 + $0x4] sm:$0xf]
        %v5836 = vld [vmem:[%s5833 + $0x8] sm:$0xf]
        %v5837 = vld [vmem:[%s5833 + $0xc] sm:$0xf]
        %v5838 = vld [vmem:[%s5833 + $0x10] sm:$0xf]
        %v5839 = vld [vmem:[%s5833 + $0x14] sm:$0xf]
        %v5840 = vld [vmem:[%s5833 + $0x18] sm:$0xf]
        %v5841 = vld [vmem:[%s5833 + $0x1c] sm:$0xf]
        %v5842 = vld [vmem:[%s5833 + $0x20] sm:$0xf]
        %v5843 = vld [vmem:[%s5833 + $0x24] sm:$0xf]
        %v5844 = vld [vmem:[%s5833 + $0x28] sm:$0xf]
        %v5845 = vld [vmem:[%s5833 + $0x2c] sm:$0xf]
        %v5846 = vld [vmem:[%s5833 + $0x30] sm:$0xf]
        %v5847 = vld [vmem:[%s5833 + $0x34] sm:$0xf]
        %v5848 = vld [vmem:[%s5833 + $0x38] sm:$0xf]
        %v5849 = vld [vmem:[%s5833 + $0x3c] sm:$0xf]
        %v5866 = vunpack.c.l.b16 %v5834
        %v5867 = vunpack.c.l.b16 %v5835
        %v5868 = vunpack.c.l.b16 %v5836
        %v5869 = vunpack.c.l.b16 %v5837
        %v5870 = vunpack.c.l.b16 %v5838
        %v5871 = vunpack.c.l.b16 %v5839
        %v5872 = vunpack.c.l.b16 %v5840
        %v5873 = vunpack.c.l.b16 %v5841
        %v5874 = vunpack.c.l.b16 %v5842
        %v5875 = vunpack.c.l.b16 %v5843
        %v5876 = vunpack.c.l.b16 %v5844
        %v5877 = vunpack.c.l.b16 %v5845
        %v5878 = vunpack.c.l.b16 %v5846
        %v5879 = vunpack.c.l.b16 %v5847
        %v5880 = vunpack.c.l.b16 %v5848
        %v5881 = vunpack.c.l.b16 %v5849
        %v5882 = vpack.c.b16 %v5867, %v5866
        %v5883 = vpack.c.b16 %v5869, %v5868
        %v5884 = vpack.c.b16 %v5871, %v5870
        %v5885 = vpack.c.b16 %v5873, %v5872
        %v5886 = vpack.c.b16 %v5875, %v5874
        %v5887 = vpack.c.b16 %v5877, %v5876
        %v5888 = vpack.c.b16 %v5879, %v5878
        %v5889 = vpack.c.b16 %v5881, %v5880
        %5898 = vmatpush.bf16.msra.mxu0 %v5889
        %5899 = vmatpush.bf16.msra.mxu0 %v5888
        %5900 = vmatpush.bf16.msra.mxu0 %v5887
        %5901 = vmatpush.bf16.msra.mxu0 %v5886
        %5902 = vmatpush.bf16.msra.mxu0 %v5885
        %5903 = vmatpush.bf16.msra.mxu0 %v5884
        %5904 = vmatpush.bf16.msra.mxu0 %v5883
        %5905 = vmatpush.bf16.msra.mxu0 %v5882
        %5906 = vmatmul.bf16.gmra.mxu0 %v5815
        %v5907 = vpop.f32.mrf.mxu0
        %v5908 = vadd.f32 0.0, %v5907
        %v5909 = vpop.f32.mrf.mxu0
        %v5910 = vadd.f32 0.0, %v5909
        %5911 = vdwg.mxu0
        %v5928 = vunpack.c.l.b16 %v5817
        %v5929 = vunpack.c.l.b16 %v5818
        %v5930 = vunpack.c.l.b16 %v5819
        %v5931 = vunpack.c.l.b16 %v5820
        %v5932 = vunpack.c.l.b16 %v5821
        %v5933 = vunpack.c.l.b16 %v5822
        %v5934 = vunpack.c.l.b16 %v5823
        %v5935 = vunpack.c.l.b16 %v5824
        %v5936 = vunpack.c.l.b16 %v5825
        %v5937 = vunpack.c.l.b16 %v5826
        %v5938 = vunpack.c.l.b16 %v5827
        %v5939 = vunpack.c.l.b16 %v5828
        %v5940 = vunpack.c.l.b16 %v5829
        %v5941 = vunpack.c.l.b16 %v5830
        %v5942 = vunpack.c.l.b16 %v5831
        %v5943 = vunpack.c.l.b16 %v5832
        %v5944 = vpack.c.b16 %v5929, %v5928
        %v5945 = vpack.c.b16 %v5931, %v5930
        %v5946 = vpack.c.b16 %v5933, %v5932
        %v5947 = vpack.c.b16 %v5935, %v5934
        %v5948 = vpack.c.b16 %v5937, %v5936
        %v5949 = vpack.c.b16 %v5939, %v5938
        %v5950 = vpack.c.b16 %v5941, %v5940
        %v5951 = vpack.c.b16 %v5943, %v5942
        %5960 = vmatpush.bf16.msra.mxu0 %v5951
        %5961 = vmatpush.bf16.msra.mxu0 %v5950
        %5962 = vmatpush.bf16.msra.mxu0 %v5949
        %5963 = vmatpush.bf16.msra.mxu0 %v5948
        %5964 = vmatpush.bf16.msra.mxu0 %v5947
        %5965 = vmatpush.bf16.msra.mxu0 %v5946
        %5966 = vmatpush.bf16.msra.mxu0 %v5945
        %5967 = vmatpush.bf16.msra.mxu0 %v5944
        %5968 = vmatmul.bf16.gmra.mxu0 %v5800
        %v5969 = vpop.f32.mrf.mxu0
        %v5970 = vadd.f32 %v5908, %v5969
        %v5971 = vpop.f32.mrf.mxu0
        %v5972 = vadd.f32 %v5910, %v5971
        %5973 = vdwg.mxu0
        %s5974 = scalar_lea.vmem [#allocation13], 26
        %v5975 = vld [vmem:[%s5974] sm:$0x1]
        %v5977 = vperm.slane %v5975, 0
        %v5979 = vadd.f32 %v5970, %v5977
        %v5980 = vadd.f32 %v5972, %v5977
        %v5981 = vadd.f32 %v5979, %v5615
        %v5982 = vadd.f32 %v5980, %v5616
        %v5983 = vmax.f32 %v5981, 0.0
        %v5984 = vmax.f32 %v5982, 0.0
        %v5985 = vpack.c.bf16 %v5984, %v5983
        %5986 = vmatpush.bf16.msra.mxu0 0
        %5987 = vmatpush.bf16.msra.mxu0 0
        %5988 = vmatpush.bf16.msra.mxu0 0
        %5989 = vmatpush.bf16.msra.mxu0 0
        %5990 = vmatpush.bf16.msra.mxu0 0
        %5991 = vmatpush.bf16.msra.mxu0 0
        %5992 = vmatpush.bf16.msra.mxu0 0
        %5993 = vmatpush.bf16.msra.mxu0 %v5985
        %5994 = vmatmul.bf16.gmra.mxu0 %v725
        %v5995 = vpop.f32.mrf.mxu0
        %v5996 = vadd.f32 0.0, %v5995
        %v5997 = vpop.f32.mrf.mxu0
        %v5998 = vadd.f32 0.0, %v5997
        %5999 = vdwg.mxu0
        %v6000 = vpack.c.bf16 %v5998, %v5996
        %s6001 = scalar_lea.vmem [#allocation10], 1728
        %v6002 = vld [vmem:[%s6001] sm:$0xf]
        %v6003 = vld [vmem:[%s6001 + $0x4] sm:$0xf]
        %v6004 = vld [vmem:[%s6001 + $0x8] sm:$0xf]
        %v6005 = vld [vmem:[%s6001 + $0xc] sm:$0xf]
        %v6006 = vld [vmem:[%s6001 + $0x10] sm:$0xf]
        %v6007 = vld [vmem:[%s6001 + $0x14] sm:$0xf]
        %v6008 = vld [vmem:[%s6001 + $0x18] sm:$0xf]
        %v6009 = vld [vmem:[%s6001 + $0x1c] sm:$0xf]
        %v6010 = vld [vmem:[%s6001 + $0x20] sm:$0xf]
        %v6011 = vld [vmem:[%s6001 + $0x24] sm:$0xf]
        %v6012 = vld [vmem:[%s6001 + $0x28] sm:$0xf]
        %v6013 = vld [vmem:[%s6001 + $0x2c] sm:$0xf]
        %v6014 = vld [vmem:[%s6001 + $0x30] sm:$0xf]
        %v6015 = vld [vmem:[%s6001 + $0x34] sm:$0xf]
        %v6016 = vld [vmem:[%s6001 + $0x38] sm:$0xf]
        %v6017 = vld [vmem:[%s6001 + $0x3c] sm:$0xf]
        %s6018 = scalar_lea.vmem [#allocation11], 1728
        %v6019 = vld [vmem:[%s6018] sm:$0xf]
        %v6020 = vld [vmem:[%s6018 + $0x4] sm:$0xf]
        %v6021 = vld [vmem:[%s6018 + $0x8] sm:$0xf]
        %v6022 = vld [vmem:[%s6018 + $0xc] sm:$0xf]
        %v6023 = vld [vmem:[%s6018 + $0x10] sm:$0xf]
        %v6024 = vld [vmem:[%s6018 + $0x14] sm:$0xf]
        %v6025 = vld [vmem:[%s6018 + $0x18] sm:$0xf]
        %v6026 = vld [vmem:[%s6018 + $0x1c] sm:$0xf]
        %v6027 = vld [vmem:[%s6018 + $0x20] sm:$0xf]
        %v6028 = vld [vmem:[%s6018 + $0x24] sm:$0xf]
        %v6029 = vld [vmem:[%s6018 + $0x28] sm:$0xf]
        %v6030 = vld [vmem:[%s6018 + $0x2c] sm:$0xf]
        %v6031 = vld [vmem:[%s6018 + $0x30] sm:$0xf]
        %v6032 = vld [vmem:[%s6018 + $0x34] sm:$0xf]
        %v6033 = vld [vmem:[%s6018 + $0x38] sm:$0xf]
        %v6034 = vld [vmem:[%s6018 + $0x3c] sm:$0xf]
        %v6051 = vunpack.c.l.b16 %v6019
        %v6052 = vunpack.c.l.b16 %v6020
        %v6053 = vunpack.c.l.b16 %v6021
        %v6054 = vunpack.c.l.b16 %v6022
        %v6055 = vunpack.c.l.b16 %v6023
        %v6056 = vunpack.c.l.b16 %v6024
        %v6057 = vunpack.c.l.b16 %v6025
        %v6058 = vunpack.c.l.b16 %v6026
        %v6059 = vunpack.c.l.b16 %v6027
        %v6060 = vunpack.c.l.b16 %v6028
        %v6061 = vunpack.c.l.b16 %v6029
        %v6062 = vunpack.c.l.b16 %v6030
        %v6063 = vunpack.c.l.b16 %v6031
        %v6064 = vunpack.c.l.b16 %v6032
        %v6065 = vunpack.c.l.b16 %v6033
        %v6066 = vunpack.c.l.b16 %v6034
        %v6067 = vpack.c.b16 %v6052, %v6051
        %v6068 = vpack.c.b16 %v6054, %v6053
        %v6069 = vpack.c.b16 %v6056, %v6055
        %v6070 = vpack.c.b16 %v6058, %v6057
        %v6071 = vpack.c.b16 %v6060, %v6059
        %v6072 = vpack.c.b16 %v6062, %v6061
        %v6073 = vpack.c.b16 %v6064, %v6063
        %v6074 = vpack.c.b16 %v6066, %v6065
        %6083 = vmatpush.bf16.msra.mxu0 %v6074
        %6084 = vmatpush.bf16.msra.mxu0 %v6073
        %6085 = vmatpush.bf16.msra.mxu0 %v6072
        %6086 = vmatpush.bf16.msra.mxu0 %v6071
        %6087 = vmatpush.bf16.msra.mxu0 %v6070
        %6088 = vmatpush.bf16.msra.mxu0 %v6069
        %6089 = vmatpush.bf16.msra.mxu0 %v6068
        %6090 = vmatpush.bf16.msra.mxu0 %v6067
        %6091 = vmatmul.bf16.gmra.mxu0 %v6000
        %v6092 = vpop.f32.mrf.mxu0
        %v6093 = vadd.f32 0.0, %v6092
        %v6094 = vpop.f32.mrf.mxu0
        %v6095 = vadd.f32 0.0, %v6094
        %6096 = vdwg.mxu0
        %v6113 = vunpack.c.l.b16 %v6002
        %v6114 = vunpack.c.l.b16 %v6003
        %v6115 = vunpack.c.l.b16 %v6004
        %v6116 = vunpack.c.l.b16 %v6005
        %v6117 = vunpack.c.l.b16 %v6006
        %v6118 = vunpack.c.l.b16 %v6007
        %v6119 = vunpack.c.l.b16 %v6008
        %v6120 = vunpack.c.l.b16 %v6009
        %v6121 = vunpack.c.l.b16 %v6010
        %v6122 = vunpack.c.l.b16 %v6011
        %v6123 = vunpack.c.l.b16 %v6012
        %v6124 = vunpack.c.l.b16 %v6013
        %v6125 = vunpack.c.l.b16 %v6014
        %v6126 = vunpack.c.l.b16 %v6015
        %v6127 = vunpack.c.l.b16 %v6016
        %v6128 = vunpack.c.l.b16 %v6017
        %v6129 = vpack.c.b16 %v6114, %v6113
        %v6130 = vpack.c.b16 %v6116, %v6115
        %v6131 = vpack.c.b16 %v6118, %v6117
        %v6132 = vpack.c.b16 %v6120, %v6119
        %v6133 = vpack.c.b16 %v6122, %v6121
        %v6134 = vpack.c.b16 %v6124, %v6123
        %v6135 = vpack.c.b16 %v6126, %v6125
        %v6136 = vpack.c.b16 %v6128, %v6127
        %6145 = vmatpush.bf16.msra.mxu0 %v6136
        %6146 = vmatpush.bf16.msra.mxu0 %v6135
        %6147 = vmatpush.bf16.msra.mxu0 %v6134
        %6148 = vmatpush.bf16.msra.mxu0 %v6133
        %6149 = vmatpush.bf16.msra.mxu0 %v6132
        %6150 = vmatpush.bf16.msra.mxu0 %v6131
        %6151 = vmatpush.bf16.msra.mxu0 %v6130
        %6152 = vmatpush.bf16.msra.mxu0 %v6129
        %6153 = vmatmul.bf16.gmra.mxu0 %v5985
        %v6154 = vpop.f32.mrf.mxu0
        %v6155 = vadd.f32 %v6093, %v6154
        %v6156 = vpop.f32.mrf.mxu0
        %v6157 = vadd.f32 %v6095, %v6156
        %6158 = vdwg.mxu0
        %s6159 = scalar_lea.vmem [#allocation13], 27
        %v6160 = vld [vmem:[%s6159] sm:$0x1]
        %v6162 = vperm.slane %v6160, 0
        %v6164 = vadd.f32 %v6155, %v6162
        %v6165 = vadd.f32 %v6157, %v6162
        %v6166 = vpack.c.bf16 %v6165, %v6164
        %s6167 = scalar_lea.vmem [#allocation14], 64
        %v6168 = vld [vmem:[%s6167] sm:$0xf]
        %v6169 = vld [vmem:[%s6167 + $0x4] sm:$0xf]
        %v6170 = vld [vmem:[%s6167 + $0x8] sm:$0xf]
        %v6171 = vld [vmem:[%s6167 + $0xc] sm:$0xf]
        %v6172 = vld [vmem:[%s6167 + $0x10] sm:$0xf]
        %v6173 = vld [vmem:[%s6167 + $0x14] sm:$0xf]
        %v6174 = vld [vmem:[%s6167 + $0x18] sm:$0xf]
        %v6175 = vld [vmem:[%s6167 + $0x1c] sm:$0xf]
        %v6176 = vld [vmem:[%s6167 + $0x20] sm:$0xf]
        %v6177 = vld [vmem:[%s6167 + $0x24] sm:$0xf]
        %v6178 = vld [vmem:[%s6167 + $0x28] sm:$0xf]
        %v6179 = vld [vmem:[%s6167 + $0x2c] sm:$0xf]
        %v6180 = vld [vmem:[%s6167 + $0x30] sm:$0xf]
        %v6181 = vld [vmem:[%s6167 + $0x34] sm:$0xf]
        %v6182 = vld [vmem:[%s6167 + $0x38] sm:$0xf]
        %v6183 = vld [vmem:[%s6167 + $0x3c] sm:$0xf]
        %s6184 = scalar_lea.vmem %s8, 1
        %v6185 = vld [vmem:[%s6184] sm:$0x1]
        %v6187 = vperm.slane %v6185, 0
        %v6205 = vunpack.c.l.b16 %v6168
        %v6206 = vunpack.c.l.b16 %v6169
        %v6207 = vunpack.c.l.b16 %v6170
        %v6208 = vunpack.c.l.b16 %v6171
        %v6209 = vunpack.c.l.b16 %v6172
        %v6210 = vunpack.c.l.b16 %v6173
        %v6211 = vunpack.c.l.b16 %v6174
        %v6212 = vunpack.c.l.b16 %v6175
        %v6213 = vunpack.c.l.b16 %v6176
        %v6214 = vunpack.c.l.b16 %v6177
        %v6215 = vunpack.c.l.b16 %v6178
        %v6216 = vunpack.c.l.b16 %v6179
        %v6217 = vunpack.c.l.b16 %v6180
        %v6218 = vunpack.c.l.b16 %v6181
        %v6219 = vunpack.c.l.b16 %v6182
        %v6220 = vunpack.c.l.b16 %v6183
        %v6221 = vpack.c.b16 %v6206, %v6205
        %v6222 = vpack.c.b16 %v6208, %v6207
        %v6223 = vpack.c.b16 %v6210, %v6209
        %v6224 = vpack.c.b16 %v6212, %v6211
        %v6225 = vpack.c.b16 %v6214, %v6213
        %v6226 = vpack.c.b16 %v6216, %v6215
        %v6227 = vpack.c.b16 %v6218, %v6217
        %v6228 = vpack.c.b16 %v6220, %v6219
        %6237 = vmatpush.bf16.msra.mxu0 %v6228
        %6238 = vmatpush.bf16.msra.mxu0 %v6227
        %6239 = vmatpush.bf16.msra.mxu0 %v6226
        %6240 = vmatpush.bf16.msra.mxu0 %v6225
        %6241 = vmatpush.bf16.msra.mxu0 %v6224
        %6242 = vmatpush.bf16.msra.mxu0 %v6223
        %6243 = vmatpush.bf16.msra.mxu0 %v6222
        %6244 = vmatpush.bf16.msra.mxu0 %v6221
        %6245 = vmatmul.bf16.gmra.mxu0 %v6166
        %v6246 = vpop.f32.mrf.mxu0
        %v6247 = vadd.f32 %v6187, %v6246
        %v6248 = vpop.f32.mrf.mxu0
        %v6249 = vadd.f32 %v6187, %v6248
        %6250 = vdwg.mxu0
        %v6251 = vadd.f32 %v3376, %v6247
        %v6252 = vadd.f32 %v3377, %v6249
        %s6253 = scalar_lea.vmem %s516, 16 [#allocation16]
        %6254 = vst [vmem:[%s6253] sm:$0xff] %v6251
        %6255 = vst [vmem:[%s6253 + $0x8] sm:$0xff] %v6252
        %s6256 = sand.u32 %s244, 1
        %s6257 = scalar_lea.sflag [#allocation4], %s6256
        %s6258 = sand.u32 %s244, 1
        %s6259 = smul.addr %s6258, 32
        %s6260 = scalar_lea.vmem [#allocation16], %s6259
        // Predicated region
        $region89: #{tpu_custom_call.1} parent=55 // pred_check
          %p6261 = pneg %p254
        $region90: #{tpu_custom_call.1} parent=55 // pred_check_branch
          %6263 = sbr.rel (%p6261) target = $region92
        $region91: #{tpu_custom_call.1} parent=55 // pred_region
          %6265 = vsyncadd %s6257, 0
          %s6266 = smul.addr %s32, 4
          %s6267 = smul.addr %s6266, 8
          %s6268 = scalar_lea.hbm %s9, %s6267
          %s6269 = sshll.u32 %s6260, 4
          %s6270 = int_to_ptr.vmem [resolvable:$true] %s6269
          %s6271 = sshll.u32 %s6268, 4
          %s6272 = int_to_ptr.hbm [resolvable:$true] %s6271
          %6277 = dma.vmem_to_hbm [thread:$0]  %s6270, 512, %s6272, %s6257, 128, 128, 8
        $region92: #{tpu_custom_call.1} parent=55 // pred_fallthru
          _
      $region56: #{tpu_custom_call.1} parent=5 // pred_fallthru
        _
      %p6278 = scmp.le.s32.totalorder 2, %s27
      // Predicated region
      $region93: #{tpu_custom_call.1} parent=5 // pred_check
        %p6279 = pneg %p6278
      $region94: #{tpu_custom_call.1} parent=5 // pred_check_branch
        %6281 = sbr.rel (%p6279) target = $region96
      $region95: #{tpu_custom_call.1} parent=5 // pred_region
        %s6282 = ssub.s32 %s27, 2
        // Predicated region
        $region97: #{tpu_custom_call.1} parent=95 // pred_check
          %p6283 = pneg %p260
        $region98: #{tpu_custom_call.1} parent=95 // pred_check_branch
          %6285 = sbr.rel (%p6283) target = $region100
        $region99: #{tpu_custom_call.1} parent=95 // pred_region
          %s6286 = sand.u32 %s245, 1
          %s6287 = scalar_lea.sflag [#allocation4], %s6286
          %s6288 = sand.u32 %s245, 1
          %s6289 = smul.addr %s6288, 32
          %s6290 = scalar_lea.vmem [#allocation16], %s6289
          %6292 = dma.done %s6287, 512
        $region100: #{tpu_custom_call.1} parent=95 // pred_fallthru
          _
      $region96: #{tpu_custom_call.1} parent=5 // pred_fallthru
        _
    $region6: #{tpu_custom_call.1} parent=1 // loop_footer
      %s31 = sadd.s32 1, %s27
    $region7: #{tpu_custom_call.1} parent=1 // loop_footer_branch
      %26 = sbr.rel target = $region3
    $region8: #{tpu_custom_call.1} parent=1 // loop_exit
      _
    %6293 = vsyncpa [#allocation3], 1
    %s6294 = scalar_lea.sflag [#allocation3], 1
    %6295 = vsyncpa %s6294, 1
    %6296 = vsyncpa [#allocation6], 1
    %s6297 = scalar_lea.sflag [#allocation6], 1
    %6298 = vsyncpa %s6297, 1
    %6299 = vsyncpa [#allocation9], 1
    %6300 = vsyncpa [#allocation12], 1
    %6301 = vsyncpa [#allocation15], 1
    %6302 = vsyncpa [#allocation4], 1
    %s6303 = scalar_lea.sflag [#allocation4], 1
    %6304 = vsyncpa %s6303, 1

</llo_original>
